<compile_context>
chip_gen: v5e
topology: v5e:2x2
jax: 0.10.0
libtpu: 0.0.40
codegen_flags: <defaults>
</compile_context>

<pallas_src>
import math
import functools

import jax
import jax.numpy as jnp
from jax.experimental import pallas as pl
from jax.experimental.pallas import tpu as pltpu


VMEM_LIMIT = 32 * 1024 * 1024  # safe on v5e (128 MiB phys), v6e (128 MiB), v7x (64 MiB)


def _cparams(n_axes):
    return pltpu.CompilerParams(
        dimension_semantics=("parallel",) * n_axes,
        vmem_limit_bytes=VMEM_LIMIT)


def _seq_tile(S, target=256):
    """Largest multiple-of-8 tile <= target that divides S; otherwise the full S."""
    if S <= target:
        return S
    start = target - (target % 8)
    for ts in range(start, 7, -8):
        if S % ts == 0:
            return ts
    return S  # e.g. S=1500: no multiple-of-8 divisor -> full-S block (still correct)


# ----------------------------- Pallas kernels -----------------------------

def _linear_kernel(x_ref, w_ref, b_ref, *rest, activation, has_add):
    # x: (TS, Din) f32, w: (Din, Dout) bf16, b: (1, Dout) f32, optional add: (TS, Dout) f32
    if has_add:
        add_ref, o_ref = rest
    else:
        (o_ref,) = rest
    y = jnp.dot(x_ref[...].astype(jnp.bfloat16), w_ref[...],
                preferred_element_type=jnp.float32)
    y = y + b_ref[...]
    if has_add:
        y = y + add_ref[...]
    if activation == "relu":
        y = jnp.maximum(y, 0.0)
    o_ref[...] = y.astype(o_ref.dtype)


def fused_linear(x, w, b, add=None, activation="none"):
    """y = act(x @ w + b [+ add]); x: (B, S, Din) -> (B, S, Dout), S tiled."""
    B, S, Din = x.shape
    Dout = w.shape[1]
    ts = _seq_tile(S)
    grid = (B, S // ts)
    in_specs = [
        pl.BlockSpec((None, ts, Din), lambda bi, si: (bi, si, 0)),
        pl.BlockSpec((Din, Dout), lambda bi, si: (0, 0)),
        pl.BlockSpec((1, Dout), lambda bi, si: (0, 0)),
    ]
    args = [x, w.astype(jnp.bfloat16), b.reshape(1, Dout).astype(jnp.float32)]
    if add is not None:
        in_specs.append(pl.BlockSpec((ts, Dout), lambda bi, si: (si, 0)))
        args.append(add.astype(jnp.float32))
    kern = functools.partial(_linear_kernel, activation=activation, has_add=add is not None)
    return pl.pallas_call(
        kern,
        out_shape=jax.ShapeDtypeStruct((B, S, Dout), jnp.float32),
        grid=grid,
        in_specs=in_specs,
        out_specs=pl.BlockSpec((None, ts, Dout), lambda bi, si: (bi, si, 0)),
        compiler_params=_cparams(2),
    )(*args)


def _qkv_kernel(x_ref, w_ref, b_ref, q_ref, k_ref, v_ref, *, h, dq, dv):
    # One wide matmul for Q|K|V, then head split written straight to (h, TS, d) outputs.
    y = jnp.dot(x_ref[...].astype(jnp.bfloat16), w_ref[...],
                preferred_element_type=jnp.float32) + b_ref[...]
    for hi in range(h):
        q_ref[hi] = y[:, hi * dq:(hi + 1) * dq].astype(q_ref.dtype)
    off = h * dq
    for hi in range(h):
        k_ref[hi] = y[:, off + hi * dq: off + (hi + 1) * dq].astype(k_ref.dtype)
    off = 2 * h * dq
    for hi in range(h):
        v_ref[hi] = y[:, off + hi * dv: off + (hi + 1) * dv].astype(v_ref.dtype)


def qkv_projection(x, wqkv, bqkv, h, dq, dv):
    """x: (B, S, D) -> Q,K: (B, h, S, dq) bf16, V: (B, h, S, dv) bf16 (head-split, no XLA transpose)."""
    B, S, D = x.shape
    tot = wqkv.shape[1]
    ts = _seq_tile(S)
    grid = (B, S // ts)
    kern = functools.partial(_qkv_kernel, h=h, dq=dq, dv=dv)
    return pl.pallas_call(
        kern,
        out_shape=(jax.ShapeDtypeStruct((B, h, S, dq), jnp.bfloat16),
                   jax.ShapeDtypeStruct((B, h, S, dq), jnp.bfloat16),
                   jax.ShapeDtypeStruct((B, h, S, dv), jnp.bfloat16)),
        grid=grid,
        in_specs=[
            pl.BlockSpec((None, ts, D), lambda bi, si: (bi, si, 0)),
            pl.BlockSpec((D, tot), lambda bi, si: (0, 0)),
            pl.BlockSpec((1, tot), lambda bi, si: (0, 0)),
        ],
        out_specs=(
            pl.BlockSpec((None, h, ts, dq), lambda bi, si: (bi, 0, si, 0)),
            pl.BlockSpec((None, h, ts, dq), lambda bi, si: (bi, 0, si, 0)),
            pl.BlockSpec((None, h, ts, dv), lambda bi, si: (bi, 0, si, 0)),
        ),
        compiler_params=_cparams(2),
    )(x, wqkv.astype(jnp.bfloat16), bqkv.reshape(1, tot).astype(jnp.float32))


def _attention_kernel(q_ref, k_ref, v_ref, o_ref, *, scale):
    # q: (TQ, dq) bf16, k: (S, dq) bf16, v: (S, dv) bf16 — softmax(q k^T * scale) v
    s = jax.lax.dot_general(q_ref[...], k_ref[...],
                            dimension_numbers=(((1,), (1,)), ((), ())),
                            preferred_element_type=jnp.float32) * scale
    s = s - jnp.max(s, axis=-1, keepdims=True)
    e = jnp.exp(s)
    p = e * pl.reciprocal(jnp.sum(e, axis=-1, keepdims=True), approx=True)
    o_ref[...] = jnp.dot(p.astype(jnp.bfloat16), v_ref[...],
                         preferred_element_type=jnp.float32).astype(o_ref.dtype)


def attention(q, k, v, scale):
    """Per (batch, head, Q-tile) scaled dot-product attention.  q/k: (B,h,S,dq), v: (B,h,S,dv)."""
    B, h, S, dq = q.shape
    dv = v.shape[-1]
    tq = _seq_tile(S)
    grid = (B, h, S // tq)
    kern = functools.partial(_attention_kernel, scale=scale)
    return pl.pallas_call(
        kern,
        out_shape=jax.ShapeDtypeStruct((B, h, S, dv), jnp.bfloat16),
        grid=grid,
        in_specs=[
            pl.BlockSpec((None, None, tq, dq), lambda bi, hi, qi: (bi, hi, qi, 0)),
            pl.BlockSpec((None, None, S, dq), lambda bi, hi, qi: (bi, hi, 0, 0)),
            pl.BlockSpec((None, None, S, dv), lambda bi, hi, qi: (bi, hi, 0, 0)),
        ],
        out_specs=pl.BlockSpec((None, None, tq, dv), lambda bi, hi, qi: (bi, hi, qi, 0)),
        compiler_params=_cparams(3),
    )(q, k, v)


def _proj_res_ln_kernel(ctx_ref, wo_ref, bo_ref, res_ref, g_ref, b_ref, o_ref, *, h, eps):
    # ctx: (h, TS, dv) bf16, wo: (h, dv, D) bf16, res: (TS, D) f32 — fused head-merge + Wo + +res + LN
    acc = res_ref[...] + bo_ref[...]
    for hi in range(h):
        acc = acc + jnp.dot(ctx_ref[hi], wo_ref[hi], preferred_element_type=jnp.float32)
    mean = jnp.mean(acc, axis=-1, keepdims=True)
    var = jnp.mean((acc - mean) * (acc - mean), axis=-1, keepdims=True)
    yn = (acc - mean) * jax.lax.rsqrt(var + eps)
    o_ref[...] = (yn * g_ref[...] + b_ref[...]).astype(o_ref.dtype)


def proj_residual_layernorm(ctx, wo, bo, residual, gamma, beta, eps=1e-5):
    B, h, S, dv = ctx.shape
    D = wo.shape[-1]
    ts = _seq_tile(S)
    grid = (B, S // ts)
    kern = functools.partial(_proj_res_ln_kernel, h=h, eps=eps)
    return pl.pallas_call(
        kern,
        out_shape=jax.ShapeDtypeStruct((B, S, D), jnp.float32),
        grid=grid,
        in_specs=[
            pl.BlockSpec((None, h, ts, dv), lambda bi, si: (bi, 0, si, 0)),
            pl.BlockSpec((h, dv, D), lambda bi, si: (0, 0, 0)),
            pl.BlockSpec((1, D), lambda bi, si: (0, 0)),
            pl.BlockSpec((None, ts, D), lambda bi, si: (bi, si, 0)),
            pl.BlockSpec((1, D), lambda bi, si: (0, 0)),
            pl.BlockSpec((1, D), lambda bi, si: (0, 0)),
        ],
        out_specs=pl.BlockSpec((None, ts, D), lambda bi, si: (bi, si, 0)),
        compiler_params=_cparams(2),
    )(ctx, wo.astype(jnp.bfloat16), bo.reshape(1, D).astype(jnp.float32),
      residual, gamma.reshape(1, D), beta.reshape(1, D))


def _ffn_res_ln_kernel(x_ref, w1_ref, b1_ref, w2_ref, b2_ref, g_ref, b_ref, o_ref, *, eps):
    # Fused FFN: LN(relu(x W1 + b1) W2 + b2 + x); hidden never leaves VMEM.
    x = x_ref[...]
    h1 = jnp.dot(x.astype(jnp.bfloat16), w1_ref[...], preferred_element_type=jnp.float32)
    h1 = jnp.maximum(h1 + b1_ref[...], 0.0)
    y = jnp.dot(h1.astype(jnp.bfloat16), w2_ref[...], preferred_element_type=jnp.float32)
    y = y + b2_ref[...] + x
    mean = jnp.mean(y, axis=-1, keepdims=True)
    var = jnp.mean((y - mean) * (y - mean), axis=-1, keepdims=True)
    yn = (y - mean) * jax.lax.rsqrt(var + eps)
    o_ref[...] = (yn * g_ref[...] + b_ref[...]).astype(o_ref.dtype)


def ffn_residual_layernorm(x, w1, b1, w2, b2, gamma, beta, eps=1e-5):
    B, S, D = x.shape
    H = w1.shape[1]
    ts = _seq_tile(S)
    grid = (B, S // ts)
    kern = functools.partial(_ffn_res_ln_kernel, eps=eps)
    return pl.pallas_call(
        kern,
        out_shape=jax.ShapeDtypeStruct((B, S, D), jnp.float32),
        grid=grid,
        in_specs=[
            pl.BlockSpec((None, ts, D), lambda bi, si: (bi, si, 0)),
            pl.BlockSpec((D, H), lambda bi, si: (0, 0)),
            pl.BlockSpec((1, H), lambda bi, si: (0, 0)),
            pl.BlockSpec((H, D), lambda bi, si: (0, 0)),
            pl.BlockSpec((1, D), lambda bi, si: (0, 0)),
            pl.BlockSpec((1, D), lambda bi, si: (0, 0)),
            pl.BlockSpec((1, D), lambda bi, si: (0, 0)),
        ],
        out_specs=pl.BlockSpec((None, ts, D), lambda bi, si: (bi, si, 0)),
        compiler_params=_cparams(2),
    )(x, w1.astype(jnp.bfloat16), b1.reshape(1, H).astype(jnp.float32),
      w2.astype(jnp.bfloat16), b2.reshape(1, D).astype(jnp.float32),
      gamma.reshape(1, D), beta.reshape(1, D))


def _final_kernel(e1_ref, e2_ref, w1_ref, b1_ref, w2_ref, b2_ref, o_ref):
    # e1: (S_in, D), e2: (C, D), w1: (D, C), w2: (D, S_in)
    # (e1 @ w1)^T produced directly via dot_general -> (C, S_in), lane-dense output.
    out1 = jax.lax.dot_general(w1_ref[...], e1_ref[...].astype(jnp.bfloat16),
                               dimension_numbers=(((0,), (1,)), ((), ())),
                               preferred_element_type=jnp.float32)
    out2 = jnp.dot(e2_ref[...].astype(jnp.bfloat16), w2_ref[...],
                   preferred_element_type=jnp.float32)
    o_ref[...] = (out1 + out2 + b1_ref[...] + b2_ref[...]).astype(o_ref.dtype)


def final_projection_add(e1, e2, w1, b1, w2, b2):
    """linear1(e1).transpose(1,2) + linear2(e2), fused; output (B, C, S_in)."""
    B, S_in, D = e1.shape
    C = e2.shape[1]
    return pl.pallas_call(
        _final_kernel,
        out_shape=jax.ShapeDtypeStruct((B, C, S_in), jnp.float32),
        grid=(B,),
        in_specs=[
            pl.BlockSpec((None, S_in, D), lambda bi: (bi, 0, 0)),
            pl.BlockSpec((None, C, D), lambda bi: (bi, 0, 0)),
            pl.BlockSpec((D, C), lambda bi: (0, 0)),
            pl.BlockSpec((C, 1), lambda bi: (0, 0)),
            pl.BlockSpec((D, S_in), lambda bi: (0, 0)),
            pl.BlockSpec((1, S_in), lambda bi: (0, 0)),
        ],
        out_specs=pl.BlockSpec((None, C, S_in), lambda bi: (bi, 0, 0)),
        compiler_params=_cparams(1),
    )(e1, e2, w1.astype(jnp.bfloat16), b1.reshape(C, 1).astype(jnp.float32),
      w2.astype(jnp.bfloat16), b2.reshape(1, S_in).astype(jnp.float32))


# ----------------------------- model glue -----------------------------

def encoder_forward(x, p, dq, dv, h):
    # fused QKV projection + head split
    wqkv = jnp.concatenate([p["wq"], p["wk"], p["wv"]], axis=1)
    bqkv = jnp.concatenate([p["bq"], p["bk"], p["bv"]], axis=0)
    Q, K, V = qkv_projection(x, wqkv, bqkv, h, dq, dv)
    ctx = attention(Q, K, V, scale=1.0 / math.sqrt(dq))          # (B, h, S, dv)
    # fused head-merge + output projection + residual + LayerNorm
    wo_heads = p["wo"].reshape(h, dv, p["wo"].shape[1])
    x = proj_residual_layernorm(ctx, wo_heads, p["bo"], x, p["ln1_g"], p["ln1_b"])
    # fused FFN + residual + LayerNorm
    x = ffn_residual_layernorm(x, p["ffn_w1"], p["ffn_b1"], p["ffn_w2"], p["ffn_b2"],
                               p["ln2_g"], p["ln2_b"])
    return x


def make_positional_encoding(d_input, d_model):
    pos = jnp.arange(d_input, dtype=jnp.float32)[:, None]
    freqs = jnp.exp(jnp.arange(0, d_model, 2, dtype=jnp.float32)
                    * -(math.log(10000.0) / d_model))[None, :]
    t = pos * freqs                                   # (d_input, ceil(d_model/2))
    pe = jnp.ones((d_input, d_model), jnp.float32)
    pe = pe.at[:, 0::2].set(jnp.sin(t))
    pe = pe.at[:, 1::2].set(jnp.cos(t[:, : d_model // 2]))   # guard odd d_model
    return pe


def transformer_forward(x, params, cfg, stage="test"):
    d_input, d_channel, d_model = cfg["d_input"], cfg["d_channel"], cfg["d_model"]
    dq, dv, h = cfg["q"], cfg["v"], cfg["h"]

    # step-wise branch: embed channels (+ positional encoding fused into the kernel)
    pe_add = make_positional_encoding(d_input, d_model) if cfg["pe"] else None
    encoding_1 = fused_linear(x, params["emb_ch_w"], params["emb_ch_b"], add=pe_add)
    for p in params["enc1"]:
        encoding_1 = encoder_forward(encoding_1, p, dq, dv, h)

    # channel-wise branch: embed time steps
    xt = jnp.transpose(x, (0, 2, 1))                  # small one-time input transpose
    encoding_2 = fused_linear(xt, params["emb_in_w"], params["emb_in_b"])
    for p in params["enc2"]:
        encoding_2 = encoder_forward(encoding_2, p, dq, dv, h)

    # fused linear1 + transpose + linear2 + add  (lane-dense output, no HBM transpose)
    return final_projection_add(encoding_1, encoding_2,
                                params["lin1_w"], params["lin1_b"],
                                params["lin2_w"], params["lin2_b"])


# ----------------------------- deterministic init -----------------------------

def init_linear_params(key, din, dout):
    k1, k2 = jax.random.split(key)
    bound = 1.0 / math.sqrt(din)
    w = jax.random.uniform(k1, (din, dout), jnp.float32, -bound, bound)
    b = jax.random.uniform(k2, (dout,), jnp.float32, -bound, bound)
    return w, b


def init_encoder_params(key, d_model, d_hidden, q, v, h):
    ks = jax.random.split(key, 6)
    p = {}
    p["wq"], p["bq"] = init_linear_params(ks[0], d_model, q * h)
    p["wk"], p["bk"] = init_linear_params(ks[1], d_model, q * h)
    p["wv"], p["bv"] = init_linear_params(ks[2], d_model, v * h)
    p["wo"], p["bo"] = init_linear_params(ks[3], v * h, d_model)
    p["ffn_w1"], p["ffn_b1"] = init_linear_params(ks[4], d_model, d_hidden)
    p["ffn_w2"], p["ffn_b2"] = init_linear_params(ks[5], d_hidden, d_model)
    p["ln1_g"] = jnp.ones((d_model,), jnp.float32)
    p["ln1_b"] = jnp.zeros((d_model,), jnp.float32)
    p["ln2_g"] = jnp.ones((d_model,), jnp.float32)
    p["ln2_b"] = jnp.zeros((d_model,), jnp.float32)
    return p


def init_transformer_params(key, cfg):
    d_model, d_input, d_channel = cfg["d_model"], cfg["d_input"], cfg["d_channel"]
    d_hidden, d_output = cfg["d_hidden"], cfg["d_output"]
    q, v, h, N = cfg["q"], cfg["v"], cfg["h"], cfg["N"]
    keys = jax.random.split(key, 2 * N + 6)
    params = {}
    params["enc1"] = [init_encoder_params(keys[i], d_model, d_hidden, q, v, h)
                      for i in range(N)]
    params["enc2"] = [init_encoder_params(keys[N + i], d_model, d_hidden, q, v, h)
                      for i in range(N)]
    params["emb_ch_w"], params["emb_ch_b"] = init_linear_params(keys[2 * N], d_channel, d_model)
    params["emb_in_w"], params["emb_in_b"] = init_linear_params(keys[2 * N + 1], d_input, d_model)
    # gate / output_linear exist in __init__ but are unused by forward (kept for fidelity)
    params["gate_w"], params["gate_b"] = init_linear_params(
        keys[2 * N + 2], d_model * d_input + d_model * d_channel, 2)
    params["out_w"], params["out_b"] = init_linear_params(
        keys[2 * N + 3], d_model * d_input + d_model * d_channel, d_output)
    # linear1: Linear(d_model, d_channel)  (512 -> 12 in the original)
    params["lin1_w"], params["lin1_b"] = init_linear_params(keys[2 * N + 4], d_model, d_channel)
    # linear2: Linear(d_model, d_input)    (512 -> 1500 in the original)
    params["lin2_w"], params["lin2_b"] = init_linear_params(keys[2 * N + 5], d_model, d_input)
    return params


# ----------------------------- main -----------------------------

if __name__ == "__main__":
    cfg = dict(
        d_model=32,     # 512 in the original (hard-coded via linear1/linear2)
        d_input=16,     # 1500 time steps in the original RE dataset
        d_channel=8,    # 12 channels in the original RE dataset
        d_output=4,
        d_hidden=64,
        q=8, v=8, h=4, N=2,
        pe=True,
    )
    B = 2

    key = jax.random.PRNGKey(0)
    k_params, k_x = jax.random.split(key)
    params = init_transformer_params(k_params, cfg)
    x = jax.random.normal(k_x, (B, cfg["d_input"], cfg["d_channel"]), jnp.float32)

    fwd = jax.jit(lambda xx, pp: transformer_forward(xx, pp, cfg, stage="test"))
    out = fwd(x, params)
    out = jax.block_until_ready(out)
    assert out.shape == (B, cfg["d_channel"], cfg["d_input"]), out.shape
    assert bool(jnp.all(jnp.isfinite(out)))
    print("KERNEL_OK")
</pallas_src>

<mosaic_0001>
module attributes {stable_mosaic.version = 11 : i64} {
  func.func @_linear_kernel(%arg0: i32, %arg1: i32, %arg2: memref<1x16x8xf32, #tpu.memory_space<vmem>>, %arg3: memref<8x32xbf16, #tpu.memory_space<vmem>>, %arg4: memref<1x32xf32, #tpu.memory_space<vmem>>, %arg5: memref<16x32xf32, #tpu.memory_space<vmem>>, %arg6: memref<1x16x32xf32, #tpu.memory_space<vmem>>) attributes {dimension_semantics = [#tpu.dimension_semantics<parallel>, #tpu.dimension_semantics<parallel>], iteration_bounds = array<i64: 2, 1>, scalar_prefetch = 0 : i64, scratch_operands = 0 : i64, tpu.core_type = #tpu.core_type<tc>, window_params = [{transform_indices = @transform_0, window_bounds = array<i64: 1, 16, 8>}, {pipeline_mode = #tpu.pipeline_mode<synchronous>, transform_indices = @transform_1, window_bounds = array<i64: 8, 32>}, {pipeline_mode = #tpu.pipeline_mode<synchronous>, transform_indices = @transform_2, window_bounds = array<i64: 1, 32>}, {transform_indices = @transform_3, window_bounds = array<i64: 16, 32>}, {transform_indices = @transform_4, window_bounds = array<i64: 1, 16, 32>}]} {
    %c0 = arith.constant 0 : index
    %c0_0 = arith.constant 0 : index
    %c0_1 = arith.constant 0 : index
    %0 = vector.load %arg2[%c0, %c0_0, %c0_1] : memref<1x16x8xf32, #tpu.memory_space<vmem>>, vector<1x16x8xf32>
    %1 = vector.shape_cast %0 : vector<1x16x8xf32> to vector<16x8xf32>
    %2 = arith.truncf %1 : vector<16x8xf32> to vector<16x8xbf16>
    %c0_2 = arith.constant 0 : index
    %c0_3 = arith.constant 0 : index
    %3 = vector.load %arg3[%c0_2, %c0_3] : memref<8x32xbf16, #tpu.memory_space<vmem>>, vector<8x32xbf16>
    %cst = arith.constant dense<0.000000e+00> : vector<16x32xf32>
    %4 = tpu.matmul %2, %3, %cst {dimension_numbers = #tpu.dot_dimension_numbers<[1], [0], [0], [1], [0, 0, 1, 1], [], []>} : vector<16x8xbf16>, vector<8x32xbf16>, vector<16x32xf32> -> vector<16x32xf32>
    %c0_4 = arith.constant 0 : index
    %c0_5 = arith.constant 0 : index
    %5 = vector.load %arg4[%c0_4, %c0_5] : memref<1x32xf32, #tpu.memory_space<vmem>>, vector<1x32xf32>
    %6 = vector.broadcast %5 : vector<1x32xf32> to vector<16x32xf32>
    %7 = arith.addf %4, %6 : vector<16x32xf32>
    %c0_6 = arith.constant 0 : index
    %c0_7 = arith.constant 0 : index
    %8 = vector.load %arg5[%c0_6, %c0_7] : memref<16x32xf32, #tpu.memory_space<vmem>>, vector<16x32xf32>
    %9 = arith.addf %7, %8 : vector<16x32xf32>
    %c0_8 = arith.constant 0 : index
    %c0_9 = arith.constant 0 : index
    %c0_10 = arith.constant 0 : index
    %10 = vector.load %arg6[%c0_8, %c0_9, %c0_10] : memref<1x16x32xf32, #tpu.memory_space<vmem>>, vector<1x16x32xf32>
    %11 = vector.shape_cast %10 : vector<1x16x32xf32> to vector<16x32xf32>
    %12 = vector.shape_cast %9 : vector<16x32xf32> to vector<1x16x32xf32>
    tpu.vector_store %arg6[%c0_8, %c0_9, %c0_10], %12 {strides = array<i32>} : memref<1x16x32xf32, #tpu.memory_space<vmem>>, vector<1x16x32xf32>,
    return
  }
  func.func @transform_0(%arg0: i32, %arg1: i32) -> (i32, i32, i32) {
    %c0_i32 = arith.constant 0 : i32
    %c0_i32_0 = arith.constant 0 : i32
    return %arg0, %arg1, %c0_i32 : i32, i32, i32
  }
  func.func @transform_1(%arg0: i32, %arg1: i32) -> (i32, i32) {
    %c0_i32 = arith.constant 0 : i32
    %c0_i32_0 = arith.constant 0 : i32
    %c0_i32_1 = arith.constant 0 : i32
    return %c0_i32, %c0_i32_0 : i32, i32
  }
  func.func @transform_2(%arg0: i32, %arg1: i32) -> (i32, i32) {
    %c0_i32 = arith.constant 0 : i32
    %c0_i32_0 = arith.constant 0 : i32
    %c0_i32_1 = arith.constant 0 : i32
    return %c0_i32, %c0_i32_0 : i32, i32
  }
  func.func @transform_3(%arg0: i32, %arg1: i32) -> (i32, i32) {
    %c0_i32 = arith.constant 0 : i32
    %c0_i32_0 = arith.constant 0 : i32
    return %arg1, %c0_i32 : i32, i32
  }
  func.func @transform_4(%arg0: i32, %arg1: i32) -> (i32, i32, i32) {
    %c0_i32 = arith.constant 0 : i32
    %c0_i32_0 = arith.constant 0 : i32
    return %arg0, %arg1, %c0_i32 : i32, i32, i32
  }
}

module attributes {stable_mosaic.version = 11 : i64} {
  func.func @_attention_kernel(%arg0: i32, %arg1: i32, %arg2: i32, %arg3: memref<1x1x16x8xbf16, #tpu.memory_space<vmem>>, %arg4: memref<1x1x16x8xbf16, #tpu.memory_space<vmem>>, %arg5: memref<1x1x16x8xbf16, #tpu.memory_space<vmem>>, %arg6: memref<1x1x16x8xbf16, #tpu.memory_space<vmem>>) attributes {dimension_semantics = [#tpu.dimension_semantics<parallel>, #tpu.dimension_semantics<parallel>, #tpu.dimension_semantics<parallel>], iteration_bounds = array<i64: 2, 4, 1>, scalar_prefetch = 0 : i64, scratch_operands = 0 : i64, tpu.core_type = #tpu.core_type<tc>, window_params = [{transform_indices = @transform_0, window_bounds = array<i64: 1, 1, 16, 8>}, {transform_indices = @transform_1, window_bounds = array<i64: 1, 1, 16, 8>}, {transform_indices = @transform_2, window_bounds = array<i64: 1, 1, 16, 8>}, {transform_indices = @transform_3, window_bounds = array<i64: 1, 1, 16, 8>}]} {
    %c0 = arith.constant 0 : index
    %c0_0 = arith.constant 0 : index
    %c0_1 = arith.constant 0 : index
    %c0_2 = arith.constant 0 : index
    %0 = vector.load %arg3[%c0, %c0_0, %c0_1, %c0_2] : memref<1x1x16x8xbf16, #tpu.memory_space<vmem>>, vector<1x1x16x8xbf16>
    %1 = vector.shape_cast %0 : vector<1x1x16x8xbf16> to vector<16x8xbf16>
    %c0_3 = arith.constant 0 : index
    %c0_4 = arith.constant 0 : index
    %c0_5 = arith.constant 0 : index
    %c0_6 = arith.constant 0 : index
    %2 = vector.load %arg4[%c0_3, %c0_4, %c0_5, %c0_6] : memref<1x1x16x8xbf16, #tpu.memory_space<vmem>>, vector<1x1x16x8xbf16>
    %3 = vector.shape_cast %2 : vector<1x1x16x8xbf16> to vector<16x8xbf16>
    %cst = arith.constant dense<0.000000e+00> : vector<16x16xf32>
    %4 = tpu.matmul %1, %3, %cst {dimension_numbers = #tpu.dot_dimension_numbers<[1], [1], [0], [0], [0, 0, 1, 0], [], []>} : vector<16x8xbf16>, vector<16x8xbf16>, vector<16x16xf32> -> vector<16x16xf32>
    %cst_7 = arith.constant 0.353553385 : f32
    %5 = vector.broadcast %cst_7 : f32 to vector<16x16xf32>
    %6 = arith.mulf %4, %5 : vector<16x16xf32>
    %cst_8 = arith.constant dense<0xFF800000> : vector<16xf32>
    %7 = vector.multi_reduction <maximumf>, %6, %cst_8 [1] : vector<16x16xf32> to vector<16xf32>
    %8 = vector.shape_cast %7 : vector<16xf32> to vector<16x1xf32>
    %9 = vector.broadcast %8 : vector<16x1xf32> to vector<16x16xf32>
    %10 = arith.subf %6, %9 : vector<16x16xf32>
    %11 = math.exp %10 : vector<16x16xf32>
    %cst_9 = arith.constant dense<0.000000e+00> : vector<16xf32>
    %12 = vector.multi_reduction <add>, %11, %cst_9 [1] : vector<16x16xf32> to vector<16xf32>
    %13 = vector.shape_cast %12 : vector<16xf32> to vector<16x1xf32>
    %14 = tpu.reciprocal %13 {approx = true} : vector<16x1xf32> -> vector<16x1xf32>
    %15 = vector.broadcast %14 : vector<16x1xf32> to vector<16x16xf32>
    %16 = arith.mulf %11, %15 : vector<16x16xf32>
    %17 = arith.truncf %16 : vector<16x16xf32> to vector<16x16xbf16>
    %c0_10 = arith.constant 0 : index
    %c0_11 = arith.constant 0 : index
    %c0_12 = arith.constant 0 : index
    %c0_13 = arith.constant 0 : index
    %18 = vector.load %arg5[%c0_10, %c0_11, %c0_12, %c0_13] : memref<1x1x16x8xbf16, #tpu.memory_space<vmem>>, vector<1x1x16x8xbf16>
    %19 = vector.shape_cast %18 : vector<1x1x16x8xbf16> to vector<16x8xbf16>
    %cst_14 = arith.constant dense<0.000000e+00> : vector<16x8xf32>
    %20 = tpu.matmul %17, %19, %cst_14 {dimension_numbers = #tpu.dot_dimension_numbers<[1], [0], [0], [1], [0, 0, 1, 1], [], []>} : vector<16x16xbf16>, vector<16x8xbf16>, vector<16x8xf32> -> vector<16x8xf32>
    %21 = arith.truncf %20 : vector<16x8xf32> to vector<16x8xbf16>
    %c0_15 = arith.constant 0 : index
    %c0_16 = arith.constant 0 : index
    %c0_17 = arith.constant 0 : index
    %c0_18 = arith.constant 0 : index
    %22 = vector.load %arg6[%c0_15, %c0_16, %c0_17, %c0_18] : memref<1x1x16x8xbf16, #tpu.memory_space<vmem>>, vector<1x1x16x8xbf16>
    %23 = vector.shape_cast %22 : vector<1x1x16x8xbf16> to vector<16x8xbf16>
    %24 = vector.shape_cast %21 : vector<16x8xbf16> to vector<1x1x16x8xbf16>
    tpu.vector_store %arg6[%c0_15, %c0_16, %c0_17, %c0_18], %24 {strides = array<i32>} : memref<1x1x16x8xbf16, #tpu.memory_space<vmem>>, vector<1x1x16x8xbf16>,
    return
  }
  func.func @transform_0(%arg0: i32, %arg1: i32, %arg2: i32) -> (i32, i32, i32, i32) {
    %c0_i32 = arith.constant 0 : i32
    %c0_i32_0 = arith.constant 0 : i32
    return %arg0, %arg1, %arg2, %c0_i32 : i32, i32, i32, i32
  }
  func.func @transform_1(%arg0: i32, %arg1: i32, %arg2: i32) -> (i32, i32, i32, i32) {
    %c0_i32 = arith.constant 0 : i32
    %c0_i32_0 = arith.constant 0 : i32
    %c0_i32_1 = arith.constant 0 : i32
    return %arg0, %arg1, %c0_i32, %c0_i32_0 : i32, i32, i32, i32
  }
  func.func @transform_2(%arg0: i32, %arg1: i32, %arg2: i32) -> (i32, i32, i32, i32) {
    %c0_i32 = arith.constant 0 : i32
    %c0_i32_0 = arith.constant 0 : i32
    %c0_i32_1 = arith.constant 0 : i32
    return %arg0, %arg1, %c0_i32, %c0_i32_0 : i32, i32, i32, i32
  }
  func.func @transform_3(%arg0: i32, %arg1: i32, %arg2: i32) -> (i32, i32, i32, i32) {
    %c0_i32 = arith.constant 0 : i32
    %c0_i32_0 = arith.constant 0 : i32
    return %arg0, %arg1, %arg2, %c0_i32 : i32, i32, i32, i32
  }
}

module attributes {stable_mosaic.version = 11 : i64} {
  func.func @_qkv_kernel(%arg0: i32, %arg1: i32, %arg2: memref<1x16x32xf32, #tpu.memory_space<vmem>>, %arg3: memref<32x96xbf16, #tpu.memory_space<vmem>>, %arg4: memref<1x96xf32, #tpu.memory_space<vmem>>, %arg5: memref<1x4x16x8xbf16, #tpu.memory_space<vmem>>, %arg6: memref<1x4x16x8xbf16, #tpu.memory_space<vmem>>, %arg7: memref<1x4x16x8xbf16, #tpu.memory_space<vmem>>) attributes {dimension_semantics = [#tpu.dimension_semantics<parallel>, #tpu.dimension_semantics<parallel>], iteration_bounds = array<i64: 2, 1>, scalar_prefetch = 0 : i64, scratch_operands = 0 : i64, tpu.core_type = #tpu.core_type<tc>, window_params = [{transform_indices = @transform_0, window_bounds = array<i64: 1, 16, 32>}, {pipeline_mode = #tpu.pipeline_mode<synchronous>, transform_indices = @transform_1, window_bounds = array<i64: 32, 96>}, {pipeline_mode = #tpu.pipeline_mode<synchronous>, transform_indices = @transform_2, window_bounds = array<i64: 1, 96>}, {transform_indices = @transform_3, window_bounds = array<i64: 1, 4, 16, 8>}, {transform_indices = @transform_4, window_bounds = array<i64: 1, 4, 16, 8>}, {transform_indices = @transform_5, window_bounds = array<i64: 1, 4, 16, 8>}]} {
    %c0 = arith.constant 0 : index
    %c0_0 = arith.constant 0 : index
    %c0_1 = arith.constant 0 : index
    %0 = vector.load %arg2[%c0, %c0_0, %c0_1] : memref<1x16x32xf32, #tpu.memory_space<vmem>>, vector<1x16x32xf32>
    %1 = vector.shape_cast %0 : vector<1x16x32xf32> to vector<16x32xf32>
    %2 = arith.truncf %1 : vector<16x32xf32> to vector<16x32xbf16>
    %c0_2 = arith.constant 0 : index
    %c0_3 = arith.constant 0 : index
    %3 = vector.load %arg3[%c0_2, %c0_3] : memref<32x96xbf16, #tpu.memory_space<vmem>>, vector<32x96xbf16>
    %cst = arith.constant dense<0.000000e+00> : vector<16x96xf32>
    %4 = tpu.matmul %2, %3, %cst {dimension_numbers = #tpu.dot_dimension_numbers<[1], [0], [0], [1], [0, 0, 1, 1], [], []>} : vector<16x32xbf16>, vector<32x96xbf16>, vector<16x96xf32> -> vector<16x96xf32>
    %c0_4 = arith.constant 0 : index
    %c0_5 = arith.constant 0 : index
    %5 = vector.load %arg4[%c0_4, %c0_5] : memref<1x96xf32, #tpu.memory_space<vmem>>, vector<1x96xf32>
    %6 = vector.broadcast %5 : vector<1x96xf32> to vector<16x96xf32>
    %7 = arith.addf %4, %6 : vector<16x96xf32>
    %8 = vector.extract_strided_slice %7 {offsets = [0, 0], sizes = [16, 8], strides = [1, 1]} : vector<16x96xf32> to vector<16x8xf32>
    %9 = arith.truncf %8 : vector<16x8xf32> to vector<16x8xbf16>
    %c0_6 = arith.constant 0 : index
    %c0_7 = arith.constant 0 : index
    %c0_8 = arith.constant 0 : index
    %c0_9 = arith.constant 0 : index
    %10 = vector.load %arg5[%c0_6, %c0_7, %c0_8, %c0_9] : memref<1x4x16x8xbf16, #tpu.memory_space<vmem>>, vector<1x1x16x8xbf16>
    %11 = vector.shape_cast %10 : vector<1x1x16x8xbf16> to vector<16x8xbf16>
    %12 = vector.shape_cast %9 : vector<16x8xbf16> to vector<1x1x16x8xbf16>
    tpu.vector_store %arg5[%c0_6, %c0_7, %c0_8, %c0_9], %12 {strides = array<i32>} : memref<1x4x16x8xbf16, #tpu.memory_space<vmem>>, vector<1x1x16x8xbf16>,
    %13 = vector.extract_strided_slice %7 {offsets = [0, 8], sizes = [16, 8], strides = [1, 1]} : vector<16x96xf32> to vector<16x8xf32>
    %14 = arith.truncf %13 : vector<16x8xf32> to vector<16x8xbf16>
    %c0_10 = arith.constant 0 : index
    %c1 = arith.constant 1 : index
    %c0_11 = arith.constant 0 : index
    %c0_12 = arith.constant 0 : index
    %15 = vector.load %arg5[%c0_10, %c1, %c0_11, %c0_12] : memref<1x4x16x8xbf16, #tpu.memory_space<vmem>>, vector<1x1x16x8xbf16>
    %16 = vector.shape_cast %15 : vector<1x1x16x8xbf16> to vector<16x8xbf16>
    %17 = vector.shape_cast %14 : vector<16x8xbf16> to vector<1x1x16x8xbf16>
    tpu.vector_store %arg5[%c0_10, %c1, %c0_11, %c0_12], %17 {strides = array<i32>} : memref<1x4x16x8xbf16, #tpu.memory_space<vmem>>, vector<1x1x16x8xbf16>,
    %18 = vector.extract_strided_slice %7 {offsets = [0, 16], sizes = [16, 8], strides = [1, 1]} : vector<16x96xf32> to vector<16x8xf32>
    %19 = arith.truncf %18 : vector<16x8xf32> to vector<16x8xbf16>
    %c0_13 = arith.constant 0 : index
    %c2 = arith.constant 2 : index
    %c0_14 = arith.constant 0 : index
    %c0_15 = arith.constant 0 : index
    %20 = vector.load %arg5[%c0_13, %c2, %c0_14, %c0_15] : memref<1x4x16x8xbf16, #tpu.memory_space<vmem>>, vector<1x1x16x8xbf16>
    %21 = vector.shape_cast %20 : vector<1x1x16x8xbf16> to vector<16x8xbf16>
    %22 = vector.shape_cast %19 : vector<16x8xbf16> to vector<1x1x16x8xbf16>
    tpu.vector_store %arg5[%c0_13, %c2, %c0_14, %c0_15], %22 {strides = array<i32>} : memref<1x4x16x8xbf16, #tpu.memory_space<vmem>>, vector<1x1x16x8xbf16>,
    %23 = vector.extract_strided_slice %7 {offsets = [0, 24], sizes = [16, 8], strides = [1, 1]} : vector<16x96xf32> to vector<16x8xf32>
    %24 = arith.truncf %23 : vector<16x8xf32> to vector<16x8xbf16>
    %c0_16 = arith.constant 0 : index
    %c3 = arith.constant 3 : index
    %c0_17 = arith.constant 0 : index
    %c0_18 = arith.constant 0 : index
    %25 = vector.load %arg5[%c0_16, %c3, %c0_17, %c0_18] : memref<1x4x16x8xbf16, #tpu.memory_space<vmem>>, vector<1x1x16x8xbf16>
    %26 = vector.shape_cast %25 : vector<1x1x16x8xbf16> to vector<16x8xbf16>
    %27 = vector.shape_cast %24 : vector<16x8xbf16> to vector<1x1x16x8xbf16>
    tpu.vector_store %arg5[%c0_16, %c3, %c0_17, %c0_18], %27 {strides = array<i32>} : memref<1x4x16x8xbf16, #tpu.memory_space<vmem>>, vector<1x1x16x8xbf16>,
    %28 = vector.extract_strided_slice %7 {offsets = [0, 32], sizes = [16, 8], strides = [1, 1]} : vector<16x96xf32> to vector<16x8xf32>
    %29 = arith.truncf %28 : vector<16x8xf32> to vector<16x8xbf16>
    %c0_19 = arith.constant 0 : index
    %c0_20 = arith.constant 0 : index
    %c0_21 = arith.constant 0 : index
    %c0_22 = arith.constant 0 : index
    %30 = vector.load %arg6[%c0_19, %c0_20, %c0_21, %c0_22] : memref<1x4x16x8xbf16, #tpu.memory_space<vmem>>, vector<1x1x16x8xbf16>
    %31 = vector.shape_cast %30 : vector<1x1x16x8xbf16> to vector<16x8xbf16>
    %32 = vector.shape_cast %29 : vector<16x8xbf16> to vector<1x1x16x8xbf16>
    tpu.vector_store %arg6[%c0_19, %c0_20, %c0_21, %c0_22], %32 {strides = array<i32>} : memref<1x4x16x8xbf16, #tpu.memory_space<vmem>>, vector<1x1x16x8xbf16>,
    %33 = vector.extract_strided_slice %7 {offsets = [0, 40], sizes = [16, 8], strides = [1, 1]} : vector<16x96xf32> to vector<16x8xf32>
    %34 = arith.truncf %33 : vector<16x8xf32> to vector<16x8xbf16>
    %c0_23 = arith.constant 0 : index
    %c1_24 = arith.constant 1 : index
    %c0_25 = arith.constant 0 : index
    %c0_26 = arith.constant 0 : index
    %35 = vector.load %arg6[%c0_23, %c1_24, %c0_25, %c0_26] : memref<1x4x16x8xbf16, #tpu.memory_space<vmem>>, vector<1x1x16x8xbf16>
    %36 = vector.shape_cast %35 : vector<1x1x16x8xbf16> to vector<16x8xbf16>
    %37 = vector.shape_cast %34 : vector<16x8xbf16> to vector<1x1x16x8xbf16>
    tpu.vector_store %arg6[%c0_23, %c1_24, %c0_25, %c0_26], %37 {strides = array<i32>} : memref<1x4x16x8xbf16, #tpu.memory_space<vmem>>, vector<1x1x16x8xbf16>,
    %38 = vector.extract_strided_slice %7 {offsets = [0, 48], sizes = [16, 8], strides = [1, 1]} : vector<16x96xf32> to vector<16x8xf32>
    %39 = arith.truncf %38 : vector<16x8xf32> to vector<16x8xbf16>
    %c0_27 = arith.constant 0 : index
    %c2_28 = arith.constant 2 : index
    %c0_29 = arith.constant 0 : index
    %c0_30 = arith.constant 0 : index
    %40 = vector.load %arg6[%c0_27, %c2_28, %c0_29, %c0_30] : memref<1x4x16x8xbf16, #tpu.memory_space<vmem>>, vector<1x1x16x8xbf16>
    %41 = vector.shape_cast %40 : vector<1x1x16x8xbf16> to vector<16x8xbf16>
    %42 = vector.shape_cast %39 : vector<16x8xbf16> to vector<1x1x16x8xbf16>
    tpu.vector_store %arg6[%c0_27, %c2_28, %c0_29, %c0_30], %42 {strides = array<i32>} : memref<1x4x16x8xbf16, #tpu.memory_space<vmem>>, vector<1x1x16x8xbf16>,
    %43 = vector.extract_strided_slice %7 {offsets = [0, 56], sizes = [16, 8], strides = [1, 1]} : vector<16x96xf32> to vector<16x8xf32>
    %44 = arith.truncf %43 : vector<16x8xf32> to vector<16x8xbf16>
    %c0_31 = arith.constant 0 : index
    %c3_32 = arith.constant 3 : index
    %c0_33 = arith.constant 0 : index
    %c0_34 = arith.constant 0 : index
    %45 = vector.load %arg6[%c0_31, %c3_32, %c0_33, %c0_34] : memref<1x4x16x8xbf16, #tpu.memory_space<vmem>>, vector<1x1x16x8xbf16>
    %46 = vector.shape_cast %45 : vector<1x1x16x8xbf16> to vector<16x8xbf16>
    %47 = vector.shape_cast %44 : vector<16x8xbf16> to vector<1x1x16x8xbf16>
    tpu.vector_store %arg6[%c0_31, %c3_32, %c0_33, %c0_34], %47 {strides = array<i32>} : memref<1x4x16x8xbf16, #tpu.memory_space<vmem>>, vector<1x1x16x8xbf16>,
    %48 = vector.extract_strided_slice %7 {offsets = [0, 64], sizes = [16, 8], strides = [1, 1]} : vector<16x96xf32> to vector<16x8xf32>
    %49 = arith.truncf %48 : vector<16x8xf32> to vector<16x8xbf16>
    %c0_35 = arith.constant 0 : index
    %c0_36 = arith.constant 0 : index
    %c0_37 = arith.constant 0 : index
    %c0_38 = arith.constant 0 : index
    %50 = vector.load %arg7[%c0_35, %c0_36, %c0_37, %c0_38] : memref<1x4x16x8xbf16, #tpu.memory_space<vmem>>, vector<1x1x16x8xbf16>
    %51 = vector.shape_cast %50 : vector<1x1x16x8xbf16> to vector<16x8xbf16>
    %52 = vector.shape_cast %49 : vector<16x8xbf16> to vector<1x1x16x8xbf16>
    tpu.vector_store %arg7[%c0_35, %c0_36, %c0_37, %c0_38], %52 {strides = array<i32>} : memref<1x4x16x8xbf16, #tpu.memory_space<vmem>>, vector<1x1x16x8xbf16>,
    %53 = vector.extract_strided_slice %7 {offsets = [0, 72], sizes = [16, 8], strides = [1, 1]} : vector<16x96xf32> to vector<16x8xf32>
    %54 = arith.truncf %53 : vector<16x8xf32> to vector<16x8xbf16>
    %c0_39 = arith.constant 0 : index
    %c1_40 = arith.constant 1 : index
    %c0_41 = arith.constant 0 : index
    %c0_42 = arith.constant 0 : index
    %55 = vector.load %arg7[%c0_39, %c1_40, %c0_41, %c0_42] : memref<1x4x16x8xbf16, #tpu.memory_space<vmem>>, vector<1x1x16x8xbf16>
    %56 = vector.shape_cast %55 : vector<1x1x16x8xbf16> to vector<16x8xbf16>
    %57 = vector.shape_cast %54 : vector<16x8xbf16> to vector<1x1x16x8xbf16>
    tpu.vector_store %arg7[%c0_39, %c1_40, %c0_41, %c0_42], %57 {strides = array<i32>} : memref<1x4x16x8xbf16, #tpu.memory_space<vmem>>, vector<1x1x16x8xbf16>,
    %58 = vector.extract_strided_slice %7 {offsets = [0, 80], sizes = [16, 8], strides = [1, 1]} : vector<16x96xf32> to vector<16x8xf32>
    %59 = arith.truncf %58 : vector<16x8xf32> to vector<16x8xbf16>
    %c0_43 = arith.constant 0 : index
    %c2_44 = arith.constant 2 : index
    %c0_45 = arith.constant 0 : index
    %c0_46 = arith.constant 0 : index
    %60 = vector.load %arg7[%c0_43, %c2_44, %c0_45, %c0_46] : memref<1x4x16x8xbf16, #tpu.memory_space<vmem>>, vector<1x1x16x8xbf16>
    %61 = vector.shape_cast %60 : vector<1x1x16x8xbf16> to vector<16x8xbf16>
    %62 = vector.shape_cast %59 : vector<16x8xbf16> to vector<1x1x16x8xbf16>
    tpu.vector_store %arg7[%c0_43, %c2_44, %c0_45, %c0_46], %62 {strides = array<i32>} : memref<1x4x16x8xbf16, #tpu.memory_space<vmem>>, vector<1x1x16x8xbf16>,
    %63 = vector.extract_strided_slice %7 {offsets = [0, 88], sizes = [16, 8], strides = [1, 1]} : vector<16x96xf32> to vector<16x8xf32>
    %64 = arith.truncf %63 : vector<16x8xf32> to vector<16x8xbf16>
    %c0_47 = arith.constant 0 : index
    %c3_48 = arith.constant 3 : index
    %c0_49 = arith.constant 0 : index
    %c0_50 = arith.constant 0 : index
    %65 = vector.load %arg7[%c0_47, %c3_48, %c0_49, %c0_50] : memref<1x4x16x8xbf16, #tpu.memory_space<vmem>>, vector<1x1x16x8xbf16>
    %66 = vector.shape_cast %65 : vector<1x1x16x8xbf16> to vector<16x8xbf16>
    %67 = vector.shape_cast %64 : vector<16x8xbf16> to vector<1x1x16x8xbf16>
    tpu.vector_store %arg7[%c0_47, %c3_48, %c0_49, %c0_50], %67 {strides = array<i32>} : memref<1x4x16x8xbf16, #tpu.memory_space<vmem>>, vector<1x1x16x8xbf16>,
    return
  }
  func.func @transform_0(%arg0: i32, %arg1: i32) -> (i32, i32, i32) {
    %c0_i32 = arith.constant 0 : i32
    %c0_i32_0 = arith.constant 0 : i32
    return %arg0, %arg1, %c0_i32 : i32, i32, i32
  }
  func.func @transform_1(%arg0: i32, %arg1: i32) -> (i32, i32) {
    %c0_i32 = arith.constant 0 : i32
    %c0_i32_0 = arith.constant 0 : i32
    %c0_i32_1 = arith.constant 0 : i32
    return %c0_i32, %c0_i32_0 : i32, i32
  }
  func.func @transform_2(%arg0: i32, %arg1: i32) -> (i32, i32) {
    %c0_i32 = arith.constant 0 : i32
    %c0_i32_0 = arith.constant 0 : i32
    %c0_i32_1 = arith.constant 0 : i32
    return %c0_i32, %c0_i32_0 : i32, i32
  }
  func.func @transform_3(%arg0: i32, %arg1: i32) -> (i32, i32, i32, i32) {
    %c0_i32 = arith.constant 0 : i32
    %c0_i32_0 = arith.constant 0 : i32
    %c0_i32_1 = arith.constant 0 : i32
    return %arg0, %c0_i32, %arg1, %c0_i32_0 : i32, i32, i32, i32
  }
  func.func @transform_4(%arg0: i32, %arg1: i32) -> (i32, i32, i32, i32) {
    %c0_i32 = arith.constant 0 : i32
    %c0_i32_0 = arith.constant 0 : i32
    %c0_i32_1 = arith.constant 0 : i32
    return %arg0, %c0_i32, %arg1, %c0_i32_0 : i32, i32, i32, i32
  }
  func.func @transform_5(%arg0: i32, %arg1: i32) -> (i32, i32, i32, i32) {
    %c0_i32 = arith.constant 0 : i32
    %c0_i32_0 = arith.constant 0 : i32
    %c0_i32_1 = arith.constant 0 : i32
    return %arg0, %c0_i32, %arg1, %c0_i32_0 : i32, i32, i32, i32
  }
}

module attributes {stable_mosaic.version = 11 : i64} {
  func.func @_proj_res_ln_kernel(%arg0: i32, %arg1: i32, %arg2: memref<1x4x16x8xbf16, #tpu.memory_space<vmem>>, %arg3: memref<4x8x32xbf16, #tpu.memory_space<vmem>>, %arg4: memref<1x32xf32, #tpu.memory_space<vmem>>, %arg5: memref<1x16x32xf32, #tpu.memory_space<vmem>>, %arg6: memref<1x32xf32, #tpu.memory_space<vmem>>, %arg7: memref<1x32xf32, #tpu.memory_space<vmem>>, %arg8: memref<1x16x32xf32, #tpu.memory_space<vmem>>) attributes {dimension_semantics = [#tpu.dimension_semantics<parallel>, #tpu.dimension_semantics<parallel>], iteration_bounds = array<i64: 2, 1>, scalar_prefetch = 0 : i64, scratch_operands = 0 : i64, tpu.core_type = #tpu.core_type<tc>, window_params = [{transform_indices = @transform_0, window_bounds = array<i64: 1, 4, 16, 8>}, {pipeline_mode = #tpu.pipeline_mode<synchronous>, transform_indices = @transform_1, window_bounds = array<i64: 4, 8, 32>}, {pipeline_mode = #tpu.pipeline_mode<synchronous>, transform_indices = @transform_2, window_bounds = array<i64: 1, 32>}, {transform_indices = @transform_3, window_bounds = array<i64: 1, 16, 32>}, {pipeline_mode = #tpu.pipeline_mode<synchronous>, transform_indices = @transform_4, window_bounds = array<i64: 1, 32>}, {pipeline_mode = #tpu.pipeline_mode<synchronous>, transform_indices = @transform_5, window_bounds = array<i64: 1, 32>}, {transform_indices = @transform_6, window_bounds = array<i64: 1, 16, 32>}]} {
    %c0 = arith.constant 0 : index
    %c0_0 = arith.constant 0 : index
    %c0_1 = arith.constant 0 : index
    %0 = vector.load %arg5[%c0, %c0_0, %c0_1] : memref<1x16x32xf32, #tpu.memory_space<vmem>>, vector<1x16x32xf32>
    %1 = vector.shape_cast %0 : vector<1x16x32xf32> to vector<16x32xf32>
    %c0_2 = arith.constant 0 : index
    %c0_3 = arith.constant 0 : index
    %2 = vector.load %arg4[%c0_2, %c0_3] : memref<1x32xf32, #tpu.memory_space<vmem>>, vector<1x32xf32>
    %3 = vector.broadcast %2 : vector<1x32xf32> to vector<16x32xf32>
    %4 = arith.addf %1, %3 : vector<16x32xf32>
    %c0_4 = arith.constant 0 : index
    %c0_5 = arith.constant 0 : index
    %c0_6 = arith.constant 0 : index
    %c0_7 = arith.constant 0 : index
    %5 = vector.load %arg2[%c0_4, %c0_5, %c0_6, %c0_7] : memref<1x4x16x8xbf16, #tpu.memory_space<vmem>>, vector<1x1x16x8xbf16>
    %6 = vector.shape_cast %5 : vector<1x1x16x8xbf16> to vector<16x8xbf16>
    %c0_8 = arith.constant 0 : index
    %c0_9 = arith.constant 0 : index
    %c0_10 = arith.constant 0 : index
    %7 = vector.load %arg3[%c0_8, %c0_9, %c0_10] : memref<4x8x32xbf16, #tpu.memory_space<vmem>>, vector<1x8x32xbf16>
    %8 = vector.shape_cast %7 : vector<1x8x32xbf16> to vector<8x32xbf16>
    %cst = arith.constant dense<0.000000e+00> : vector<16x32xf32>
    %9 = tpu.matmul %6, %8, %cst {dimension_numbers = #tpu.dot_dimension_numbers<[1], [0], [0], [1], [0, 0, 1, 1], [], []>} : vector<16x8xbf16>, vector<8x32xbf16>, vector<16x32xf32> -> vector<16x32xf32>
    %10 = arith.addf %4, %9 : vector<16x32xf32>
    %c0_11 = arith.constant 0 : index
    %c1 = arith.constant 1 : index
    %c0_12 = arith.constant 0 : index
    %c0_13 = arith.constant 0 : index
    %11 = vector.load %arg2[%c0_11, %c1, %c0_12, %c0_13] : memref<1x4x16x8xbf16, #tpu.memory_space<vmem>>, vector<1x1x16x8xbf16>
    %12 = vector.shape_cast %11 : vector<1x1x16x8xbf16> to vector<16x8xbf16>
    %c1_14 = arith.constant 1 : index
    %c0_15 = arith.constant 0 : index
    %c0_16 = arith.constant 0 : index
    %13 = vector.load %arg3[%c1_14, %c0_15, %c0_16] : memref<4x8x32xbf16, #tpu.memory_space<vmem>>, vector<1x8x32xbf16>
    %14 = vector.shape_cast %13 : vector<1x8x32xbf16> to vector<8x32xbf16>
    %cst_17 = arith.constant dense<0.000000e+00> : vector<16x32xf32>
    %15 = tpu.matmul %12, %14, %cst_17 {dimension_numbers = #tpu.dot_dimension_numbers<[1], [0], [0], [1], [0, 0, 1, 1], [], []>} : vector<16x8xbf16>, vector<8x32xbf16>, vector<16x32xf32> -> vector<16x32xf32>
    %16 = arith.addf %10, %15 : vector<16x32xf32>
    %c0_18 = arith.constant 0 : index
    %c2 = arith.constant 2 : index
    %c0_19 = arith.constant 0 : index
    %c0_20 = arith.constant 0 : index
    %17 = vector.load %arg2[%c0_18, %c2, %c0_19, %c0_20] : memref<1x4x16x8xbf16, #tpu.memory_space<vmem>>, vector<1x1x16x8xbf16>
    %18 = vector.shape_cast %17 : vector<1x1x16x8xbf16> to vector<16x8xbf16>
    %c2_21 = arith.constant 2 : index
    %c0_22 = arith.constant 0 : index
    %c0_23 = arith.constant 0 : index
    %19 = vector.load %arg3[%c2_21, %c0_22, %c0_23] : memref<4x8x32xbf16, #tpu.memory_space<vmem>>, vector<1x8x32xbf16>
    %20 = vector.shape_cast %19 : vector<1x8x32xbf16> to vector<8x32xbf16>
    %cst_24 = arith.constant dense<0.000000e+00> : vector<16x32xf32>
    %21 = tpu.matmul %18, %20, %cst_24 {dimension_numbers = #tpu.dot_dimension_numbers<[1], [0], [0], [1], [0, 0, 1, 1], [], []>} : vector<16x8xbf16>, vector<8x32xbf16>, vector<16x32xf32> -> vector<16x32xf32>
    %22 = arith.addf %16, %21 : vector<16x32xf32>
    %c0_25 = arith.constant 0 : index
    %c3 = arith.constant 3 : index
    %c0_26 = arith.constant 0 : index
    %c0_27 = arith.constant 0 : index
    %23 = vector.load %arg2[%c0_25, %c3, %c0_26, %c0_27] : memref<1x4x16x8xbf16, #tpu.memory_space<vmem>>, vector<1x1x16x8xbf16>
    %24 = vector.shape_cast %23 : vector<1x1x16x8xbf16> to vector<16x8xbf16>
    %c3_28 = arith.constant 3 : index
    %c0_29 = arith.constant 0 : index
    %c0_30 = arith.constant 0 : index
    %25 = vector.load %arg3[%c3_28, %c0_29, %c0_30] : memref<4x8x32xbf16, #tpu.memory_space<vmem>>, vector<1x8x32xbf16>
    %26 = vector.shape_cast %25 : vector<1x8x32xbf16> to vector<8x32xbf16>
    %cst_31 = arith.constant dense<0.000000e+00> : vector<16x32xf32>
    %27 = tpu.matmul %24, %26, %cst_31 {dimension_numbers = #tpu.dot_dimension_numbers<[1], [0], [0], [1], [0, 0, 1, 1], [], []>} : vector<16x8xbf16>, vector<8x32xbf16>, vector<16x32xf32> -> vector<16x32xf32>
    %28 = arith.addf %22, %27 : vector<16x32xf32>
    %cst_32 = arith.constant dense<0.000000e+00> : vector<16xf32>
    %29 = vector.multi_reduction <add>, %28, %cst_32 [1] : vector<16x32xf32> to vector<16xf32>
    %30 = vector.shape_cast %29 : vector<16xf32> to vector<16x1xf32>
    %cst_33 = arith.constant 3.200000e+01 : f32
    %31 = vector.broadcast %cst_33 : f32 to vector<16x1xf32>
    %32 = arith.divf %30, %31 : vector<16x1xf32>
    %33 = vector.broadcast %32 : vector<16x1xf32> to vector<16x32xf32>
    %34 = arith.subf %28, %33 : vector<16x32xf32>
    %35 = vector.broadcast %32 : vector<16x1xf32> to vector<16x32xf32>
    %36 = arith.subf %28, %35 : vector<16x32xf32>
    %37 = arith.mulf %34, %36 : vector<16x32xf32>
    %cst_34 = arith.constant dense<0.000000e+00> : vector<16xf32>
    %38 = vector.multi_reduction <add>, %37, %cst_34 [1] : vector<16x32xf32> to vector<16xf32>
    %39 = vector.shape_cast %38 : vector<16xf32> to vector<16x1xf32>
    %cst_35 = arith.constant 3.200000e+01 : f32
    %40 = vector.broadcast %cst_35 : f32 to vector<16x1xf32>
    %41 = arith.divf %39, %40 : vector<16x1xf32>
    %42 = vector.broadcast %32 : vector<16x1xf32> to vector<16x32xf32>
    %43 = arith.subf %28, %42 : vector<16x32xf32>
    %cst_36 = arith.constant 9.99999974E-6 : f32
    %44 = vector.broadcast %cst_36 : f32 to vector<16x1xf32>
    %45 = arith.addf %41, %44 : vector<16x1xf32>
    %46 = math.rsqrt %45 : vector<16x1xf32>
    %47 = vector.broadcast %46 : vector<16x1xf32> to vector<16x32xf32>
    %48 = arith.mulf %43, %47 : vector<16x32xf32>
    %c0_37 = arith.constant 0 : index
    %c0_38 = arith.constant 0 : index
    %49 = vector.load %arg6[%c0_37, %c0_38] : memref<1x32xf32, #tpu.memory_space<vmem>>, vector<1x32xf32>
    %50 = vector.broadcast %49 : vector<1x32xf32> to vector<16x32xf32>
    %51 = arith.mulf %48, %50 : vector<16x32xf32>
    %c0_39 = arith.constant 0 : index
    %c0_40 = arith.constant 0 : index
    %52 = vector.load %arg7[%c0_39, %c0_40] : memref<1x32xf32, #tpu.memory_space<vmem>>, vector<1x32xf32>
    %53 = vector.broadcast %52 : vector<1x32xf32> to vector<16x32xf32>
    %54 = arith.addf %51, %53 : vector<16x32xf32>
    %c0_41 = arith.constant 0 : index
    %c0_42 = arith.constant 0 : index
    %c0_43 = arith.constant 0 : index
    %55 = vector.load %arg8[%c0_41, %c0_42, %c0_43] : memref<1x16x32xf32, #tpu.memory_space<vmem>>, vector<1x16x32xf32>
    %56 = vector.shape_cast %55 : vector<1x16x32xf32> to vector<16x32xf32>
    %57 = vector.shape_cast %54 : vector<16x32xf32> to vector<1x16x32xf32>
    tpu.vector_store %arg8[%c0_41, %c0_42, %c0_43], %57 {strides = array<i32>} : memref<1x16x32xf32, #tpu.memory_space<vmem>>, vector<1x16x32xf32>,
    return
  }
  func.func @transform_0(%arg0: i32, %arg1: i32) -> (i32, i32, i32, i32) {
    %c0_i32 = arith.constant 0 : i32
    %c0_i32_0 = arith.constant 0 : i32
    %c0_i32_1 = arith.constant 0 : i32
    return %arg0, %c0_i32, %arg1, %c0_i32_0 : i32, i32, i32, i32
  }
  func.func @transform_1(%arg0: i32, %arg1: i32) -> (i32, i32, i32) {
    %c0_i32 = arith.constant 0 : i32
    %c0_i32_0 = arith.constant 0 : i32
    %c0_i32_1 = arith.constant 0 : i32
    %c0_i32_2 = arith.constant 0 : i32
    return %c0_i32, %c0_i32_0, %c0_i32_1 : i32, i32, i32
  }
  func.func @transform_2(%arg0: i32, %arg1: i32) -> (i32, i32) {
    %c0_i32 = arith.constant 0 : i32
    %c0_i32_0 = arith.constant 0 : i32
    %c0_i32_1 = arith.constant 0 : i32
    return %c0_i32, %c0_i32_0 : i32, i32
  }
  func.func @transform_3(%arg0: i32, %arg1: i32) -> (i32, i32, i32) {
    %c0_i32 = arith.constant 0 : i32
    %c0_i32_0 = arith.constant 0 : i32
    return %arg0, %arg1, %c0_i32 : i32, i32, i32
  }
  func.func @transform_4(%arg0: i32, %arg1: i32) -> (i32, i32) {
    %c0_i32 = arith.constant 0 : i32
    %c0_i32_0 = arith.constant 0 : i32
    %c0_i32_1 = arith.constant 0 : i32
    return %c0_i32, %c0_i32_0 : i32, i32
  }
  func.func @transform_5(%arg0: i32, %arg1: i32) -> (i32, i32) {
    %c0_i32 = arith.constant 0 : i32
    %c0_i32_0 = arith.constant 0 : i32
    %c0_i32_1 = arith.constant 0 : i32
    return %c0_i32, %c0_i32_0 : i32, i32
  }
  func.func @transform_6(%arg0: i32, %arg1: i32) -> (i32, i32, i32) {
    %c0_i32 = arith.constant 0 : i32
    %c0_i32_0 = arith.constant 0 : i32
    return %arg0, %arg1, %c0_i32 : i32, i32, i32
  }
}

module attributes {stable_mosaic.version = 11 : i64} {
  func.func @_linear_kernel(%arg0: i32, %arg1: i32, %arg2: memref<1x8x16xf32, #tpu.memory_space<vmem>>, %arg3: memref<16x32xbf16, #tpu.memory_space<vmem>>, %arg4: memref<1x32xf32, #tpu.memory_space<vmem>>, %arg5: memref<1x8x32xf32, #tpu.memory_space<vmem>>) attributes {dimension_semantics = [#tpu.dimension_semantics<parallel>, #tpu.dimension_semantics<parallel>], iteration_bounds = array<i64: 2, 1>, scalar_prefetch = 0 : i64, scratch_operands = 0 : i64, tpu.core_type = #tpu.core_type<tc>, window_params = [{transform_indices = @transform_0, window_bounds = array<i64: 1, 8, 16>}, {pipeline_mode = #tpu.pipeline_mode<synchronous>, transform_indices = @transform_1, window_bounds = array<i64: 16, 32>}, {pipeline_mode = #tpu.pipeline_mode<synchronous>, transform_indices = @transform_2, window_bounds = array<i64: 1, 32>}, {transform_indices = @transform_3, window_bounds = array<i64: 1, 8, 32>}]} {
    %c0 = arith.constant 0 : index
    %c0_0 = arith.constant 0 : index
    %c0_1 = arith.constant 0 : index
    %0 = vector.load %arg2[%c0, %c0_0, %c0_1] : memref<1x8x16xf32, #tpu.memory_space<vmem>>, vector<1x8x16xf32>
    %1 = vector.shape_cast %0 : vector<1x8x16xf32> to vector<8x16xf32>
    %2 = arith.truncf %1 : vector<8x16xf32> to vector<8x16xbf16>
    %c0_2 = arith.constant 0 : index
    %c0_3 = arith.constant 0 : index
    %3 = vector.load %arg3[%c0_2, %c0_3] : memref<16x32xbf16, #tpu.memory_space<vmem>>, vector<16x32xbf16>
    %cst = arith.constant dense<0.000000e+00> : vector<8x32xf32>
    %4 = tpu.matmul %2, %3, %cst {dimension_numbers = #tpu.dot_dimension_numbers<[1], [0], [0], [1], [0, 0, 1, 1], [], []>} : vector<8x16xbf16>, vector<16x32xbf16>, vector<8x32xf32> -> vector<8x32xf32>
    %c0_4 = arith.constant 0 : index
    %c0_5 = arith.constant 0 : index
    %5 = vector.load %arg4[%c0_4, %c0_5] : memref<1x32xf32, #tpu.memory_space<vmem>>, vector<1x32xf32>
    %6 = vector.broadcast %5 : vector<1x32xf32> to vector<8x32xf32>
    %7 = arith.addf %4, %6 : vector<8x32xf32>
    %c0_6 = arith.constant 0 : index
    %c0_7 = arith.constant 0 : index
    %c0_8 = arith.constant 0 : index
    %8 = vector.load %arg5[%c0_6, %c0_7, %c0_8] : memref<1x8x32xf32, #tpu.memory_space<vmem>>, vector<1x8x32xf32>
    %9 = vector.shape_cast %8 : vector<1x8x32xf32> to vector<8x32xf32>
    %10 = vector.shape_cast %7 : vector<8x32xf32> to vector<1x8x32xf32>
    tpu.vector_store %arg5[%c0_6, %c0_7, %c0_8], %10 {strides = array<i32>} : memref<1x8x32xf32, #tpu.memory_space<vmem>>, vector<1x8x32xf32>,
    return
  }
  func.func @transform_0(%arg0: i32, %arg1: i32) -> (i32, i32, i32) {
    %c0_i32 = arith.constant 0 : i32
    %c0_i32_0 = arith.constant 0 : i32
    return %arg0, %arg1, %c0_i32 : i32, i32, i32
  }
  func.func @transform_1(%arg0: i32, %arg1: i32) -> (i32, i32) {
    %c0_i32 = arith.constant 0 : i32
    %c0_i32_0 = arith.constant 0 : i32
    %c0_i32_1 = arith.constant 0 : i32
    return %c0_i32, %c0_i32_0 : i32, i32
  }
  func.func @transform_2(%arg0: i32, %arg1: i32) -> (i32, i32) {
    %c0_i32 = arith.constant 0 : i32
    %c0_i32_0 = arith.constant 0 : i32
    %c0_i32_1 = arith.constant 0 : i32
    return %c0_i32, %c0_i32_0 : i32, i32
  }
  func.func @transform_3(%arg0: i32, %arg1: i32) -> (i32, i32, i32) {
    %c0_i32 = arith.constant 0 : i32
    %c0_i32_0 = arith.constant 0 : i32
    return %arg0, %arg1, %c0_i32 : i32, i32, i32
  }
}

module attributes {stable_mosaic.version = 11 : i64} {
  func.func @_qkv_kernel(%arg0: i32, %arg1: i32, %arg2: memref<1x8x32xf32, #tpu.memory_space<vmem>>, %arg3: memref<32x96xbf16, #tpu.memory_space<vmem>>, %arg4: memref<1x96xf32, #tpu.memory_space<vmem>>, %arg5: memref<1x4x8x8xbf16, #tpu.memory_space<vmem>>, %arg6: memref<1x4x8x8xbf16, #tpu.memory_space<vmem>>, %arg7: memref<1x4x8x8xbf16, #tpu.memory_space<vmem>>) attributes {dimension_semantics = [#tpu.dimension_semantics<parallel>, #tpu.dimension_semantics<parallel>], iteration_bounds = array<i64: 2, 1>, scalar_prefetch = 0 : i64, scratch_operands = 0 : i64, tpu.core_type = #tpu.core_type<tc>, window_params = [{transform_indices = @transform_0, window_bounds = array<i64: 1, 8, 32>}, {pipeline_mode = #tpu.pipeline_mode<synchronous>, transform_indices = @transform_1, window_bounds = array<i64: 32, 96>}, {pipeline_mode = #tpu.pipeline_mode<synchronous>, transform_indices = @transform_2, window_bounds = array<i64: 1, 96>}, {transform_indices = @transform_3, window_bounds = array<i64: 1, 4, 8, 8>}, {transform_indices = @transform_4, window_bounds = array<i64: 1, 4, 8, 8>}, {transform_indices = @transform_5, window_bounds = array<i64: 1, 4, 8, 8>}]} {
    %c0 = arith.constant 0 : index
    %c0_0 = arith.constant 0 : index
    %c0_1 = arith.constant 0 : index
    %0 = vector.load %arg2[%c0, %c0_0, %c0_1] : memref<1x8x32xf32, #tpu.memory_space<vmem>>, vector<1x8x32xf32>
    %1 = vector.shape_cast %0 : vector<1x8x32xf32> to vector<8x32xf32>
    %2 = arith.truncf %1 : vector<8x32xf32> to vector<8x32xbf16>
    %c0_2 = arith.constant 0 : index
    %c0_3 = arith.constant 0 : index
    %3 = vector.load %arg3[%c0_2, %c0_3] : memref<32x96xbf16, #tpu.memory_space<vmem>>, vector<32x96xbf16>
    %cst = arith.constant dense<0.000000e+00> : vector<8x96xf32>
    %4 = tpu.matmul %2, %3, %cst {dimension_numbers = #tpu.dot_dimension_numbers<[1], [0], [0], [1], [0, 0, 1, 1], [], []>} : vector<8x32xbf16>, vector<32x96xbf16>, vector<8x96xf32> -> vector<8x96xf32>
    %c0_4 = arith.constant 0 : index
    %c0_5 = arith.constant 0 : index
    %5 = vector.load %arg4[%c0_4, %c0_5] : memref<1x96xf32, #tpu.memory_space<vmem>>, vector<1x96xf32>
    %6 = vector.broadcast %5 : vector<1x96xf32> to vector<8x96xf32>
    %7 = arith.addf %4, %6 : vector<8x96xf32>
    %8 = vector.extract_strided_slice %7 {offsets = [0, 0], sizes = [8, 8], strides = [1, 1]} : vector<8x96xf32> to vector<8x8xf32>
    %9 = arith.truncf %8 : vector<8x8xf32> to vector<8x8xbf16>
    %c0_6 = arith.constant 0 : index
    %c0_7 = arith.constant 0 : index
    %c0_8 = arith.constant 0 : index
    %c0_9 = arith.constant 0 : index
    %10 = vector.load %arg5[%c0_6, %c0_7, %c0_8, %c0_9] : memref<1x4x8x8xbf16, #tpu.memory_space<vmem>>, vector<1x1x8x8xbf16>
    %11 = vector.shape_cast %10 : vector<1x1x8x8xbf16> to vector<8x8xbf16>
    %12 = vector.shape_cast %9 : vector<8x8xbf16> to vector<1x1x8x8xbf16>
    tpu.vector_store %arg5[%c0_6, %c0_7, %c0_8, %c0_9], %12 {strides = array<i32>} : memref<1x4x8x8xbf16, #tpu.memory_space<vmem>>, vector<1x1x8x8xbf16>,
    %13 = vector.extract_strided_slice %7 {offsets = [0, 8], sizes = [8, 8], strides = [1, 1]} : vector<8x96xf32> to vector<8x8xf32>
    %14 = arith.truncf %13 : vector<8x8xf32> to vector<8x8xbf16>
    %c0_10 = arith.constant 0 : index
    %c1 = arith.constant 1 : index
    %c0_11 = arith.constant 0 : index
    %c0_12 = arith.constant 0 : index
    %15 = vector.load %arg5[%c0_10, %c1, %c0_11, %c0_12] : memref<1x4x8x8xbf16, #tpu.memory_space<vmem>>, vector<1x1x8x8xbf16>
    %16 = vector.shape_cast %15 : vector<1x1x8x8xbf16> to vector<8x8xbf16>
    %17 = vector.shape_cast %14 : vector<8x8xbf16> to vector<1x1x8x8xbf16>
    tpu.vector_store %arg5[%c0_10, %c1, %c0_11, %c0_12], %17 {strides = array<i32>} : memref<1x4x8x8xbf16, #tpu.memory_space<vmem>>, vector<1x1x8x8xbf16>,
    %18 = vector.extract_strided_slice %7 {offsets = [0, 16], sizes = [8, 8], strides = [1, 1]} : vector<8x96xf32> to vector<8x8xf32>
    %19 = arith.truncf %18 : vector<8x8xf32> to vector<8x8xbf16>
    %c0_13 = arith.constant 0 : index
    %c2 = arith.constant 2 : index
    %c0_14 = arith.constant 0 : index
    %c0_15 = arith.constant 0 : index
    %20 = vector.load %arg5[%c0_13, %c2, %c0_14, %c0_15] : memref<1x4x8x8xbf16, #tpu.memory_space<vmem>>, vector<1x1x8x8xbf16>
    %21 = vector.shape_cast %20 : vector<1x1x8x8xbf16> to vector<8x8xbf16>
    %22 = vector.shape_cast %19 : vector<8x8xbf16> to vector<1x1x8x8xbf16>
    tpu.vector_store %arg5[%c0_13, %c2, %c0_14, %c0_15], %22 {strides = array<i32>} : memref<1x4x8x8xbf16, #tpu.memory_space<vmem>>, vector<1x1x8x8xbf16>,
    %23 = vector.extract_strided_slice %7 {offsets = [0, 24], sizes = [8, 8], strides = [1, 1]} : vector<8x96xf32> to vector<8x8xf32>
    %24 = arith.truncf %23 : vector<8x8xf32> to vector<8x8xbf16>
    %c0_16 = arith.constant 0 : index
    %c3 = arith.constant 3 : index
    %c0_17 = arith.constant 0 : index
    %c0_18 = arith.constant 0 : index
    %25 = vector.load %arg5[%c0_16, %c3, %c0_17, %c0_18] : memref<1x4x8x8xbf16, #tpu.memory_space<vmem>>, vector<1x1x8x8xbf16>
    %26 = vector.shape_cast %25 : vector<1x1x8x8xbf16> to vector<8x8xbf16>
    %27 = vector.shape_cast %24 : vector<8x8xbf16> to vector<1x1x8x8xbf16>
    tpu.vector_store %arg5[%c0_16, %c3, %c0_17, %c0_18], %27 {strides = array<i32>} : memref<1x4x8x8xbf16, #tpu.memory_space<vmem>>, vector<1x1x8x8xbf16>,
    %28 = vector.extract_strided_slice %7 {offsets = [0, 32], sizes = [8, 8], strides = [1, 1]} : vector<8x96xf32> to vector<8x8xf32>
    %29 = arith.truncf %28 : vector<8x8xf32> to vector<8x8xbf16>
    %c0_19 = arith.constant 0 : index
    %c0_20 = arith.constant 0 : index
    %c0_21 = arith.constant 0 : index
    %c0_22 = arith.constant 0 : index
    %30 = vector.load %arg6[%c0_19, %c0_20, %c0_21, %c0_22] : memref<1x4x8x8xbf16, #tpu.memory_space<vmem>>, vector<1x1x8x8xbf16>
    %31 = vector.shape_cast %30 : vector<1x1x8x8xbf16> to vector<8x8xbf16>
    %32 = vector.shape_cast %29 : vector<8x8xbf16> to vector<1x1x8x8xbf16>
    tpu.vector_store %arg6[%c0_19, %c0_20, %c0_21, %c0_22], %32 {strides = array<i32>} : memref<1x4x8x8xbf16, #tpu.memory_space<vmem>>, vector<1x1x8x8xbf16>,
    %33 = vector.extract_strided_slice %7 {offsets = [0, 40], sizes = [8, 8], strides = [1, 1]} : vector<8x96xf32> to vector<8x8xf32>
    %34 = arith.truncf %33 : vector<8x8xf32> to vector<8x8xbf16>
    %c0_23 = arith.constant 0 : index
    %c1_24 = arith.constant 1 : index
    %c0_25 = arith.constant 0 : index
    %c0_26 = arith.constant 0 : index
    %35 = vector.load %arg6[%c0_23, %c1_24, %c0_25, %c0_26] : memref<1x4x8x8xbf16, #tpu.memory_space<vmem>>, vector<1x1x8x8xbf16>
    %36 = vector.shape_cast %35 : vector<1x1x8x8xbf16> to vector<8x8xbf16>
    %37 = vector.shape_cast %34 : vector<8x8xbf16> to vector<1x1x8x8xbf16>
    tpu.vector_store %arg6[%c0_23, %c1_24, %c0_25, %c0_26], %37 {strides = array<i32>} : memref<1x4x8x8xbf16, #tpu.memory_space<vmem>>, vector<1x1x8x8xbf16>,
    %38 = vector.extract_strided_slice %7 {offsets = [0, 48], sizes = [8, 8], strides = [1, 1]} : vector<8x96xf32> to vector<8x8xf32>
    %39 = arith.truncf %38 : vector<8x8xf32> to vector<8x8xbf16>
    %c0_27 = arith.constant 0 : index
    %c2_28 = arith.constant 2 : index
    %c0_29 = arith.constant 0 : index
    %c0_30 = arith.constant 0 : index
    %40 = vector.load %arg6[%c0_27, %c2_28, %c0_29, %c0_30] : memref<1x4x8x8xbf16, #tpu.memory_space<vmem>>, vector<1x1x8x8xbf16>
    %41 = vector.shape_cast %40 : vector<1x1x8x8xbf16> to vector<8x8xbf16>
    %42 = vector.shape_cast %39 : vector<8x8xbf16> to vector<1x1x8x8xbf16>
    tpu.vector_store %arg6[%c0_27, %c2_28, %c0_29, %c0_30], %42 {strides = array<i32>} : memref<1x4x8x8xbf16, #tpu.memory_space<vmem>>, vector<1x1x8x8xbf16>,
    %43 = vector.extract_strided_slice %7 {offsets = [0, 56], sizes = [8, 8], strides = [1, 1]} : vector<8x96xf32> to vector<8x8xf32>
    %44 = arith.truncf %43 : vector<8x8xf32> to vector<8x8xbf16>
    %c0_31 = arith.constant 0 : index
    %c3_32 = arith.constant 3 : index
    %c0_33 = arith.constant 0 : index
    %c0_34 = arith.constant 0 : index
    %45 = vector.load %arg6[%c0_31, %c3_32, %c0_33, %c0_34] : memref<1x4x8x8xbf16, #tpu.memory_space<vmem>>, vector<1x1x8x8xbf16>
    %46 = vector.shape_cast %45 : vector<1x1x8x8xbf16> to vector<8x8xbf16>
    %47 = vector.shape_cast %44 : vector<8x8xbf16> to vector<1x1x8x8xbf16>
    tpu.vector_store %arg6[%c0_31, %c3_32, %c0_33, %c0_34], %47 {strides = array<i32>} : memref<1x4x8x8xbf16, #tpu.memory_space<vmem>>, vector<1x1x8x8xbf16>,
    %48 = vector.extract_strided_slice %7 {offsets = [0, 64], sizes = [8, 8], strides = [1, 1]} : vector<8x96xf32> to vector<8x8xf32>
    %49 = arith.truncf %48 : vector<8x8xf32> to vector<8x8xbf16>
    %c0_35 = arith.constant 0 : index
    %c0_36 = arith.constant 0 : index
    %c0_37 = arith.constant 0 : index
    %c0_38 = arith.constant 0 : index
    %50 = vector.load %arg7[%c0_35, %c0_36, %c0_37, %c0_38] : memref<1x4x8x8xbf16, #tpu.memory_space<vmem>>, vector<1x1x8x8xbf16>
    %51 = vector.shape_cast %50 : vector<1x1x8x8xbf16> to vector<8x8xbf16>
    %52 = vector.shape_cast %49 : vector<8x8xbf16> to vector<1x1x8x8xbf16>
    tpu.vector_store %arg7[%c0_35, %c0_36, %c0_37, %c0_38], %52 {strides = array<i32>} : memref<1x4x8x8xbf16, #tpu.memory_space<vmem>>, vector<1x1x8x8xbf16>,
    %53 = vector.extract_strided_slice %7 {offsets = [0, 72], sizes = [8, 8], strides = [1, 1]} : vector<8x96xf32> to vector<8x8xf32>
    %54 = arith.truncf %53 : vector<8x8xf32> to vector<8x8xbf16>
    %c0_39 = arith.constant 0 : index
    %c1_40 = arith.constant 1 : index
    %c0_41 = arith.constant 0 : index
    %c0_42 = arith.constant 0 : index
    %55 = vector.load %arg7[%c0_39, %c1_40, %c0_41, %c0_42] : memref<1x4x8x8xbf16, #tpu.memory_space<vmem>>, vector<1x1x8x8xbf16>
    %56 = vector.shape_cast %55 : vector<1x1x8x8xbf16> to vector<8x8xbf16>
    %57 = vector.shape_cast %54 : vector<8x8xbf16> to vector<1x1x8x8xbf16>
    tpu.vector_store %arg7[%c0_39, %c1_40, %c0_41, %c0_42], %57 {strides = array<i32>} : memref<1x4x8x8xbf16, #tpu.memory_space<vmem>>, vector<1x1x8x8xbf16>,
    %58 = vector.extract_strided_slice %7 {offsets = [0, 80], sizes = [8, 8], strides = [1, 1]} : vector<8x96xf32> to vector<8x8xf32>
    %59 = arith.truncf %58 : vector<8x8xf32> to vector<8x8xbf16>
    %c0_43 = arith.constant 0 : index
    %c2_44 = arith.constant 2 : index
    %c0_45 = arith.constant 0 : index
    %c0_46 = arith.constant 0 : index
    %60 = vector.load %arg7[%c0_43, %c2_44, %c0_45, %c0_46] : memref<1x4x8x8xbf16, #tpu.memory_space<vmem>>, vector<1x1x8x8xbf16>
    %61 = vector.shape_cast %60 : vector<1x1x8x8xbf16> to vector<8x8xbf16>
    %62 = vector.shape_cast %59 : vector<8x8xbf16> to vector<1x1x8x8xbf16>
    tpu.vector_store %arg7[%c0_43, %c2_44, %c0_45, %c0_46], %62 {strides = array<i32>} : memref<1x4x8x8xbf16, #tpu.memory_space<vmem>>, vector<1x1x8x8xbf16>,
    %63 = vector.extract_strided_slice %7 {offsets = [0, 88], sizes = [8, 8], strides = [1, 1]} : vector<8x96xf32> to vector<8x8xf32>
    %64 = arith.truncf %63 : vector<8x8xf32> to vector<8x8xbf16>
    %c0_47 = arith.constant 0 : index
    %c3_48 = arith.constant 3 : index
    %c0_49 = arith.constant 0 : index
    %c0_50 = arith.constant 0 : index
    %65 = vector.load %arg7[%c0_47, %c3_48, %c0_49, %c0_50] : memref<1x4x8x8xbf16, #tpu.memory_space<vmem>>, vector<1x1x8x8xbf16>
    %66 = vector.shape_cast %65 : vector<1x1x8x8xbf16> to vector<8x8xbf16>
    %67 = vector.shape_cast %64 : vector<8x8xbf16> to vector<1x1x8x8xbf16>
    tpu.vector_store %arg7[%c0_47, %c3_48, %c0_49, %c0_50], %67 {strides = array<i32>} : memref<1x4x8x8xbf16, #tpu.memory_space<vmem>>, vector<1x1x8x8xbf16>,
    return
  }
  func.func @transform_0(%arg0: i32, %arg1: i32) -> (i32, i32, i32) {
    %c0_i32 = arith.constant 0 : i32
    %c0_i32_0 = arith.constant 0 : i32
    return %arg0, %arg1, %c0_i32 : i32, i32, i32
  }
  func.func @transform_1(%arg0: i32, %arg1: i32) -> (i32, i32) {
    %c0_i32 = arith.constant 0 : i32
    %c0_i32_0 = arith.constant 0 : i32
    %c0_i32_1 = arith.constant 0 : i32
    return %c0_i32, %c0_i32_0 : i32, i32
  }
  func.func @transform_2(%arg0: i32, %arg1: i32) -> (i32, i32) {
    %c0_i32 = arith.constant 0 : i32
    %c0_i32_0 = arith.constant 0 : i32
    %c0_i32_1 = arith.constant 0 : i32
    return %c0_i32, %c0_i32_0 : i32, i32
  }
  func.func @transform_3(%arg0: i32, %arg1: i32) -> (i32, i32, i32, i32) {
    %c0_i32 = arith.constant 0 : i32
    %c0_i32_0 = arith.constant 0 : i32
    %c0_i32_1 = arith.constant 0 : i32
    return %arg0, %c0_i32, %arg1, %c0_i32_0 : i32, i32, i32, i32
  }
  func.func @transform_4(%arg0: i32, %arg1: i32) -> (i32, i32, i32, i32) {
    %c0_i32 = arith.constant 0 : i32
    %c0_i32_0 = arith.constant 0 : i32
    %c0_i32_1 = arith.constant 0 : i32
    return %arg0, %c0_i32, %arg1, %c0_i32_0 : i32, i32, i32, i32
  }
  func.func @transform_5(%arg0: i32, %arg1: i32) -> (i32, i32, i32, i32) {
    %c0_i32 = arith.constant 0 : i32
    %c0_i32_0 = arith.constant 0 : i32
    %c0_i32_1 = arith.constant 0 : i32
    return %arg0, %c0_i32, %arg1, %c0_i32_0 : i32, i32, i32, i32
  }
}

module attributes {stable_mosaic.version = 11 : i64} {
  func.func @_ffn_res_ln_kernel(%arg0: i32, %arg1: i32, %arg2: memref<1x16x32xf32, #tpu.memory_space<vmem>>, %arg3: memref<32x64xbf16, #tpu.memory_space<vmem>>, %arg4: memref<1x64xf32, #tpu.memory_space<vmem>>, %arg5: memref<64x32xbf16, #tpu.memory_space<vmem>>, %arg6: memref<1x32xf32, #tpu.memory_space<vmem>>, %arg7: memref<1x32xf32, #tpu.memory_space<vmem>>, %arg8: memref<1x32xf32, #tpu.memory_space<vmem>>, %arg9: memref<1x16x32xf32, #tpu.memory_space<vmem>>) attributes {dimension_semantics = [#tpu.dimension_semantics<parallel>, #tpu.dimension_semantics<parallel>], iteration_bounds = array<i64: 2, 1>, scalar_prefetch = 0 : i64, scratch_operands = 0 : i64, tpu.core_type = #tpu.core_type<tc>, window_params = [{transform_indices = @transform_0, window_bounds = array<i64: 1, 16, 32>}, {pipeline_mode = #tpu.pipeline_mode<synchronous>, transform_indices = @transform_1, window_bounds = array<i64: 32, 64>}, {pipeline_mode = #tpu.pipeline_mode<synchronous>, transform_indices = @transform_2, window_bounds = array<i64: 1, 64>}, {pipeline_mode = #tpu.pipeline_mode<synchronous>, transform_indices = @transform_3, window_bounds = array<i64: 64, 32>}, {pipeline_mode = #tpu.pipeline_mode<synchronous>, transform_indices = @transform_4, window_bounds = array<i64: 1, 32>}, {pipeline_mode = #tpu.pipeline_mode<synchronous>, transform_indices = @transform_5, window_bounds = array<i64: 1, 32>}, {pipeline_mode = #tpu.pipeline_mode<synchronous>, transform_indices = @transform_6, window_bounds = array<i64: 1, 32>}, {transform_indices = @transform_7, window_bounds = array<i64: 1, 16, 32>}]} {
    %c0 = arith.constant 0 : index
    %c0_0 = arith.constant 0 : index
    %c0_1 = arith.constant 0 : index
    %0 = vector.load %arg2[%c0, %c0_0, %c0_1] : memref<1x16x32xf32, #tpu.memory_space<vmem>>, vector<1x16x32xf32>
    %1 = vector.shape_cast %0 : vector<1x16x32xf32> to vector<16x32xf32>
    %2 = arith.truncf %1 : vector<16x32xf32> to vector<16x32xbf16>
    %c0_2 = arith.constant 0 : index
    %c0_3 = arith.constant 0 : index
    %3 = vector.load %arg3[%c0_2, %c0_3] : memref<32x64xbf16, #tpu.memory_space<vmem>>, vector<32x64xbf16>
    %cst = arith.constant dense<0.000000e+00> : vector<16x64xf32>
    %4 = tpu.matmul %2, %3, %cst {dimension_numbers = #tpu.dot_dimension_numbers<[1], [0], [0], [1], [0, 0, 1, 1], [], []>} : vector<16x32xbf16>, vector<32x64xbf16>, vector<16x64xf32> -> vector<16x64xf32>
    %c0_4 = arith.constant 0 : index
    %c0_5 = arith.constant 0 : index
    %5 = vector.load %arg4[%c0_4, %c0_5] : memref<1x64xf32, #tpu.memory_space<vmem>>, vector<1x64xf32>
    %6 = vector.broadcast %5 : vector<1x64xf32> to vector<16x64xf32>
    %7 = arith.addf %4, %6 : vector<16x64xf32>
    %cst_6 = arith.constant 0.000000e+00 : f32
    %8 = vector.broadcast %cst_6 : f32 to vector<16x64xf32>
    %9 = arith.maximumf %7, %8 : vector<16x64xf32>
    %10 = arith.truncf %9 : vector<16x64xf32> to vector<16x64xbf16>
    %c0_7 = arith.constant 0 : index
    %c0_8 = arith.constant 0 : index
    %11 = vector.load %arg5[%c0_7, %c0_8] : memref<64x32xbf16, #tpu.memory_space<vmem>>, vector<64x32xbf16>
    %cst_9 = arith.constant dense<0.000000e+00> : vector<16x32xf32>
    %12 = tpu.matmul %10, %11, %cst_9 {dimension_numbers = #tpu.dot_dimension_numbers<[1], [0], [0], [1], [0, 0, 1, 1], [], []>} : vector<16x64xbf16>, vector<64x32xbf16>, vector<16x32xf32> -> vector<16x32xf32>
    %c0_10 = arith.constant 0 : index
    %c0_11 = arith.constant 0 : index
    %13 = vector.load %arg6[%c0_10, %c0_11] : memref<1x32xf32, #tpu.memory_space<vmem>>, vector<1x32xf32>
    %14 = vector.broadcast %13 : vector<1x32xf32> to vector<16x32xf32>
    %15 = arith.addf %12, %14 : vector<16x32xf32>
    %16 = arith.addf %15, %1 : vector<16x32xf32>
    %cst_12 = arith.constant dense<0.000000e+00> : vector<16xf32>
    %17 = vector.multi_reduction <add>, %16, %cst_12 [1] : vector<16x32xf32> to vector<16xf32>
    %18 = vector.shape_cast %17 : vector<16xf32> to vector<16x1xf32>
    %cst_13 = arith.constant 3.200000e+01 : f32
    %19 = vector.broadcast %cst_13 : f32 to vector<16x1xf32>
    %20 = arith.divf %18, %19 : vector<16x1xf32>
    %21 = vector.broadcast %20 : vector<16x1xf32> to vector<16x32xf32>
    %22 = arith.subf %16, %21 : vector<16x32xf32>
    %23 = vector.broadcast %20 : vector<16x1xf32> to vector<16x32xf32>
    %24 = arith.subf %16, %23 : vector<16x32xf32>
    %25 = arith.mulf %22, %24 : vector<16x32xf32>
    %cst_14 = arith.constant dense<0.000000e+00> : vector<16xf32>
    %26 = vector.multi_reduction <add>, %25, %cst_14 [1] : vector<16x32xf32> to vector<16xf32>
    %27 = vector.shape_cast %26 : vector<16xf32> to vector<16x1xf32>
    %cst_15 = arith.constant 3.200000e+01 : f32
    %28 = vector.broadcast %cst_15 : f32 to vector<16x1xf32>
    %29 = arith.divf %27, %28 : vector<16x1xf32>
    %30 = vector.broadcast %20 : vector<16x1xf32> to vector<16x32xf32>
    %31 = arith.subf %16, %30 : vector<16x32xf32>
    %cst_16 = arith.constant 9.99999974E-6 : f32
    %32 = vector.broadcast %cst_16 : f32 to vector<16x1xf32>
    %33 = arith.addf %29, %32 : vector<16x1xf32>
    %34 = math.rsqrt %33 : vector<16x1xf32>
    %35 = vector.broadcast %34 : vector<16x1xf32> to vector<16x32xf32>
    %36 = arith.mulf %31, %35 : vector<16x32xf32>
    %c0_17 = arith.constant 0 : index
    %c0_18 = arith.constant 0 : index
    %37 = vector.load %arg7[%c0_17, %c0_18] : memref<1x32xf32, #tpu.memory_space<vmem>>, vector<1x32xf32>
    %38 = vector.broadcast %37 : vector<1x32xf32> to vector<16x32xf32>
    %39 = arith.mulf %36, %38 : vector<16x32xf32>
    %c0_19 = arith.constant 0 : index
    %c0_20 = arith.constant 0 : index
    %40 = vector.load %arg8[%c0_19, %c0_20] : memref<1x32xf32, #tpu.memory_space<vmem>>, vector<1x32xf32>
    %41 = vector.broadcast %40 : vector<1x32xf32> to vector<16x32xf32>
    %42 = arith.addf %39, %41 : vector<16x32xf32>
    %c0_21 = arith.constant 0 : index
    %c0_22 = arith.constant 0 : index
    %c0_23 = arith.constant 0 : index
    %43 = vector.load %arg9[%c0_21, %c0_22, %c0_23] : memref<1x16x32xf32, #tpu.memory_space<vmem>>, vector<1x16x32xf32>
    %44 = vector.shape_cast %43 : vector<1x16x32xf32> to vector<16x32xf32>
    %45 = vector.shape_cast %42 : vector<16x32xf32> to vector<1x16x32xf32>
    tpu.vector_store %arg9[%c0_21, %c0_22, %c0_23], %45 {strides = array<i32>} : memref<1x16x32xf32, #tpu.memory_space<vmem>>, vector<1x16x32xf32>,
    return
  }
  func.func @transform_0(%arg0: i32, %arg1: i32) -> (i32, i32, i32) {
    %c0_i32 = arith.constant 0 : i32
    %c0_i32_0 = arith.constant 0 : i32
    return %arg0, %arg1, %c0_i32 : i32, i32, i32
  }
  func.func @transform_1(%arg0: i32, %arg1: i32) -> (i32, i32) {
    %c0_i32 = arith.constant 0 : i32
    %c0_i32_0 = arith.constant 0 : i32
    %c0_i32_1 = arith.constant 0 : i32
    return %c0_i32, %c0_i32_0 : i32, i32
  }
  func.func @transform_2(%arg0: i32, %arg1: i32) -> (i32, i32) {
    %c0_i32 = arith.constant 0 : i32
    %c0_i32_0 = arith.constant 0 : i32
    %c0_i32_1 = arith.constant 0 : i32
    return %c0_i32, %c0_i32_0 : i32, i32
  }
  func.func @transform_3(%arg0: i32, %arg1: i32) -> (i32, i32) {
    %c0_i32 = arith.constant 0 : i32
    %c0_i32_0 = arith.constant 0 : i32
    %c0_i32_1 = arith.constant 0 : i32
    return %c0_i32, %c0_i32_0 : i32, i32
  }
  func.func @transform_4(%arg0: i32, %arg1: i32) -> (i32, i32) {
    %c0_i32 = arith.constant 0 : i32
    %c0_i32_0 = arith.constant 0 : i32
    %c0_i32_1 = arith.constant 0 : i32
    return %c0_i32, %c0_i32_0 : i32, i32
  }
  func.func @transform_5(%arg0: i32, %arg1: i32) -> (i32, i32) {
    %c0_i32 = arith.constant 0 : i32
    %c0_i32_0 = arith.constant 0 : i32
    %c0_i32_1 = arith.constant 0 : i32
    return %c0_i32, %c0_i32_0 : i32, i32
  }
  func.func @transform_6(%arg0: i32, %arg1: i32) -> (i32, i32) {
    %c0_i32 = arith.constant 0 : i32
    %c0_i32_0 = arith.constant 0 : i32
    %c0_i32_1 = arith.constant 0 : i32
    return %c0_i32, %c0_i32_0 : i32, i32
  }
  func.func @transform_7(%arg0: i32, %arg1: i32) -> (i32, i32, i32) {
    %c0_i32 = arith.constant 0 : i32
    %c0_i32_0 = arith.constant 0 : i32
    return %arg0, %arg1, %c0_i32 : i32, i32, i32
  }
}

module attributes {stable_mosaic.version = 11 : i64} {
  func.func @_attention_kernel(%arg0: i32, %arg1: i32, %arg2: i32, %arg3: memref<1x1x8x8xbf16, #tpu.memory_space<vmem>>, %arg4: memref<1x1x8x8xbf16, #tpu.memory_space<vmem>>, %arg5: memref<1x1x8x8xbf16, #tpu.memory_space<vmem>>, %arg6: memref<1x1x8x8xbf16, #tpu.memory_space<vmem>>) attributes {dimension_semantics = [#tpu.dimension_semantics<parallel>, #tpu.dimension_semantics<parallel>, #tpu.dimension_semantics<parallel>], iteration_bounds = array<i64: 2, 4, 1>, scalar_prefetch = 0 : i64, scratch_operands = 0 : i64, tpu.core_type = #tpu.core_type<tc>, window_params = [{transform_indices = @transform_0, window_bounds = array<i64: 1, 1, 8, 8>}, {transform_indices = @transform_1, window_bounds = array<i64: 1, 1, 8, 8>}, {transform_indices = @transform_2, window_bounds = array<i64: 1, 1, 8, 8>}, {transform_indices = @transform_3, window_bounds = array<i64: 1, 1, 8, 8>}]} {
    %c0 = arith.constant 0 : index
    %c0_0 = arith.constant 0 : index
    %c0_1 = arith.constant 0 : index
    %c0_2 = arith.constant 0 : index
    %0 = vector.load %arg3[%c0, %c0_0, %c0_1, %c0_2] : memref<1x1x8x8xbf16, #tpu.memory_space<vmem>>, vector<1x1x8x8xbf16>
    %1 = vector.shape_cast %0 : vector<1x1x8x8xbf16> to vector<8x8xbf16>
    %c0_3 = arith.constant 0 : index
    %c0_4 = arith.constant 0 : index
    %c0_5 = arith.constant 0 : index
    %c0_6 = arith.constant 0 : index
    %2 = vector.load %arg4[%c0_3, %c0_4, %c0_5, %c0_6] : memref<1x1x8x8xbf16, #tpu.memory_space<vmem>>, vector<1x1x8x8xbf16>
    %3 = vector.shape_cast %2 : vector<1x1x8x8xbf16> to vector<8x8xbf16>
    %cst = arith.constant dense<0.000000e+00> : vector<8x8xf32>
    %4 = tpu.matmul %1, %3, %cst {dimension_numbers = #tpu.dot_dimension_numbers<[1], [1], [0], [0], [0, 0, 1, 0], [], []>} : vector<8x8xbf16>, vector<8x8xbf16>, vector<8x8xf32> -> vector<8x8xf32>
    %cst_7 = arith.constant 0.353553385 : f32
    %5 = vector.broadcast %cst_7 : f32 to vector<8x8xf32>
    %6 = arith.mulf %4, %5 : vector<8x8xf32>
    %cst_8 = arith.constant dense<0xFF800000> : vector<8xf32>
    %7 = vector.multi_reduction <maximumf>, %6, %cst_8 [1] : vector<8x8xf32> to vector<8xf32>
    %8 = vector.shape_cast %7 : vector<8xf32> to vector<8x1xf32>
    %9 = vector.broadcast %8 : vector<8x1xf32> to vector<8x8xf32>
    %10 = arith.subf %6, %9 : vector<8x8xf32>
    %11 = math.exp %10 : vector<8x8xf32>
    %cst_9 = arith.constant dense<0.000000e+00> : vector<8xf32>
    %12 = vector.multi_reduction <add>, %11, %cst_9 [1] : vector<8x8xf32> to vector<8xf32>
    %13 = vector.shape_cast %12 : vector<8xf32> to vector<8x1xf32>
    %14 = tpu.reciprocal %13 {approx = true} : vector<8x1xf32> -> vector<8x1xf32>
    %15 = vector.broadcast %14 : vector<8x1xf32> to vector<8x8xf32>
    %16 = arith.mulf %11, %15 : vector<8x8xf32>
    %17 = arith.truncf %16 : vector<8x8xf32> to vector<8x8xbf16>
    %c0_10 = arith.constant 0 : index
    %c0_11 = arith.constant 0 : index
    %c0_12 = arith.constant 0 : index
    %c0_13 = arith.constant 0 : index
    %18 = vector.load %arg5[%c0_10, %c0_11, %c0_12, %c0_13] : memref<1x1x8x8xbf16, #tpu.memory_space<vmem>>, vector<1x1x8x8xbf16>
    %19 = vector.shape_cast %18 : vector<1x1x8x8xbf16> to vector<8x8xbf16>
    %cst_14 = arith.constant dense<0.000000e+00> : vector<8x8xf32>
    %20 = tpu.matmul %17, %19, %cst_14 {dimension_numbers = #tpu.dot_dimension_numbers<[1], [0], [0], [1], [0, 0, 1, 1], [], []>} : vector<8x8xbf16>, vector<8x8xbf16>, vector<8x8xf32> -> vector<8x8xf32>
    %21 = arith.truncf %20 : vector<8x8xf32> to vector<8x8xbf16>
    %c0_15 = arith.constant 0 : index
    %c0_16 = arith.constant 0 : index
    %c0_17 = arith.constant 0 : index
    %c0_18 = arith.constant 0 : index
    %22 = vector.load %arg6[%c0_15, %c0_16, %c0_17, %c0_18] : memref<1x1x8x8xbf16, #tpu.memory_space<vmem>>, vector<1x1x8x8xbf16>
    %23 = vector.shape_cast %22 : vector<1x1x8x8xbf16> to vector<8x8xbf16>
    %24 = vector.shape_cast %21 : vector<8x8xbf16> to vector<1x1x8x8xbf16>
    tpu.vector_store %arg6[%c0_15, %c0_16, %c0_17, %c0_18], %24 {strides = array<i32>} : memref<1x1x8x8xbf16, #tpu.memory_space<vmem>>, vector<1x1x8x8xbf16>,
    return
  }
  func.func @transform_0(%arg0: i32, %arg1: i32, %arg2: i32) -> (i32, i32, i32, i32) {
    %c0_i32 = arith.constant 0 : i32
    %c0_i32_0 = arith.constant 0 : i32
    return %arg0, %arg1, %arg2, %c0_i32 : i32, i32, i32, i32
  }
  func.func @transform_1(%arg0: i32, %arg1: i32, %arg2: i32) -> (i32, i32, i32, i32) {
    %c0_i32 = arith.constant 0 : i32
    %c0_i32_0 = arith.constant 0 : i32
    %c0_i32_1 = arith.constant 0 : i32
    return %arg0, %arg1, %c0_i32, %c0_i32_0 : i32, i32, i32, i32
  }
  func.func @transform_2(%arg0: i32, %arg1: i32, %arg2: i32) -> (i32, i32, i32, i32) {
    %c0_i32 = arith.constant 0 : i32
    %c0_i32_0 = arith.constant 0 : i32
    %c0_i32_1 = arith.constant 0 : i32
    return %arg0, %arg1, %c0_i32, %c0_i32_0 : i32, i32, i32, i32
  }
  func.func @transform_3(%arg0: i32, %arg1: i32, %arg2: i32) -> (i32, i32, i32, i32) {
    %c0_i32 = arith.constant 0 : i32
    %c0_i32_0 = arith.constant 0 : i32
    return %arg0, %arg1, %arg2, %c0_i32 : i32, i32, i32, i32
  }
}

module attributes {stable_mosaic.version = 11 : i64} {
  func.func @_proj_res_ln_kernel(%arg0: i32, %arg1: i32, %arg2: memref<1x4x8x8xbf16, #tpu.memory_space<vmem>>, %arg3: memref<4x8x32xbf16, #tpu.memory_space<vmem>>, %arg4: memref<1x32xf32, #tpu.memory_space<vmem>>, %arg5: memref<1x8x32xf32, #tpu.memory_space<vmem>>, %arg6: memref<1x32xf32, #tpu.memory_space<vmem>>, %arg7: memref<1x32xf32, #tpu.memory_space<vmem>>, %arg8: memref<1x8x32xf32, #tpu.memory_space<vmem>>) attributes {dimension_semantics = [#tpu.dimension_semantics<parallel>, #tpu.dimension_semantics<parallel>], iteration_bounds = array<i64: 2, 1>, scalar_prefetch = 0 : i64, scratch_operands = 0 : i64, tpu.core_type = #tpu.core_type<tc>, window_params = [{transform_indices = @transform_0, window_bounds = array<i64: 1, 4, 8, 8>}, {pipeline_mode = #tpu.pipeline_mode<synchronous>, transform_indices = @transform_1, window_bounds = array<i64: 4, 8, 32>}, {pipeline_mode = #tpu.pipeline_mode<synchronous>, transform_indices = @transform_2, window_bounds = array<i64: 1, 32>}, {transform_indices = @transform_3, window_bounds = array<i64: 1, 8, 32>}, {pipeline_mode = #tpu.pipeline_mode<synchronous>, transform_indices = @transform_4, window_bounds = array<i64: 1, 32>}, {pipeline_mode = #tpu.pipeline_mode<synchronous>, transform_indices = @transform_5, window_bounds = array<i64: 1, 32>}, {transform_indices = @transform_6, window_bounds = array<i64: 1, 8, 32>}]} {
    %c0 = arith.constant 0 : index
    %c0_0 = arith.constant 0 : index
    %c0_1 = arith.constant 0 : index
    %0 = vector.load %arg5[%c0, %c0_0, %c0_1] : memref<1x8x32xf32, #tpu.memory_space<vmem>>, vector<1x8x32xf32>
    %1 = vector.shape_cast %0 : vector<1x8x32xf32> to vector<8x32xf32>
    %c0_2 = arith.constant 0 : index
    %c0_3 = arith.constant 0 : index
    %2 = vector.load %arg4[%c0_2, %c0_3] : memref<1x32xf32, #tpu.memory_space<vmem>>, vector<1x32xf32>
    %3 = vector.broadcast %2 : vector<1x32xf32> to vector<8x32xf32>
    %4 = arith.addf %1, %3 : vector<8x32xf32>
    %c0_4 = arith.constant 0 : index
    %c0_5 = arith.constant 0 : index
    %c0_6 = arith.constant 0 : index
    %c0_7 = arith.constant 0 : index
    %5 = vector.load %arg2[%c0_4, %c0_5, %c0_6, %c0_7] : memref<1x4x8x8xbf16, #tpu.memory_space<vmem>>, vector<1x1x8x8xbf16>
    %6 = vector.shape_cast %5 : vector<1x1x8x8xbf16> to vector<8x8xbf16>
    %c0_8 = arith.constant 0 : index
    %c0_9 = arith.constant 0 : index
    %c0_10 = arith.constant 0 : index
    %7 = vector.load %arg3[%c0_8, %c0_9, %c0_10] : memref<4x8x32xbf16, #tpu.memory_space<vmem>>, vector<1x8x32xbf16>
    %8 = vector.shape_cast %7 : vector<1x8x32xbf16> to vector<8x32xbf16>
    %cst = arith.constant dense<0.000000e+00> : vector<8x32xf32>
    %9 = tpu.matmul %6, %8, %cst {dimension_numbers = #tpu.dot_dimension_numbers<[1], [0], [0], [1], [0, 0, 1, 1], [], []>} : vector<8x8xbf16>, vector<8x32xbf16>, vector<8x32xf32> -> vector<8x32xf32>
    %10 = arith.addf %4, %9 : vector<8x32xf32>
    %c0_11 = arith.constant 0 : index
    %c1 = arith.constant 1 : index
    %c0_12 = arith.constant 0 : index
    %c0_13 = arith.constant 0 : index
    %11 = vector.load %arg2[%c0_11, %c1, %c0_12, %c0_13] : memref<1x4x8x8xbf16, #tpu.memory_space<vmem>>, vector<1x1x8x8xbf16>
    %12 = vector.shape_cast %11 : vector<1x1x8x8xbf16> to vector<8x8xbf16>
    %c1_14 = arith.constant 1 : index
    %c0_15 = arith.constant 0 : index
    %c0_16 = arith.constant 0 : index
    %13 = vector.load %arg3[%c1_14, %c0_15, %c0_16] : memref<4x8x32xbf16, #tpu.memory_space<vmem>>, vector<1x8x32xbf16>
    %14 = vector.shape_cast %13 : vector<1x8x32xbf16> to vector<8x32xbf16>
    %cst_17 = arith.constant dense<0.000000e+00> : vector<8x32xf32>
    %15 = tpu.matmul %12, %14, %cst_17 {dimension_numbers = #tpu.dot_dimension_numbers<[1], [0], [0], [1], [0, 0, 1, 1], [], []>} : vector<8x8xbf16>, vector<8x32xbf16>, vector<8x32xf32> -> vector<8x32xf32>
    %16 = arith.addf %10, %15 : vector<8x32xf32>
    %c0_18 = arith.constant 0 : index
    %c2 = arith.constant 2 : index
    %c0_19 = arith.constant 0 : index
    %c0_20 = arith.constant 0 : index
    %17 = vector.load %arg2[%c0_18, %c2, %c0_19, %c0_20] : memref<1x4x8x8xbf16, #tpu.memory_space<vmem>>, vector<1x1x8x8xbf16>
    %18 = vector.shape_cast %17 : vector<1x1x8x8xbf16> to vector<8x8xbf16>
    %c2_21 = arith.constant 2 : index
    %c0_22 = arith.constant 0 : index
    %c0_23 = arith.constant 0 : index
    %19 = vector.load %arg3[%c2_21, %c0_22, %c0_23] : memref<4x8x32xbf16, #tpu.memory_space<vmem>>, vector<1x8x32xbf16>
    %20 = vector.shape_cast %19 : vector<1x8x32xbf16> to vector<8x32xbf16>
    %cst_24 = arith.constant dense<0.000000e+00> : vector<8x32xf32>
    %21 = tpu.matmul %18, %20, %cst_24 {dimension_numbers = #tpu.dot_dimension_numbers<[1], [0], [0], [1], [0, 0, 1, 1], [], []>} : vector<8x8xbf16>, vector<8x32xbf16>, vector<8x32xf32> -> vector<8x32xf32>
    %22 = arith.addf %16, %21 : vector<8x32xf32>
    %c0_25 = arith.constant 0 : index
    %c3 = arith.constant 3 : index
    %c0_26 = arith.constant 0 : index
    %c0_27 = arith.constant 0 : index
    %23 = vector.load %arg2[%c0_25, %c3, %c0_26, %c0_27] : memref<1x4x8x8xbf16, #tpu.memory_space<vmem>>, vector<1x1x8x8xbf16>
    %24 = vector.shape_cast %23 : vector<1x1x8x8xbf16> to vector<8x8xbf16>
    %c3_28 = arith.constant 3 : index
    %c0_29 = arith.constant 0 : index
    %c0_30 = arith.constant 0 : index
    %25 = vector.load %arg3[%c3_28, %c0_29, %c0_30] : memref<4x8x32xbf16, #tpu.memory_space<vmem>>, vector<1x8x32xbf16>
    %26 = vector.shape_cast %25 : vector<1x8x32xbf16> to vector<8x32xbf16>
    %cst_31 = arith.constant dense<0.000000e+00> : vector<8x32xf32>
    %27 = tpu.matmul %24, %26, %cst_31 {dimension_numbers = #tpu.dot_dimension_numbers<[1], [0], [0], [1], [0, 0, 1, 1], [], []>} : vector<8x8xbf16>, vector<8x32xbf16>, vector<8x32xf32> -> vector<8x32xf32>
    %28 = arith.addf %22, %27 : vector<8x32xf32>
    %cst_32 = arith.constant dense<0.000000e+00> : vector<8xf32>
    %29 = vector.multi_reduction <add>, %28, %cst_32 [1] : vector<8x32xf32> to vector<8xf32>
    %30 = vector.shape_cast %29 : vector<8xf32> to vector<8x1xf32>
    %cst_33 = arith.constant 3.200000e+01 : f32
    %31 = vector.broadcast %cst_33 : f32 to vector<8x1xf32>
    %32 = arith.divf %30, %31 : vector<8x1xf32>
    %33 = vector.broadcast %32 : vector<8x1xf32> to vector<8x32xf32>
    %34 = arith.subf %28, %33 : vector<8x32xf32>
    %35 = vector.broadcast %32 : vector<8x1xf32> to vector<8x32xf32>
    %36 = arith.subf %28, %35 : vector<8x32xf32>
    %37 = arith.mulf %34, %36 : vector<8x32xf32>
    %cst_34 = arith.constant dense<0.000000e+00> : vector<8xf32>
    %38 = vector.multi_reduction <add>, %37, %cst_34 [1] : vector<8x32xf32> to vector<8xf32>
    %39 = vector.shape_cast %38 : vector<8xf32> to vector<8x1xf32>
    %cst_35 = arith.constant 3.200000e+01 : f32
    %40 = vector.broadcast %cst_35 : f32 to vector<8x1xf32>
    %41 = arith.divf %39, %40 : vector<8x1xf32>
    %42 = vector.broadcast %32 : vector<8x1xf32> to vector<8x32xf32>
    %43 = arith.subf %28, %42 : vector<8x32xf32>
    %cst_36 = arith.constant 9.99999974E-6 : f32
    %44 = vector.broadcast %cst_36 : f32 to vector<8x1xf32>
    %45 = arith.addf %41, %44 : vector<8x1xf32>
    %46 = math.rsqrt %45 : vector<8x1xf32>
    %47 = vector.broadcast %46 : vector<8x1xf32> to vector<8x32xf32>
    %48 = arith.mulf %43, %47 : vector<8x32xf32>
    %c0_37 = arith.constant 0 : index
    %c0_38 = arith.constant 0 : index
    %49 = vector.load %arg6[%c0_37, %c0_38] : memref<1x32xf32, #tpu.memory_space<vmem>>, vector<1x32xf32>
    %50 = vector.broadcast %49 : vector<1x32xf32> to vector<8x32xf32>
    %51 = arith.mulf %48, %50 : vector<8x32xf32>
    %c0_39 = arith.constant 0 : index
    %c0_40 = arith.constant 0 : index
    %52 = vector.load %arg7[%c0_39, %c0_40] : memref<1x32xf32, #tpu.memory_space<vmem>>, vector<1x32xf32>
    %53 = vector.broadcast %52 : vector<1x32xf32> to vector<8x32xf32>
    %54 = arith.addf %51, %53 : vector<8x32xf32>
    %c0_41 = arith.constant 0 : index
    %c0_42 = arith.constant 0 : index
    %c0_43 = arith.constant 0 : index
    %55 = vector.load %arg8[%c0_41, %c0_42, %c0_43] : memref<1x8x32xf32, #tpu.memory_space<vmem>>, vector<1x8x32xf32>
    %56 = vector.shape_cast %55 : vector<1x8x32xf32> to vector<8x32xf32>
    %57 = vector.shape_cast %54 : vector<8x32xf32> to vector<1x8x32xf32>
    tpu.vector_store %arg8[%c0_41, %c0_42, %c0_43], %57 {strides = array<i32>} : memref<1x8x32xf32, #tpu.memory_space<vmem>>, vector<1x8x32xf32>,
    return
  }
  func.func @transform_0(%arg0: i32, %arg1: i32) -> (i32, i32, i32, i32) {
    %c0_i32 = arith.constant 0 : i32
    %c0_i32_0 = arith.constant 0 : i32
    %c0_i32_1 = arith.constant 0 : i32
    return %arg0, %c0_i32, %arg1, %c0_i32_0 : i32, i32, i32, i32
  }
  func.func @transform_1(%arg0: i32, %arg1: i32) -> (i32, i32, i32) {
    %c0_i32 = arith.constant 0 : i32
    %c0_i32_0 = arith.constant 0 : i32
    %c0_i32_1 = arith.constant 0 : i32
    %c0_i32_2 = arith.constant 0 : i32
    return %c0_i32, %c0_i32_0, %c0_i32_1 : i32, i32, i32
  }
  func.func @transform_2(%arg0: i32, %arg1: i32) -> (i32, i32) {
    %c0_i32 = arith.constant 0 : i32
    %c0_i32_0 = arith.constant 0 : i32
    %c0_i32_1 = arith.constant 0 : i32
    return %c0_i32, %c0_i32_0 : i32, i32
  }
  func.func @transform_3(%arg0: i32, %arg1: i32) -> (i32, i32, i32) {
    %c0_i32 = arith.constant 0 : i32
    %c0_i32_0 = arith.constant 0 : i32
    return %arg0, %arg1, %c0_i32 : i32, i32, i32
  }
  func.func @transform_4(%arg0: i32, %arg1: i32) -> (i32, i32) {
    %c0_i32 = arith.constant 0 : i32
    %c0_i32_0 = arith.constant 0 : i32
    %c0_i32_1 = arith.constant 0 : i32
    return %c0_i32, %c0_i32_0 : i32, i32
  }
  func.func @transform_5(%arg0: i32, %arg1: i32) -> (i32, i32) {
    %c0_i32 = arith.constant 0 : i32
    %c0_i32_0 = arith.constant 0 : i32
    %c0_i32_1 = arith.constant 0 : i32
    return %c0_i32, %c0_i32_0 : i32, i32
  }
  func.func @transform_6(%arg0: i32, %arg1: i32) -> (i32, i32, i32) {
    %c0_i32 = arith.constant 0 : i32
    %c0_i32_0 = arith.constant 0 : i32
    return %arg0, %arg1, %c0_i32 : i32, i32, i32
  }
}

module attributes {stable_mosaic.version = 11 : i64} {
  func.func @_ffn_res_ln_kernel(%arg0: i32, %arg1: i32, %arg2: memref<1x8x32xf32, #tpu.memory_space<vmem>>, %arg3: memref<32x64xbf16, #tpu.memory_space<vmem>>, %arg4: memref<1x64xf32, #tpu.memory_space<vmem>>, %arg5: memref<64x32xbf16, #tpu.memory_space<vmem>>, %arg6: memref<1x32xf32, #tpu.memory_space<vmem>>, %arg7: memref<1x32xf32, #tpu.memory_space<vmem>>, %arg8: memref<1x32xf32, #tpu.memory_space<vmem>>, %arg9: memref<1x8x32xf32, #tpu.memory_space<vmem>>) attributes {dimension_semantics = [#tpu.dimension_semantics<parallel>, #tpu.dimension_semantics<parallel>], iteration_bounds = array<i64: 2, 1>, scalar_prefetch = 0 : i64, scratch_operands = 0 : i64, tpu.core_type = #tpu.core_type<tc>, window_params = [{transform_indices = @transform_0, window_bounds = array<i64: 1, 8, 32>}, {pipeline_mode = #tpu.pipeline_mode<synchronous>, transform_indices = @transform_1, window_bounds = array<i64: 32, 64>}, {pipeline_mode = #tpu.pipeline_mode<synchronous>, transform_indices = @transform_2, window_bounds = array<i64: 1, 64>}, {pipeline_mode = #tpu.pipeline_mode<synchronous>, transform_indices = @transform_3, window_bounds = array<i64: 64, 32>}, {pipeline_mode = #tpu.pipeline_mode<synchronous>, transform_indices = @transform_4, window_bounds = array<i64: 1, 32>}, {pipeline_mode = #tpu.pipeline_mode<synchronous>, transform_indices = @transform_5, window_bounds = array<i64: 1, 32>}, {pipeline_mode = #tpu.pipeline_mode<synchronous>, transform_indices = @transform_6, window_bounds = array<i64: 1, 32>}, {transform_indices = @transform_7, window_bounds = array<i64: 1, 8, 32>}]} {
    %c0 = arith.constant 0 : index
    %c0_0 = arith.constant 0 : index
    %c0_1 = arith.constant 0 : index
    %0 = vector.load %arg2[%c0, %c0_0, %c0_1] : memref<1x8x32xf32, #tpu.memory_space<vmem>>, vector<1x8x32xf32>
    %1 = vector.shape_cast %0 : vector<1x8x32xf32> to vector<8x32xf32>
    %2 = arith.truncf %1 : vector<8x32xf32> to vector<8x32xbf16>
    %c0_2 = arith.constant 0 : index
    %c0_3 = arith.constant 0 : index
    %3 = vector.load %arg3[%c0_2, %c0_3] : memref<32x64xbf16, #tpu.memory_space<vmem>>, vector<32x64xbf16>
    %cst = arith.constant dense<0.000000e+00> : vector<8x64xf32>
    %4 = tpu.matmul %2, %3, %cst {dimension_numbers = #tpu.dot_dimension_numbers<[1], [0], [0], [1], [0, 0, 1, 1], [], []>} : vector<8x32xbf16>, vector<32x64xbf16>, vector<8x64xf32> -> vector<8x64xf32>
    %c0_4 = arith.constant 0 : index
    %c0_5 = arith.constant 0 : index
    %5 = vector.load %arg4[%c0_4, %c0_5] : memref<1x64xf32, #tpu.memory_space<vmem>>, vector<1x64xf32>
    %6 = vector.broadcast %5 : vector<1x64xf32> to vector<8x64xf32>
    %7 = arith.addf %4, %6 : vector<8x64xf32>
    %cst_6 = arith.constant 0.000000e+00 : f32
    %8 = vector.broadcast %cst_6 : f32 to vector<8x64xf32>
    %9 = arith.maximumf %7, %8 : vector<8x64xf32>
    %10 = arith.truncf %9 : vector<8x64xf32> to vector<8x64xbf16>
    %c0_7 = arith.constant 0 : index
    %c0_8 = arith.constant 0 : index
    %11 = vector.load %arg5[%c0_7, %c0_8] : memref<64x32xbf16, #tpu.memory_space<vmem>>, vector<64x32xbf16>
    %cst_9 = arith.constant dense<0.000000e+00> : vector<8x32xf32>
    %12 = tpu.matmul %10, %11, %cst_9 {dimension_numbers = #tpu.dot_dimension_numbers<[1], [0], [0], [1], [0, 0, 1, 1], [], []>} : vector<8x64xbf16>, vector<64x32xbf16>, vector<8x32xf32> -> vector<8x32xf32>
    %c0_10 = arith.constant 0 : index
    %c0_11 = arith.constant 0 : index
    %13 = vector.load %arg6[%c0_10, %c0_11] : memref<1x32xf32, #tpu.memory_space<vmem>>, vector<1x32xf32>
    %14 = vector.broadcast %13 : vector<1x32xf32> to vector<8x32xf32>
    %15 = arith.addf %12, %14 : vector<8x32xf32>
    %16 = arith.addf %15, %1 : vector<8x32xf32>
    %cst_12 = arith.constant dense<0.000000e+00> : vector<8xf32>
    %17 = vector.multi_reduction <add>, %16, %cst_12 [1] : vector<8x32xf32> to vector<8xf32>
    %18 = vector.shape_cast %17 : vector<8xf32> to vector<8x1xf32>
    %cst_13 = arith.constant 3.200000e+01 : f32
    %19 = vector.broadcast %cst_13 : f32 to vector<8x1xf32>
    %20 = arith.divf %18, %19 : vector<8x1xf32>
    %21 = vector.broadcast %20 : vector<8x1xf32> to vector<8x32xf32>
    %22 = arith.subf %16, %21 : vector<8x32xf32>
    %23 = vector.broadcast %20 : vector<8x1xf32> to vector<8x32xf32>
    %24 = arith.subf %16, %23 : vector<8x32xf32>
    %25 = arith.mulf %22, %24 : vector<8x32xf32>
    %cst_14 = arith.constant dense<0.000000e+00> : vector<8xf32>
    %26 = vector.multi_reduction <add>, %25, %cst_14 [1] : vector<8x32xf32> to vector<8xf32>
    %27 = vector.shape_cast %26 : vector<8xf32> to vector<8x1xf32>
    %cst_15 = arith.constant 3.200000e+01 : f32
    %28 = vector.broadcast %cst_15 : f32 to vector<8x1xf32>
    %29 = arith.divf %27, %28 : vector<8x1xf32>
    %30 = vector.broadcast %20 : vector<8x1xf32> to vector<8x32xf32>
    %31 = arith.subf %16, %30 : vector<8x32xf32>
    %cst_16 = arith.constant 9.99999974E-6 : f32
    %32 = vector.broadcast %cst_16 : f32 to vector<8x1xf32>
    %33 = arith.addf %29, %32 : vector<8x1xf32>
    %34 = math.rsqrt %33 : vector<8x1xf32>
    %35 = vector.broadcast %34 : vector<8x1xf32> to vector<8x32xf32>
    %36 = arith.mulf %31, %35 : vector<8x32xf32>
    %c0_17 = arith.constant 0 : index
    %c0_18 = arith.constant 0 : index
    %37 = vector.load %arg7[%c0_17, %c0_18] : memref<1x32xf32, #tpu.memory_space<vmem>>, vector<1x32xf32>
    %38 = vector.broadcast %37 : vector<1x32xf32> to vector<8x32xf32>
    %39 = arith.mulf %36, %38 : vector<8x32xf32>
    %c0_19 = arith.constant 0 : index
    %c0_20 = arith.constant 0 : index
    %40 = vector.load %arg8[%c0_19, %c0_20] : memref<1x32xf32, #tpu.memory_space<vmem>>, vector<1x32xf32>
    %41 = vector.broadcast %40 : vector<1x32xf32> to vector<8x32xf32>
    %42 = arith.addf %39, %41 : vector<8x32xf32>
    %c0_21 = arith.constant 0 : index
    %c0_22 = arith.constant 0 : index
    %c0_23 = arith.constant 0 : index
    %43 = vector.load %arg9[%c0_21, %c0_22, %c0_23] : memref<1x8x32xf32, #tpu.memory_space<vmem>>, vector<1x8x32xf32>
    %44 = vector.shape_cast %43 : vector<1x8x32xf32> to vector<8x32xf32>
    %45 = vector.shape_cast %42 : vector<8x32xf32> to vector<1x8x32xf32>
    tpu.vector_store %arg9[%c0_21, %c0_22, %c0_23], %45 {strides = array<i32>} : memref<1x8x32xf32, #tpu.memory_space<vmem>>, vector<1x8x32xf32>,
    return
  }
  func.func @transform_0(%arg0: i32, %arg1: i32) -> (i32, i32, i32) {
    %c0_i32 = arith.constant 0 : i32
    %c0_i32_0 = arith.constant 0 : i32
    return %arg0, %arg1, %c0_i32 : i32, i32, i32
  }
  func.func @transform_1(%arg0: i32, %arg1: i32) -> (i32, i32) {
    %c0_i32 = arith.constant 0 : i32
    %c0_i32_0 = arith.constant 0 : i32
    %c0_i32_1 = arith.constant 0 : i32
    return %c0_i32, %c0_i32_0 : i32, i32
  }
  func.func @transform_2(%arg0: i32, %arg1: i32) -> (i32, i32) {
    %c0_i32 = arith.constant 0 : i32
    %c0_i32_0 = arith.constant 0 : i32
    %c0_i32_1 = arith.constant 0 : i32
    return %c0_i32, %c0_i32_0 : i32, i32
  }
  func.func @transform_3(%arg0: i32, %arg1: i32) -> (i32, i32) {
    %c0_i32 = arith.constant 0 : i32
    %c0_i32_0 = arith.constant 0 : i32
    %c0_i32_1 = arith.constant 0 : i32
    return %c0_i32, %c0_i32_0 : i32, i32
  }
  func.func @transform_4(%arg0: i32, %arg1: i32) -> (i32, i32) {
    %c0_i32 = arith.constant 0 : i32
    %c0_i32_0 = arith.constant 0 : i32
    %c0_i32_1 = arith.constant 0 : i32
    return %c0_i32, %c0_i32_0 : i32, i32
  }
  func.func @transform_5(%arg0: i32, %arg1: i32) -> (i32, i32) {
    %c0_i32 = arith.constant 0 : i32
    %c0_i32_0 = arith.constant 0 : i32
    %c0_i32_1 = arith.constant 0 : i32
    return %c0_i32, %c0_i32_0 : i32, i32
  }
  func.func @transform_6(%arg0: i32, %arg1: i32) -> (i32, i32) {
    %c0_i32 = arith.constant 0 : i32
    %c0_i32_0 = arith.constant 0 : i32
    %c0_i32_1 = arith.constant 0 : i32
    return %c0_i32, %c0_i32_0 : i32, i32
  }
  func.func @transform_7(%arg0: i32, %arg1: i32) -> (i32, i32, i32) {
    %c0_i32 = arith.constant 0 : i32
    %c0_i32_0 = arith.constant 0 : i32
    return %arg0, %arg1, %c0_i32 : i32, i32, i32
  }
}

module attributes {stable_mosaic.version = 11 : i64} {
  func.func @_final_kernel(%arg0: i32, %arg1: memref<1x16x32xf32, #tpu.memory_space<vmem>>, %arg2: memref<1x8x32xf32, #tpu.memory_space<vmem>>, %arg3: memref<32x8xbf16, #tpu.memory_space<vmem>>, %arg4: memref<8x1xf32, #tpu.memory_space<vmem>>, %arg5: memref<32x16xbf16, #tpu.memory_space<vmem>>, %arg6: memref<1x16xf32, #tpu.memory_space<vmem>>, %arg7: memref<1x8x16xf32, #tpu.memory_space<vmem>>) attributes {dimension_semantics = [#tpu.dimension_semantics<parallel>], iteration_bounds = array<i64: 2>, scalar_prefetch = 0 : i64, scratch_operands = 0 : i64, tpu.core_type = #tpu.core_type<tc>, window_params = [{transform_indices = @transform_0, window_bounds = array<i64: 1, 16, 32>}, {transform_indices = @transform_1, window_bounds = array<i64: 1, 8, 32>}, {pipeline_mode = #tpu.pipeline_mode<synchronous>, transform_indices = @transform_2, window_bounds = array<i64: 32, 8>}, {pipeline_mode = #tpu.pipeline_mode<synchronous>, transform_indices = @transform_3, window_bounds = array<i64: 8, 1>}, {pipeline_mode = #tpu.pipeline_mode<synchronous>, transform_indices = @transform_4, window_bounds = array<i64: 32, 16>}, {pipeline_mode = #tpu.pipeline_mode<synchronous>, transform_indices = @transform_5, window_bounds = array<i64: 1, 16>}, {transform_indices = @transform_6, window_bounds = array<i64: 1, 8, 16>}]} {
    %c0 = arith.constant 0 : index
    %c0_0 = arith.constant 0 : index
    %0 = vector.load %arg3[%c0, %c0_0] : memref<32x8xbf16, #tpu.memory_space<vmem>>, vector<32x8xbf16>
    %c0_1 = arith.constant 0 : index
    %c0_2 = arith.constant 0 : index
    %c0_3 = arith.constant 0 : index
    %1 = vector.load %arg1[%c0_1, %c0_2, %c0_3] : memref<1x16x32xf32, #tpu.memory_space<vmem>>, vector<1x16x32xf32>
    %2 = vector.shape_cast %1 : vector<1x16x32xf32> to vector<16x32xf32>
    %3 = arith.truncf %2 : vector<16x32xf32> to vector<16x32xbf16>
    %cst = arith.constant dense<0.000000e+00> : vector<8x16xf32>
    %4 = tpu.matmul %0, %3, %cst {dimension_numbers = #tpu.dot_dimension_numbers<[0], [1], [1], [0], [0, 1, 1, 0], [], []>} : vector<32x8xbf16>, vector<16x32xbf16>, vector<8x16xf32> -> vector<8x16xf32>
    %c0_4 = arith.constant 0 : index
    %c0_5 = arith.constant 0 : index
    %c0_6 = arith.constant 0 : index
    %5 = vector.load %arg2[%c0_4, %c0_5, %c0_6] : memref<1x8x32xf32, #tpu.memory_space<vmem>>, vector<1x8x32xf32>
    %6 = vector.shape_cast %5 : vector<1x8x32xf32> to vector<8x32xf32>
    %7 = arith.truncf %6 : vector<8x32xf32> to vector<8x32xbf16>
    %c0_7 = arith.constant 0 : index
    %c0_8 = arith.constant 0 : index
    %8 = vector.load %arg5[%c0_7, %c0_8] : memref<32x16xbf16, #tpu.memory_space<vmem>>, vector<32x16xbf16>
    %cst_9 = arith.constant dense<0.000000e+00> : vector<8x16xf32>
    %9 = tpu.matmul %7, %8, %cst_9 {dimension_numbers = #tpu.dot_dimension_numbers<[1], [0], [0], [1], [0, 0, 1, 1], [], []>} : vector<8x32xbf16>, vector<32x16xbf16>, vector<8x16xf32> -> vector<8x16xf32>
    %10 = arith.addf %4, %9 : vector<8x16xf32>
    %c0_10 = arith.constant 0 : index
    %c0_11 = arith.constant 0 : index
    %11 = vector.load %arg4[%c0_10, %c0_11] : memref<8x1xf32, #tpu.memory_space<vmem>>, vector<8x1xf32>
    %12 = vector.broadcast %11 : vector<8x1xf32> to vector<8x16xf32>
    %13 = arith.addf %10, %12 : vector<8x16xf32>
    %c0_12 = arith.constant 0 : index
    %c0_13 = arith.constant 0 : index
    %14 = vector.load %arg6[%c0_12, %c0_13] : memref<1x16xf32, #tpu.memory_space<vmem>>, vector<1x16xf32>
    %15 = vector.broadcast %14 : vector<1x16xf32> to vector<8x16xf32>
    %16 = arith.addf %13, %15 : vector<8x16xf32>
    %c0_14 = arith.constant 0 : index
    %c0_15 = arith.constant 0 : index
    %c0_16 = arith.constant 0 : index
    %17 = vector.load %arg7[%c0_14, %c0_15, %c0_16] : memref<1x8x16xf32, #tpu.memory_space<vmem>>, vector<1x8x16xf32>
    %18 = vector.shape_cast %17 : vector<1x8x16xf32> to vector<8x16xf32>
    %19 = vector.shape_cast %16 : vector<8x16xf32> to vector<1x8x16xf32>
    tpu.vector_store %arg7[%c0_14, %c0_15, %c0_16], %19 {strides = array<i32>} : memref<1x8x16xf32, #tpu.memory_space<vmem>>, vector<1x8x16xf32>,
    return
  }
  func.func @transform_0(%arg0: i32) -> (i32, i32, i32) {
    %c0_i32 = arith.constant 0 : i32
    %c0_i32_0 = arith.constant 0 : i32
    %c0_i32_1 = arith.constant 0 : i32
    return %arg0, %c0_i32, %c0_i32_0 : i32, i32, i32
  }
  func.func @transform_1(%arg0: i32) -> (i32, i32, i32) {
    %c0_i32 = arith.constant 0 : i32
    %c0_i32_0 = arith.constant 0 : i32
    %c0_i32_1 = arith.constant 0 : i32
    return %arg0, %c0_i32, %c0_i32_0 : i32, i32, i32
  }
  func.func @transform_2(%arg0: i32) -> (i32, i32) {
    %c0_i32 = arith.constant 0 : i32
    %c0_i32_0 = arith.constant 0 : i32
    %c0_i32_1 = arith.constant 0 : i32
    return %c0_i32, %c0_i32_0 : i32, i32
  }
  func.func @transform_3(%arg0: i32) -> (i32, i32) {
    %c0_i32 = arith.constant 0 : i32
    %c0_i32_0 = arith.constant 0 : i32
    %c0_i32_1 = arith.constant 0 : i32
    return %c0_i32, %c0_i32_0 : i32, i32
  }
  func.func @transform_4(%arg0: i32) -> (i32, i32) {
    %c0_i32 = arith.constant 0 : i32
    %c0_i32_0 = arith.constant 0 : i32
    %c0_i32_1 = arith.constant 0 : i32
    return %c0_i32, %c0_i32_0 : i32, i32
  }
  func.func @transform_5(%arg0: i32) -> (i32, i32) {
    %c0_i32 = arith.constant 0 : i32
    %c0_i32_0 = arith.constant 0 : i32
    %c0_i32_1 = arith.constant 0 : i32
    return %c0_i32, %c0_i32_0 : i32, i32
  }
  func.func @transform_6(%arg0: i32) -> (i32, i32, i32) {
    %c0_i32 = arith.constant 0 : i32
    %c0_i32_0 = arith.constant 0 : i32
    %c0_i32_1 = arith.constant 0 : i32
    return %arg0, %c0_i32, %c0_i32_0 : i32, i32, i32
  }
}

</mosaic_0001>

<llo_original>
// kernel: _lambda_.21
$region0: #{_lambda_.21}
  #allocation0 [shape = 'u32[]', space=smem, size = 0x4, offset = 0x4, fixed_abs, tag = 'smem constant byte address 0x4 - core index']
  #allocation1 [shape = 'u32[72,128]{1,0:T(1,128)}', space=vmem, size = 0x9000, scoped, tag = 'internal scratch']
  %s0 = inlined_call_operand.vmem [shape: bf16[2,4,16,8], index: 0, kind: input, shape index: {}]
  %s1 = inlined_call_operand.vmem [shape: bf16[2,4,16,8], index: 1, kind: input, shape index: {}]
  %s2 = inlined_call_operand.vmem [shape: bf16[2,4,16,8], index: 2, kind: input, shape index: {}]
  %s3 = inlined_call_operand.vmem [shape: bf16[2,4,16,8], index: 3, kind: output, shape index: {}]
  %s4 = sld [smem:[#allocation0]]
  $region45: #{_lambda_.21} parent=0
    _
  %s6 = ssub.s32 1, %s4
  %s7 = scalar_select 0, %s6, %s4
  loop: start=0, step=1, limit=10
  $region2: #{_lambda_.21} parent=0 // loop_pre_header
    _
  $region3: #{_lambda_.21} parent=0 // loop_header
    %s9 = sphi 0, %s13
    %p10 = scmp.ge.s32.totalorder %s9, 10
    %s16 = sphi 0, %s35
    %s17 = sphi 0, %s31
    %s18 = sphi 0, %s27
    %s19 = sphi 0, %s16
    %s20 = sphi 0, %s17
    %s21 = sphi 0, %s18
    %s22 = sphi 0, %s19
    %s23 = sphi 0, %s20
    %s24 = sphi 0, %s21
    %s42 = sphi 0, %s44
    %s45 = sphi 0, %s42
    %s46 = sphi 0, %s45
    %s62 = sphi 0, %s46
    %s70 = sphi 0, %s72
    %s73 = sphi 0, %s70
    %s74 = sphi 0, %s73
    %s90 = sphi 0, %s74
    %s98 = sphi 0, %s100
    %s101 = sphi 0, %s98
    %s102 = sphi 0, %s101
    %s118 = sphi 0, %s102
    %s128 = sphi 0, %s130
    %s131 = sphi 0, %s128
    %s132 = sphi 0, %s131
    %s148 = sphi 0, %s132
  $region4: #{_lambda_.21} parent=0 // loop_header_branch
    %12 = sbr.rel (%p10) target = $region8
  $region5: #{_lambda_.21} parent=0 // loop_body
    %s14 = ssub.s32 %s9, 1
    %s15 = ssub.s32 %s9, 2
    %s25 = sadd.s32 1, %s18
    %p26 = scmp.ge.s32.totalorder %s25, 1
    %s27 = scalar_select %p26, 0, %s25
    %s28 = sadd.s32 1, %s17
    %s29 = scalar_select %p26, %s28, %s17
    %p30 = scmp.ge.s32.totalorder %s29, 4
    %s31 = scalar_select %p30, 0, %s29
    %s32 = sadd.s32 1, %s16
    %s33 = scalar_select %p30, %s32, %s16
    %p34 = scmp.ge.s32.totalorder %s33, 2
    %s35 = scalar_select %p34, 0, %s33
    %s36 = ssub.s32 %s16, %s35
    %s37 = ssub.s32 %s17, %s31
    %s38 = sor.u32 %s36, %s37
    %s39 = ssub.s32 %s18, %s27
    %s40 = sor.u32 %s38, %s39
    %p41 = scmp.eq.s32.totalorder %s40, 0
    %s43 = sadd.s32 %s42, 1
    %s44 = scalar_select %p41, %s42, %s43
    %p47 = pneg %p41
    %p48 = scmp.eq.s32.totalorder %s9, 7
    %p49 = por %p47, %p48
    %p50 = scmp.ne.s32.totalorder %s42, %s45
    %p51 = scmp.eq.s32.totalorder %s9, 0
    %p52 = por %p50, %p51
    %p53 = scmp.ne.s32.totalorder %s42, %s45
    %p54 = scmp.eq.s32.totalorder %s14, 7
    %p55 = por %p53, %p54
    %p56 = scmp.ne.s32.totalorder %s45, %s46
    %p57 = scmp.eq.s32.totalorder %s14, 0
    %p58 = por %p56, %p57
    %p59 = scmp.ne.s32.totalorder %s45, %s46
    %p60 = scmp.eq.s32.totalorder %s15, 7
    %p61 = por %p59, %p60
    %p63 = scmp.ne.s32.totalorder %s46, %s62
    %p64 = scmp.eq.s32.totalorder %s15, 0
    %p65 = por %p63, %p64
    %s66 = ssub.s32 %s16, %s35
    %s67 = ssub.s32 %s17, %s31
    %s68 = sor.u32 %s66, %s67
    %p69 = scmp.eq.s32.totalorder %s68, 0
    %s71 = sadd.s32 %s70, 1
    %s72 = scalar_select %p69, %s70, %s71
    %p75 = pneg %p69
    %p76 = scmp.eq.s32.totalorder %s9, 7
    %p77 = por %p75, %p76
    %p78 = scmp.ne.s32.totalorder %s70, %s73
    %p79 = scmp.eq.s32.totalorder %s9, 0
    %p80 = por %p78, %p79
    %p81 = scmp.ne.s32.totalorder %s70, %s73
    %p82 = scmp.eq.s32.totalorder %s14, 7
    %p83 = por %p81, %p82
    %p84 = scmp.ne.s32.totalorder %s73, %s74
    %p85 = scmp.eq.s32.totalorder %s14, 0
    %p86 = por %p84, %p85
    %p87 = scmp.ne.s32.totalorder %s73, %s74
    %p88 = scmp.eq.s32.totalorder %s15, 7
    %p89 = por %p87, %p88
    %p91 = scmp.ne.s32.totalorder %s74, %s90
    %p92 = scmp.eq.s32.totalorder %s15, 0
    %p93 = por %p91, %p92
    %s94 = ssub.s32 %s16, %s35
    %s95 = ssub.s32 %s17, %s31
    %s96 = sor.u32 %s94, %s95
    %p97 = scmp.eq.s32.totalorder %s96, 0
    %s99 = sadd.s32 %s98, 1
    %s100 = scalar_select %p97, %s98, %s99
    %p103 = pneg %p97
    %p104 = scmp.eq.s32.totalorder %s9, 7
    %p105 = por %p103, %p104
    %p106 = scmp.ne.s32.totalorder %s98, %s101
    %p107 = scmp.eq.s32.totalorder %s9, 0
    %p108 = por %p106, %p107
    %p109 = scmp.ne.s32.totalorder %s98, %s101
    %p110 = scmp.eq.s32.totalorder %s14, 7
    %p111 = por %p109, %p110
    %p112 = scmp.ne.s32.totalorder %s101, %s102
    %p113 = scmp.eq.s32.totalorder %s14, 0
    %p114 = por %p112, %p113
    %p115 = scmp.ne.s32.totalorder %s101, %s102
    %p116 = scmp.eq.s32.totalorder %s15, 7
    %p117 = por %p115, %p116
    %p119 = scmp.ne.s32.totalorder %s102, %s118
    %p120 = scmp.eq.s32.totalorder %s15, 0
    %p121 = por %p119, %p120
    %s122 = ssub.s32 %s16, %s35
    %s123 = ssub.s32 %s17, %s31
    %s124 = sor.u32 %s122, %s123
    %s125 = ssub.s32 %s18, %s27
    %s126 = sor.u32 %s124, %s125
    %p127 = scmp.eq.s32.totalorder %s126, 0
    %s129 = sadd.s32 %s128, 1
    %s130 = scalar_select %p127, %s128, %s129
    %p133 = pneg %p127
    %p134 = scmp.eq.s32.totalorder %s9, 7
    %p135 = por %p133, %p134
    %p136 = scmp.ne.s32.totalorder %s128, %s131
    %p137 = scmp.eq.s32.totalorder %s9, 0
    %p138 = por %p136, %p137
    %p139 = scmp.ne.s32.totalorder %s128, %s131
    %p140 = scmp.eq.s32.totalorder %s14, 7
    %p141 = por %p139, %p140
    %p142 = scmp.ne.s32.totalorder %s131, %s132
    %p143 = scmp.eq.s32.totalorder %s14, 0
    %p144 = por %p142, %p143
    %p145 = scmp.ne.s32.totalorder %s131, %s132
    %p146 = scmp.eq.s32.totalorder %s15, 7
    %p147 = por %p145, %p146
    %p149 = scmp.ne.s32.totalorder %s132, %s148
    %p150 = scmp.eq.s32.totalorder %s15, 0
    %p151 = por %p149, %p150
    %p152 = scmp.le.s32.totalorder 1, %s9
    %p153 = scmp.lt.s32.totalorder %s9, 9
    %p154 = pnand %p152, %p153
    %p155 = pneg %p154
    // Predicated region
    $region9: #{_lambda_.21} parent=5 // pred_check
      _
    $region10: #{_lambda_.21} parent=5 // pred_check_branch
      %157 = sbr.rel (%p154) target = $region12
    $region11: #{_lambda_.21} parent=5 // pred_region
      %s158 = ssub.s32 %s9, 1
    $region12: #{_lambda_.21} parent=5 // pred_fallthru
      _
    %p159 = scmp.lt.s32.totalorder %s9, 8
    // Predicated region
    $region13: #{_lambda_.21} parent=5 // pred_check
      %p160 = pneg %p159
    $region14: #{_lambda_.21} parent=5 // pred_check_branch
      %162 = sbr.rel (%p160) target = $region16
    $region15: #{_lambda_.21} parent=5 // pred_region
      // Predicated region
      $region17: #{_lambda_.21} parent=15 // pred_check
        %p163 = pneg %p52
      $region18: #{_lambda_.21} parent=15 // pred_check_branch
        %165 = sbr.rel (%p163) target = $region20
      $region19: #{_lambda_.21} parent=15 // pred_region
        %s166 = smul.u32 2, %s18
        %p167 = scmp.lt.s32.totalorder %s16, 1
        %s168 = scalar_select %p167, %s16, 1
        %p169 = scmp.lt.s32.totalorder %s17, 3
        %s170 = scalar_select %p169, %s17, 3
        %p171 = scmp.lt.s32.totalorder %s166, 1
        %s172 = scalar_select %p171, %s166, 1
        %s173 = smul.addr %s170, 2
        %s174 = sadd.s32 %s172, %s173
        %s175 = smul.addr %s168, 8
        %s176 = sadd.s32 %s174, %s175
        %s177 = smul.addr %s176, 4
        %s178 = scalar_lea.vmem %s0, %s177
        %s179 = smul.u32 2, %s18
      $region20: #{_lambda_.21} parent=15 // pred_fallthru
        _
      // Predicated region
      $region21: #{_lambda_.21} parent=15 // pred_check
        %p180 = pneg %p80
      $region22: #{_lambda_.21} parent=15 // pred_check_branch
        %182 = sbr.rel (%p180) target = $region24
      $region23: #{_lambda_.21} parent=15 // pred_region
        %p183 = scmp.lt.s32.totalorder %s16, 1
        %s184 = scalar_select %p183, %s16, 1
        %p185 = scmp.lt.s32.totalorder %s17, 3
        %s186 = scalar_select %p185, %s17, 3
        %s187 = smul.addr %s186, 2
        %s188 = smul.addr %s184, 8
        %s189 = sadd.s32 %s187, %s188
        %s190 = smul.addr %s189, 4
        %s191 = scalar_lea.vmem %s1, %s190
      $region24: #{_lambda_.21} parent=15 // pred_fallthru
        _
      // Predicated region
      $region25: #{_lambda_.21} parent=15 // pred_check
        %p192 = pneg %p108
      $region26: #{_lambda_.21} parent=15 // pred_check_branch
        %194 = sbr.rel (%p192) target = $region28
      $region27: #{_lambda_.21} parent=15 // pred_region
        %p195 = scmp.lt.s32.totalorder %s16, 1
        %s196 = scalar_select %p195, %s16, 1
        %p197 = scmp.lt.s32.totalorder %s17, 3
        %s198 = scalar_select %p197, %s17, 3
        %s199 = smul.addr %s198, 2
        %s200 = smul.addr %s196, 8
        %s201 = sadd.s32 %s199, %s200
        %s202 = smul.addr %s201, 4
        %s203 = scalar_lea.vmem %s2, %s202
      $region28: #{_lambda_.21} parent=15 // pred_fallthru
        _
    $region16: #{_lambda_.21} parent=5 // pred_fallthru
      _
    %p204 = scmp.le.s32.totalorder 1, %s9
    %p205 = scmp.lt.s32.totalorder %s9, 9
    %p206 = pnand %p204, %p205
    %p207 = pneg %p206
    // Predicated region
    $region29: #{_lambda_.21} parent=5 // pred_check
      _
    $region30: #{_lambda_.21} parent=5 // pred_check_branch
      %209 = sbr.rel (%p206) target = $region32
    $region31: #{_lambda_.21} parent=5 // pred_region
      %s210 = ssub.s32 %s9, 1
      %s211 = smul.u32 2, %s21
      %p212 = scmp.lt.s32.totalorder %s19, 1
      %s213 = scalar_select %p212, %s19, 1
      %p214 = scmp.lt.s32.totalorder %s20, 3
      %s215 = scalar_select %p214, %s20, 3
      %p216 = scmp.lt.s32.totalorder %s211, 1
      %s217 = scalar_select %p216, %s211, 1
      %s218 = smul.addr %s215, 2
      %s219 = sadd.s32 %s217, %s218
      %s220 = smul.addr %s213, 8
      %s221 = sadd.s32 %s219, %s220
      %s222 = smul.addr %s221, 4
      %s223 = scalar_lea.vmem %s0, %s222
      %p224 = pneg %p58
      %p225 = pneg %p55
      %p226 = scmp.lt.s32.totalorder %s19, 1
      %s227 = scalar_select %p226, %s19, 1
      %p228 = scmp.lt.s32.totalorder %s20, 3
      %s229 = scalar_select %p228, %s20, 3
      %s230 = smul.addr %s229, 2
      %s231 = smul.addr %s227, 8
      %s232 = sadd.s32 %s230, %s231
      %s233 = smul.addr %s232, 4
      %s234 = scalar_lea.vmem %s1, %s233
      %p235 = pneg %p86
      %p236 = pneg %p83
      %p237 = scmp.lt.s32.totalorder %s19, 1
      %s238 = scalar_select %p237, %s19, 1
      %p239 = scmp.lt.s32.totalorder %s20, 3
      %s240 = scalar_select %p239, %s20, 3
      %s241 = smul.addr %s240, 2
      %s242 = smul.addr %s238, 8
      %s243 = sadd.s32 %s241, %s242
      %s244 = smul.addr %s243, 4
      %s245 = scalar_lea.vmem %s2, %s244
      %p246 = pneg %p114
      %p247 = pneg %p111
      %p248 = pneg %p144
      %p249 = pneg %p141
      %s250 = smul.u32 2, %s21
      %p251 = scmp.lt.s32.totalorder %s19, 1
      %s252 = scalar_select %p251, %s19, 1
      %p253 = scmp.lt.s32.totalorder %s20, 3
      %s254 = scalar_select %p253, %s20, 3
      %p255 = scmp.lt.s32.totalorder %s250, 1
      %s256 = scalar_select %p255, %s250, 1
      %s257 = smul.addr %s254, 2
      %s258 = sadd.s32 %s256, %s257
      %s259 = smul.addr %s252, 8
      %s260 = sadd.s32 %s258, %s259
      %s261 = smul.addr %s260, 4
      %s262 = scalar_lea.vmem %s3, %s261
      %s263 = smul.u32 2, %s21
      %p264 = scmp.lt.s32.totalorder %s19, 1
      %s265 = scalar_select %p264, %s19, 1
      %p266 = scmp.lt.s32.totalorder %s20, 3
      %s267 = scalar_select %p266, %s20, 3
      %p268 = scmp.lt.s32.totalorder %s263, 1
      %s269 = scalar_select %p268, %s263, 1
      %s270 = smul.addr %s267, 2
      %s271 = sadd.s32 %s269, %s270
      %s272 = smul.addr %s265, 8
      %s273 = sadd.s32 %s271, %s272
      %s274 = smul.addr %s273, 4
      %s275 = scalar_lea.vmem %s0, %s274
      %s276 = smul.u32 2, %s21
      %p277 = scmp.lt.s32.totalorder %s19, 1
      %s278 = scalar_select %p277, %s19, 1
      %p279 = scmp.lt.s32.totalorder %s20, 3
      %s280 = scalar_select %p279, %s20, 3
      %s281 = smul.addr %s280, 2
      %s282 = smul.addr %s278, 8
      %s283 = sadd.s32 %s281, %s282
      %s284 = smul.addr %s283, 4
      %s285 = scalar_lea.vmem %s1, %s284
      %p286 = scmp.lt.s32.totalorder %s19, 1
      %s287 = scalar_select %p286, %s19, 1
      %p288 = scmp.lt.s32.totalorder %s20, 3
      %s289 = scalar_select %p288, %s20, 3
      %s290 = smul.addr %s289, 2
      %s291 = smul.addr %s287, 8
      %s292 = sadd.s32 %s290, %s291
      %s293 = smul.addr %s292, 4
      %s294 = scalar_lea.vmem %s2, %s293
      %s295 = smul.u32 2, %s21
      %p296 = scmp.lt.s32.totalorder %s19, 1
      %s297 = scalar_select %p296, %s19, 1
      %p298 = scmp.lt.s32.totalorder %s20, 3
      %s299 = scalar_select %p298, %s20, 3
      %p300 = scmp.lt.s32.totalorder %s295, 1
      %s301 = scalar_select %p300, %s295, 1
      %s302 = smul.addr %s299, 2
      %s303 = sadd.s32 %s301, %s302
      %s304 = smul.addr %s297, 8
      %s305 = sadd.s32 %s303, %s304
      %s306 = smul.addr %s305, 4
      %s307 = scalar_lea.vmem %s3, %s306
      %s308 = smul.u32 2, %s21
      %v310 = vld [vmem:[%s275] sm:$0xf]
      %v311 = vld [vmem:[%s275 + $0x4] sm:$0xf]
      %v312 = vld [vmem:[%s285] sm:$0xf]
      %v313 = vld [vmem:[%s285 + $0x4] sm:$0xf]
      %v316 = vunpack.c.l.b16 %v310
      %v317 = vunpack.c.l.b16 %v311
      %v318 = vpack.c.b16 %v317, %v316
      %v321 = vunpack.c.l.b16 %v312
      %v322 = vunpack.c.l.b16 %v313
      %v323 = vpack.c.b16 %v322, %v321
      %vm324 = vcmask 64512
      %v326 = vsel %vm324, %v318, 0
      %v329 = vsel %vm324, %v323, 0
      %331 = vmatpush.bf16.xpose.msra.mxu0 0
      %332 = vmatpush.bf16.xpose.msra.mxu0 0
      %333 = vmatpush.bf16.xpose.msra.mxu0 0
      %334 = vmatpush.bf16.xpose.msra.mxu0 0
      %335 = vmatpush.bf16.xpose.msra.mxu0 0
      %336 = vmatpush.bf16.xpose.msra.mxu0 0
      %337 = vmatpush.bf16.xpose.msra.mxu0 0
      %338 = vmatpush.bf16.xpose.msra.mxu0 %v329
      %339 = vmatmul.bf16.gmra.mxu0 %v326
      %v340 = vpop.f32.mrf.mxu0
      %v341 = vadd.f32 0.0, %v340
      %v342 = vpop.f32.mrf.mxu0
      %v343 = vadd.f32 0.0, %v342
      %344 = vdwg.mxu0
      %v345 = vmul.f32 %v341, 0.35355338
      %v346 = vmul.f32 %v343, 0.35355338
      %vm347 = vcmask 130048
      %v348 = vsel %vm347, %v345, -inf
      %349 = vmax.xlane.f32.xlu0 %v348
      %v350 = vpop.xlane.xlu0 %349
      %v351 = vsel %vm347, %v346, -inf
      %352 = vmax.xlane.f32.xlu0 %v351
      %v353 = vpop.xlane.xlu0 %352
      %v354 = vsub.f32 %v345, %v350
      %v355 = vsub.f32 %v346, %v353
      %v356 = vmul.f32 %v354, 1.442695
      %v357 = vpow.pop %v356
      %v358 = vmul.f32 %v355, 1.442695
      %v359 = vpow.pop %v358
      %v360 = vsel %vm347, %v357, 0.0
      %361 = vadd.xlane.f32.xlu0 %v360
      %v362 = vpop.xlane.xlu0 %361
      %v363 = vsel %vm347, %v359, 0.0
      %364 = vadd.xlane.f32.xlu0 %v363
      %v365 = vpop.xlane.xlu0 %364
      %v366 = vrcp.pop %v362
      %v367 = vrcp.pop %v365
      %v368 = vmul.f32 %v357, %v366
      %v369 = vmul.f32 %v359, %v367
      %v370 = vpack.c.bf16 %v369, %v368
      %v371 = vld [vmem:[%s294] sm:$0xf]
      %v372 = vld [vmem:[%s294 + $0x4] sm:$0xf]
      %v375 = vunpack.c.l.b16 %v371
      %v376 = vunpack.c.l.b16 %v372
      %v377 = vpack.c.b16 %v376, %v375
      %v380 = vsel %vm347, %v370, 0
      %382 = vmatpush.bf16.msra.mxu0 0
      %383 = vmatpush.bf16.msra.mxu0 0
      %384 = vmatpush.bf16.msra.mxu0 0
      %385 = vmatpush.bf16.msra.mxu0 0
      %386 = vmatpush.bf16.msra.mxu0 0
      %387 = vmatpush.bf16.msra.mxu0 0
      %388 = vmatpush.bf16.msra.mxu0 0
      %389 = vmatpush.bf16.msra.mxu0 %v377
      %390 = vmatmul.bf16.gmra.mxu0 %v380
      %v391 = vpop.f32.mrf.mxu0
      %v392 = vadd.f32 0.0, %v391
      %v393 = vpop.f32.mrf.mxu0
      %v394 = vadd.f32 0.0, %v393
      %395 = vdwg.mxu0
      %v396 = vpack.c.bf16 %v392, %v392
      %v397 = vpack.c.bf16 %v394, %v394
      %vm398 = vcmask 60416
      %399 = vst.msk [vmem:[%s307] sm:$0xf] %vm398, %v396
      %400 = vst.msk [vmem:[%s307 + $0x4] sm:$0xf] %vm398, %v397
      %s401 = smul.u32 2, %s21
      %p402 = scmp.lt.s32.totalorder %s19, 1
      %s403 = scalar_select %p402, %s19, 1
      %p404 = scmp.lt.s32.totalorder %s20, 3
      %s405 = scalar_select %p404, %s20, 3
      %p406 = scmp.lt.s32.totalorder %s401, 1
      %s407 = scalar_select %p406, %s401, 1
      %s408 = smul.addr %s405, 2
      %s409 = sadd.s32 %s407, %s408
      %s410 = smul.addr %s403, 8
      %s411 = sadd.s32 %s409, %s410
      %s412 = smul.addr %s411, 4
      %s413 = scalar_lea.vmem %s3, %s412
      // Predicated region
      $region33: #{_lambda_.21} parent=31 // pred_check
        %p414 = pneg %p141
      $region34: #{_lambda_.21} parent=31 // pred_check_branch
        %416 = sbr.rel (%p414) target = $region36
      $region35: #{_lambda_.21} parent=31 // pred_region
        %s417 = smul.u32 2, %s21
      $region36: #{_lambda_.21} parent=31 // pred_fallthru
        _
    $region32: #{_lambda_.21} parent=5 // pred_fallthru
      _
    %p418 = scmp.le.s32.totalorder 2, %s9
    // Predicated region
    $region37: #{_lambda_.21} parent=5 // pred_check
      %p419 = pneg %p418
    $region38: #{_lambda_.21} parent=5 // pred_check_branch
      %421 = sbr.rel (%p419) target = $region40
    $region39: #{_lambda_.21} parent=5 // pred_region
      %s422 = ssub.s32 %s9, 2
      // Predicated region
      $region41: #{_lambda_.21} parent=39 // pred_check
        %p423 = pneg %p147
      $region42: #{_lambda_.21} parent=39 // pred_check_branch
        %425 = sbr.rel (%p423) target = $region44
      $region43: #{_lambda_.21} parent=39 // pred_region
        %s426 = smul.u32 2, %s24
        %p427 = scmp.lt.s32.totalorder %s22, 1
        %s428 = scalar_select %p427, %s22, 1
        %p429 = scmp.lt.s32.totalorder %s23, 3
        %s430 = scalar_select %p429, %s23, 3
        %p431 = scmp.lt.s32.totalorder %s426, 1
        %s432 = scalar_select %p431, %s426, 1
        %s433 = smul.addr %s430, 2
        %s434 = sadd.s32 %s432, %s433
        %s435 = smul.addr %s428, 8
        %s436 = sadd.s32 %s434, %s435
        %s437 = smul.addr %s436, 4
        %s438 = scalar_lea.vmem %s3, %s437
      $region44: #{_lambda_.21} parent=39 // pred_fallthru
        _
    $region40: #{_lambda_.21} parent=5 // pred_fallthru
      _
  $region6: #{_lambda_.21} parent=0 // loop_footer
    %s13 = sadd.s32 1, %s9
  $region7: #{_lambda_.21} parent=0 // loop_footer_branch
    %8 = sbr.rel target = $region3
  $region8: #{_lambda_.21} parent=0 // loop_exit
    _

// kernel: _lambda_.19
$region0: #{_lambda_.19}
  #allocation0 [shape = 'u32[]', space=smem, size = 0x4, offset = 0x4, fixed_abs, tag = 'smem constant byte address 0x4 - core index']
  #allocation1 [shape = 'u32[72,128]{1,0:T(1,128)}', space=vmem, size = 0x9000, scoped, tag = 'internal scratch']
  %s0 = inlined_call_operand.vmem [shape: f32[2,16,8], index: 0, kind: input, shape index: {}]
  %s1 = inlined_call_operand.vmem [shape: bf16[8,32], index: 1, kind: input, shape index: {}]
  %s2 = inlined_call_operand.vmem [shape: f32[1,32], index: 2, kind: input, shape index: {}]
  %s3 = inlined_call_operand.vmem [shape: f32[16,32], index: 3, kind: input, shape index: {}]
  %s4 = inlined_call_operand.vmem [shape: f32[2,16,32], index: 4, kind: output, shape index: {}]
  %s5 = sld [smem:[#allocation0]]
  $region49: #{_lambda_.19} parent=0
    _
  %s7 = ssub.s32 1, %s5
  %s8 = scalar_select 0, %s7, %s5
  loop: start=0, step=1, limit=4
  $region2: #{_lambda_.19} parent=0 // loop_pre_header
    _
  $region3: #{_lambda_.19} parent=0 // loop_header
    %s10 = sphi 0, %s14
    %p11 = scmp.ge.s32.totalorder %s10, 4
    %s17 = sphi 0, %s29
    %s18 = sphi 0, %s25
    %s19 = sphi 0, %s17
    %s20 = sphi 0, %s18
    %s21 = sphi 0, %s19
    %s22 = sphi 0, %s20
    %s34 = sphi 0, %s36
    %s37 = sphi 0, %s34
    %s38 = sphi 0, %s37
    %s54 = sphi 0, %s38
    %s58 = sphi 0, %s58
    %s60 = sphi 0, %s58
    %s61 = sphi 0, %s60
    %s75 = sphi 0, %s61
    %s79 = sphi 0, %s79
    %s81 = sphi 0, %s79
    %s82 = sphi 0, %s81
    %s96 = sphi 0, %s82
    %s102 = sphi 0, %s104
    %s105 = sphi 0, %s102
    %s106 = sphi 0, %s105
    %s122 = sphi 0, %s106
    %s130 = sphi 0, %s132
    %s133 = sphi 0, %s130
    %s134 = sphi 0, %s133
    %s150 = sphi 0, %s134
  $region4: #{_lambda_.19} parent=0 // loop_header_branch
    %13 = sbr.rel (%p11) target = $region8
  $region5: #{_lambda_.19} parent=0 // loop_body
    %s15 = ssub.s32 %s10, 1
    %s16 = ssub.s32 %s10, 2
    %s23 = sadd.s32 1, %s18
    %p24 = scmp.ge.s32.totalorder %s23, 1
    %s25 = scalar_select %p24, 0, %s23
    %s26 = sadd.s32 1, %s17
    %s27 = scalar_select %p24, %s26, %s17
    %p28 = scmp.ge.s32.totalorder %s27, 2
    %s29 = scalar_select %p28, 0, %s27
    %s30 = ssub.s32 %s17, %s29
    %s31 = ssub.s32 %s18, %s25
    %s32 = sor.u32 %s30, %s31
    %p33 = scmp.eq.s32.totalorder %s32, 0
    %s35 = sadd.s32 %s34, 1
    %s36 = scalar_select %p33, %s34, %s35
    %p39 = pneg %p33
    %p40 = scmp.eq.s32.totalorder %s10, 1
    %p41 = por %p39, %p40
    %p42 = scmp.ne.s32.totalorder %s34, %s37
    %p43 = scmp.eq.s32.totalorder %s10, 0
    %p44 = por %p42, %p43
    %p45 = scmp.ne.s32.totalorder %s34, %s37
    %p46 = scmp.eq.s32.totalorder %s15, 1
    %p47 = por %p45, %p46
    %p48 = scmp.ne.s32.totalorder %s37, %s38
    %p49 = scmp.eq.s32.totalorder %s15, 0
    %p50 = por %p48, %p49
    %p51 = scmp.ne.s32.totalorder %s37, %s38
    %p52 = scmp.eq.s32.totalorder %s16, 1
    %p53 = por %p51, %p52
    %p55 = scmp.ne.s32.totalorder %s38, %s54
    %p56 = scmp.eq.s32.totalorder %s16, 0
    %p57 = por %p55, %p56
    %s59 = sadd.s32 %s58, 1
    %p62 = scmp.eq.s32.totalorder %s10, 1
    %p63 = scmp.ne.s32.totalorder %s58, %s60
    %p64 = scmp.eq.s32.totalorder %s10, 0
    %p65 = por %p63, %p64
    %p66 = scmp.ne.s32.totalorder %s58, %s60
    %p67 = scmp.eq.s32.totalorder %s15, 1
    %p68 = por %p66, %p67
    %p69 = scmp.ne.s32.totalorder %s60, %s61
    %p70 = scmp.eq.s32.totalorder %s15, 0
    %p71 = por %p69, %p70
    %p72 = scmp.ne.s32.totalorder %s60, %s61
    %p73 = scmp.eq.s32.totalorder %s16, 1
    %p74 = por %p72, %p73
    %p76 = scmp.ne.s32.totalorder %s61, %s75
    %p77 = scmp.eq.s32.totalorder %s16, 0
    %p78 = por %p76, %p77
    %s80 = sadd.s32 %s79, 1
    %p83 = scmp.eq.s32.totalorder %s10, 1
    %p84 = scmp.ne.s32.totalorder %s79, %s81
    %p85 = scmp.eq.s32.totalorder %s10, 0
    %p86 = por %p84, %p85
    %p87 = scmp.ne.s32.totalorder %s79, %s81
    %p88 = scmp.eq.s32.totalorder %s15, 1
    %p89 = por %p87, %p88
    %p90 = scmp.ne.s32.totalorder %s81, %s82
    %p91 = scmp.eq.s32.totalorder %s15, 0
    %p92 = por %p90, %p91
    %p93 = scmp.ne.s32.totalorder %s81, %s82
    %p94 = scmp.eq.s32.totalorder %s16, 1
    %p95 = por %p93, %p94
    %p97 = scmp.ne.s32.totalorder %s82, %s96
    %p98 = scmp.eq.s32.totalorder %s16, 0
    %p99 = por %p97, %p98
    %s100 = ssub.s32 %s18, %s25
    %p101 = scmp.eq.s32.totalorder %s100, 0
    %s103 = sadd.s32 %s102, 1
    %s104 = scalar_select %p101, %s102, %s103
    %p107 = pneg %p101
    %p108 = scmp.eq.s32.totalorder %s10, 1
    %p109 = por %p107, %p108
    %p110 = scmp.ne.s32.totalorder %s102, %s105
    %p111 = scmp.eq.s32.totalorder %s10, 0
    %p112 = por %p110, %p111
    %p113 = scmp.ne.s32.totalorder %s102, %s105
    %p114 = scmp.eq.s32.totalorder %s15, 1
    %p115 = por %p113, %p114
    %p116 = scmp.ne.s32.totalorder %s105, %s106
    %p117 = scmp.eq.s32.totalorder %s15, 0
    %p118 = por %p116, %p117
    %p119 = scmp.ne.s32.totalorder %s105, %s106
    %p120 = scmp.eq.s32.totalorder %s16, 1
    %p121 = por %p119, %p120
    %p123 = scmp.ne.s32.totalorder %s106, %s122
    %p124 = scmp.eq.s32.totalorder %s16, 0
    %p125 = por %p123, %p124
    %s126 = ssub.s32 %s17, %s29
    %s127 = ssub.s32 %s18, %s25
    %s128 = sor.u32 %s126, %s127
    %p129 = scmp.eq.s32.totalorder %s128, 0
    %s131 = sadd.s32 %s130, 1
    %s132 = scalar_select %p129, %s130, %s131
    %p135 = pneg %p129
    %p136 = scmp.eq.s32.totalorder %s10, 1
    %p137 = por %p135, %p136
    %p138 = scmp.ne.s32.totalorder %s130, %s133
    %p139 = scmp.eq.s32.totalorder %s10, 0
    %p140 = por %p138, %p139
    %p141 = scmp.ne.s32.totalorder %s130, %s133
    %p142 = scmp.eq.s32.totalorder %s15, 1
    %p143 = por %p141, %p142
    %p144 = scmp.ne.s32.totalorder %s133, %s134
    %p145 = scmp.eq.s32.totalorder %s15, 0
    %p146 = por %p144, %p145
    %p147 = scmp.ne.s32.totalorder %s133, %s134
    %p148 = scmp.eq.s32.totalorder %s16, 1
    %p149 = por %p147, %p148
    %p151 = scmp.ne.s32.totalorder %s134, %s150
    %p152 = scmp.eq.s32.totalorder %s16, 0
    %p153 = por %p151, %p152
    %p154 = scmp.le.s32.totalorder 1, %s10
    %p155 = scmp.lt.s32.totalorder %s10, 3
    %p156 = pnand %p154, %p155
    %p157 = pneg %p156
    // Predicated region
    $region9: #{_lambda_.19} parent=5 // pred_check
      _
    $region10: #{_lambda_.19} parent=5 // pred_check_branch
      %159 = sbr.rel (%p156) target = $region12
    $region11: #{_lambda_.19} parent=5 // pred_region
      %s160 = ssub.s32 %s10, 1
      // Predicated region
      $region13: #{_lambda_.19} parent=11 // pred_check
        %p161 = pneg %p71
      $region14: #{_lambda_.19} parent=11 // pred_check_branch
        %163 = sbr.rel (%p161) target = $region16
      $region15: #{_lambda_.19} parent=11 // pred_region
        _
      $region16: #{_lambda_.19} parent=11 // pred_fallthru
        _
      // Predicated region
      $region17: #{_lambda_.19} parent=11 // pred_check
        %p164 = pneg %p92
      $region18: #{_lambda_.19} parent=11 // pred_check_branch
        %166 = sbr.rel (%p164) target = $region20
      $region19: #{_lambda_.19} parent=11 // pred_region
        _
      $region20: #{_lambda_.19} parent=11 // pred_fallthru
        _
      // Predicated region
      $region21: #{_lambda_.19} parent=11 // pred_check
        %p167 = pneg %p118
      $region22: #{_lambda_.19} parent=11 // pred_check_branch
        %169 = sbr.rel (%p167) target = $region24
      $region23: #{_lambda_.19} parent=11 // pred_region
        %s170 = smul.u32 2, %s20
        %p171 = scmp.lt.s32.totalorder %s170, 1
        %s172 = scalar_select %p171, %s170, 1
        %s173 = smul.addr %s172, 8
        %s174 = scalar_lea.vmem %s3, %s173
        %s175 = smul.u32 2, %s20
      $region24: #{_lambda_.19} parent=11 // pred_fallthru
        _
    $region12: #{_lambda_.19} parent=5 // pred_fallthru
      _
    %p176 = scmp.lt.s32.totalorder %s10, 2
    // Predicated region
    $region25: #{_lambda_.19} parent=5 // pred_check
      %p177 = pneg %p176
    $region26: #{_lambda_.19} parent=5 // pred_check_branch
      %179 = sbr.rel (%p177) target = $region28
    $region27: #{_lambda_.19} parent=5 // pred_region
      // Predicated region
      $region29: #{_lambda_.19} parent=27 // pred_check
        %p180 = pneg %p44
      $region30: #{_lambda_.19} parent=27 // pred_check_branch
        %182 = sbr.rel (%p180) target = $region32
      $region31: #{_lambda_.19} parent=27 // pred_region
        %s183 = smul.u32 2, %s18
        %p184 = scmp.lt.s32.totalorder %s17, 1
        %s185 = scalar_select %p184, %s17, 1
        %p186 = scmp.lt.s32.totalorder %s183, 1
        %s187 = scalar_select %p186, %s183, 1
        %s188 = smul.addr %s185, 2
        %s189 = sadd.s32 %s187, %s188
        %s190 = smul.addr %s189, 8
        %s191 = scalar_lea.vmem %s0, %s190
        %s192 = smul.u32 2, %s18
      $region32: #{_lambda_.19} parent=27 // pred_fallthru
        _
    $region28: #{_lambda_.19} parent=5 // pred_fallthru
      _
    %p193 = scmp.le.s32.totalorder 1, %s10
    %p194 = scmp.lt.s32.totalorder %s10, 3
    %p195 = pnand %p193, %p194
    %p196 = pneg %p195
    // Predicated region
    $region33: #{_lambda_.19} parent=5 // pred_check
      _
    $region34: #{_lambda_.19} parent=5 // pred_check_branch
      %198 = sbr.rel (%p195) target = $region36
    $region35: #{_lambda_.19} parent=5 // pred_region
      %s199 = ssub.s32 %s10, 1
      %s200 = smul.u32 2, %s20
      %p201 = scmp.lt.s32.totalorder %s19, 1
      %s202 = scalar_select %p201, %s19, 1
      %p203 = scmp.lt.s32.totalorder %s200, 1
      %s204 = scalar_select %p203, %s200, 1
      %s205 = smul.addr %s202, 2
      %s206 = sadd.s32 %s204, %s205
      %s207 = smul.addr %s206, 8
      %s208 = scalar_lea.vmem %s0, %s207
      %p209 = pneg %p50
      %p210 = pneg %p47
      %p211 = pneg %p71
      %p212 = pneg %p68
      %p213 = pneg %p92
      %p214 = pneg %p89
      %s215 = smul.u32 2, %s20
      %p216 = scmp.lt.s32.totalorder %s215, 1
      %s217 = scalar_select %p216, %s215, 1
      %s218 = smul.addr %s217, 8
      %s219 = scalar_lea.vmem %s3, %s218
      %p220 = pneg %p118
      %p221 = pneg %p115
      %p222 = pneg %p146
      %p223 = pneg %p143
      %s224 = smul.u32 2, %s20
      %p225 = scmp.lt.s32.totalorder %s19, 1
      %s226 = scalar_select %p225, %s19, 1
      %p227 = scmp.lt.s32.totalorder %s224, 1
      %s228 = scalar_select %p227, %s224, 1
      %s229 = smul.addr %s226, 2
      %s230 = sadd.s32 %s228, %s229
      %s231 = smul.addr %s230, 8
      %s232 = scalar_lea.vmem %s4, %s231
      %s233 = smul.u32 2, %s20
      %p234 = scmp.lt.s32.totalorder %s19, 1
      %s235 = scalar_select %p234, %s19, 1
      %p236 = scmp.lt.s32.totalorder %s233, 1
      %s237 = scalar_select %p236, %s233, 1
      %s238 = smul.addr %s235, 2
      %s239 = sadd.s32 %s237, %s238
      %s240 = smul.addr %s239, 8
      %s241 = scalar_lea.vmem %s0, %s240
      %s242 = smul.u32 2, %s20
      %s243 = smul.u32 2, %s20
      %p244 = scmp.lt.s32.totalorder %s243, 1
      %s245 = scalar_select %p244, %s243, 1
      %s246 = smul.addr %s245, 8
      %s247 = scalar_lea.vmem %s3, %s246
      %s248 = smul.u32 2, %s20
      %s249 = smul.u32 2, %s20
      %p250 = scmp.lt.s32.totalorder %s19, 1
      %s251 = scalar_select %p250, %s19, 1
      %p252 = scmp.lt.s32.totalorder %s249, 1
      %s253 = scalar_select %p252, %s249, 1
      %s254 = smul.addr %s251, 2
      %s255 = sadd.s32 %s253, %s254
      %s256 = smul.addr %s255, 8
      %s257 = scalar_lea.vmem %s4, %s256
      %s258 = smul.u32 2, %s20
      %v260 = vld [vmem:[%s241] sm:$0xff]
      %v261 = vld [vmem:[%s241 + $0x8] sm:$0xff]
      %v262 = vpack.c.bf16 %v261, %v260
      %v263 = vld [vmem:[%s1] sm:$0xf]
      %v264 = vld [vmem:[%s2] sm:$0x1]
      %v266 = vperm.slane %v264, 0
      %vm268 = vcmask 64512
      %v270 = vsel %vm268, %v262, 0
      %vm272 = vcmask 1043456
      %v274 = vsel %vm272, %v263, 0
      %276 = vmatpush.bf16.msra.mxu0 0
      %277 = vmatpush.bf16.msra.mxu0 0
      %278 = vmatpush.bf16.msra.mxu0 0
      %279 = vmatpush.bf16.msra.mxu0 0
      %280 = vmatpush.bf16.msra.mxu0 0
      %281 = vmatpush.bf16.msra.mxu0 0
      %282 = vmatpush.bf16.msra.mxu0 0
      %283 = vmatpush.bf16.msra.mxu0 %v274
      %284 = vmatmul.bf16.gmra.mxu0 %v270
      %v285 = vpop.f32.mrf.mxu0
      %v286 = vadd.f32 %v266, %v285
      %v287 = vpop.f32.mrf.mxu0
      %v288 = vadd.f32 %v266, %v287
      %289 = vdwg.mxu0
      %v290 = vld [vmem:[%s247] sm:$0xff]
      %v291 = vld [vmem:[%s247 + $0x8] sm:$0xff]
      %v292 = vadd.f32 %v286, %v290
      %v293 = vadd.f32 %v288, %v291
      %vm294 = vcmask 261120
      %295 = vst.msk [vmem:[%s257] sm:$0xff] %vm294, %v292
      %296 = vst.msk [vmem:[%s257 + $0x8] sm:$0xff] %vm294, %v293
      %s297 = smul.u32 2, %s20
      %p298 = scmp.lt.s32.totalorder %s19, 1
      %s299 = scalar_select %p298, %s19, 1
      %p300 = scmp.lt.s32.totalorder %s297, 1
      %s301 = scalar_select %p300, %s297, 1
      %s302 = smul.addr %s299, 2
      %s303 = sadd.s32 %s301, %s302
      %s304 = smul.addr %s303, 8
      %s305 = scalar_lea.vmem %s4, %s304
      // Predicated region
      $region37: #{_lambda_.19} parent=35 // pred_check
        %p306 = pneg %p143
      $region38: #{_lambda_.19} parent=35 // pred_check_branch
        %308 = sbr.rel (%p306) target = $region40
      $region39: #{_lambda_.19} parent=35 // pred_region
        %s309 = smul.u32 2, %s20
      $region40: #{_lambda_.19} parent=35 // pred_fallthru
        _
    $region36: #{_lambda_.19} parent=5 // pred_fallthru
      _
    %p310 = scmp.le.s32.totalorder 2, %s10
    // Predicated region
    $region41: #{_lambda_.19} parent=5 // pred_check
      %p311 = pneg %p310
    $region42: #{_lambda_.19} parent=5 // pred_check_branch
      %313 = sbr.rel (%p311) target = $region44
    $region43: #{_lambda_.19} parent=5 // pred_region
      %s314 = ssub.s32 %s10, 2
      // Predicated region
      $region45: #{_lambda_.19} parent=43 // pred_check
        %p315 = pneg %p149
      $region46: #{_lambda_.19} parent=43 // pred_check_branch
        %317 = sbr.rel (%p315) target = $region48
      $region47: #{_lambda_.19} parent=43 // pred_region
        %s318 = smul.u32 2, %s22
        %p319 = scmp.lt.s32.totalorder %s21, 1
        %s320 = scalar_select %p319, %s21, 1
        %p321 = scmp.lt.s32.totalorder %s318, 1
        %s322 = scalar_select %p321, %s318, 1
        %s323 = smul.addr %s320, 2
        %s324 = sadd.s32 %s322, %s323
        %s325 = smul.addr %s324, 8
        %s326 = scalar_lea.vmem %s4, %s325
      $region48: #{_lambda_.19} parent=43 // pred_fallthru
        _
    $region44: #{_lambda_.19} parent=5 // pred_fallthru
      _
  $region6: #{_lambda_.19} parent=0 // loop_footer
    %s14 = sadd.s32 1, %s10
  $region7: #{_lambda_.19} parent=0 // loop_footer_branch
    %9 = sbr.rel target = $region3
  $region8: #{_lambda_.19} parent=0 // loop_exit
    _

// kernel: _lambda_.20
$region0: #{_lambda_.20}
  #allocation0 [shape = 'u32[]', space=smem, size = 0x4, offset = 0x4, fixed_abs, tag = 'smem constant byte address 0x4 - core index']
  #allocation1 [shape = 'u32[72,128]{1,0:T(1,128)}', space=vmem, size = 0x9000, scoped, tag = 'internal scratch']
  %s0 = inlined_call_operand.vmem [shape: f32[2,16,32], index: 0, kind: input, shape index: {}]
  %s1 = inlined_call_operand.vmem [shape: bf16[32,96], index: 1, kind: input, shape index: {}]
  %s2 = inlined_call_operand.vmem [shape: f32[1,96], index: 2, kind: input, shape index: {}]
  %s3 = inlined_call_operand.vmem [shape: bf16[2,4,16,8], index: 3, kind: output, shape index: {0}]
  %s4 = inlined_call_operand.vmem [shape: bf16[2,4,16,8], index: 4, kind: output, shape index: {1}]
  %s5 = inlined_call_operand.vmem [shape: bf16[2,4,16,8], index: 5, kind: output, shape index: {2}]
  %6 = xla_tuple %s3, %s4, %s5
  %s7 = sld [smem:[#allocation0]]
  $region61: #{_lambda_.20} parent=0
    _
  %s9 = ssub.s32 1, %s7
  %s10 = scalar_select 0, %s9, %s7
  loop: start=0, step=1, limit=4
  $region2: #{_lambda_.20} parent=0 // loop_pre_header
    _
  $region3: #{_lambda_.20} parent=0 // loop_header
    %s12 = sphi 0, %s16
    %p13 = scmp.ge.s32.totalorder %s12, 4
    %s19 = sphi 0, %s31
    %s20 = sphi 0, %s27
    %s21 = sphi 0, %s19
    %s22 = sphi 0, %s20
    %s23 = sphi 0, %s21
    %s24 = sphi 0, %s22
    %s36 = sphi 0, %s38
    %s39 = sphi 0, %s36
    %s40 = sphi 0, %s39
    %s56 = sphi 0, %s40
    %s60 = sphi 0, %s60
    %s62 = sphi 0, %s60
    %s63 = sphi 0, %s62
    %s77 = sphi 0, %s63
    %s81 = sphi 0, %s81
    %s83 = sphi 0, %s81
    %s84 = sphi 0, %s83
    %s98 = sphi 0, %s84
    %s106 = sphi 0, %s108
    %s109 = sphi 0, %s106
    %s110 = sphi 0, %s109
    %s126 = sphi 0, %s110
    %s134 = sphi 0, %s136
    %s137 = sphi 0, %s134
    %s138 = sphi 0, %s137
    %s154 = sphi 0, %s138
    %s162 = sphi 0, %s164
    %s165 = sphi 0, %s162
    %s166 = sphi 0, %s165
    %s182 = sphi 0, %s166
  $region4: #{_lambda_.20} parent=0 // loop_header_branch
    %15 = sbr.rel (%p13) target = $region8
  $region5: #{_lambda_.20} parent=0 // loop_body
    %s17 = ssub.s32 %s12, 1
    %s18 = ssub.s32 %s12, 2
    %s25 = sadd.s32 1, %s20
    %p26 = scmp.ge.s32.totalorder %s25, 1
    %s27 = scalar_select %p26, 0, %s25
    %s28 = sadd.s32 1, %s19
    %s29 = scalar_select %p26, %s28, %s19
    %p30 = scmp.ge.s32.totalorder %s29, 2
    %s31 = scalar_select %p30, 0, %s29
    %s32 = ssub.s32 %s19, %s31
    %s33 = ssub.s32 %s20, %s27
    %s34 = sor.u32 %s32, %s33
    %p35 = scmp.eq.s32.totalorder %s34, 0
    %s37 = sadd.s32 %s36, 1
    %s38 = scalar_select %p35, %s36, %s37
    %p41 = pneg %p35
    %p42 = scmp.eq.s32.totalorder %s12, 1
    %p43 = por %p41, %p42
    %p44 = scmp.ne.s32.totalorder %s36, %s39
    %p45 = scmp.eq.s32.totalorder %s12, 0
    %p46 = por %p44, %p45
    %p47 = scmp.ne.s32.totalorder %s36, %s39
    %p48 = scmp.eq.s32.totalorder %s17, 1
    %p49 = por %p47, %p48
    %p50 = scmp.ne.s32.totalorder %s39, %s40
    %p51 = scmp.eq.s32.totalorder %s17, 0
    %p52 = por %p50, %p51
    %p53 = scmp.ne.s32.totalorder %s39, %s40
    %p54 = scmp.eq.s32.totalorder %s18, 1
    %p55 = por %p53, %p54
    %p57 = scmp.ne.s32.totalorder %s40, %s56
    %p58 = scmp.eq.s32.totalorder %s18, 0
    %p59 = por %p57, %p58
    %s61 = sadd.s32 %s60, 1
    %p64 = scmp.eq.s32.totalorder %s12, 1
    %p65 = scmp.ne.s32.totalorder %s60, %s62
    %p66 = scmp.eq.s32.totalorder %s12, 0
    %p67 = por %p65, %p66
    %p68 = scmp.ne.s32.totalorder %s60, %s62
    %p69 = scmp.eq.s32.totalorder %s17, 1
    %p70 = por %p68, %p69
    %p71 = scmp.ne.s32.totalorder %s62, %s63
    %p72 = scmp.eq.s32.totalorder %s17, 0
    %p73 = por %p71, %p72
    %p74 = scmp.ne.s32.totalorder %s62, %s63
    %p75 = scmp.eq.s32.totalorder %s18, 1
    %p76 = por %p74, %p75
    %p78 = scmp.ne.s32.totalorder %s63, %s77
    %p79 = scmp.eq.s32.totalorder %s18, 0
    %p80 = por %p78, %p79
    %s82 = sadd.s32 %s81, 1
    %p85 = scmp.eq.s32.totalorder %s12, 1
    %p86 = scmp.ne.s32.totalorder %s81, %s83
    %p87 = scmp.eq.s32.totalorder %s12, 0
    %p88 = por %p86, %p87
    %p89 = scmp.ne.s32.totalorder %s81, %s83
    %p90 = scmp.eq.s32.totalorder %s17, 1
    %p91 = por %p89, %p90
    %p92 = scmp.ne.s32.totalorder %s83, %s84
    %p93 = scmp.eq.s32.totalorder %s17, 0
    %p94 = por %p92, %p93
    %p95 = scmp.ne.s32.totalorder %s83, %s84
    %p96 = scmp.eq.s32.totalorder %s18, 1
    %p97 = por %p95, %p96
    %p99 = scmp.ne.s32.totalorder %s84, %s98
    %p100 = scmp.eq.s32.totalorder %s18, 0
    %p101 = por %p99, %p100
    %s102 = ssub.s32 %s19, %s31
    %s103 = ssub.s32 %s20, %s27
    %s104 = sor.u32 %s102, %s103
    %p105 = scmp.eq.s32.totalorder %s104, 0
    %s107 = sadd.s32 %s106, 1
    %s108 = scalar_select %p105, %s106, %s107
    %p111 = pneg %p105
    %p112 = scmp.eq.s32.totalorder %s12, 1
    %p113 = por %p111, %p112
    %p114 = scmp.ne.s32.totalorder %s106, %s109
    %p115 = scmp.eq.s32.totalorder %s12, 0
    %p116 = por %p114, %p115
    %p117 = scmp.ne.s32.totalorder %s106, %s109
    %p118 = scmp.eq.s32.totalorder %s17, 1
    %p119 = por %p117, %p118
    %p120 = scmp.ne.s32.totalorder %s109, %s110
    %p121 = scmp.eq.s32.totalorder %s17, 0
    %p122 = por %p120, %p121
    %p123 = scmp.ne.s32.totalorder %s109, %s110
    %p124 = scmp.eq.s32.totalorder %s18, 1
    %p125 = por %p123, %p124
    %p127 = scmp.ne.s32.totalorder %s110, %s126
    %p128 = scmp.eq.s32.totalorder %s18, 0
    %p129 = por %p127, %p128
    %s130 = ssub.s32 %s19, %s31
    %s131 = ssub.s32 %s20, %s27
    %s132 = sor.u32 %s130, %s131
    %p133 = scmp.eq.s32.totalorder %s132, 0
    %s135 = sadd.s32 %s134, 1
    %s136 = scalar_select %p133, %s134, %s135
    %p139 = pneg %p133
    %p140 = scmp.eq.s32.totalorder %s12, 1
    %p141 = por %p139, %p140
    %p142 = scmp.ne.s32.totalorder %s134, %s137
    %p143 = scmp.eq.s32.totalorder %s12, 0
    %p144 = por %p142, %p143
    %p145 = scmp.ne.s32.totalorder %s134, %s137
    %p146 = scmp.eq.s32.totalorder %s17, 1
    %p147 = por %p145, %p146
    %p148 = scmp.ne.s32.totalorder %s137, %s138
    %p149 = scmp.eq.s32.totalorder %s17, 0
    %p150 = por %p148, %p149
    %p151 = scmp.ne.s32.totalorder %s137, %s138
    %p152 = scmp.eq.s32.totalorder %s18, 1
    %p153 = por %p151, %p152
    %p155 = scmp.ne.s32.totalorder %s138, %s154
    %p156 = scmp.eq.s32.totalorder %s18, 0
    %p157 = por %p155, %p156
    %s158 = ssub.s32 %s19, %s31
    %s159 = ssub.s32 %s20, %s27
    %s160 = sor.u32 %s158, %s159
    %p161 = scmp.eq.s32.totalorder %s160, 0
    %s163 = sadd.s32 %s162, 1
    %s164 = scalar_select %p161, %s162, %s163
    %p167 = pneg %p161
    %p168 = scmp.eq.s32.totalorder %s12, 1
    %p169 = por %p167, %p168
    %p170 = scmp.ne.s32.totalorder %s162, %s165
    %p171 = scmp.eq.s32.totalorder %s12, 0
    %p172 = por %p170, %p171
    %p173 = scmp.ne.s32.totalorder %s162, %s165
    %p174 = scmp.eq.s32.totalorder %s17, 1
    %p175 = por %p173, %p174
    %p176 = scmp.ne.s32.totalorder %s165, %s166
    %p177 = scmp.eq.s32.totalorder %s17, 0
    %p178 = por %p176, %p177
    %p179 = scmp.ne.s32.totalorder %s165, %s166
    %p180 = scmp.eq.s32.totalorder %s18, 1
    %p181 = por %p179, %p180
    %p183 = scmp.ne.s32.totalorder %s166, %s182
    %p184 = scmp.eq.s32.totalorder %s18, 0
    %p185 = por %p183, %p184
    %p186 = scmp.le.s32.totalorder 1, %s12
    %p187 = scmp.lt.s32.totalorder %s12, 3
    %p188 = pnand %p186, %p187
    %p189 = pneg %p188
    // Predicated region
    $region9: #{_lambda_.20} parent=5 // pred_check
      _
    $region10: #{_lambda_.20} parent=5 // pred_check_branch
      %191 = sbr.rel (%p188) target = $region12
    $region11: #{_lambda_.20} parent=5 // pred_region
      %s192 = ssub.s32 %s12, 1
      // Predicated region
      $region13: #{_lambda_.20} parent=11 // pred_check
        %p193 = pneg %p73
      $region14: #{_lambda_.20} parent=11 // pred_check_branch
        %195 = sbr.rel (%p193) target = $region16
      $region15: #{_lambda_.20} parent=11 // pred_region
        _
      $region16: #{_lambda_.20} parent=11 // pred_fallthru
        _
      // Predicated region
      $region17: #{_lambda_.20} parent=11 // pred_check
        %p196 = pneg %p94
      $region18: #{_lambda_.20} parent=11 // pred_check_branch
        %198 = sbr.rel (%p196) target = $region20
      $region19: #{_lambda_.20} parent=11 // pred_region
        _
      $region20: #{_lambda_.20} parent=11 // pred_fallthru
        _
    $region12: #{_lambda_.20} parent=5 // pred_fallthru
      _
    %p199 = scmp.lt.s32.totalorder %s12, 2
    // Predicated region
    $region21: #{_lambda_.20} parent=5 // pred_check
      %p200 = pneg %p199
    $region22: #{_lambda_.20} parent=5 // pred_check_branch
      %202 = sbr.rel (%p200) target = $region24
    $region23: #{_lambda_.20} parent=5 // pred_region
      // Predicated region
      $region25: #{_lambda_.20} parent=23 // pred_check
        %p203 = pneg %p46
      $region26: #{_lambda_.20} parent=23 // pred_check_branch
        %205 = sbr.rel (%p203) target = $region28
      $region27: #{_lambda_.20} parent=23 // pred_region
        %s206 = smul.u32 2, %s20
        %p207 = scmp.lt.s32.totalorder %s19, 1
        %s208 = scalar_select %p207, %s19, 1
        %p209 = scmp.lt.s32.totalorder %s206, 1
        %s210 = scalar_select %p209, %s206, 1
        %s211 = smul.addr %s208, 2
        %s212 = sadd.s32 %s210, %s211
        %s213 = smul.addr %s212, 8
        %s214 = scalar_lea.vmem %s0, %s213
        %s215 = smul.u32 2, %s20
      $region28: #{_lambda_.20} parent=23 // pred_fallthru
        _
    $region24: #{_lambda_.20} parent=5 // pred_fallthru
      _
    %p216 = scmp.le.s32.totalorder 1, %s12
    %p217 = scmp.lt.s32.totalorder %s12, 3
    %p218 = pnand %p216, %p217
    %p219 = pneg %p218
    // Predicated region
    $region29: #{_lambda_.20} parent=5 // pred_check
      _
    $region30: #{_lambda_.20} parent=5 // pred_check_branch
      %221 = sbr.rel (%p218) target = $region32
    $region31: #{_lambda_.20} parent=5 // pred_region
      %s222 = ssub.s32 %s12, 1
      %s223 = smul.u32 2, %s22
      %p224 = scmp.lt.s32.totalorder %s21, 1
      %s225 = scalar_select %p224, %s21, 1
      %p226 = scmp.lt.s32.totalorder %s223, 1
      %s227 = scalar_select %p226, %s223, 1
      %s228 = smul.addr %s225, 2
      %s229 = sadd.s32 %s227, %s228
      %s230 = smul.addr %s229, 8
      %s231 = scalar_lea.vmem %s0, %s230
      %p232 = pneg %p52
      %p233 = pneg %p49
      %p234 = pneg %p73
      %p235 = pneg %p70
      %p236 = pneg %p94
      %p237 = pneg %p91
      %p238 = pneg %p122
      %p239 = pneg %p119
      %s240 = smul.u32 2, %s22
      %p241 = scmp.lt.s32.totalorder %s21, 1
      %s242 = scalar_select %p241, %s21, 1
      %p243 = scmp.lt.s32.totalorder %s240, 1
      %s244 = scalar_select %p243, %s240, 1
      %s245 = smul.addr %s242, 8
      %s246 = sadd.s32 %s244, %s245
      %s247 = smul.addr %s246, 4
      %s248 = scalar_lea.vmem %s3, %s247
      %p249 = pneg %p150
      %p250 = pneg %p147
      %s251 = smul.u32 2, %s22
      %p252 = scmp.lt.s32.totalorder %s21, 1
      %s253 = scalar_select %p252, %s21, 1
      %p254 = scmp.lt.s32.totalorder %s251, 1
      %s255 = scalar_select %p254, %s251, 1
      %s256 = smul.addr %s253, 8
      %s257 = sadd.s32 %s255, %s256
      %s258 = smul.addr %s257, 4
      %s259 = scalar_lea.vmem %s4, %s258
      %p260 = pneg %p178
      %p261 = pneg %p175
      %s262 = smul.u32 2, %s22
      %p263 = scmp.lt.s32.totalorder %s21, 1
      %s264 = scalar_select %p263, %s21, 1
      %p265 = scmp.lt.s32.totalorder %s262, 1
      %s266 = scalar_select %p265, %s262, 1
      %s267 = smul.addr %s264, 8
      %s268 = sadd.s32 %s266, %s267
      %s269 = smul.addr %s268, 4
      %s270 = scalar_lea.vmem %s5, %s269
      %s271 = smul.u32 2, %s22
      %p272 = scmp.lt.s32.totalorder %s21, 1
      %s273 = scalar_select %p272, %s21, 1
      %p274 = scmp.lt.s32.totalorder %s271, 1
      %s275 = scalar_select %p274, %s271, 1
      %s276 = smul.addr %s273, 2
      %s277 = sadd.s32 %s275, %s276
      %s278 = smul.addr %s277, 8
      %s279 = scalar_lea.vmem %s0, %s278
      %s280 = smul.u32 2, %s22
      %s281 = smul.u32 2, %s22
      %p282 = scmp.lt.s32.totalorder %s21, 1
      %s283 = scalar_select %p282, %s21, 1
      %p284 = scmp.lt.s32.totalorder %s281, 1
      %s285 = scalar_select %p284, %s281, 1
      %s286 = smul.addr %s283, 8
      %s287 = sadd.s32 %s285, %s286
      %s288 = smul.addr %s287, 4
      %s289 = scalar_lea.vmem %s3, %s288
      %s290 = smul.u32 2, %s22
      %s291 = smul.u32 2, %s22
      %p292 = scmp.lt.s32.totalorder %s21, 1
      %s293 = scalar_select %p292, %s21, 1
      %p294 = scmp.lt.s32.totalorder %s291, 1
      %s295 = scalar_select %p294, %s291, 1
      %s296 = smul.addr %s293, 8
      %s297 = sadd.s32 %s295, %s296
      %s298 = smul.addr %s297, 4
      %s299 = scalar_lea.vmem %s4, %s298
      %s300 = smul.u32 2, %s22
      %s301 = smul.u32 2, %s22
      %p302 = scmp.lt.s32.totalorder %s21, 1
      %s303 = scalar_select %p302, %s21, 1
      %p304 = scmp.lt.s32.totalorder %s301, 1
      %s305 = scalar_select %p304, %s301, 1
      %s306 = smul.addr %s303, 8
      %s307 = sadd.s32 %s305, %s306
      %s308 = smul.addr %s307, 4
      %s309 = scalar_lea.vmem %s5, %s308
      %s310 = smul.u32 2, %s22
      %v312 = vld [vmem:[%s279] sm:$0xff]
      %v313 = vld [vmem:[%s279 + $0x8] sm:$0xff]
      %v314 = vpack.c.bf16 %v313, %v312
      %v315 = vld [vmem:[%s1] sm:$0xf]
      %v316 = vld [vmem:[%s1 + $0x4] sm:$0xf]
      %v317 = vld [vmem:[%s1 + $0x8] sm:$0xf]
      %v318 = vld [vmem:[%s1 + $0xc] sm:$0xf]
      %v319 = vld [vmem:[%s2] sm:$0x1]
      %v321 = vperm.slane %v319, 0
      %v327 = vunpack.c.l.b16 %v315
      %v328 = vunpack.c.l.b16 %v316
      %v329 = vunpack.c.l.b16 %v317
      %v330 = vunpack.c.l.b16 %v318
      %v331 = vpack.c.b16 %v328, %v327
      %v332 = vpack.c.b16 %v330, %v329
      %vm335 = vcmask 261120
      %v337 = vsel %vm335, %v314, 0
      %339 = vmatpush.bf16.msra.mxu0 0
      %340 = vmatpush.bf16.msra.mxu0 0
      %341 = vmatpush.bf16.msra.mxu0 0
      %342 = vmatpush.bf16.msra.mxu0 0
      %343 = vmatpush.bf16.msra.mxu0 0
      %344 = vmatpush.bf16.msra.mxu0 0
      %345 = vmatpush.bf16.msra.mxu0 %v332
      %346 = vmatpush.bf16.msra.mxu0 %v331
      %347 = vmatmul.bf16.gmra.mxu0 %v337
      %v348 = vpop.f32.mrf.mxu0
      %v349 = vadd.f32 %v321, %v348
      %v350 = vpop.f32.mrf.mxu0
      %v351 = vadd.f32 %v321, %v350
      %352 = vdwg.mxu0
      %v353 = vpack.c.bf16 %v349, %v349
      %v354 = vpack.c.bf16 %v351, %v351
      %vm355 = vcmask 60416
      %356 = vst.msk [vmem:[%s289] sm:$0xf] %vm355, %v353
      %357 = vst.msk [vmem:[%s289 + $0x4] sm:$0xf] %vm355, %v354
      %360 = vrot.lane.b32.xlu0 %v353, 120
      %v361 = vpop.permute.xlu0 %360
      %362 = vrot.lane.b32.xlu0 %v354, 120
      %v363 = vpop.permute.xlu0 %362
      %s366 = scalar_lea.vmem %s289, 8
      %367 = vst.msk [vmem:[%s366] sm:$0xf] %vm355, %v361
      %368 = vst.msk [vmem:[%s366 + $0x4] sm:$0xf] %vm355, %v363
      %369 = vrot.lane.b32.xlu0 %v353, 112
      %v370 = vpop.permute.xlu0 %369
      %371 = vrot.lane.b32.xlu0 %v354, 112
      %v372 = vpop.permute.xlu0 %371
      %s375 = scalar_lea.vmem %s289, 16
      %376 = vst.msk [vmem:[%s375] sm:$0xf] %vm355, %v370
      %377 = vst.msk [vmem:[%s375 + $0x4] sm:$0xf] %vm355, %v372
      %378 = vrot.lane.b32.xlu0 %v353, 104
      %v379 = vpop.permute.xlu0 %378
      %380 = vrot.lane.b32.xlu0 %v354, 104
      %v381 = vpop.permute.xlu0 %380
      %s384 = scalar_lea.vmem %s289, 24
      %385 = vst.msk [vmem:[%s384] sm:$0xf] %vm355, %v379
      %386 = vst.msk [vmem:[%s384 + $0x4] sm:$0xf] %vm355, %v381
      %387 = vrot.lane.b32.xlu0 %v353, 96
      %v388 = vpop.permute.xlu0 %387
      %389 = vrot.lane.b32.xlu0 %v354, 96
      %v390 = vpop.permute.xlu0 %389
      %393 = vst.msk [vmem:[%s299] sm:$0xf] %vm355, %v388
      %394 = vst.msk [vmem:[%s299 + $0x4] sm:$0xf] %vm355, %v390
      %395 = vrot.lane.b32.xlu0 %v353, 88
      %v396 = vpop.permute.xlu0 %395
      %397 = vrot.lane.b32.xlu0 %v354, 88
      %v398 = vpop.permute.xlu0 %397
      %s401 = scalar_lea.vmem %s299, 8
      %402 = vst.msk [vmem:[%s401] sm:$0xf] %vm355, %v396
      %403 = vst.msk [vmem:[%s401 + $0x4] sm:$0xf] %vm355, %v398
      %404 = vrot.lane.b32.xlu0 %v353, 80
      %v405 = vpop.permute.xlu0 %404
      %406 = vrot.lane.b32.xlu0 %v354, 80
      %v407 = vpop.permute.xlu0 %406
      %s410 = scalar_lea.vmem %s299, 16
      %411 = vst.msk [vmem:[%s410] sm:$0xf] %vm355, %v405
      %412 = vst.msk [vmem:[%s410 + $0x4] sm:$0xf] %vm355, %v407
      %413 = vrot.lane.b32.xlu0 %v353, 72
      %v414 = vpop.permute.xlu0 %413
      %415 = vrot.lane.b32.xlu0 %v354, 72
      %v416 = vpop.permute.xlu0 %415
      %s419 = scalar_lea.vmem %s299, 24
      %420 = vst.msk [vmem:[%s419] sm:$0xf] %vm355, %v414
      %421 = vst.msk [vmem:[%s419 + $0x4] sm:$0xf] %vm355, %v416
      %422 = vrot.lane.b32.xlu0 %v353, 64
      %v423 = vpop.permute.xlu0 %422
      %424 = vrot.lane.b32.xlu0 %v354, 64
      %v425 = vpop.permute.xlu0 %424
      %428 = vst.msk [vmem:[%s309] sm:$0xf] %vm355, %v423
      %429 = vst.msk [vmem:[%s309 + $0x4] sm:$0xf] %vm355, %v425
      %430 = vrot.lane.b32.xlu0 %v353, 56
      %v431 = vpop.permute.xlu0 %430
      %432 = vrot.lane.b32.xlu0 %v354, 56
      %v433 = vpop.permute.xlu0 %432
      %s436 = scalar_lea.vmem %s309, 8
      %437 = vst.msk [vmem:[%s436] sm:$0xf] %vm355, %v431
      %438 = vst.msk [vmem:[%s436 + $0x4] sm:$0xf] %vm355, %v433
      %439 = vrot.lane.b32.xlu0 %v353, 48
      %v440 = vpop.permute.xlu0 %439
      %441 = vrot.lane.b32.xlu0 %v354, 48
      %v442 = vpop.permute.xlu0 %441
      %s445 = scalar_lea.vmem %s309, 16
      %446 = vst.msk [vmem:[%s445] sm:$0xf] %vm355, %v440
      %447 = vst.msk [vmem:[%s445 + $0x4] sm:$0xf] %vm355, %v442
      %448 = vrot.lane.b32.xlu0 %v353, 40
      %v449 = vpop.permute.xlu0 %448
      %450 = vrot.lane.b32.xlu0 %v354, 40
      %v451 = vpop.permute.xlu0 %450
      %s454 = scalar_lea.vmem %s309, 24
      %455 = vst.msk [vmem:[%s454] sm:$0xf] %vm355, %v449
      %456 = vst.msk [vmem:[%s454 + $0x4] sm:$0xf] %vm355, %v451
      %s457 = smul.u32 2, %s22
      %p458 = scmp.lt.s32.totalorder %s21, 1
      %s459 = scalar_select %p458, %s21, 1
      %p460 = scmp.lt.s32.totalorder %s457, 1
      %s461 = scalar_select %p460, %s457, 1
      %s462 = smul.addr %s459, 8
      %s463 = sadd.s32 %s461, %s462
      %s464 = smul.addr %s463, 4
      %s465 = scalar_lea.vmem %s3, %s464
      %s466 = smul.u32 2, %s22
      %p467 = scmp.lt.s32.totalorder %s21, 1
      %s468 = scalar_select %p467, %s21, 1
      %p469 = scmp.lt.s32.totalorder %s466, 1
      %s470 = scalar_select %p469, %s466, 1
      %s471 = smul.addr %s468, 8
      %s472 = sadd.s32 %s470, %s471
      %s473 = smul.addr %s472, 4
      %s474 = scalar_lea.vmem %s4, %s473
      %s475 = smul.u32 2, %s22
      %p476 = scmp.lt.s32.totalorder %s21, 1
      %s477 = scalar_select %p476, %s21, 1
      %p478 = scmp.lt.s32.totalorder %s475, 1
      %s479 = scalar_select %p478, %s475, 1
      %s480 = smul.addr %s477, 8
      %s481 = sadd.s32 %s479, %s480
      %s482 = smul.addr %s481, 4
      %s483 = scalar_lea.vmem %s5, %s482
      // Predicated region
      $region33: #{_lambda_.20} parent=31 // pred_check
        %p484 = pneg %p119
      $region34: #{_lambda_.20} parent=31 // pred_check_branch
        %486 = sbr.rel (%p484) target = $region36
      $region35: #{_lambda_.20} parent=31 // pred_region
        %s487 = smul.u32 2, %s22
      $region36: #{_lambda_.20} parent=31 // pred_fallthru
        _
      // Predicated region
      $region37: #{_lambda_.20} parent=31 // pred_check
        %p488 = pneg %p147
      $region38: #{_lambda_.20} parent=31 // pred_check_branch
        %490 = sbr.rel (%p488) target = $region40
      $region39: #{_lambda_.20} parent=31 // pred_region
        %s491 = smul.u32 2, %s22
      $region40: #{_lambda_.20} parent=31 // pred_fallthru
        _
      // Predicated region
      $region41: #{_lambda_.20} parent=31 // pred_check
        %p492 = pneg %p175
      $region42: #{_lambda_.20} parent=31 // pred_check_branch
        %494 = sbr.rel (%p492) target = $region44
      $region43: #{_lambda_.20} parent=31 // pred_region
        %s495 = smul.u32 2, %s22
      $region44: #{_lambda_.20} parent=31 // pred_fallthru
        _
    $region32: #{_lambda_.20} parent=5 // pred_fallthru
      _
    %p496 = scmp.le.s32.totalorder 2, %s12
    // Predicated region
    $region45: #{_lambda_.20} parent=5 // pred_check
      %p497 = pneg %p496
    $region46: #{_lambda_.20} parent=5 // pred_check_branch
      %499 = sbr.rel (%p497) target = $region48
    $region47: #{_lambda_.20} parent=5 // pred_region
      %s500 = ssub.s32 %s12, 2
      // Predicated region
      $region49: #{_lambda_.20} parent=47 // pred_check
        %p501 = pneg %p125
      $region50: #{_lambda_.20} parent=47 // pred_check_branch
        %503 = sbr.rel (%p501) target = $region52
      $region51: #{_lambda_.20} parent=47 // pred_region
        %s504 = smul.u32 2, %s24
        %p505 = scmp.lt.s32.totalorder %s23, 1
        %s506 = scalar_select %p505, %s23, 1
        %p507 = scmp.lt.s32.totalorder %s504, 1
        %s508 = scalar_select %p507, %s504, 1
        %s509 = smul.addr %s506, 8
        %s510 = sadd.s32 %s508, %s509
        %s511 = smul.addr %s510, 4
        %s512 = scalar_lea.vmem %s3, %s511
      $region52: #{_lambda_.20} parent=47 // pred_fallthru
        _
      // Predicated region
      $region53: #{_lambda_.20} parent=47 // pred_check
        %p513 = pneg %p153
      $region54: #{_lambda_.20} parent=47 // pred_check_branch
        %515 = sbr.rel (%p513) target = $region56
      $region55: #{_lambda_.20} parent=47 // pred_region
        %s516 = smul.u32 2, %s24
        %p517 = scmp.lt.s32.totalorder %s23, 1
        %s518 = scalar_select %p517, %s23, 1
        %p519 = scmp.lt.s32.totalorder %s516, 1
        %s520 = scalar_select %p519, %s516, 1
        %s521 = smul.addr %s518, 8
        %s522 = sadd.s32 %s520, %s521
        %s523 = smul.addr %s522, 4
        %s524 = scalar_lea.vmem %s4, %s523
      $region56: #{_lambda_.20} parent=47 // pred_fallthru
        _
      // Predicated region
      $region57: #{_lambda_.20} parent=47 // pred_check
        %p525 = pneg %p181
      $region58: #{_lambda_.20} parent=47 // pred_check_branch
        %527 = sbr.rel (%p525) target = $region60
      $region59: #{_lambda_.20} parent=47 // pred_region
        %s528 = smul.u32 2, %s24
        %p529 = scmp.lt.s32.totalorder %s23, 1
        %s530 = scalar_select %p529, %s23, 1
        %p531 = scmp.lt.s32.totalorder %s528, 1
        %s532 = scalar_select %p531, %s528, 1
        %s533 = smul.addr %s530, 8
        %s534 = sadd.s32 %s532, %s533
        %s535 = smul.addr %s534, 4
        %s536 = scalar_lea.vmem %s5, %s535
      $region60: #{_lambda_.20} parent=47 // pred_fallthru
        _
    $region48: #{_lambda_.20} parent=5 // pred_fallthru
      _
  $region6: #{_lambda_.20} parent=0 // loop_footer
    %s16 = sadd.s32 1, %s12
  $region7: #{_lambda_.20} parent=0 // loop_footer_branch
    %11 = sbr.rel target = $region3
  $region8: #{_lambda_.20} parent=0 // loop_exit
    _

// kernel: _lambda_.22
$region0: #{_lambda_.22}
  #allocation0 [shape = 'u32[]', space=smem, size = 0x4, offset = 0x4, fixed_abs, tag = 'smem constant byte address 0x4 - core index']
  #allocation1 [shape = 'u32[72,128]{1,0:T(1,128)}', space=vmem, size = 0x9000, scoped, tag = 'internal scratch']
  %s0 = inlined_call_operand.vmem [shape: bf16[2,4,16,8], index: 0, kind: input, shape index: {}]
  %s1 = inlined_call_operand.vmem [shape: bf16[4,8,32], index: 1, kind: input, shape index: {}]
  %s2 = inlined_call_operand.vmem [shape: f32[1,32], index: 2, kind: input, shape index: {}]
  %s3 = inlined_call_operand.vmem [shape: f32[2,16,32], index: 3, kind: input, shape index: {}]
  %s4 = inlined_call_operand.vmem [shape: f32[1,32], index: 4, kind: input, shape index: {}]
  %s5 = inlined_call_operand.vmem [shape: f32[1,32], index: 5, kind: input, shape index: {}]
  %s6 = inlined_call_operand.vmem [shape: f32[2,16,32], index: 6, kind: output, shape index: {}]
  %s7 = sld [smem:[#allocation0]]
  $region57: #{_lambda_.22} parent=0
    _
  %s9 = ssub.s32 1, %s7
  %s10 = scalar_select 0, %s9, %s7
  loop: start=0, step=1, limit=4
  $region2: #{_lambda_.22} parent=0 // loop_pre_header
    _
  $region3: #{_lambda_.22} parent=0 // loop_header
    %s12 = sphi 0, %s16
    %p13 = scmp.ge.s32.totalorder %s12, 4
    %s19 = sphi 0, %s31
    %s20 = sphi 0, %s27
    %s21 = sphi 0, %s19
    %s22 = sphi 0, %s20
    %s23 = sphi 0, %s21
    %s24 = sphi 0, %s22
    %s36 = sphi 0, %s38
    %s39 = sphi 0, %s36
    %s40 = sphi 0, %s39
    %s56 = sphi 0, %s40
    %s60 = sphi 0, %s60
    %s62 = sphi 0, %s60
    %s63 = sphi 0, %s62
    %s77 = sphi 0, %s63
    %s81 = sphi 0, %s81
    %s83 = sphi 0, %s81
    %s84 = sphi 0, %s83
    %s98 = sphi 0, %s84
    %s106 = sphi 0, %s108
    %s109 = sphi 0, %s106
    %s110 = sphi 0, %s109
    %s126 = sphi 0, %s110
    %s130 = sphi 0, %s130
    %s132 = sphi 0, %s130
    %s133 = sphi 0, %s132
    %s147 = sphi 0, %s133
    %s151 = sphi 0, %s151
    %s153 = sphi 0, %s151
    %s154 = sphi 0, %s153
    %s168 = sphi 0, %s154
    %s176 = sphi 0, %s178
    %s179 = sphi 0, %s176
    %s180 = sphi 0, %s179
    %s196 = sphi 0, %s180
  $region4: #{_lambda_.22} parent=0 // loop_header_branch
    %15 = sbr.rel (%p13) target = $region8
  $region5: #{_lambda_.22} parent=0 // loop_body
    %s17 = ssub.s32 %s12, 1
    %s18 = ssub.s32 %s12, 2
    %s25 = sadd.s32 1, %s20
    %p26 = scmp.ge.s32.totalorder %s25, 1
    %s27 = scalar_select %p26, 0, %s25
    %s28 = sadd.s32 1, %s19
    %s29 = scalar_select %p26, %s28, %s19
    %p30 = scmp.ge.s32.totalorder %s29, 2
    %s31 = scalar_select %p30, 0, %s29
    %s32 = ssub.s32 %s19, %s31
    %s33 = ssub.s32 %s20, %s27
    %s34 = sor.u32 %s32, %s33
    %p35 = scmp.eq.s32.totalorder %s34, 0
    %s37 = sadd.s32 %s36, 1
    %s38 = scalar_select %p35, %s36, %s37
    %p41 = pneg %p35
    %p42 = scmp.eq.s32.totalorder %s12, 1
    %p43 = por %p41, %p42
    %p44 = scmp.ne.s32.totalorder %s36, %s39
    %p45 = scmp.eq.s32.totalorder %s12, 0
    %p46 = por %p44, %p45
    %p47 = scmp.ne.s32.totalorder %s36, %s39
    %p48 = scmp.eq.s32.totalorder %s17, 1
    %p49 = por %p47, %p48
    %p50 = scmp.ne.s32.totalorder %s39, %s40
    %p51 = scmp.eq.s32.totalorder %s17, 0
    %p52 = por %p50, %p51
    %p53 = scmp.ne.s32.totalorder %s39, %s40
    %p54 = scmp.eq.s32.totalorder %s18, 1
    %p55 = por %p53, %p54
    %p57 = scmp.ne.s32.totalorder %s40, %s56
    %p58 = scmp.eq.s32.totalorder %s18, 0
    %p59 = por %p57, %p58
    %s61 = sadd.s32 %s60, 1
    %p64 = scmp.eq.s32.totalorder %s12, 1
    %p65 = scmp.ne.s32.totalorder %s60, %s62
    %p66 = scmp.eq.s32.totalorder %s12, 0
    %p67 = por %p65, %p66
    %p68 = scmp.ne.s32.totalorder %s60, %s62
    %p69 = scmp.eq.s32.totalorder %s17, 1
    %p70 = por %p68, %p69
    %p71 = scmp.ne.s32.totalorder %s62, %s63
    %p72 = scmp.eq.s32.totalorder %s17, 0
    %p73 = por %p71, %p72
    %p74 = scmp.ne.s32.totalorder %s62, %s63
    %p75 = scmp.eq.s32.totalorder %s18, 1
    %p76 = por %p74, %p75
    %p78 = scmp.ne.s32.totalorder %s63, %s77
    %p79 = scmp.eq.s32.totalorder %s18, 0
    %p80 = por %p78, %p79
    %s82 = sadd.s32 %s81, 1
    %p85 = scmp.eq.s32.totalorder %s12, 1
    %p86 = scmp.ne.s32.totalorder %s81, %s83
    %p87 = scmp.eq.s32.totalorder %s12, 0
    %p88 = por %p86, %p87
    %p89 = scmp.ne.s32.totalorder %s81, %s83
    %p90 = scmp.eq.s32.totalorder %s17, 1
    %p91 = por %p89, %p90
    %p92 = scmp.ne.s32.totalorder %s83, %s84
    %p93 = scmp.eq.s32.totalorder %s17, 0
    %p94 = por %p92, %p93
    %p95 = scmp.ne.s32.totalorder %s83, %s84
    %p96 = scmp.eq.s32.totalorder %s18, 1
    %p97 = por %p95, %p96
    %p99 = scmp.ne.s32.totalorder %s84, %s98
    %p100 = scmp.eq.s32.totalorder %s18, 0
    %p101 = por %p99, %p100
    %s102 = ssub.s32 %s19, %s31
    %s103 = ssub.s32 %s20, %s27
    %s104 = sor.u32 %s102, %s103
    %p105 = scmp.eq.s32.totalorder %s104, 0
    %s107 = sadd.s32 %s106, 1
    %s108 = scalar_select %p105, %s106, %s107
    %p111 = pneg %p105
    %p112 = scmp.eq.s32.totalorder %s12, 1
    %p113 = por %p111, %p112
    %p114 = scmp.ne.s32.totalorder %s106, %s109
    %p115 = scmp.eq.s32.totalorder %s12, 0
    %p116 = por %p114, %p115
    %p117 = scmp.ne.s32.totalorder %s106, %s109
    %p118 = scmp.eq.s32.totalorder %s17, 1
    %p119 = por %p117, %p118
    %p120 = scmp.ne.s32.totalorder %s109, %s110
    %p121 = scmp.eq.s32.totalorder %s17, 0
    %p122 = por %p120, %p121
    %p123 = scmp.ne.s32.totalorder %s109, %s110
    %p124 = scmp.eq.s32.totalorder %s18, 1
    %p125 = por %p123, %p124
    %p127 = scmp.ne.s32.totalorder %s110, %s126
    %p128 = scmp.eq.s32.totalorder %s18, 0
    %p129 = por %p127, %p128
    %s131 = sadd.s32 %s130, 1
    %p134 = scmp.eq.s32.totalorder %s12, 1
    %p135 = scmp.ne.s32.totalorder %s130, %s132
    %p136 = scmp.eq.s32.totalorder %s12, 0
    %p137 = por %p135, %p136
    %p138 = scmp.ne.s32.totalorder %s130, %s132
    %p139 = scmp.eq.s32.totalorder %s17, 1
    %p140 = por %p138, %p139
    %p141 = scmp.ne.s32.totalorder %s132, %s133
    %p142 = scmp.eq.s32.totalorder %s17, 0
    %p143 = por %p141, %p142
    %p144 = scmp.ne.s32.totalorder %s132, %s133
    %p145 = scmp.eq.s32.totalorder %s18, 1
    %p146 = por %p144, %p145
    %p148 = scmp.ne.s32.totalorder %s133, %s147
    %p149 = scmp.eq.s32.totalorder %s18, 0
    %p150 = por %p148, %p149
    %s152 = sadd.s32 %s151, 1
    %p155 = scmp.eq.s32.totalorder %s12, 1
    %p156 = scmp.ne.s32.totalorder %s151, %s153
    %p157 = scmp.eq.s32.totalorder %s12, 0
    %p158 = por %p156, %p157
    %p159 = scmp.ne.s32.totalorder %s151, %s153
    %p160 = scmp.eq.s32.totalorder %s17, 1
    %p161 = por %p159, %p160
    %p162 = scmp.ne.s32.totalorder %s153, %s154
    %p163 = scmp.eq.s32.totalorder %s17, 0
    %p164 = por %p162, %p163
    %p165 = scmp.ne.s32.totalorder %s153, %s154
    %p166 = scmp.eq.s32.totalorder %s18, 1
    %p167 = por %p165, %p166
    %p169 = scmp.ne.s32.totalorder %s154, %s168
    %p170 = scmp.eq.s32.totalorder %s18, 0
    %p171 = por %p169, %p170
    %s172 = ssub.s32 %s19, %s31
    %s173 = ssub.s32 %s20, %s27
    %s174 = sor.u32 %s172, %s173
    %p175 = scmp.eq.s32.totalorder %s174, 0
    %s177 = sadd.s32 %s176, 1
    %s178 = scalar_select %p175, %s176, %s177
    %p181 = pneg %p175
    %p182 = scmp.eq.s32.totalorder %s12, 1
    %p183 = por %p181, %p182
    %p184 = scmp.ne.s32.totalorder %s176, %s179
    %p185 = scmp.eq.s32.totalorder %s12, 0
    %p186 = por %p184, %p185
    %p187 = scmp.ne.s32.totalorder %s176, %s179
    %p188 = scmp.eq.s32.totalorder %s17, 1
    %p189 = por %p187, %p188
    %p190 = scmp.ne.s32.totalorder %s179, %s180
    %p191 = scmp.eq.s32.totalorder %s17, 0
    %p192 = por %p190, %p191
    %p193 = scmp.ne.s32.totalorder %s179, %s180
    %p194 = scmp.eq.s32.totalorder %s18, 1
    %p195 = por %p193, %p194
    %p197 = scmp.ne.s32.totalorder %s180, %s196
    %p198 = scmp.eq.s32.totalorder %s18, 0
    %p199 = por %p197, %p198
    %p200 = scmp.le.s32.totalorder 1, %s12
    %p201 = scmp.lt.s32.totalorder %s12, 3
    %p202 = pnand %p200, %p201
    %p203 = pneg %p202
    // Predicated region
    $region9: #{_lambda_.22} parent=5 // pred_check
      _
    $region10: #{_lambda_.22} parent=5 // pred_check_branch
      %205 = sbr.rel (%p202) target = $region12
    $region11: #{_lambda_.22} parent=5 // pred_region
      %s206 = ssub.s32 %s12, 1
      // Predicated region
      $region13: #{_lambda_.22} parent=11 // pred_check
        %p207 = pneg %p73
      $region14: #{_lambda_.22} parent=11 // pred_check_branch
        %209 = sbr.rel (%p207) target = $region16
      $region15: #{_lambda_.22} parent=11 // pred_region
        _
      $region16: #{_lambda_.22} parent=11 // pred_fallthru
        _
      // Predicated region
      $region17: #{_lambda_.22} parent=11 // pred_check
        %p210 = pneg %p94
      $region18: #{_lambda_.22} parent=11 // pred_check_branch
        %212 = sbr.rel (%p210) target = $region20
      $region19: #{_lambda_.22} parent=11 // pred_region
        _
      $region20: #{_lambda_.22} parent=11 // pred_fallthru
        _
      // Predicated region
      $region21: #{_lambda_.22} parent=11 // pred_check
        %p213 = pneg %p143
      $region22: #{_lambda_.22} parent=11 // pred_check_branch
        %215 = sbr.rel (%p213) target = $region24
      $region23: #{_lambda_.22} parent=11 // pred_region
        _
      $region24: #{_lambda_.22} parent=11 // pred_fallthru
        _
      // Predicated region
      $region25: #{_lambda_.22} parent=11 // pred_check
        %p216 = pneg %p164
      $region26: #{_lambda_.22} parent=11 // pred_check_branch
        %218 = sbr.rel (%p216) target = $region28
      $region27: #{_lambda_.22} parent=11 // pred_region
        _
      $region28: #{_lambda_.22} parent=11 // pred_fallthru
        _
    $region12: #{_lambda_.22} parent=5 // pred_fallthru
      _
    %p219 = scmp.lt.s32.totalorder %s12, 2
    // Predicated region
    $region29: #{_lambda_.22} parent=5 // pred_check
      %p220 = pneg %p219
    $region30: #{_lambda_.22} parent=5 // pred_check_branch
      %222 = sbr.rel (%p220) target = $region32
    $region31: #{_lambda_.22} parent=5 // pred_region
      // Predicated region
      $region33: #{_lambda_.22} parent=31 // pred_check
        %p223 = pneg %p46
      $region34: #{_lambda_.22} parent=31 // pred_check_branch
        %225 = sbr.rel (%p223) target = $region36
      $region35: #{_lambda_.22} parent=31 // pred_region
        %s226 = smul.u32 2, %s20
        %p227 = scmp.lt.s32.totalorder %s19, 1
        %s228 = scalar_select %p227, %s19, 1
        %p229 = scmp.lt.s32.totalorder %s226, 1
        %s230 = scalar_select %p229, %s226, 1
        %s231 = smul.addr %s228, 8
        %s232 = sadd.s32 %s230, %s231
        %s233 = smul.addr %s232, 4
        %s234 = scalar_lea.vmem %s0, %s233
        %s235 = smul.u32 2, %s20
      $region36: #{_lambda_.22} parent=31 // pred_fallthru
        _
      // Predicated region
      $region37: #{_lambda_.22} parent=31 // pred_check
        %p236 = pneg %p116
      $region38: #{_lambda_.22} parent=31 // pred_check_branch
        %238 = sbr.rel (%p236) target = $region40
      $region39: #{_lambda_.22} parent=31 // pred_region
        %s239 = smul.u32 2, %s20
        %p240 = scmp.lt.s32.totalorder %s19, 1
        %s241 = scalar_select %p240, %s19, 1
        %p242 = scmp.lt.s32.totalorder %s239, 1
        %s243 = scalar_select %p242, %s239, 1
        %s244 = smul.addr %s241, 2
        %s245 = sadd.s32 %s243, %s244
        %s246 = smul.addr %s245, 8
        %s247 = scalar_lea.vmem %s3, %s246
        %s248 = smul.u32 2, %s20
      $region40: #{_lambda_.22} parent=31 // pred_fallthru
        _
    $region32: #{_lambda_.22} parent=5 // pred_fallthru
      _
    %p249 = scmp.le.s32.totalorder 1, %s12
    %p250 = scmp.lt.s32.totalorder %s12, 3
    %p251 = pnand %p249, %p250
    %p252 = pneg %p251
    // Predicated region
    $region41: #{_lambda_.22} parent=5 // pred_check
      _
    $region42: #{_lambda_.22} parent=5 // pred_check_branch
      %254 = sbr.rel (%p251) target = $region44
    $region43: #{_lambda_.22} parent=5 // pred_region
      %s255 = ssub.s32 %s12, 1
      %s256 = smul.u32 2, %s22
      %p257 = scmp.lt.s32.totalorder %s21, 1
      %s258 = scalar_select %p257, %s21, 1
      %p259 = scmp.lt.s32.totalorder %s256, 1
      %s260 = scalar_select %p259, %s256, 1
      %s261 = smul.addr %s258, 8
      %s262 = sadd.s32 %s260, %s261
      %s263 = smul.addr %s262, 4
      %s264 = scalar_lea.vmem %s0, %s263
      %p265 = pneg %p52
      %p266 = pneg %p49
      %p267 = pneg %p73
      %p268 = pneg %p70
      %p269 = pneg %p94
      %p270 = pneg %p91
      %s271 = smul.u32 2, %s22
      %p272 = scmp.lt.s32.totalorder %s21, 1
      %s273 = scalar_select %p272, %s21, 1
      %p274 = scmp.lt.s32.totalorder %s271, 1
      %s275 = scalar_select %p274, %s271, 1
      %s276 = smul.addr %s273, 2
      %s277 = sadd.s32 %s275, %s276
      %s278 = smul.addr %s277, 8
      %s279 = scalar_lea.vmem %s3, %s278
      %p280 = pneg %p122
      %p281 = pneg %p119
      %p282 = pneg %p143
      %p283 = pneg %p140
      %p284 = pneg %p164
      %p285 = pneg %p161
      %p286 = pneg %p192
      %p287 = pneg %p189
      %s288 = smul.u32 2, %s22
      %p289 = scmp.lt.s32.totalorder %s21, 1
      %s290 = scalar_select %p289, %s21, 1
      %p291 = scmp.lt.s32.totalorder %s288, 1
      %s292 = scalar_select %p291, %s288, 1
      %s293 = smul.addr %s290, 2
      %s294 = sadd.s32 %s292, %s293
      %s295 = smul.addr %s294, 8
      %s296 = scalar_lea.vmem %s6, %s295
      %s297 = smul.u32 2, %s22
      %p298 = scmp.lt.s32.totalorder %s21, 1
      %s299 = scalar_select %p298, %s21, 1
      %p300 = scmp.lt.s32.totalorder %s297, 1
      %s301 = scalar_select %p300, %s297, 1
      %s302 = smul.addr %s299, 8
      %s303 = sadd.s32 %s301, %s302
      %s304 = smul.addr %s303, 4
      %s305 = scalar_lea.vmem %s0, %s304
      %s306 = smul.u32 2, %s22
      %s307 = smul.u32 2, %s22
      %p308 = scmp.lt.s32.totalorder %s21, 1
      %s309 = scalar_select %p308, %s21, 1
      %p310 = scmp.lt.s32.totalorder %s307, 1
      %s311 = scalar_select %p310, %s307, 1
      %s312 = smul.addr %s309, 2
      %s313 = sadd.s32 %s311, %s312
      %s314 = smul.addr %s313, 8
      %s315 = scalar_lea.vmem %s3, %s314
      %s316 = smul.u32 2, %s22
      %s317 = smul.u32 2, %s22
      %p318 = scmp.lt.s32.totalorder %s21, 1
      %s319 = scalar_select %p318, %s21, 1
      %p320 = scmp.lt.s32.totalorder %s317, 1
      %s321 = scalar_select %p320, %s317, 1
      %s322 = smul.addr %s319, 2
      %s323 = sadd.s32 %s321, %s322
      %s324 = smul.addr %s323, 8
      %s325 = scalar_lea.vmem %s6, %s324
      %s326 = smul.u32 2, %s22
      %v328 = vld [vmem:[%s315] sm:$0xff]
      %v329 = vld [vmem:[%s315 + $0x8] sm:$0xff]
      %v330 = vld [vmem:[%s2] sm:$0x1]
      %v332 = vperm.slane %v330, 0
      %v334 = vadd.f32 %v328, %v332
      %v335 = vadd.f32 %v329, %v332
      %v336 = vld [vmem:[%s305] sm:$0xf]
      %v337 = vld [vmem:[%s305 + $0x4] sm:$0xf]
      %v338 = vld [vmem:[%s1] sm:$0xf]
      %v341 = vunpack.c.l.b16 %v336
      %v342 = vunpack.c.l.b16 %v337
      %v343 = vpack.c.b16 %v342, %v341
      %vm344 = vcmask 64512
      %v346 = vsel %vm344, %v343, 0
      %vm348 = vcmask 1043456
      %v350 = vsel %vm348, %v338, 0
      %352 = vmatpush.bf16.msra.mxu0 0
      %353 = vmatpush.bf16.msra.mxu0 0
      %354 = vmatpush.bf16.msra.mxu0 0
      %355 = vmatpush.bf16.msra.mxu0 0
      %356 = vmatpush.bf16.msra.mxu0 0
      %357 = vmatpush.bf16.msra.mxu0 0
      %358 = vmatpush.bf16.msra.mxu0 0
      %359 = vmatpush.bf16.msra.mxu0 %v350
      %360 = vmatmul.bf16.gmra.mxu0 %v346
      %v361 = vpop.f32.mrf.mxu0
      %v362 = vadd.f32 0.0, %v361
      %v363 = vpop.f32.mrf.mxu0
      %v364 = vadd.f32 0.0, %v363
      %365 = vdwg.mxu0
      %v366 = vadd.f32 %v334, %v362
      %v367 = vadd.f32 %v335, %v364
      %s368 = scalar_lea.vmem %s305, 8
      %v369 = vld [vmem:[%s368] sm:$0xf]
      %v370 = vld [vmem:[%s368 + $0x4] sm:$0xf]
      %s371 = scalar_lea.vmem %s1, 4
      %v372 = vld [vmem:[%s371] sm:$0xf]
      %v375 = vunpack.c.l.b16 %v369
      %v376 = vunpack.c.l.b16 %v370
      %v377 = vpack.c.b16 %v376, %v375
      %v379 = vsel %vm344, %v377, 0
      %v382 = vsel %vm348, %v372, 0
      %384 = vmatpush.bf16.msra.mxu0 0
      %385 = vmatpush.bf16.msra.mxu0 0
      %386 = vmatpush.bf16.msra.mxu0 0
      %387 = vmatpush.bf16.msra.mxu0 0
      %388 = vmatpush.bf16.msra.mxu0 0
      %389 = vmatpush.bf16.msra.mxu0 0
      %390 = vmatpush.bf16.msra.mxu0 0
      %391 = vmatpush.bf16.msra.mxu0 %v382
      %392 = vmatmul.bf16.gmra.mxu0 %v379
      %v393 = vpop.f32.mrf.mxu0
      %v394 = vadd.f32 0.0, %v393
      %v395 = vpop.f32.mrf.mxu0
      %v396 = vadd.f32 0.0, %v395
      %397 = vdwg.mxu0
      %v398 = vadd.f32 %v366, %v394
      %v399 = vadd.f32 %v367, %v396
      %s400 = scalar_lea.vmem %s305, 16
      %v401 = vld [vmem:[%s400] sm:$0xf]
      %v402 = vld [vmem:[%s400 + $0x4] sm:$0xf]
      %s403 = scalar_lea.vmem %s1, 8
      %v404 = vld [vmem:[%s403] sm:$0xf]
      %v407 = vunpack.c.l.b16 %v401
      %v408 = vunpack.c.l.b16 %v402
      %v409 = vpack.c.b16 %v408, %v407
      %v411 = vsel %vm344, %v409, 0
      %v414 = vsel %vm348, %v404, 0
      %416 = vmatpush.bf16.msra.mxu0 0
      %417 = vmatpush.bf16.msra.mxu0 0
      %418 = vmatpush.bf16.msra.mxu0 0
      %419 = vmatpush.bf16.msra.mxu0 0
      %420 = vmatpush.bf16.msra.mxu0 0
      %421 = vmatpush.bf16.msra.mxu0 0
      %422 = vmatpush.bf16.msra.mxu0 0
      %423 = vmatpush.bf16.msra.mxu0 %v414
      %424 = vmatmul.bf16.gmra.mxu0 %v411
      %v425 = vpop.f32.mrf.mxu0
      %v426 = vadd.f32 0.0, %v425
      %v427 = vpop.f32.mrf.mxu0
      %v428 = vadd.f32 0.0, %v427
      %429 = vdwg.mxu0
      %v430 = vadd.f32 %v398, %v426
      %v431 = vadd.f32 %v399, %v428
      %s432 = scalar_lea.vmem %s305, 24
      %v433 = vld [vmem:[%s432] sm:$0xf]
      %v434 = vld [vmem:[%s432 + $0x4] sm:$0xf]
      %s435 = scalar_lea.vmem %s1, 12
      %v436 = vld [vmem:[%s435] sm:$0xf]
      %v439 = vunpack.c.l.b16 %v433
      %v440 = vunpack.c.l.b16 %v434
      %v441 = vpack.c.b16 %v440, %v439
      %v443 = vsel %vm344, %v441, 0
      %v446 = vsel %vm348, %v436, 0
      %448 = vmatpush.bf16.msra.mxu0 0
      %449 = vmatpush.bf16.msra.mxu0 0
      %450 = vmatpush.bf16.msra.mxu0 0
      %451 = vmatpush.bf16.msra.mxu0 0
      %452 = vmatpush.bf16.msra.mxu0 0
      %453 = vmatpush.bf16.msra.mxu0 0
      %454 = vmatpush.bf16.msra.mxu0 0
      %455 = vmatpush.bf16.msra.mxu0 %v446
      %456 = vmatmul.bf16.gmra.mxu0 %v443
      %v457 = vpop.f32.mrf.mxu0
      %v458 = vadd.f32 0.0, %v457
      %v459 = vpop.f32.mrf.mxu0
      %v460 = vadd.f32 0.0, %v459
      %461 = vdwg.mxu0
      %v462 = vadd.f32 %v430, %v458
      %v463 = vadd.f32 %v431, %v460
      %vm464 = vcmask 261120
      %v465 = vsel %vm464, %v462, 0.0
      %466 = vadd.xlane.f32.xlu0 %v465
      %v467 = vpop.xlane.xlu0 %466
      %v468 = vsel %vm464, %v463, 0.0
      %469 = vadd.xlane.f32.xlu0 %v468
      %v470 = vpop.xlane.xlu0 %469
      %v471 = vrcp.pop 32.0
      %v472 = vmul.f32 32.0, %v471
      %v473 = vsub.f32 1.0, %v472
      %v474 = vmul.f32 %v471, %v473
      %v475 = vadd.f32 %v471, %v474
      %vm476 = vweird.f32 %v471
      %v477 = vsel %vm476, %v471, %v475
      %v478 = vmul.f32 %v467, %v477
      %v479 = vmul.f32 %v470, %v477
      %v480 = vsub.f32 %v462, %v478
      %v481 = vsub.f32 %v463, %v479
      %v482 = vmul.f32 %v480, %v480
      %v483 = vmul.f32 %v481, %v481
      %v484 = vsel %vm464, %v482, 0.0
      %485 = vadd.xlane.f32.xlu0 %v484
      %v486 = vpop.xlane.xlu0 %485
      %v487 = vsel %vm464, %v483, 0.0
      %488 = vadd.xlane.f32.xlu0 %v487
      %v489 = vpop.xlane.xlu0 %488
      %v490 = vmul.f32 %v486, %v477
      %v491 = vmul.f32 %v489, %v477
      %v492 = vadd.f32 %v490, 1e-05
      %v493 = vadd.f32 %v491, 1e-05
      %v494 = vrsqrt.pop %v492
      %v495 = vmul.f32 %v494, %v492
      %v496 = vmul.f32 %v495, %v494
      %v497 = vmul.f32 0.5, %v496
      %v498 = vsub.f32 1.5, %v497
      %v499 = vmul.f32 %v494, %v498
      %vm500 = vweird.f32 %v492
      %vm501 = vweird.f32 %v494
      %vm502 = vmor %vm500, %vm501
      %v503 = vsel %vm502, %v494, %v499
      %v504 = vrsqrt.pop %v493
      %v505 = vmul.f32 %v504, %v493
      %v506 = vmul.f32 %v505, %v504
      %v507 = vmul.f32 0.5, %v506
      %v508 = vsub.f32 1.5, %v507
      %v509 = vmul.f32 %v504, %v508
      %vm510 = vweird.f32 %v493
      %vm511 = vweird.f32 %v504
      %vm512 = vmor %vm510, %vm511
      %v513 = vsel %vm512, %v504, %v509
      %v514 = vmul.f32 %v480, %v503
      %v515 = vmul.f32 %v481, %v513
      %v516 = vld [vmem:[%s4] sm:$0x1]
      %v518 = vperm.slane %v516, 0
      %v520 = vmul.f32 %v514, %v518
      %v521 = vmul.f32 %v515, %v518
      %v522 = vld [vmem:[%s5] sm:$0x1]
      %v524 = vperm.slane %v522, 0
      %v526 = vadd.f32 %v520, %v524
      %v527 = vadd.f32 %v521, %v524
      %528 = vst.msk [vmem:[%s325] sm:$0xff] %vm464, %v526
      %529 = vst.msk [vmem:[%s325 + $0x8] sm:$0xff] %vm464, %v527
      %s530 = smul.u32 2, %s22
      %p531 = scmp.lt.s32.totalorder %s21, 1
      %s532 = scalar_select %p531, %s21, 1
      %p533 = scmp.lt.s32.totalorder %s530, 1
      %s534 = scalar_select %p533, %s530, 1
      %s535 = smul.addr %s532, 2
      %s536 = sadd.s32 %s534, %s535
      %s537 = smul.addr %s536, 8
      %s538 = scalar_lea.vmem %s6, %s537
      // Predicated region
      $region45: #{_lambda_.22} parent=43 // pred_check
        %p539 = pneg %p189
      $region46: #{_lambda_.22} parent=43 // pred_check_branch
        %541 = sbr.rel (%p539) target = $region48
      $region47: #{_lambda_.22} parent=43 // pred_region
        %s542 = smul.u32 2, %s22
      $region48: #{_lambda_.22} parent=43 // pred_fallthru
        _
    $region44: #{_lambda_.22} parent=5 // pred_fallthru
      _
    %p543 = scmp.le.s32.totalorder 2, %s12
    // Predicated region
    $region49: #{_lambda_.22} parent=5 // pred_check
      %p544 = pneg %p543
    $region50: #{_lambda_.22} parent=5 // pred_check_branch
      %546 = sbr.rel (%p544) target = $region52
    $region51: #{_lambda_.22} parent=5 // pred_region
      %s547 = ssub.s32 %s12, 2
      // Predicated region
      $region53: #{_lambda_.22} parent=51 // pred_check
        %p548 = pneg %p195
      $region54: #{_lambda_.22} parent=51 // pred_check_branch
        %550 = sbr.rel (%p548) target = $region56
      $region55: #{_lambda_.22} parent=51 // pred_region
        %s551 = smul.u32 2, %s24
        %p552 = scmp.lt.s32.totalorder %s23, 1
        %s553 = scalar_select %p552, %s23, 1
        %p554 = scmp.lt.s32.totalorder %s551, 1
        %s555 = scalar_select %p554, %s551, 1
        %s556 = smul.addr %s553, 2
        %s557 = sadd.s32 %s555, %s556
        %s558 = smul.addr %s557, 8
        %s559 = scalar_lea.vmem %s6, %s558
      $region56: #{_lambda_.22} parent=51 // pred_fallthru
        _
    $region52: #{_lambda_.22} parent=5 // pred_fallthru
      _
  $region6: #{_lambda_.22} parent=0 // loop_footer
    %s16 = sadd.s32 1, %s12
  $region7: #{_lambda_.22} parent=0 // loop_footer_branch
    %11 = sbr.rel target = $region3
  $region8: #{_lambda_.22} parent=0 // loop_exit
    _

// kernel: _lambda_.28
$region0: #{_lambda_.28}
  #allocation0 [shape = 'u32[]', space=smem, size = 0x4, offset = 0x4, fixed_abs, tag = 'smem constant byte address 0x4 - core index']
  #allocation1 [shape = 'u32[72,128]{1,0:T(1,128)}', space=vmem, size = 0x9000, scoped, tag = 'internal scratch']
  %s0 = inlined_call_operand.vmem [shape: f32[2,8,16], index: 0, kind: input, shape index: {}]
  %s1 = inlined_call_operand.vmem [shape: bf16[16,32], index: 1, kind: input, shape index: {}]
  %s2 = inlined_call_operand.vmem [shape: f32[1,32], index: 2, kind: input, shape index: {}]
  %s3 = inlined_call_operand.vmem [shape: f32[2,8,32], index: 3, kind: output, shape index: {}]
  %s4 = sld [smem:[#allocation0]]
  $region45: #{_lambda_.28} parent=0
    _
  %s6 = ssub.s32 1, %s4
  %s7 = scalar_select 0, %s6, %s4
  loop: start=0, step=1, limit=4
  $region2: #{_lambda_.28} parent=0 // loop_pre_header
    _
  $region3: #{_lambda_.28} parent=0 // loop_header
    %s9 = sphi 0, %s13
    %p10 = scmp.ge.s32.totalorder %s9, 4
    %s16 = sphi 0, %s28
    %s17 = sphi 0, %s24
    %s18 = sphi 0, %s16
    %s19 = sphi 0, %s17
    %s20 = sphi 0, %s18
    %s21 = sphi 0, %s19
    %s33 = sphi 0, %s35
    %s36 = sphi 0, %s33
    %s37 = sphi 0, %s36
    %s53 = sphi 0, %s37
    %s57 = sphi 0, %s57
    %s59 = sphi 0, %s57
    %s60 = sphi 0, %s59
    %s74 = sphi 0, %s60
    %s78 = sphi 0, %s78
    %s80 = sphi 0, %s78
    %s81 = sphi 0, %s80
    %s95 = sphi 0, %s81
    %s103 = sphi 0, %s105
    %s106 = sphi 0, %s103
    %s107 = sphi 0, %s106
    %s123 = sphi 0, %s107
  $region4: #{_lambda_.28} parent=0 // loop_header_branch
    %12 = sbr.rel (%p10) target = $region8
  $region5: #{_lambda_.28} parent=0 // loop_body
    %s14 = ssub.s32 %s9, 1
    %s15 = ssub.s32 %s9, 2
    %s22 = sadd.s32 1, %s17
    %p23 = scmp.ge.s32.totalorder %s22, 1
    %s24 = scalar_select %p23, 0, %s22
    %s25 = sadd.s32 1, %s16
    %s26 = scalar_select %p23, %s25, %s16
    %p27 = scmp.ge.s32.totalorder %s26, 2
    %s28 = scalar_select %p27, 0, %s26
    %s29 = ssub.s32 %s16, %s28
    %s30 = ssub.s32 %s17, %s24
    %s31 = sor.u32 %s29, %s30
    %p32 = scmp.eq.s32.totalorder %s31, 0
    %s34 = sadd.s32 %s33, 1
    %s35 = scalar_select %p32, %s33, %s34
    %p38 = pneg %p32
    %p39 = scmp.eq.s32.totalorder %s9, 1
    %p40 = por %p38, %p39
    %p41 = scmp.ne.s32.totalorder %s33, %s36
    %p42 = scmp.eq.s32.totalorder %s9, 0
    %p43 = por %p41, %p42
    %p44 = scmp.ne.s32.totalorder %s33, %s36
    %p45 = scmp.eq.s32.totalorder %s14, 1
    %p46 = por %p44, %p45
    %p47 = scmp.ne.s32.totalorder %s36, %s37
    %p48 = scmp.eq.s32.totalorder %s14, 0
    %p49 = por %p47, %p48
    %p50 = scmp.ne.s32.totalorder %s36, %s37
    %p51 = scmp.eq.s32.totalorder %s15, 1
    %p52 = por %p50, %p51
    %p54 = scmp.ne.s32.totalorder %s37, %s53
    %p55 = scmp.eq.s32.totalorder %s15, 0
    %p56 = por %p54, %p55
    %s58 = sadd.s32 %s57, 1
    %p61 = scmp.eq.s32.totalorder %s9, 1
    %p62 = scmp.ne.s32.totalorder %s57, %s59
    %p63 = scmp.eq.s32.totalorder %s9, 0
    %p64 = por %p62, %p63
    %p65 = scmp.ne.s32.totalorder %s57, %s59
    %p66 = scmp.eq.s32.totalorder %s14, 1
    %p67 = por %p65, %p66
    %p68 = scmp.ne.s32.totalorder %s59, %s60
    %p69 = scmp.eq.s32.totalorder %s14, 0
    %p70 = por %p68, %p69
    %p71 = scmp.ne.s32.totalorder %s59, %s60
    %p72 = scmp.eq.s32.totalorder %s15, 1
    %p73 = por %p71, %p72
    %p75 = scmp.ne.s32.totalorder %s60, %s74
    %p76 = scmp.eq.s32.totalorder %s15, 0
    %p77 = por %p75, %p76
    %s79 = sadd.s32 %s78, 1
    %p82 = scmp.eq.s32.totalorder %s9, 1
    %p83 = scmp.ne.s32.totalorder %s78, %s80
    %p84 = scmp.eq.s32.totalorder %s9, 0
    %p85 = por %p83, %p84
    %p86 = scmp.ne.s32.totalorder %s78, %s80
    %p87 = scmp.eq.s32.totalorder %s14, 1
    %p88 = por %p86, %p87
    %p89 = scmp.ne.s32.totalorder %s80, %s81
    %p90 = scmp.eq.s32.totalorder %s14, 0
    %p91 = por %p89, %p90
    %p92 = scmp.ne.s32.totalorder %s80, %s81
    %p93 = scmp.eq.s32.totalorder %s15, 1
    %p94 = por %p92, %p93
    %p96 = scmp.ne.s32.totalorder %s81, %s95
    %p97 = scmp.eq.s32.totalorder %s15, 0
    %p98 = por %p96, %p97
    %s99 = ssub.s32 %s16, %s28
    %s100 = ssub.s32 %s17, %s24
    %s101 = sor.u32 %s99, %s100
    %p102 = scmp.eq.s32.totalorder %s101, 0
    %s104 = sadd.s32 %s103, 1
    %s105 = scalar_select %p102, %s103, %s104
    %p108 = pneg %p102
    %p109 = scmp.eq.s32.totalorder %s9, 1
    %p110 = por %p108, %p109
    %p111 = scmp.ne.s32.totalorder %s103, %s106
    %p112 = scmp.eq.s32.totalorder %s9, 0
    %p113 = por %p111, %p112
    %p114 = scmp.ne.s32.totalorder %s103, %s106
    %p115 = scmp.eq.s32.totalorder %s14, 1
    %p116 = por %p114, %p115
    %p117 = scmp.ne.s32.totalorder %s106, %s107
    %p118 = scmp.eq.s32.totalorder %s14, 0
    %p119 = por %p117, %p118
    %p120 = scmp.ne.s32.totalorder %s106, %s107
    %p121 = scmp.eq.s32.totalorder %s15, 1
    %p122 = por %p120, %p121
    %p124 = scmp.ne.s32.totalorder %s107, %s123
    %p125 = scmp.eq.s32.totalorder %s15, 0
    %p126 = por %p124, %p125
    %p127 = scmp.le.s32.totalorder 1, %s9
    %p128 = scmp.lt.s32.totalorder %s9, 3
    %p129 = pnand %p127, %p128
    %p130 = pneg %p129
    // Predicated region
    $region9: #{_lambda_.28} parent=5 // pred_check
      _
    $region10: #{_lambda_.28} parent=5 // pred_check_branch
      %132 = sbr.rel (%p129) target = $region12
    $region11: #{_lambda_.28} parent=5 // pred_region
      %s133 = ssub.s32 %s9, 1
      // Predicated region
      $region13: #{_lambda_.28} parent=11 // pred_check
        %p134 = pneg %p70
      $region14: #{_lambda_.28} parent=11 // pred_check_branch
        %136 = sbr.rel (%p134) target = $region16
      $region15: #{_lambda_.28} parent=11 // pred_region
        _
      $region16: #{_lambda_.28} parent=11 // pred_fallthru
        _
      // Predicated region
      $region17: #{_lambda_.28} parent=11 // pred_check
        %p137 = pneg %p91
      $region18: #{_lambda_.28} parent=11 // pred_check_branch
        %139 = sbr.rel (%p137) target = $region20
      $region19: #{_lambda_.28} parent=11 // pred_region
        _
      $region20: #{_lambda_.28} parent=11 // pred_fallthru
        _
    $region12: #{_lambda_.28} parent=5 // pred_fallthru
      _
    %p140 = scmp.lt.s32.totalorder %s9, 2
    // Predicated region
    $region21: #{_lambda_.28} parent=5 // pred_check
      %p141 = pneg %p140
    $region22: #{_lambda_.28} parent=5 // pred_check_branch
      %143 = sbr.rel (%p141) target = $region24
    $region23: #{_lambda_.28} parent=5 // pred_region
      // Predicated region
      $region25: #{_lambda_.28} parent=23 // pred_check
        %p144 = pneg %p43
      $region26: #{_lambda_.28} parent=23 // pred_check_branch
        %146 = sbr.rel (%p144) target = $region28
      $region27: #{_lambda_.28} parent=23 // pred_region
        %p147 = scmp.lt.s32.totalorder %s16, 1
        %s148 = scalar_select %p147, %s16, 1
        %p149 = scmp.lt.s32.totalorder %s17, 0
        %s150 = scalar_select %p149, %s17, 0
        %s151 = sadd.s32 %s150, %s148
        %s152 = smul.addr %s151, 8
        %s153 = scalar_lea.vmem %s0, %s152
      $region28: #{_lambda_.28} parent=23 // pred_fallthru
        _
    $region24: #{_lambda_.28} parent=5 // pred_fallthru
      _
    %p154 = scmp.le.s32.totalorder 1, %s9
    %p155 = scmp.lt.s32.totalorder %s9, 3
    %p156 = pnand %p154, %p155
    %p157 = pneg %p156
    // Predicated region
    $region29: #{_lambda_.28} parent=5 // pred_check
      _
    $region30: #{_lambda_.28} parent=5 // pred_check_branch
      %159 = sbr.rel (%p156) target = $region32
    $region31: #{_lambda_.28} parent=5 // pred_region
      %s160 = ssub.s32 %s9, 1
      %p161 = scmp.lt.s32.totalorder %s18, 1
      %s162 = scalar_select %p161, %s18, 1
      %p163 = scmp.lt.s32.totalorder %s19, 0
      %s164 = scalar_select %p163, %s19, 0
      %s165 = sadd.s32 %s164, %s162
      %s166 = smul.addr %s165, 8
      %s167 = scalar_lea.vmem %s0, %s166
      %p168 = pneg %p49
      %p169 = pneg %p46
      %p170 = pneg %p70
      %p171 = pneg %p67
      %p172 = pneg %p91
      %p173 = pneg %p88
      %p174 = pneg %p119
      %p175 = pneg %p116
      %p176 = scmp.lt.s32.totalorder %s18, 1
      %s177 = scalar_select %p176, %s18, 1
      %p178 = scmp.lt.s32.totalorder %s19, 0
      %s179 = scalar_select %p178, %s19, 0
      %s180 = sadd.s32 %s179, %s177
      %s181 = smul.addr %s180, 8
      %s182 = scalar_lea.vmem %s3, %s181
      %p183 = scmp.lt.s32.totalorder %s18, 1
      %s184 = scalar_select %p183, %s18, 1
      %p185 = scmp.lt.s32.totalorder %s19, 0
      %s186 = scalar_select %p185, %s19, 0
      %s187 = sadd.s32 %s186, %s184
      %s188 = smul.addr %s187, 8
      %s189 = scalar_lea.vmem %s0, %s188
      %p190 = scmp.lt.s32.totalorder %s18, 1
      %s191 = scalar_select %p190, %s18, 1
      %p192 = scmp.lt.s32.totalorder %s19, 0
      %s193 = scalar_select %p192, %s19, 0
      %s194 = sadd.s32 %s193, %s191
      %s195 = smul.addr %s194, 8
      %s196 = scalar_lea.vmem %s3, %s195
      %v198 = vld [vmem:[%s189] sm:$0xff]
      %v199 = vpack.c.bf16 %v198, %v198
      %v200 = vld [vmem:[%s1] sm:$0xf]
      %v201 = vld [vmem:[%s1 + $0x4] sm:$0xf]
      %v202 = vld [vmem:[%s2] sm:$0x1]
      %v204 = vperm.slane %v202, 0
      %v208 = vunpack.c.l.b16 %v200
      %v209 = vunpack.c.l.b16 %v201
      %v210 = vpack.c.b16 %v209, %v208
      %vm212 = vcmask 130048
      %v214 = vsel %vm212, %v199, 0
      %216 = vmatpush.bf16.msra.mxu0 0
      %217 = vmatpush.bf16.msra.mxu0 0
      %218 = vmatpush.bf16.msra.mxu0 0
      %219 = vmatpush.bf16.msra.mxu0 0
      %220 = vmatpush.bf16.msra.mxu0 0
      %221 = vmatpush.bf16.msra.mxu0 0
      %222 = vmatpush.bf16.msra.mxu0 0
      %223 = vmatpush.bf16.msra.mxu0 %v210
      %224 = vmatmul.bf16.gmra.mxu0 %v214
      %v225 = vpop.f32.mrf.mxu0
      %v226 = vadd.f32 %v204, %v225
      %v227 = vpop.f32.mrf.mxu0
      %228 = vdwg.mxu0
      %vm229 = vcmask 261120
      %230 = vst.msk [vmem:[%s196] sm:$0xff] %vm229, %v226
      %p231 = scmp.lt.s32.totalorder %s18, 1
      %s232 = scalar_select %p231, %s18, 1
      %p233 = scmp.lt.s32.totalorder %s19, 0
      %s234 = scalar_select %p233, %s19, 0
      %s235 = sadd.s32 %s234, %s232
      %s236 = smul.addr %s235, 8
      %s237 = scalar_lea.vmem %s3, %s236
      // Predicated region
      $region33: #{_lambda_.28} parent=31 // pred_check
        %p238 = pneg %p116
      $region34: #{_lambda_.28} parent=31 // pred_check_branch
        %240 = sbr.rel (%p238) target = $region36
      $region35: #{_lambda_.28} parent=31 // pred_region
        _
      $region36: #{_lambda_.28} parent=31 // pred_fallthru
        _
    $region32: #{_lambda_.28} parent=5 // pred_fallthru
      _
    %p241 = scmp.le.s32.totalorder 2, %s9
    // Predicated region
    $region37: #{_lambda_.28} parent=5 // pred_check
      %p242 = pneg %p241
    $region38: #{_lambda_.28} parent=5 // pred_check_branch
      %244 = sbr.rel (%p242) target = $region40
    $region39: #{_lambda_.28} parent=5 // pred_region
      %s245 = ssub.s32 %s9, 2
      // Predicated region
      $region41: #{_lambda_.28} parent=39 // pred_check
        %p246 = pneg %p122
      $region42: #{_lambda_.28} parent=39 // pred_check_branch
        %248 = sbr.rel (%p246) target = $region44
      $region43: #{_lambda_.28} parent=39 // pred_region
        %p249 = scmp.lt.s32.totalorder %s20, 1
        %s250 = scalar_select %p249, %s20, 1
        %p251 = scmp.lt.s32.totalorder %s21, 0
        %s252 = scalar_select %p251, %s21, 0
        %s253 = sadd.s32 %s252, %s250
        %s254 = smul.addr %s253, 8
        %s255 = scalar_lea.vmem %s3, %s254
      $region44: #{_lambda_.28} parent=39 // pred_fallthru
        _
    $region40: #{_lambda_.28} parent=5 // pred_fallthru
      _
  $region6: #{_lambda_.28} parent=0 // loop_footer
    %s13 = sadd.s32 1, %s9
  $region7: #{_lambda_.28} parent=0 // loop_footer_branch
    %8 = sbr.rel target = $region3
  $region8: #{_lambda_.28} parent=0 // loop_exit
    _

// kernel: _lambda_.29
$region0: #{_lambda_.29}
  #allocation0 [shape = 'u32[]', space=smem, size = 0x4, offset = 0x4, fixed_abs, tag = 'smem constant byte address 0x4 - core index']
  #allocation1 [shape = 'u32[72,128]{1,0:T(1,128)}', space=vmem, size = 0x9000, scoped, tag = 'internal scratch']
  %s0 = inlined_call_operand.vmem [shape: f32[2,8,32], index: 0, kind: input, shape index: {}]
  %s1 = inlined_call_operand.vmem [shape: bf16[32,96], index: 1, kind: input, shape index: {}]
  %s2 = inlined_call_operand.vmem [shape: f32[1,96], index: 2, kind: input, shape index: {}]
  %s3 = inlined_call_operand.vmem [shape: bf16[2,4,8,8], index: 3, kind: output, shape index: {0}]
  %s4 = inlined_call_operand.vmem [shape: bf16[2,4,8,8], index: 4, kind: output, shape index: {1}]
  %s5 = inlined_call_operand.vmem [shape: bf16[2,4,8,8], index: 5, kind: output, shape index: {2}]
  %6 = xla_tuple %s3, %s4, %s5
  %s7 = sld [smem:[#allocation0]]
  $region61: #{_lambda_.29} parent=0
    _
  %s9 = ssub.s32 1, %s7
  %s10 = scalar_select 0, %s9, %s7
  loop: start=0, step=1, limit=4
  $region2: #{_lambda_.29} parent=0 // loop_pre_header
    _
  $region3: #{_lambda_.29} parent=0 // loop_header
    %s12 = sphi 0, %s16
    %p13 = scmp.ge.s32.totalorder %s12, 4
    %s19 = sphi 0, %s31
    %s20 = sphi 0, %s27
    %s21 = sphi 0, %s19
    %s22 = sphi 0, %s20
    %s23 = sphi 0, %s21
    %s24 = sphi 0, %s22
    %s36 = sphi 0, %s38
    %s39 = sphi 0, %s36
    %s40 = sphi 0, %s39
    %s56 = sphi 0, %s40
    %s60 = sphi 0, %s60
    %s62 = sphi 0, %s60
    %s63 = sphi 0, %s62
    %s77 = sphi 0, %s63
    %s81 = sphi 0, %s81
    %s83 = sphi 0, %s81
    %s84 = sphi 0, %s83
    %s98 = sphi 0, %s84
    %s106 = sphi 0, %s108
    %s109 = sphi 0, %s106
    %s110 = sphi 0, %s109
    %s126 = sphi 0, %s110
    %s134 = sphi 0, %s136
    %s137 = sphi 0, %s134
    %s138 = sphi 0, %s137
    %s154 = sphi 0, %s138
    %s162 = sphi 0, %s164
    %s165 = sphi 0, %s162
    %s166 = sphi 0, %s165
    %s182 = sphi 0, %s166
  $region4: #{_lambda_.29} parent=0 // loop_header_branch
    %15 = sbr.rel (%p13) target = $region8
  $region5: #{_lambda_.29} parent=0 // loop_body
    %s17 = ssub.s32 %s12, 1
    %s18 = ssub.s32 %s12, 2
    %s25 = sadd.s32 1, %s20
    %p26 = scmp.ge.s32.totalorder %s25, 1
    %s27 = scalar_select %p26, 0, %s25
    %s28 = sadd.s32 1, %s19
    %s29 = scalar_select %p26, %s28, %s19
    %p30 = scmp.ge.s32.totalorder %s29, 2
    %s31 = scalar_select %p30, 0, %s29
    %s32 = ssub.s32 %s19, %s31
    %s33 = ssub.s32 %s20, %s27
    %s34 = sor.u32 %s32, %s33
    %p35 = scmp.eq.s32.totalorder %s34, 0
    %s37 = sadd.s32 %s36, 1
    %s38 = scalar_select %p35, %s36, %s37
    %p41 = pneg %p35
    %p42 = scmp.eq.s32.totalorder %s12, 1
    %p43 = por %p41, %p42
    %p44 = scmp.ne.s32.totalorder %s36, %s39
    %p45 = scmp.eq.s32.totalorder %s12, 0
    %p46 = por %p44, %p45
    %p47 = scmp.ne.s32.totalorder %s36, %s39
    %p48 = scmp.eq.s32.totalorder %s17, 1
    %p49 = por %p47, %p48
    %p50 = scmp.ne.s32.totalorder %s39, %s40
    %p51 = scmp.eq.s32.totalorder %s17, 0
    %p52 = por %p50, %p51
    %p53 = scmp.ne.s32.totalorder %s39, %s40
    %p54 = scmp.eq.s32.totalorder %s18, 1
    %p55 = por %p53, %p54
    %p57 = scmp.ne.s32.totalorder %s40, %s56
    %p58 = scmp.eq.s32.totalorder %s18, 0
    %p59 = por %p57, %p58
    %s61 = sadd.s32 %s60, 1
    %p64 = scmp.eq.s32.totalorder %s12, 1
    %p65 = scmp.ne.s32.totalorder %s60, %s62
    %p66 = scmp.eq.s32.totalorder %s12, 0
    %p67 = por %p65, %p66
    %p68 = scmp.ne.s32.totalorder %s60, %s62
    %p69 = scmp.eq.s32.totalorder %s17, 1
    %p70 = por %p68, %p69
    %p71 = scmp.ne.s32.totalorder %s62, %s63
    %p72 = scmp.eq.s32.totalorder %s17, 0
    %p73 = por %p71, %p72
    %p74 = scmp.ne.s32.totalorder %s62, %s63
    %p75 = scmp.eq.s32.totalorder %s18, 1
    %p76 = por %p74, %p75
    %p78 = scmp.ne.s32.totalorder %s63, %s77
    %p79 = scmp.eq.s32.totalorder %s18, 0
    %p80 = por %p78, %p79
    %s82 = sadd.s32 %s81, 1
    %p85 = scmp.eq.s32.totalorder %s12, 1
    %p86 = scmp.ne.s32.totalorder %s81, %s83
    %p87 = scmp.eq.s32.totalorder %s12, 0
    %p88 = por %p86, %p87
    %p89 = scmp.ne.s32.totalorder %s81, %s83
    %p90 = scmp.eq.s32.totalorder %s17, 1
    %p91 = por %p89, %p90
    %p92 = scmp.ne.s32.totalorder %s83, %s84
    %p93 = scmp.eq.s32.totalorder %s17, 0
    %p94 = por %p92, %p93
    %p95 = scmp.ne.s32.totalorder %s83, %s84
    %p96 = scmp.eq.s32.totalorder %s18, 1
    %p97 = por %p95, %p96
    %p99 = scmp.ne.s32.totalorder %s84, %s98
    %p100 = scmp.eq.s32.totalorder %s18, 0
    %p101 = por %p99, %p100
    %s102 = ssub.s32 %s19, %s31
    %s103 = ssub.s32 %s20, %s27
    %s104 = sor.u32 %s102, %s103
    %p105 = scmp.eq.s32.totalorder %s104, 0
    %s107 = sadd.s32 %s106, 1
    %s108 = scalar_select %p105, %s106, %s107
    %p111 = pneg %p105
    %p112 = scmp.eq.s32.totalorder %s12, 1
    %p113 = por %p111, %p112
    %p114 = scmp.ne.s32.totalorder %s106, %s109
    %p115 = scmp.eq.s32.totalorder %s12, 0
    %p116 = por %p114, %p115
    %p117 = scmp.ne.s32.totalorder %s106, %s109
    %p118 = scmp.eq.s32.totalorder %s17, 1
    %p119 = por %p117, %p118
    %p120 = scmp.ne.s32.totalorder %s109, %s110
    %p121 = scmp.eq.s32.totalorder %s17, 0
    %p122 = por %p120, %p121
    %p123 = scmp.ne.s32.totalorder %s109, %s110
    %p124 = scmp.eq.s32.totalorder %s18, 1
    %p125 = por %p123, %p124
    %p127 = scmp.ne.s32.totalorder %s110, %s126
    %p128 = scmp.eq.s32.totalorder %s18, 0
    %p129 = por %p127, %p128
    %s130 = ssub.s32 %s19, %s31
    %s131 = ssub.s32 %s20, %s27
    %s132 = sor.u32 %s130, %s131
    %p133 = scmp.eq.s32.totalorder %s132, 0
    %s135 = sadd.s32 %s134, 1
    %s136 = scalar_select %p133, %s134, %s135
    %p139 = pneg %p133
    %p140 = scmp.eq.s32.totalorder %s12, 1
    %p141 = por %p139, %p140
    %p142 = scmp.ne.s32.totalorder %s134, %s137
    %p143 = scmp.eq.s32.totalorder %s12, 0
    %p144 = por %p142, %p143
    %p145 = scmp.ne.s32.totalorder %s134, %s137
    %p146 = scmp.eq.s32.totalorder %s17, 1
    %p147 = por %p145, %p146
    %p148 = scmp.ne.s32.totalorder %s137, %s138
    %p149 = scmp.eq.s32.totalorder %s17, 0
    %p150 = por %p148, %p149
    %p151 = scmp.ne.s32.totalorder %s137, %s138
    %p152 = scmp.eq.s32.totalorder %s18, 1
    %p153 = por %p151, %p152
    %p155 = scmp.ne.s32.totalorder %s138, %s154
    %p156 = scmp.eq.s32.totalorder %s18, 0
    %p157 = por %p155, %p156
    %s158 = ssub.s32 %s19, %s31
    %s159 = ssub.s32 %s20, %s27
    %s160 = sor.u32 %s158, %s159
    %p161 = scmp.eq.s32.totalorder %s160, 0
    %s163 = sadd.s32 %s162, 1
    %s164 = scalar_select %p161, %s162, %s163
    %p167 = pneg %p161
    %p168 = scmp.eq.s32.totalorder %s12, 1
    %p169 = por %p167, %p168
    %p170 = scmp.ne.s32.totalorder %s162, %s165
    %p171 = scmp.eq.s32.totalorder %s12, 0
    %p172 = por %p170, %p171
    %p173 = scmp.ne.s32.totalorder %s162, %s165
    %p174 = scmp.eq.s32.totalorder %s17, 1
    %p175 = por %p173, %p174
    %p176 = scmp.ne.s32.totalorder %s165, %s166
    %p177 = scmp.eq.s32.totalorder %s17, 0
    %p178 = por %p176, %p177
    %p179 = scmp.ne.s32.totalorder %s165, %s166
    %p180 = scmp.eq.s32.totalorder %s18, 1
    %p181 = por %p179, %p180
    %p183 = scmp.ne.s32.totalorder %s166, %s182
    %p184 = scmp.eq.s32.totalorder %s18, 0
    %p185 = por %p183, %p184
    %p186 = scmp.le.s32.totalorder 1, %s12
    %p187 = scmp.lt.s32.totalorder %s12, 3
    %p188 = pnand %p186, %p187
    %p189 = pneg %p188
    // Predicated region
    $region9: #{_lambda_.29} parent=5 // pred_check
      _
    $region10: #{_lambda_.29} parent=5 // pred_check_branch
      %191 = sbr.rel (%p188) target = $region12
    $region11: #{_lambda_.29} parent=5 // pred_region
      %s192 = ssub.s32 %s12, 1
      // Predicated region
      $region13: #{_lambda_.29} parent=11 // pred_check
        %p193 = pneg %p73
      $region14: #{_lambda_.29} parent=11 // pred_check_branch
        %195 = sbr.rel (%p193) target = $region16
      $region15: #{_lambda_.29} parent=11 // pred_region
        _
      $region16: #{_lambda_.29} parent=11 // pred_fallthru
        _
      // Predicated region
      $region17: #{_lambda_.29} parent=11 // pred_check
        %p196 = pneg %p94
      $region18: #{_lambda_.29} parent=11 // pred_check_branch
        %198 = sbr.rel (%p196) target = $region20
      $region19: #{_lambda_.29} parent=11 // pred_region
        _
      $region20: #{_lambda_.29} parent=11 // pred_fallthru
        _
    $region12: #{_lambda_.29} parent=5 // pred_fallthru
      _
    %p199 = scmp.lt.s32.totalorder %s12, 2
    // Predicated region
    $region21: #{_lambda_.29} parent=5 // pred_check
      %p200 = pneg %p199
    $region22: #{_lambda_.29} parent=5 // pred_check_branch
      %202 = sbr.rel (%p200) target = $region24
    $region23: #{_lambda_.29} parent=5 // pred_region
      // Predicated region
      $region25: #{_lambda_.29} parent=23 // pred_check
        %p203 = pneg %p46
      $region26: #{_lambda_.29} parent=23 // pred_check_branch
        %205 = sbr.rel (%p203) target = $region28
      $region27: #{_lambda_.29} parent=23 // pred_region
        %p206 = scmp.lt.s32.totalorder %s19, 1
        %s207 = scalar_select %p206, %s19, 1
        %p208 = scmp.lt.s32.totalorder %s20, 0
        %s209 = scalar_select %p208, %s20, 0
        %s210 = sadd.s32 %s209, %s207
        %s211 = smul.addr %s210, 8
        %s212 = scalar_lea.vmem %s0, %s211
      $region28: #{_lambda_.29} parent=23 // pred_fallthru
        _
    $region24: #{_lambda_.29} parent=5 // pred_fallthru
      _
    %p213 = scmp.le.s32.totalorder 1, %s12
    %p214 = scmp.lt.s32.totalorder %s12, 3
    %p215 = pnand %p213, %p214
    %p216 = pneg %p215
    // Predicated region
    $region29: #{_lambda_.29} parent=5 // pred_check
      _
    $region30: #{_lambda_.29} parent=5 // pred_check_branch
      %218 = sbr.rel (%p215) target = $region32
    $region31: #{_lambda_.29} parent=5 // pred_region
      %s219 = ssub.s32 %s12, 1
      %p220 = scmp.lt.s32.totalorder %s21, 1
      %s221 = scalar_select %p220, %s21, 1
      %p222 = scmp.lt.s32.totalorder %s22, 0
      %s223 = scalar_select %p222, %s22, 0
      %s224 = sadd.s32 %s223, %s221
      %s225 = smul.addr %s224, 8
      %s226 = scalar_lea.vmem %s0, %s225
      %p227 = pneg %p52
      %p228 = pneg %p49
      %p229 = pneg %p73
      %p230 = pneg %p70
      %p231 = pneg %p94
      %p232 = pneg %p91
      %p233 = pneg %p122
      %p234 = pneg %p119
      %p235 = scmp.lt.s32.totalorder %s21, 1
      %s236 = scalar_select %p235, %s21, 1
      %p237 = scmp.lt.s32.totalorder %s22, 0
      %s238 = scalar_select %p237, %s22, 0
      %s239 = smul.addr %s236, 4
      %s240 = sadd.s32 %s238, %s239
      %s241 = smul.addr %s240, 4
      %s242 = scalar_lea.vmem %s3, %s241
      %p243 = pneg %p150
      %p244 = pneg %p147
      %p245 = scmp.lt.s32.totalorder %s21, 1
      %s246 = scalar_select %p245, %s21, 1
      %p247 = scmp.lt.s32.totalorder %s22, 0
      %s248 = scalar_select %p247, %s22, 0
      %s249 = smul.addr %s246, 4
      %s250 = sadd.s32 %s248, %s249
      %s251 = smul.addr %s250, 4
      %s252 = scalar_lea.vmem %s4, %s251
      %p253 = pneg %p178
      %p254 = pneg %p175
      %p255 = scmp.lt.s32.totalorder %s21, 1
      %s256 = scalar_select %p255, %s21, 1
      %p257 = scmp.lt.s32.totalorder %s22, 0
      %s258 = scalar_select %p257, %s22, 0
      %s259 = smul.addr %s256, 4
      %s260 = sadd.s32 %s258, %s259
      %s261 = smul.addr %s260, 4
      %s262 = scalar_lea.vmem %s5, %s261
      %p263 = scmp.lt.s32.totalorder %s21, 1
      %s264 = scalar_select %p263, %s21, 1
      %p265 = scmp.lt.s32.totalorder %s22, 0
      %s266 = scalar_select %p265, %s22, 0
      %s267 = sadd.s32 %s266, %s264
      %s268 = smul.addr %s267, 8
      %s269 = scalar_lea.vmem %s0, %s268
      %p270 = scmp.lt.s32.totalorder %s21, 1
      %s271 = scalar_select %p270, %s21, 1
      %p272 = scmp.lt.s32.totalorder %s22, 0
      %s273 = scalar_select %p272, %s22, 0
      %s274 = smul.addr %s271, 4
      %s275 = sadd.s32 %s273, %s274
      %s276 = smul.addr %s275, 4
      %s277 = scalar_lea.vmem %s3, %s276
      %p278 = scmp.lt.s32.totalorder %s21, 1
      %s279 = scalar_select %p278, %s21, 1
      %p280 = scmp.lt.s32.totalorder %s22, 0
      %s281 = scalar_select %p280, %s22, 0
      %s282 = smul.addr %s279, 4
      %s283 = sadd.s32 %s281, %s282
      %s284 = smul.addr %s283, 4
      %s285 = scalar_lea.vmem %s4, %s284
      %p286 = scmp.lt.s32.totalorder %s21, 1
      %s287 = scalar_select %p286, %s21, 1
      %p288 = scmp.lt.s32.totalorder %s22, 0
      %s289 = scalar_select %p288, %s22, 0
      %s290 = smul.addr %s287, 4
      %s291 = sadd.s32 %s289, %s290
      %s292 = smul.addr %s291, 4
      %s293 = scalar_lea.vmem %s5, %s292
      %v295 = vld [vmem:[%s269] sm:$0xff]
      %v296 = vpack.c.bf16 %v295, %v295
      %v297 = vld [vmem:[%s1] sm:$0xf]
      %v298 = vld [vmem:[%s1 + $0x4] sm:$0xf]
      %v299 = vld [vmem:[%s1 + $0x8] sm:$0xf]
      %v300 = vld [vmem:[%s1 + $0xc] sm:$0xf]
      %v301 = vld [vmem:[%s2] sm:$0x1]
      %v303 = vperm.slane %v301, 0
      %v309 = vunpack.c.l.b16 %v297
      %v310 = vunpack.c.l.b16 %v298
      %v311 = vunpack.c.l.b16 %v299
      %v312 = vunpack.c.l.b16 %v300
      %v313 = vpack.c.b16 %v310, %v309
      %v314 = vpack.c.b16 %v312, %v311
      %vm317 = vcmask 261120
      %v319 = vsel %vm317, %v296, 0
      %321 = vmatpush.bf16.msra.mxu0 0
      %322 = vmatpush.bf16.msra.mxu0 0
      %323 = vmatpush.bf16.msra.mxu0 0
      %324 = vmatpush.bf16.msra.mxu0 0
      %325 = vmatpush.bf16.msra.mxu0 0
      %326 = vmatpush.bf16.msra.mxu0 0
      %327 = vmatpush.bf16.msra.mxu0 %v314
      %328 = vmatpush.bf16.msra.mxu0 %v313
      %329 = vmatmul.bf16.gmra.mxu0 %v319
      %v330 = vpop.f32.mrf.mxu0
      %v331 = vadd.f32 %v303, %v330
      %v332 = vpop.f32.mrf.mxu0
      %333 = vdwg.mxu0
      %v334 = vpack.c.bf16 %v331, %v331
      %vm335 = vcmask 60416
      %336 = vst.msk [vmem:[%s277] sm:$0xf] %vm335, %v334
      %338 = vrot.lane.b32.xlu0 %v334, 120
      %v339 = vpop.permute.xlu0 %338
      %s341 = scalar_lea.vmem %s277, 4
      %342 = vst.msk [vmem:[%s341] sm:$0xf] %vm335, %v339
      %343 = vrot.lane.b32.xlu0 %v334, 112
      %v344 = vpop.permute.xlu0 %343
      %s346 = scalar_lea.vmem %s277, 8
      %347 = vst.msk [vmem:[%s346] sm:$0xf] %vm335, %v344
      %348 = vrot.lane.b32.xlu0 %v334, 104
      %v349 = vpop.permute.xlu0 %348
      %s351 = scalar_lea.vmem %s277, 12
      %352 = vst.msk [vmem:[%s351] sm:$0xf] %vm335, %v349
      %353 = vrot.lane.b32.xlu0 %v334, 96
      %v354 = vpop.permute.xlu0 %353
      %356 = vst.msk [vmem:[%s285] sm:$0xf] %vm335, %v354
      %357 = vrot.lane.b32.xlu0 %v334, 88
      %v358 = vpop.permute.xlu0 %357
      %s360 = scalar_lea.vmem %s285, 4
      %361 = vst.msk [vmem:[%s360] sm:$0xf] %vm335, %v358
      %362 = vrot.lane.b32.xlu0 %v334, 80
      %v363 = vpop.permute.xlu0 %362
      %s365 = scalar_lea.vmem %s285, 8
      %366 = vst.msk [vmem:[%s365] sm:$0xf] %vm335, %v363
      %367 = vrot.lane.b32.xlu0 %v334, 72
      %v368 = vpop.permute.xlu0 %367
      %s370 = scalar_lea.vmem %s285, 12
      %371 = vst.msk [vmem:[%s370] sm:$0xf] %vm335, %v368
      %372 = vrot.lane.b32.xlu0 %v334, 64
      %v373 = vpop.permute.xlu0 %372
      %375 = vst.msk [vmem:[%s293] sm:$0xf] %vm335, %v373
      %376 = vrot.lane.b32.xlu0 %v334, 56
      %v377 = vpop.permute.xlu0 %376
      %s379 = scalar_lea.vmem %s293, 4
      %380 = vst.msk [vmem:[%s379] sm:$0xf] %vm335, %v377
      %381 = vrot.lane.b32.xlu0 %v334, 48
      %v382 = vpop.permute.xlu0 %381
      %s384 = scalar_lea.vmem %s293, 8
      %385 = vst.msk [vmem:[%s384] sm:$0xf] %vm335, %v382
      %386 = vrot.lane.b32.xlu0 %v334, 40
      %v387 = vpop.permute.xlu0 %386
      %s389 = scalar_lea.vmem %s293, 12
      %390 = vst.msk [vmem:[%s389] sm:$0xf] %vm335, %v387
      %p391 = scmp.lt.s32.totalorder %s21, 1
      %s392 = scalar_select %p391, %s21, 1
      %p393 = scmp.lt.s32.totalorder %s22, 0
      %s394 = scalar_select %p393, %s22, 0
      %s395 = smul.addr %s392, 4
      %s396 = sadd.s32 %s394, %s395
      %s397 = smul.addr %s396, 4
      %s398 = scalar_lea.vmem %s3, %s397
      %p399 = scmp.lt.s32.totalorder %s21, 1
      %s400 = scalar_select %p399, %s21, 1
      %p401 = scmp.lt.s32.totalorder %s22, 0
      %s402 = scalar_select %p401, %s22, 0
      %s403 = smul.addr %s400, 4
      %s404 = sadd.s32 %s402, %s403
      %s405 = smul.addr %s404, 4
      %s406 = scalar_lea.vmem %s4, %s405
      %p407 = scmp.lt.s32.totalorder %s21, 1
      %s408 = scalar_select %p407, %s21, 1
      %p409 = scmp.lt.s32.totalorder %s22, 0
      %s410 = scalar_select %p409, %s22, 0
      %s411 = smul.addr %s408, 4
      %s412 = sadd.s32 %s410, %s411
      %s413 = smul.addr %s412, 4
      %s414 = scalar_lea.vmem %s5, %s413
      // Predicated region
      $region33: #{_lambda_.29} parent=31 // pred_check
        %p415 = pneg %p119
      $region34: #{_lambda_.29} parent=31 // pred_check_branch
        %417 = sbr.rel (%p415) target = $region36
      $region35: #{_lambda_.29} parent=31 // pred_region
        _
      $region36: #{_lambda_.29} parent=31 // pred_fallthru
        _
      // Predicated region
      $region37: #{_lambda_.29} parent=31 // pred_check
        %p418 = pneg %p147
      $region38: #{_lambda_.29} parent=31 // pred_check_branch
        %420 = sbr.rel (%p418) target = $region40
      $region39: #{_lambda_.29} parent=31 // pred_region
        _
      $region40: #{_lambda_.29} parent=31 // pred_fallthru
        _
      // Predicated region
      $region41: #{_lambda_.29} parent=31 // pred_check
        %p421 = pneg %p175
      $region42: #{_lambda_.29} parent=31 // pred_check_branch
        %423 = sbr.rel (%p421) target = $region44
      $region43: #{_lambda_.29} parent=31 // pred_region
        _
      $region44: #{_lambda_.29} parent=31 // pred_fallthru
        _
    $region32: #{_lambda_.29} parent=5 // pred_fallthru
      _
    %p424 = scmp.le.s32.totalorder 2, %s12
    // Predicated region
    $region45: #{_lambda_.29} parent=5 // pred_check
      %p425 = pneg %p424
    $region46: #{_lambda_.29} parent=5 // pred_check_branch
      %427 = sbr.rel (%p425) target = $region48
    $region47: #{_lambda_.29} parent=5 // pred_region
      %s428 = ssub.s32 %s12, 2
      // Predicated region
      $region49: #{_lambda_.29} parent=47 // pred_check
        %p429 = pneg %p125
      $region50: #{_lambda_.29} parent=47 // pred_check_branch
        %431 = sbr.rel (%p429) target = $region52
      $region51: #{_lambda_.29} parent=47 // pred_region
        %p432 = scmp.lt.s32.totalorder %s23, 1
        %s433 = scalar_select %p432, %s23, 1
        %p434 = scmp.lt.s32.totalorder %s24, 0
        %s435 = scalar_select %p434, %s24, 0
        %s436 = smul.addr %s433, 4
        %s437 = sadd.s32 %s435, %s436
        %s438 = smul.addr %s437, 4
        %s439 = scalar_lea.vmem %s3, %s438
      $region52: #{_lambda_.29} parent=47 // pred_fallthru
        _
      // Predicated region
      $region53: #{_lambda_.29} parent=47 // pred_check
        %p440 = pneg %p153
      $region54: #{_lambda_.29} parent=47 // pred_check_branch
        %442 = sbr.rel (%p440) target = $region56
      $region55: #{_lambda_.29} parent=47 // pred_region
        %p443 = scmp.lt.s32.totalorder %s23, 1
        %s444 = scalar_select %p443, %s23, 1
        %p445 = scmp.lt.s32.totalorder %s24, 0
        %s446 = scalar_select %p445, %s24, 0
        %s447 = smul.addr %s444, 4
        %s448 = sadd.s32 %s446, %s447
        %s449 = smul.addr %s448, 4
        %s450 = scalar_lea.vmem %s4, %s449
      $region56: #{_lambda_.29} parent=47 // pred_fallthru
        _
      // Predicated region
      $region57: #{_lambda_.29} parent=47 // pred_check
        %p451 = pneg %p181
      $region58: #{_lambda_.29} parent=47 // pred_check_branch
        %453 = sbr.rel (%p451) target = $region60
      $region59: #{_lambda_.29} parent=47 // pred_region
        %p454 = scmp.lt.s32.totalorder %s23, 1
        %s455 = scalar_select %p454, %s23, 1
        %p456 = scmp.lt.s32.totalorder %s24, 0
        %s457 = scalar_select %p456, %s24, 0
        %s458 = smul.addr %s455, 4
        %s459 = sadd.s32 %s457, %s458
        %s460 = smul.addr %s459, 4
        %s461 = scalar_lea.vmem %s5, %s460
      $region60: #{_lambda_.29} parent=47 // pred_fallthru
        _
    $region48: #{_lambda_.29} parent=5 // pred_fallthru
      _
  $region6: #{_lambda_.29} parent=0 // loop_footer
    %s16 = sadd.s32 1, %s12
  $region7: #{_lambda_.29} parent=0 // loop_footer_branch
    %11 = sbr.rel target = $region3
  $region8: #{_lambda_.29} parent=0 // loop_exit
    _

// kernel: _lambda_.23
$region0: #{_lambda_.23}
  #allocation0 [shape = 'u32[]', space=smem, size = 0x4, offset = 0x4, fixed_abs, tag = 'smem constant byte address 0x4 - core index']
  #allocation1 [shape = 'u32[72,128]{1,0:T(1,128)}', space=vmem, size = 0x9000, scoped, tag = 'internal scratch']
  %s0 = inlined_call_operand.vmem [shape: f32[2,16,32], index: 0, kind: input, shape index: {}]
  %s1 = inlined_call_operand.vmem [shape: bf16[32,64], index: 1, kind: input, shape index: {}]
  %s2 = inlined_call_operand.vmem [shape: f32[1,64], index: 2, kind: input, shape index: {}]
  %s3 = inlined_call_operand.vmem [shape: bf16[64,32], index: 3, kind: input, shape index: {}]
  %s4 = inlined_call_operand.vmem [shape: f32[1,32], index: 4, kind: input, shape index: {}]
  %s5 = inlined_call_operand.vmem [shape: f32[1,32], index: 5, kind: input, shape index: {}]
  %s6 = inlined_call_operand.vmem [shape: f32[1,32], index: 6, kind: input, shape index: {}]
  %s7 = inlined_call_operand.vmem [shape: f32[2,16,32], index: 7, kind: output, shape index: {}]
  %s8 = sld [smem:[#allocation0]]
  $region61: #{_lambda_.23} parent=0
    _
  %s10 = ssub.s32 1, %s8
  %s11 = scalar_select 0, %s10, %s8
  loop: start=0, step=1, limit=4
  $region2: #{_lambda_.23} parent=0 // loop_pre_header
    _
  $region3: #{_lambda_.23} parent=0 // loop_header
    %s13 = sphi 0, %s17
    %p14 = scmp.ge.s32.totalorder %s13, 4
    %s20 = sphi 0, %s32
    %s21 = sphi 0, %s28
    %s22 = sphi 0, %s20
    %s23 = sphi 0, %s21
    %s24 = sphi 0, %s22
    %s25 = sphi 0, %s23
    %s37 = sphi 0, %s39
    %s40 = sphi 0, %s37
    %s41 = sphi 0, %s40
    %s57 = sphi 0, %s41
    %s61 = sphi 0, %s61
    %s63 = sphi 0, %s61
    %s64 = sphi 0, %s63
    %s78 = sphi 0, %s64
    %s82 = sphi 0, %s82
    %s84 = sphi 0, %s82
    %s85 = sphi 0, %s84
    %s99 = sphi 0, %s85
    %s103 = sphi 0, %s103
    %s105 = sphi 0, %s103
    %s106 = sphi 0, %s105
    %s120 = sphi 0, %s106
    %s124 = sphi 0, %s124
    %s126 = sphi 0, %s124
    %s127 = sphi 0, %s126
    %s141 = sphi 0, %s127
    %s145 = sphi 0, %s145
    %s147 = sphi 0, %s145
    %s148 = sphi 0, %s147
    %s162 = sphi 0, %s148
    %s166 = sphi 0, %s166
    %s168 = sphi 0, %s166
    %s169 = sphi 0, %s168
    %s183 = sphi 0, %s169
    %s191 = sphi 0, %s193
    %s194 = sphi 0, %s191
    %s195 = sphi 0, %s194
    %s211 = sphi 0, %s195
  $region4: #{_lambda_.23} parent=0 // loop_header_branch
    %16 = sbr.rel (%p14) target = $region8
  $region5: #{_lambda_.23} parent=0 // loop_body
    %s18 = ssub.s32 %s13, 1
    %s19 = ssub.s32 %s13, 2
    %s26 = sadd.s32 1, %s21
    %p27 = scmp.ge.s32.totalorder %s26, 1
    %s28 = scalar_select %p27, 0, %s26
    %s29 = sadd.s32 1, %s20
    %s30 = scalar_select %p27, %s29, %s20
    %p31 = scmp.ge.s32.totalorder %s30, 2
    %s32 = scalar_select %p31, 0, %s30
    %s33 = ssub.s32 %s20, %s32
    %s34 = ssub.s32 %s21, %s28
    %s35 = sor.u32 %s33, %s34
    %p36 = scmp.eq.s32.totalorder %s35, 0
    %s38 = sadd.s32 %s37, 1
    %s39 = scalar_select %p36, %s37, %s38
    %p42 = pneg %p36
    %p43 = scmp.eq.s32.totalorder %s13, 1
    %p44 = por %p42, %p43
    %p45 = scmp.ne.s32.totalorder %s37, %s40
    %p46 = scmp.eq.s32.totalorder %s13, 0
    %p47 = por %p45, %p46
    %p48 = scmp.ne.s32.totalorder %s37, %s40
    %p49 = scmp.eq.s32.totalorder %s18, 1
    %p50 = por %p48, %p49
    %p51 = scmp.ne.s32.totalorder %s40, %s41
    %p52 = scmp.eq.s32.totalorder %s18, 0
    %p53 = por %p51, %p52
    %p54 = scmp.ne.s32.totalorder %s40, %s41
    %p55 = scmp.eq.s32.totalorder %s19, 1
    %p56 = por %p54, %p55
    %p58 = scmp.ne.s32.totalorder %s41, %s57
    %p59 = scmp.eq.s32.totalorder %s19, 0
    %p60 = por %p58, %p59
    %s62 = sadd.s32 %s61, 1
    %p65 = scmp.eq.s32.totalorder %s13, 1
    %p66 = scmp.ne.s32.totalorder %s61, %s63
    %p67 = scmp.eq.s32.totalorder %s13, 0
    %p68 = por %p66, %p67
    %p69 = scmp.ne.s32.totalorder %s61, %s63
    %p70 = scmp.eq.s32.totalorder %s18, 1
    %p71 = por %p69, %p70
    %p72 = scmp.ne.s32.totalorder %s63, %s64
    %p73 = scmp.eq.s32.totalorder %s18, 0
    %p74 = por %p72, %p73
    %p75 = scmp.ne.s32.totalorder %s63, %s64
    %p76 = scmp.eq.s32.totalorder %s19, 1
    %p77 = por %p75, %p76
    %p79 = scmp.ne.s32.totalorder %s64, %s78
    %p80 = scmp.eq.s32.totalorder %s19, 0
    %p81 = por %p79, %p80
    %s83 = sadd.s32 %s82, 1
    %p86 = scmp.eq.s32.totalorder %s13, 1
    %p87 = scmp.ne.s32.totalorder %s82, %s84
    %p88 = scmp.eq.s32.totalorder %s13, 0
    %p89 = por %p87, %p88
    %p90 = scmp.ne.s32.totalorder %s82, %s84
    %p91 = scmp.eq.s32.totalorder %s18, 1
    %p92 = por %p90, %p91
    %p93 = scmp.ne.s32.totalorder %s84, %s85
    %p94 = scmp.eq.s32.totalorder %s18, 0
    %p95 = por %p93, %p94
    %p96 = scmp.ne.s32.totalorder %s84, %s85
    %p97 = scmp.eq.s32.totalorder %s19, 1
    %p98 = por %p96, %p97
    %p100 = scmp.ne.s32.totalorder %s85, %s99
    %p101 = scmp.eq.s32.totalorder %s19, 0
    %p102 = por %p100, %p101
    %s104 = sadd.s32 %s103, 1
    %p107 = scmp.eq.s32.totalorder %s13, 1
    %p108 = scmp.ne.s32.totalorder %s103, %s105
    %p109 = scmp.eq.s32.totalorder %s13, 0
    %p110 = por %p108, %p109
    %p111 = scmp.ne.s32.totalorder %s103, %s105
    %p112 = scmp.eq.s32.totalorder %s18, 1
    %p113 = por %p111, %p112
    %p114 = scmp.ne.s32.totalorder %s105, %s106
    %p115 = scmp.eq.s32.totalorder %s18, 0
    %p116 = por %p114, %p115
    %p117 = scmp.ne.s32.totalorder %s105, %s106
    %p118 = scmp.eq.s32.totalorder %s19, 1
    %p119 = por %p117, %p118
    %p121 = scmp.ne.s32.totalorder %s106, %s120
    %p122 = scmp.eq.s32.totalorder %s19, 0
    %p123 = por %p121, %p122
    %s125 = sadd.s32 %s124, 1
    %p128 = scmp.eq.s32.totalorder %s13, 1
    %p129 = scmp.ne.s32.totalorder %s124, %s126
    %p130 = scmp.eq.s32.totalorder %s13, 0
    %p131 = por %p129, %p130
    %p132 = scmp.ne.s32.totalorder %s124, %s126
    %p133 = scmp.eq.s32.totalorder %s18, 1
    %p134 = por %p132, %p133
    %p135 = scmp.ne.s32.totalorder %s126, %s127
    %p136 = scmp.eq.s32.totalorder %s18, 0
    %p137 = por %p135, %p136
    %p138 = scmp.ne.s32.totalorder %s126, %s127
    %p139 = scmp.eq.s32.totalorder %s19, 1
    %p140 = por %p138, %p139
    %p142 = scmp.ne.s32.totalorder %s127, %s141
    %p143 = scmp.eq.s32.totalorder %s19, 0
    %p144 = por %p142, %p143
    %s146 = sadd.s32 %s145, 1
    %p149 = scmp.eq.s32.totalorder %s13, 1
    %p150 = scmp.ne.s32.totalorder %s145, %s147
    %p151 = scmp.eq.s32.totalorder %s13, 0
    %p152 = por %p150, %p151
    %p153 = scmp.ne.s32.totalorder %s145, %s147
    %p154 = scmp.eq.s32.totalorder %s18, 1
    %p155 = por %p153, %p154
    %p156 = scmp.ne.s32.totalorder %s147, %s148
    %p157 = scmp.eq.s32.totalorder %s18, 0
    %p158 = por %p156, %p157
    %p159 = scmp.ne.s32.totalorder %s147, %s148
    %p160 = scmp.eq.s32.totalorder %s19, 1
    %p161 = por %p159, %p160
    %p163 = scmp.ne.s32.totalorder %s148, %s162
    %p164 = scmp.eq.s32.totalorder %s19, 0
    %p165 = por %p163, %p164
    %s167 = sadd.s32 %s166, 1
    %p170 = scmp.eq.s32.totalorder %s13, 1
    %p171 = scmp.ne.s32.totalorder %s166, %s168
    %p172 = scmp.eq.s32.totalorder %s13, 0
    %p173 = por %p171, %p172
    %p174 = scmp.ne.s32.totalorder %s166, %s168
    %p175 = scmp.eq.s32.totalorder %s18, 1
    %p176 = por %p174, %p175
    %p177 = scmp.ne.s32.totalorder %s168, %s169
    %p178 = scmp.eq.s32.totalorder %s18, 0
    %p179 = por %p177, %p178
    %p180 = scmp.ne.s32.totalorder %s168, %s169
    %p181 = scmp.eq.s32.totalorder %s19, 1
    %p182 = por %p180, %p181
    %p184 = scmp.ne.s32.totalorder %s169, %s183
    %p185 = scmp.eq.s32.totalorder %s19, 0
    %p186 = por %p184, %p185
    %s187 = ssub.s32 %s20, %s32
    %s188 = ssub.s32 %s21, %s28
    %s189 = sor.u32 %s187, %s188
    %p190 = scmp.eq.s32.totalorder %s189, 0
    %s192 = sadd.s32 %s191, 1
    %s193 = scalar_select %p190, %s191, %s192
    %p196 = pneg %p190
    %p197 = scmp.eq.s32.totalorder %s13, 1
    %p198 = por %p196, %p197
    %p199 = scmp.ne.s32.totalorder %s191, %s194
    %p200 = scmp.eq.s32.totalorder %s13, 0
    %p201 = por %p199, %p200
    %p202 = scmp.ne.s32.totalorder %s191, %s194
    %p203 = scmp.eq.s32.totalorder %s18, 1
    %p204 = por %p202, %p203
    %p205 = scmp.ne.s32.totalorder %s194, %s195
    %p206 = scmp.eq.s32.totalorder %s18, 0
    %p207 = por %p205, %p206
    %p208 = scmp.ne.s32.totalorder %s194, %s195
    %p209 = scmp.eq.s32.totalorder %s19, 1
    %p210 = por %p208, %p209
    %p212 = scmp.ne.s32.totalorder %s195, %s211
    %p213 = scmp.eq.s32.totalorder %s19, 0
    %p214 = por %p212, %p213
    %p215 = scmp.le.s32.totalorder 1, %s13
    %p216 = scmp.lt.s32.totalorder %s13, 3
    %p217 = pnand %p215, %p216
    %p218 = pneg %p217
    // Predicated region
    $region9: #{_lambda_.23} parent=5 // pred_check
      _
    $region10: #{_lambda_.23} parent=5 // pred_check_branch
      %220 = sbr.rel (%p217) target = $region12
    $region11: #{_lambda_.23} parent=5 // pred_region
      %s221 = ssub.s32 %s13, 1
      // Predicated region
      $region13: #{_lambda_.23} parent=11 // pred_check
        %p222 = pneg %p74
      $region14: #{_lambda_.23} parent=11 // pred_check_branch
        %224 = sbr.rel (%p222) target = $region16
      $region15: #{_lambda_.23} parent=11 // pred_region
        _
      $region16: #{_lambda_.23} parent=11 // pred_fallthru
        _
      // Predicated region
      $region17: #{_lambda_.23} parent=11 // pred_check
        %p225 = pneg %p95
      $region18: #{_lambda_.23} parent=11 // pred_check_branch
        %227 = sbr.rel (%p225) target = $region20
      $region19: #{_lambda_.23} parent=11 // pred_region
        _
      $region20: #{_lambda_.23} parent=11 // pred_fallthru
        _
      // Predicated region
      $region21: #{_lambda_.23} parent=11 // pred_check
        %p228 = pneg %p116
      $region22: #{_lambda_.23} parent=11 // pred_check_branch
        %230 = sbr.rel (%p228) target = $region24
      $region23: #{_lambda_.23} parent=11 // pred_region
        _
      $region24: #{_lambda_.23} parent=11 // pred_fallthru
        _
      // Predicated region
      $region25: #{_lambda_.23} parent=11 // pred_check
        %p231 = pneg %p137
      $region26: #{_lambda_.23} parent=11 // pred_check_branch
        %233 = sbr.rel (%p231) target = $region28
      $region27: #{_lambda_.23} parent=11 // pred_region
        _
      $region28: #{_lambda_.23} parent=11 // pred_fallthru
        _
      // Predicated region
      $region29: #{_lambda_.23} parent=11 // pred_check
        %p234 = pneg %p158
      $region30: #{_lambda_.23} parent=11 // pred_check_branch
        %236 = sbr.rel (%p234) target = $region32
      $region31: #{_lambda_.23} parent=11 // pred_region
        _
      $region32: #{_lambda_.23} parent=11 // pred_fallthru
        _
      // Predicated region
      $region33: #{_lambda_.23} parent=11 // pred_check
        %p237 = pneg %p179
      $region34: #{_lambda_.23} parent=11 // pred_check_branch
        %239 = sbr.rel (%p237) target = $region36
      $region35: #{_lambda_.23} parent=11 // pred_region
        _
      $region36: #{_lambda_.23} parent=11 // pred_fallthru
        _
    $region12: #{_lambda_.23} parent=5 // pred_fallthru
      _
    %p240 = scmp.lt.s32.totalorder %s13, 2
    // Predicated region
    $region37: #{_lambda_.23} parent=5 // pred_check
      %p241 = pneg %p240
    $region38: #{_lambda_.23} parent=5 // pred_check_branch
      %243 = sbr.rel (%p241) target = $region40
    $region39: #{_lambda_.23} parent=5 // pred_region
      // Predicated region
      $region41: #{_lambda_.23} parent=39 // pred_check
        %p244 = pneg %p47
      $region42: #{_lambda_.23} parent=39 // pred_check_branch
        %246 = sbr.rel (%p244) target = $region44
      $region43: #{_lambda_.23} parent=39 // pred_region
        %s247 = smul.u32 2, %s21
        %p248 = scmp.lt.s32.totalorder %s20, 1
        %s249 = scalar_select %p248, %s20, 1
        %p250 = scmp.lt.s32.totalorder %s247, 1
        %s251 = scalar_select %p250, %s247, 1
        %s252 = smul.addr %s249, 2
        %s253 = sadd.s32 %s251, %s252
        %s254 = smul.addr %s253, 8
        %s255 = scalar_lea.vmem %s0, %s254
        %s256 = smul.u32 2, %s21
      $region44: #{_lambda_.23} parent=39 // pred_fallthru
        _
    $region40: #{_lambda_.23} parent=5 // pred_fallthru
      _
    %p257 = scmp.le.s32.totalorder 1, %s13
    %p258 = scmp.lt.s32.totalorder %s13, 3
    %p259 = pnand %p257, %p258
    %p260 = pneg %p259
    // Predicated region
    $region45: #{_lambda_.23} parent=5 // pred_check
      _
    $region46: #{_lambda_.23} parent=5 // pred_check_branch
      %262 = sbr.rel (%p259) target = $region48
    $region47: #{_lambda_.23} parent=5 // pred_region
      %s263 = ssub.s32 %s13, 1
      %s264 = smul.u32 2, %s23
      %p265 = scmp.lt.s32.totalorder %s22, 1
      %s266 = scalar_select %p265, %s22, 1
      %p267 = scmp.lt.s32.totalorder %s264, 1
      %s268 = scalar_select %p267, %s264, 1
      %s269 = smul.addr %s266, 2
      %s270 = sadd.s32 %s268, %s269
      %s271 = smul.addr %s270, 8
      %s272 = scalar_lea.vmem %s0, %s271
      %p273 = pneg %p53
      %p274 = pneg %p50
      %p275 = pneg %p74
      %p276 = pneg %p71
      %p277 = pneg %p95
      %p278 = pneg %p92
      %p279 = pneg %p116
      %p280 = pneg %p113
      %p281 = pneg %p137
      %p282 = pneg %p134
      %p283 = pneg %p158
      %p284 = pneg %p155
      %p285 = pneg %p179
      %p286 = pneg %p176
      %p287 = pneg %p207
      %p288 = pneg %p204
      %s289 = smul.u32 2, %s23
      %p290 = scmp.lt.s32.totalorder %s22, 1
      %s291 = scalar_select %p290, %s22, 1
      %p292 = scmp.lt.s32.totalorder %s289, 1
      %s293 = scalar_select %p292, %s289, 1
      %s294 = smul.addr %s291, 2
      %s295 = sadd.s32 %s293, %s294
      %s296 = smul.addr %s295, 8
      %s297 = scalar_lea.vmem %s7, %s296
      %s298 = smul.u32 2, %s23
      %p299 = scmp.lt.s32.totalorder %s22, 1
      %s300 = scalar_select %p299, %s22, 1
      %p301 = scmp.lt.s32.totalorder %s298, 1
      %s302 = scalar_select %p301, %s298, 1
      %s303 = smul.addr %s300, 2
      %s304 = sadd.s32 %s302, %s303
      %s305 = smul.addr %s304, 8
      %s306 = scalar_lea.vmem %s0, %s305
      %s307 = smul.u32 2, %s23
      %s308 = smul.u32 2, %s23
      %p309 = scmp.lt.s32.totalorder %s22, 1
      %s310 = scalar_select %p309, %s22, 1
      %p311 = scmp.lt.s32.totalorder %s308, 1
      %s312 = scalar_select %p311, %s308, 1
      %s313 = smul.addr %s310, 2
      %s314 = sadd.s32 %s312, %s313
      %s315 = smul.addr %s314, 8
      %s316 = scalar_lea.vmem %s7, %s315
      %s317 = smul.u32 2, %s23
      %v319 = vld [vmem:[%s306] sm:$0xff]
      %v320 = vld [vmem:[%s306 + $0x8] sm:$0xff]
      %v321 = vpack.c.bf16 %v320, %v319
      %v322 = vld [vmem:[%s1] sm:$0xf]
      %v323 = vld [vmem:[%s1 + $0x4] sm:$0xf]
      %v324 = vld [vmem:[%s1 + $0x8] sm:$0xf]
      %v325 = vld [vmem:[%s1 + $0xc] sm:$0xf]
      %v326 = vld [vmem:[%s2] sm:$0x1]
      %v328 = vperm.slane %v326, 0
      %v334 = vunpack.c.l.b16 %v322
      %v335 = vunpack.c.l.b16 %v323
      %v336 = vunpack.c.l.b16 %v324
      %v337 = vunpack.c.l.b16 %v325
      %v338 = vpack.c.b16 %v335, %v334
      %v339 = vpack.c.b16 %v337, %v336
      %vm342 = vcmask 261120
      %v344 = vsel %vm342, %v321, 0
      %346 = vmatpush.bf16.msra.mxu0 0
      %347 = vmatpush.bf16.msra.mxu0 0
      %348 = vmatpush.bf16.msra.mxu0 0
      %349 = vmatpush.bf16.msra.mxu0 0
      %350 = vmatpush.bf16.msra.mxu0 0
      %351 = vmatpush.bf16.msra.mxu0 0
      %352 = vmatpush.bf16.msra.mxu0 %v339
      %353 = vmatpush.bf16.msra.mxu0 %v338
      %354 = vmatmul.bf16.gmra.mxu0 %v344
      %v355 = vpop.f32.mrf.mxu0
      %v356 = vadd.f32 %v328, %v355
      %v357 = vpop.f32.mrf.mxu0
      %v358 = vadd.f32 %v328, %v357
      %359 = vdwg.mxu0
      %v360 = vmax.f32 %v356, 0.0
      %v361 = vmax.f32 %v358, 0.0
      %v362 = vpack.c.bf16 %v361, %v360
      %v363 = vld [vmem:[%s3] sm:$0xf]
      %v364 = vld [vmem:[%s3 + $0x4] sm:$0xf]
      %v365 = vld [vmem:[%s3 + $0x8] sm:$0xf]
      %v366 = vld [vmem:[%s3 + $0xc] sm:$0xf]
      %v367 = vld [vmem:[%s3 + $0x10] sm:$0xf]
      %v368 = vld [vmem:[%s3 + $0x14] sm:$0xf]
      %v369 = vld [vmem:[%s3 + $0x18] sm:$0xf]
      %v370 = vld [vmem:[%s3 + $0x1c] sm:$0xf]
      %v371 = vld [vmem:[%s4] sm:$0x1]
      %v373 = vperm.slane %v371, 0
      %v383 = vunpack.c.l.b16 %v363
      %v384 = vunpack.c.l.b16 %v364
      %v385 = vunpack.c.l.b16 %v365
      %v386 = vunpack.c.l.b16 %v366
      %v387 = vunpack.c.l.b16 %v367
      %v388 = vunpack.c.l.b16 %v368
      %v389 = vunpack.c.l.b16 %v369
      %v390 = vunpack.c.l.b16 %v370
      %v391 = vpack.c.b16 %v384, %v383
      %v392 = vpack.c.b16 %v386, %v385
      %v393 = vpack.c.b16 %v388, %v387
      %v394 = vpack.c.b16 %v390, %v389
      %vm399 = vcmask 523264
      %v401 = vsel %vm399, %v362, 0
      %403 = vmatpush.bf16.msra.mxu0 0
      %404 = vmatpush.bf16.msra.mxu0 0
      %405 = vmatpush.bf16.msra.mxu0 0
      %406 = vmatpush.bf16.msra.mxu0 0
      %407 = vmatpush.bf16.msra.mxu0 %v394
      %408 = vmatpush.bf16.msra.mxu0 %v393
      %409 = vmatpush.bf16.msra.mxu0 %v392
      %410 = vmatpush.bf16.msra.mxu0 %v391
      %411 = vmatmul.bf16.gmra.mxu0 %v401
      %v412 = vpop.f32.mrf.mxu0
      %v413 = vadd.f32 %v373, %v412
      %v414 = vpop.f32.mrf.mxu0
      %v415 = vadd.f32 %v373, %v414
      %416 = vdwg.mxu0
      %v417 = vadd.f32 %v413, %v319
      %v418 = vadd.f32 %v415, %v320
      %v419 = vsel %vm342, %v417, 0.0
      %420 = vadd.xlane.f32.xlu0 %v419
      %v421 = vpop.xlane.xlu0 %420
      %v422 = vsel %vm342, %v418, 0.0
      %423 = vadd.xlane.f32.xlu0 %v422
      %v424 = vpop.xlane.xlu0 %423
      %v425 = vrcp.pop 32.0
      %v426 = vmul.f32 32.0, %v425
      %v427 = vsub.f32 1.0, %v426
      %v428 = vmul.f32 %v425, %v427
      %v429 = vadd.f32 %v425, %v428
      %vm430 = vweird.f32 %v425
      %v431 = vsel %vm430, %v425, %v429
      %v432 = vmul.f32 %v421, %v431
      %v433 = vmul.f32 %v424, %v431
      %v434 = vsub.f32 %v417, %v432
      %v435 = vsub.f32 %v418, %v433
      %v436 = vmul.f32 %v434, %v434
      %v437 = vmul.f32 %v435, %v435
      %v438 = vsel %vm342, %v436, 0.0
      %439 = vadd.xlane.f32.xlu0 %v438
      %v440 = vpop.xlane.xlu0 %439
      %v441 = vsel %vm342, %v437, 0.0
      %442 = vadd.xlane.f32.xlu0 %v441
      %v443 = vpop.xlane.xlu0 %442
      %v444 = vmul.f32 %v440, %v431
      %v445 = vmul.f32 %v443, %v431
      %v446 = vadd.f32 %v444, 1e-05
      %v447 = vadd.f32 %v445, 1e-05
      %v448 = vrsqrt.pop %v446
      %v449 = vmul.f32 %v448, %v446
      %v450 = vmul.f32 %v449, %v448
      %v451 = vmul.f32 0.5, %v450
      %v452 = vsub.f32 1.5, %v451
      %v453 = vmul.f32 %v448, %v452
      %vm454 = vweird.f32 %v446
      %vm455 = vweird.f32 %v448
      %vm456 = vmor %vm454, %vm455
      %v457 = vsel %vm456, %v448, %v453
      %v458 = vrsqrt.pop %v447
      %v459 = vmul.f32 %v458, %v447
      %v460 = vmul.f32 %v459, %v458
      %v461 = vmul.f32 0.5, %v460
      %v462 = vsub.f32 1.5, %v461
      %v463 = vmul.f32 %v458, %v462
      %vm464 = vweird.f32 %v447
      %vm465 = vweird.f32 %v458
      %vm466 = vmor %vm464, %vm465
      %v467 = vsel %vm466, %v458, %v463
      %v468 = vmul.f32 %v434, %v457
      %v469 = vmul.f32 %v435, %v467
      %v470 = vld [vmem:[%s5] sm:$0x1]
      %v472 = vperm.slane %v470, 0
      %v474 = vmul.f32 %v468, %v472
      %v475 = vmul.f32 %v469, %v472
      %v476 = vld [vmem:[%s6] sm:$0x1]
      %v478 = vperm.slane %v476, 0
      %v480 = vadd.f32 %v474, %v478
      %v481 = vadd.f32 %v475, %v478
      %482 = vst.msk [vmem:[%s316] sm:$0xff] %vm342, %v480
      %483 = vst.msk [vmem:[%s316 + $0x8] sm:$0xff] %vm342, %v481
      %s484 = smul.u32 2, %s23
      %p485 = scmp.lt.s32.totalorder %s22, 1
      %s486 = scalar_select %p485, %s22, 1
      %p487 = scmp.lt.s32.totalorder %s484, 1
      %s488 = scalar_select %p487, %s484, 1
      %s489 = smul.addr %s486, 2
      %s490 = sadd.s32 %s488, %s489
      %s491 = smul.addr %s490, 8
      %s492 = scalar_lea.vmem %s7, %s491
      // Predicated region
      $region49: #{_lambda_.23} parent=47 // pred_check
        %p493 = pneg %p204
      $region50: #{_lambda_.23} parent=47 // pred_check_branch
        %495 = sbr.rel (%p493) target = $region52
      $region51: #{_lambda_.23} parent=47 // pred_region
        %s496 = smul.u32 2, %s23
      $region52: #{_lambda_.23} parent=47 // pred_fallthru
        _
    $region48: #{_lambda_.23} parent=5 // pred_fallthru
      _
    %p497 = scmp.le.s32.totalorder 2, %s13
    // Predicated region
    $region53: #{_lambda_.23} parent=5 // pred_check
      %p498 = pneg %p497
    $region54: #{_lambda_.23} parent=5 // pred_check_branch
      %500 = sbr.rel (%p498) target = $region56
    $region55: #{_lambda_.23} parent=5 // pred_region
      %s501 = ssub.s32 %s13, 2
      // Predicated region
      $region57: #{_lambda_.23} parent=55 // pred_check
        %p502 = pneg %p210
      $region58: #{_lambda_.23} parent=55 // pred_check_branch
        %504 = sbr.rel (%p502) target = $region60
      $region59: #{_lambda_.23} parent=55 // pred_region
        %s505 = smul.u32 2, %s25
        %p506 = scmp.lt.s32.totalorder %s24, 1
        %s507 = scalar_select %p506, %s24, 1
        %p508 = scmp.lt.s32.totalorder %s505, 1
        %s509 = scalar_select %p508, %s505, 1
        %s510 = smul.addr %s507, 2
        %s511 = sadd.s32 %s509, %s510
        %s512 = smul.addr %s511, 8
        %s513 = scalar_lea.vmem %s7, %s512
      $region60: #{_lambda_.23} parent=55 // pred_fallthru
        _
    $region56: #{_lambda_.23} parent=5 // pred_fallthru
      _
  $region6: #{_lambda_.23} parent=0 // loop_footer
    %s17 = sadd.s32 1, %s13
  $region7: #{_lambda_.23} parent=0 // loop_footer_branch
    %12 = sbr.rel target = $region3
  $region8: #{_lambda_.23} parent=0 // loop_exit
    _

// kernel: _lambda_.30
$region0: #{_lambda_.30}
  #allocation0 [shape = 'u32[]', space=smem, size = 0x4, offset = 0x4, fixed_abs, tag = 'smem constant byte address 0x4 - core index']
  #allocation1 [shape = 'u32[72,128]{1,0:T(1,128)}', space=vmem, size = 0x9000, scoped, tag = 'internal scratch']
  %s0 = inlined_call_operand.vmem [shape: bf16[2,4,8,8], index: 0, kind: input, shape index: {}]
  %s1 = inlined_call_operand.vmem [shape: bf16[2,4,8,8], index: 1, kind: input, shape index: {}]
  %s2 = inlined_call_operand.vmem [shape: bf16[2,4,8,8], index: 2, kind: input, shape index: {}]
  %s3 = inlined_call_operand.vmem [shape: bf16[2,4,8,8], index: 3, kind: output, shape index: {}]
  %s4 = sld [smem:[#allocation0]]
  $region45: #{_lambda_.30} parent=0
    _
  %s6 = ssub.s32 1, %s4
  %s7 = scalar_select 0, %s6, %s4
  loop: start=0, step=1, limit=10
  $region2: #{_lambda_.30} parent=0 // loop_pre_header
    _
  $region3: #{_lambda_.30} parent=0 // loop_header
    %s9 = sphi 0, %s13
    %p10 = scmp.ge.s32.totalorder %s9, 10
    %s16 = sphi 0, %s35
    %s17 = sphi 0, %s31
    %s18 = sphi 0, %s27
    %s19 = sphi 0, %s16
    %s20 = sphi 0, %s17
    %s21 = sphi 0, %s18
    %s22 = sphi 0, %s19
    %s23 = sphi 0, %s20
    %s24 = sphi 0, %s21
    %s42 = sphi 0, %s44
    %s45 = sphi 0, %s42
    %s46 = sphi 0, %s45
    %s62 = sphi 0, %s46
    %s70 = sphi 0, %s72
    %s73 = sphi 0, %s70
    %s74 = sphi 0, %s73
    %s90 = sphi 0, %s74
    %s98 = sphi 0, %s100
    %s101 = sphi 0, %s98
    %s102 = sphi 0, %s101
    %s118 = sphi 0, %s102
    %s128 = sphi 0, %s130
    %s131 = sphi 0, %s128
    %s132 = sphi 0, %s131
    %s148 = sphi 0, %s132
  $region4: #{_lambda_.30} parent=0 // loop_header_branch
    %12 = sbr.rel (%p10) target = $region8
  $region5: #{_lambda_.30} parent=0 // loop_body
    %s14 = ssub.s32 %s9, 1
    %s15 = ssub.s32 %s9, 2
    %s25 = sadd.s32 1, %s18
    %p26 = scmp.ge.s32.totalorder %s25, 1
    %s27 = scalar_select %p26, 0, %s25
    %s28 = sadd.s32 1, %s17
    %s29 = scalar_select %p26, %s28, %s17
    %p30 = scmp.ge.s32.totalorder %s29, 4
    %s31 = scalar_select %p30, 0, %s29
    %s32 = sadd.s32 1, %s16
    %s33 = scalar_select %p30, %s32, %s16
    %p34 = scmp.ge.s32.totalorder %s33, 2
    %s35 = scalar_select %p34, 0, %s33
    %s36 = ssub.s32 %s16, %s35
    %s37 = ssub.s32 %s17, %s31
    %s38 = sor.u32 %s36, %s37
    %s39 = ssub.s32 %s18, %s27
    %s40 = sor.u32 %s38, %s39
    %p41 = scmp.eq.s32.totalorder %s40, 0
    %s43 = sadd.s32 %s42, 1
    %s44 = scalar_select %p41, %s42, %s43
    %p47 = pneg %p41
    %p48 = scmp.eq.s32.totalorder %s9, 7
    %p49 = por %p47, %p48
    %p50 = scmp.ne.s32.totalorder %s42, %s45
    %p51 = scmp.eq.s32.totalorder %s9, 0
    %p52 = por %p50, %p51
    %p53 = scmp.ne.s32.totalorder %s42, %s45
    %p54 = scmp.eq.s32.totalorder %s14, 7
    %p55 = por %p53, %p54
    %p56 = scmp.ne.s32.totalorder %s45, %s46
    %p57 = scmp.eq.s32.totalorder %s14, 0
    %p58 = por %p56, %p57
    %p59 = scmp.ne.s32.totalorder %s45, %s46
    %p60 = scmp.eq.s32.totalorder %s15, 7
    %p61 = por %p59, %p60
    %p63 = scmp.ne.s32.totalorder %s46, %s62
    %p64 = scmp.eq.s32.totalorder %s15, 0
    %p65 = por %p63, %p64
    %s66 = ssub.s32 %s16, %s35
    %s67 = ssub.s32 %s17, %s31
    %s68 = sor.u32 %s66, %s67
    %p69 = scmp.eq.s32.totalorder %s68, 0
    %s71 = sadd.s32 %s70, 1
    %s72 = scalar_select %p69, %s70, %s71
    %p75 = pneg %p69
    %p76 = scmp.eq.s32.totalorder %s9, 7
    %p77 = por %p75, %p76
    %p78 = scmp.ne.s32.totalorder %s70, %s73
    %p79 = scmp.eq.s32.totalorder %s9, 0
    %p80 = por %p78, %p79
    %p81 = scmp.ne.s32.totalorder %s70, %s73
    %p82 = scmp.eq.s32.totalorder %s14, 7
    %p83 = por %p81, %p82
    %p84 = scmp.ne.s32.totalorder %s73, %s74
    %p85 = scmp.eq.s32.totalorder %s14, 0
    %p86 = por %p84, %p85
    %p87 = scmp.ne.s32.totalorder %s73, %s74
    %p88 = scmp.eq.s32.totalorder %s15, 7
    %p89 = por %p87, %p88
    %p91 = scmp.ne.s32.totalorder %s74, %s90
    %p92 = scmp.eq.s32.totalorder %s15, 0
    %p93 = por %p91, %p92
    %s94 = ssub.s32 %s16, %s35
    %s95 = ssub.s32 %s17, %s31
    %s96 = sor.u32 %s94, %s95
    %p97 = scmp.eq.s32.totalorder %s96, 0
    %s99 = sadd.s32 %s98, 1
    %s100 = scalar_select %p97, %s98, %s99
    %p103 = pneg %p97
    %p104 = scmp.eq.s32.totalorder %s9, 7
    %p105 = por %p103, %p104
    %p106 = scmp.ne.s32.totalorder %s98, %s101
    %p107 = scmp.eq.s32.totalorder %s9, 0
    %p108 = por %p106, %p107
    %p109 = scmp.ne.s32.totalorder %s98, %s101
    %p110 = scmp.eq.s32.totalorder %s14, 7
    %p111 = por %p109, %p110
    %p112 = scmp.ne.s32.totalorder %s101, %s102
    %p113 = scmp.eq.s32.totalorder %s14, 0
    %p114 = por %p112, %p113
    %p115 = scmp.ne.s32.totalorder %s101, %s102
    %p116 = scmp.eq.s32.totalorder %s15, 7
    %p117 = por %p115, %p116
    %p119 = scmp.ne.s32.totalorder %s102, %s118
    %p120 = scmp.eq.s32.totalorder %s15, 0
    %p121 = por %p119, %p120
    %s122 = ssub.s32 %s16, %s35
    %s123 = ssub.s32 %s17, %s31
    %s124 = sor.u32 %s122, %s123
    %s125 = ssub.s32 %s18, %s27
    %s126 = sor.u32 %s124, %s125
    %p127 = scmp.eq.s32.totalorder %s126, 0
    %s129 = sadd.s32 %s128, 1
    %s130 = scalar_select %p127, %s128, %s129
    %p133 = pneg %p127
    %p134 = scmp.eq.s32.totalorder %s9, 7
    %p135 = por %p133, %p134
    %p136 = scmp.ne.s32.totalorder %s128, %s131
    %p137 = scmp.eq.s32.totalorder %s9, 0
    %p138 = por %p136, %p137
    %p139 = scmp.ne.s32.totalorder %s128, %s131
    %p140 = scmp.eq.s32.totalorder %s14, 7
    %p141 = por %p139, %p140
    %p142 = scmp.ne.s32.totalorder %s131, %s132
    %p143 = scmp.eq.s32.totalorder %s14, 0
    %p144 = por %p142, %p143
    %p145 = scmp.ne.s32.totalorder %s131, %s132
    %p146 = scmp.eq.s32.totalorder %s15, 7
    %p147 = por %p145, %p146
    %p149 = scmp.ne.s32.totalorder %s132, %s148
    %p150 = scmp.eq.s32.totalorder %s15, 0
    %p151 = por %p149, %p150
    %p152 = scmp.le.s32.totalorder 1, %s9
    %p153 = scmp.lt.s32.totalorder %s9, 9
    %p154 = pnand %p152, %p153
    %p155 = pneg %p154
    // Predicated region
    $region9: #{_lambda_.30} parent=5 // pred_check
      _
    $region10: #{_lambda_.30} parent=5 // pred_check_branch
      %157 = sbr.rel (%p154) target = $region12
    $region11: #{_lambda_.30} parent=5 // pred_region
      %s158 = ssub.s32 %s9, 1
    $region12: #{_lambda_.30} parent=5 // pred_fallthru
      _
    %p159 = scmp.lt.s32.totalorder %s9, 8
    // Predicated region
    $region13: #{_lambda_.30} parent=5 // pred_check
      %p160 = pneg %p159
    $region14: #{_lambda_.30} parent=5 // pred_check_branch
      %162 = sbr.rel (%p160) target = $region16
    $region15: #{_lambda_.30} parent=5 // pred_region
      // Predicated region
      $region17: #{_lambda_.30} parent=15 // pred_check
        %p163 = pneg %p52
      $region18: #{_lambda_.30} parent=15 // pred_check_branch
        %165 = sbr.rel (%p163) target = $region20
      $region19: #{_lambda_.30} parent=15 // pred_region
        %p166 = scmp.lt.s32.totalorder %s16, 1
        %s167 = scalar_select %p166, %s16, 1
        %p168 = scmp.lt.s32.totalorder %s17, 3
        %s169 = scalar_select %p168, %s17, 3
        %p170 = scmp.lt.s32.totalorder %s18, 0
        %s171 = scalar_select %p170, %s18, 0
        %s172 = sadd.s32 %s171, %s169
        %s173 = smul.addr %s167, 4
        %s174 = sadd.s32 %s172, %s173
        %s175 = smul.addr %s174, 4
        %s176 = scalar_lea.vmem %s0, %s175
      $region20: #{_lambda_.30} parent=15 // pred_fallthru
        _
      // Predicated region
      $region21: #{_lambda_.30} parent=15 // pred_check
        %p177 = pneg %p80
      $region22: #{_lambda_.30} parent=15 // pred_check_branch
        %179 = sbr.rel (%p177) target = $region24
      $region23: #{_lambda_.30} parent=15 // pred_region
        %p180 = scmp.lt.s32.totalorder %s16, 1
        %s181 = scalar_select %p180, %s16, 1
        %p182 = scmp.lt.s32.totalorder %s17, 3
        %s183 = scalar_select %p182, %s17, 3
        %s184 = smul.addr %s181, 4
        %s185 = sadd.s32 %s183, %s184
        %s186 = smul.addr %s185, 4
        %s187 = scalar_lea.vmem %s1, %s186
      $region24: #{_lambda_.30} parent=15 // pred_fallthru
        _
      // Predicated region
      $region25: #{_lambda_.30} parent=15 // pred_check
        %p188 = pneg %p108
      $region26: #{_lambda_.30} parent=15 // pred_check_branch
        %190 = sbr.rel (%p188) target = $region28
      $region27: #{_lambda_.30} parent=15 // pred_region
        %p191 = scmp.lt.s32.totalorder %s16, 1
        %s192 = scalar_select %p191, %s16, 1
        %p193 = scmp.lt.s32.totalorder %s17, 3
        %s194 = scalar_select %p193, %s17, 3
        %s195 = smul.addr %s192, 4
        %s196 = sadd.s32 %s194, %s195
        %s197 = smul.addr %s196, 4
        %s198 = scalar_lea.vmem %s2, %s197
      $region28: #{_lambda_.30} parent=15 // pred_fallthru
        _
    $region16: #{_lambda_.30} parent=5 // pred_fallthru
      _
    %p199 = scmp.le.s32.totalorder 1, %s9
    %p200 = scmp.lt.s32.totalorder %s9, 9
    %p201 = pnand %p199, %p200
    %p202 = pneg %p201
    // Predicated region
    $region29: #{_lambda_.30} parent=5 // pred_check
      _
    $region30: #{_lambda_.30} parent=5 // pred_check_branch
      %204 = sbr.rel (%p201) target = $region32
    $region31: #{_lambda_.30} parent=5 // pred_region
      %s205 = ssub.s32 %s9, 1
      %p206 = scmp.lt.s32.totalorder %s19, 1
      %s207 = scalar_select %p206, %s19, 1
      %p208 = scmp.lt.s32.totalorder %s20, 3
      %s209 = scalar_select %p208, %s20, 3
      %p210 = scmp.lt.s32.totalorder %s21, 0
      %s211 = scalar_select %p210, %s21, 0
      %s212 = sadd.s32 %s211, %s209
      %s213 = smul.addr %s207, 4
      %s214 = sadd.s32 %s212, %s213
      %s215 = smul.addr %s214, 4
      %s216 = scalar_lea.vmem %s0, %s215
      %p217 = pneg %p58
      %p218 = pneg %p55
      %p219 = scmp.lt.s32.totalorder %s19, 1
      %s220 = scalar_select %p219, %s19, 1
      %p221 = scmp.lt.s32.totalorder %s20, 3
      %s222 = scalar_select %p221, %s20, 3
      %s223 = smul.addr %s220, 4
      %s224 = sadd.s32 %s222, %s223
      %s225 = smul.addr %s224, 4
      %s226 = scalar_lea.vmem %s1, %s225
      %p227 = pneg %p86
      %p228 = pneg %p83
      %p229 = scmp.lt.s32.totalorder %s19, 1
      %s230 = scalar_select %p229, %s19, 1
      %p231 = scmp.lt.s32.totalorder %s20, 3
      %s232 = scalar_select %p231, %s20, 3
      %s233 = smul.addr %s230, 4
      %s234 = sadd.s32 %s232, %s233
      %s235 = smul.addr %s234, 4
      %s236 = scalar_lea.vmem %s2, %s235
      %p237 = pneg %p114
      %p238 = pneg %p111
      %p239 = pneg %p144
      %p240 = pneg %p141
      %p241 = scmp.lt.s32.totalorder %s19, 1
      %s242 = scalar_select %p241, %s19, 1
      %p243 = scmp.lt.s32.totalorder %s20, 3
      %s244 = scalar_select %p243, %s20, 3
      %p245 = scmp.lt.s32.totalorder %s21, 0
      %s246 = scalar_select %p245, %s21, 0
      %s247 = sadd.s32 %s246, %s244
      %s248 = smul.addr %s242, 4
      %s249 = sadd.s32 %s247, %s248
      %s250 = smul.addr %s249, 4
      %s251 = scalar_lea.vmem %s3, %s250
      %p252 = scmp.lt.s32.totalorder %s19, 1
      %s253 = scalar_select %p252, %s19, 1
      %p254 = scmp.lt.s32.totalorder %s20, 3
      %s255 = scalar_select %p254, %s20, 3
      %p256 = scmp.lt.s32.totalorder %s21, 0
      %s257 = scalar_select %p256, %s21, 0
      %s258 = sadd.s32 %s257, %s255
      %s259 = smul.addr %s253, 4
      %s260 = sadd.s32 %s258, %s259
      %s261 = smul.addr %s260, 4
      %s262 = scalar_lea.vmem %s0, %s261
      %p263 = scmp.lt.s32.totalorder %s19, 1
      %s264 = scalar_select %p263, %s19, 1
      %p265 = scmp.lt.s32.totalorder %s20, 3
      %s266 = scalar_select %p265, %s20, 3
      %s267 = smul.addr %s264, 4
      %s268 = sadd.s32 %s266, %s267
      %s269 = smul.addr %s268, 4
      %s270 = scalar_lea.vmem %s1, %s269
      %p271 = scmp.lt.s32.totalorder %s19, 1
      %s272 = scalar_select %p271, %s19, 1
      %p273 = scmp.lt.s32.totalorder %s20, 3
      %s274 = scalar_select %p273, %s20, 3
      %s275 = smul.addr %s272, 4
      %s276 = sadd.s32 %s274, %s275
      %s277 = smul.addr %s276, 4
      %s278 = scalar_lea.vmem %s2, %s277
      %p279 = scmp.lt.s32.totalorder %s19, 1
      %s280 = scalar_select %p279, %s19, 1
      %p281 = scmp.lt.s32.totalorder %s20, 3
      %s282 = scalar_select %p281, %s20, 3
      %p283 = scmp.lt.s32.totalorder %s21, 0
      %s284 = scalar_select %p283, %s21, 0
      %s285 = sadd.s32 %s284, %s282
      %s286 = smul.addr %s280, 4
      %s287 = sadd.s32 %s285, %s286
      %s288 = smul.addr %s287, 4
      %s289 = scalar_lea.vmem %s3, %s288
      %v291 = vld [vmem:[%s262] sm:$0xf]
      %v292 = vld [vmem:[%s270] sm:$0xf]
      %vm293 = vcmask 64512
      %v295 = vsel %vm293, %v291, 0
      %v298 = vsel %vm293, %v292, 0
      %300 = vmatpush.bf16.xpose.msra.mxu0 0
      %301 = vmatpush.bf16.xpose.msra.mxu0 0
      %302 = vmatpush.bf16.xpose.msra.mxu0 0
      %303 = vmatpush.bf16.xpose.msra.mxu0 0
      %304 = vmatpush.bf16.xpose.msra.mxu0 0
      %305 = vmatpush.bf16.xpose.msra.mxu0 0
      %306 = vmatpush.bf16.xpose.msra.mxu0 0
      %307 = vmatpush.bf16.xpose.msra.mxu0 %v298
      %308 = vmatmul.bf16.gmra.mxu0 %v295
      %v309 = vpop.f32.mrf.mxu0
      %v310 = vadd.f32 0.0, %v309
      %v311 = vpop.f32.mrf.mxu0
      %312 = vdwg.mxu0
      %v313 = vmul.f32 %v310, 0.35355338
      %v314 = vsel %vm293, %v313, -inf
      %315 = vmax.xlane.f32.xlu0 %v314
      %v316 = vpop.xlane.xlu0 %315
      %v317 = vsub.f32 %v313, %v316
      %v318 = vmul.f32 %v317, 1.442695
      %v319 = vpow.pop %v318
      %v320 = vsel %vm293, %v319, 0.0
      %321 = vadd.xlane.f32.xlu0 %v320
      %v322 = vpop.xlane.xlu0 %321
      %v323 = vrcp.pop %v322
      %v324 = vmul.f32 %v319, %v323
      %v325 = vpack.c.bf16 %v324, %v324
      %v326 = vld [vmem:[%s278] sm:$0xf]
      %v328 = vsel %vm293, %v325, 0
      %vm330 = vcmask 1043456
      %v332 = vsel %vm330, %v326, 0
      %334 = vmatpush.bf16.msra.mxu0 0
      %335 = vmatpush.bf16.msra.mxu0 0
      %336 = vmatpush.bf16.msra.mxu0 0
      %337 = vmatpush.bf16.msra.mxu0 0
      %338 = vmatpush.bf16.msra.mxu0 0
      %339 = vmatpush.bf16.msra.mxu0 0
      %340 = vmatpush.bf16.msra.mxu0 0
      %341 = vmatpush.bf16.msra.mxu0 %v332
      %342 = vmatmul.bf16.gmra.mxu0 %v328
      %v343 = vpop.f32.mrf.mxu0
      %v344 = vadd.f32 0.0, %v343
      %v345 = vpop.f32.mrf.mxu0
      %346 = vdwg.mxu0
      %v347 = vpack.c.bf16 %v344, %v344
      %vm348 = vcmask 60416
      %349 = vst.msk [vmem:[%s289] sm:$0xf] %vm348, %v347
      %p350 = scmp.lt.s32.totalorder %s19, 1
      %s351 = scalar_select %p350, %s19, 1
      %p352 = scmp.lt.s32.totalorder %s20, 3
      %s353 = scalar_select %p352, %s20, 3
      %p354 = scmp.lt.s32.totalorder %s21, 0
      %s355 = scalar_select %p354, %s21, 0
      %s356 = sadd.s32 %s355, %s353
      %s357 = smul.addr %s351, 4
      %s358 = sadd.s32 %s356, %s357
      %s359 = smul.addr %s358, 4
      %s360 = scalar_lea.vmem %s3, %s359
      // Predicated region
      $region33: #{_lambda_.30} parent=31 // pred_check
        %p361 = pneg %p141
      $region34: #{_lambda_.30} parent=31 // pred_check_branch
        %363 = sbr.rel (%p361) target = $region36
      $region35: #{_lambda_.30} parent=31 // pred_region
        _
      $region36: #{_lambda_.30} parent=31 // pred_fallthru
        _
    $region32: #{_lambda_.30} parent=5 // pred_fallthru
      _
    %p364 = scmp.le.s32.totalorder 2, %s9
    // Predicated region
    $region37: #{_lambda_.30} parent=5 // pred_check
      %p365 = pneg %p364
    $region38: #{_lambda_.30} parent=5 // pred_check_branch
      %367 = sbr.rel (%p365) target = $region40
    $region39: #{_lambda_.30} parent=5 // pred_region
      %s368 = ssub.s32 %s9, 2
      // Predicated region
      $region41: #{_lambda_.30} parent=39 // pred_check
        %p369 = pneg %p147
      $region42: #{_lambda_.30} parent=39 // pred_check_branch
        %371 = sbr.rel (%p369) target = $region44
      $region43: #{_lambda_.30} parent=39 // pred_region
        %p372 = scmp.lt.s32.totalorder %s22, 1
        %s373 = scalar_select %p372, %s22, 1
        %p374 = scmp.lt.s32.totalorder %s23, 3
        %s375 = scalar_select %p374, %s23, 3
        %p376 = scmp.lt.s32.totalorder %s24, 0
        %s377 = scalar_select %p376, %s24, 0
        %s378 = sadd.s32 %s377, %s375
        %s379 = smul.addr %s373, 4
        %s380 = sadd.s32 %s378, %s379
        %s381 = smul.addr %s380, 4
        %s382 = scalar_lea.vmem %s3, %s381
      $region44: #{_lambda_.30} parent=39 // pred_fallthru
        _
    $region40: #{_lambda_.30} parent=5 // pred_fallthru
      _
  $region6: #{_lambda_.30} parent=0 // loop_footer
    %s13 = sadd.s32 1, %s9
  $region7: #{_lambda_.30} parent=0 // loop_footer_branch
    %8 = sbr.rel target = $region3
  $region8: #{_lambda_.30} parent=0 // loop_exit
    _

// kernel: _lambda_.31
$region0: #{_lambda_.31}
  #allocation0 [shape = 'u32[]', space=smem, size = 0x4, offset = 0x4, fixed_abs, tag = 'smem constant byte address 0x4 - core index']
  #allocation1 [shape = 'u32[72,128]{1,0:T(1,128)}', space=vmem, size = 0x9000, scoped, tag = 'internal scratch']
  %s0 = inlined_call_operand.vmem [shape: bf16[2,4,8,8], index: 0, kind: input, shape index: {}]
  %s1 = inlined_call_operand.vmem [shape: bf16[4,8,32], index: 1, kind: input, shape index: {}]
  %s2 = inlined_call_operand.vmem [shape: f32[1,32], index: 2, kind: input, shape index: {}]
  %s3 = inlined_call_operand.vmem [shape: f32[2,8,32], index: 3, kind: input, shape index: {}]
  %s4 = inlined_call_operand.vmem [shape: f32[1,32], index: 4, kind: input, shape index: {}]
  %s5 = inlined_call_operand.vmem [shape: f32[1,32], index: 5, kind: input, shape index: {}]
  %s6 = inlined_call_operand.vmem [shape: f32[2,8,32], index: 6, kind: output, shape index: {}]
  %s7 = sld [smem:[#allocation0]]
  $region57: #{_lambda_.31} parent=0
    _
  %s9 = ssub.s32 1, %s7
  %s10 = scalar_select 0, %s9, %s7
  loop: start=0, step=1, limit=4
  $region2: #{_lambda_.31} parent=0 // loop_pre_header
    _
  $region3: #{_lambda_.31} parent=0 // loop_header
    %s12 = sphi 0, %s16
    %p13 = scmp.ge.s32.totalorder %s12, 4
    %s19 = sphi 0, %s31
    %s20 = sphi 0, %s27
    %s21 = sphi 0, %s19
    %s22 = sphi 0, %s20
    %s23 = sphi 0, %s21
    %s24 = sphi 0, %s22
    %s36 = sphi 0, %s38
    %s39 = sphi 0, %s36
    %s40 = sphi 0, %s39
    %s56 = sphi 0, %s40
    %s60 = sphi 0, %s60
    %s62 = sphi 0, %s60
    %s63 = sphi 0, %s62
    %s77 = sphi 0, %s63
    %s81 = sphi 0, %s81
    %s83 = sphi 0, %s81
    %s84 = sphi 0, %s83
    %s98 = sphi 0, %s84
    %s106 = sphi 0, %s108
    %s109 = sphi 0, %s106
    %s110 = sphi 0, %s109
    %s126 = sphi 0, %s110
    %s130 = sphi 0, %s130
    %s132 = sphi 0, %s130
    %s133 = sphi 0, %s132
    %s147 = sphi 0, %s133
    %s151 = sphi 0, %s151
    %s153 = sphi 0, %s151
    %s154 = sphi 0, %s153
    %s168 = sphi 0, %s154
    %s176 = sphi 0, %s178
    %s179 = sphi 0, %s176
    %s180 = sphi 0, %s179
    %s196 = sphi 0, %s180
  $region4: #{_lambda_.31} parent=0 // loop_header_branch
    %15 = sbr.rel (%p13) target = $region8
  $region5: #{_lambda_.31} parent=0 // loop_body
    %s17 = ssub.s32 %s12, 1
    %s18 = ssub.s32 %s12, 2
    %s25 = sadd.s32 1, %s20
    %p26 = scmp.ge.s32.totalorder %s25, 1
    %s27 = scalar_select %p26, 0, %s25
    %s28 = sadd.s32 1, %s19
    %s29 = scalar_select %p26, %s28, %s19
    %p30 = scmp.ge.s32.totalorder %s29, 2
    %s31 = scalar_select %p30, 0, %s29
    %s32 = ssub.s32 %s19, %s31
    %s33 = ssub.s32 %s20, %s27
    %s34 = sor.u32 %s32, %s33
    %p35 = scmp.eq.s32.totalorder %s34, 0
    %s37 = sadd.s32 %s36, 1
    %s38 = scalar_select %p35, %s36, %s37
    %p41 = pneg %p35
    %p42 = scmp.eq.s32.totalorder %s12, 1
    %p43 = por %p41, %p42
    %p44 = scmp.ne.s32.totalorder %s36, %s39
    %p45 = scmp.eq.s32.totalorder %s12, 0
    %p46 = por %p44, %p45
    %p47 = scmp.ne.s32.totalorder %s36, %s39
    %p48 = scmp.eq.s32.totalorder %s17, 1
    %p49 = por %p47, %p48
    %p50 = scmp.ne.s32.totalorder %s39, %s40
    %p51 = scmp.eq.s32.totalorder %s17, 0
    %p52 = por %p50, %p51
    %p53 = scmp.ne.s32.totalorder %s39, %s40
    %p54 = scmp.eq.s32.totalorder %s18, 1
    %p55 = por %p53, %p54
    %p57 = scmp.ne.s32.totalorder %s40, %s56
    %p58 = scmp.eq.s32.totalorder %s18, 0
    %p59 = por %p57, %p58
    %s61 = sadd.s32 %s60, 1
    %p64 = scmp.eq.s32.totalorder %s12, 1
    %p65 = scmp.ne.s32.totalorder %s60, %s62
    %p66 = scmp.eq.s32.totalorder %s12, 0
    %p67 = por %p65, %p66
    %p68 = scmp.ne.s32.totalorder %s60, %s62
    %p69 = scmp.eq.s32.totalorder %s17, 1
    %p70 = por %p68, %p69
    %p71 = scmp.ne.s32.totalorder %s62, %s63
    %p72 = scmp.eq.s32.totalorder %s17, 0
    %p73 = por %p71, %p72
    %p74 = scmp.ne.s32.totalorder %s62, %s63
    %p75 = scmp.eq.s32.totalorder %s18, 1
    %p76 = por %p74, %p75
    %p78 = scmp.ne.s32.totalorder %s63, %s77
    %p79 = scmp.eq.s32.totalorder %s18, 0
    %p80 = por %p78, %p79
    %s82 = sadd.s32 %s81, 1
    %p85 = scmp.eq.s32.totalorder %s12, 1
    %p86 = scmp.ne.s32.totalorder %s81, %s83
    %p87 = scmp.eq.s32.totalorder %s12, 0
    %p88 = por %p86, %p87
    %p89 = scmp.ne.s32.totalorder %s81, %s83
    %p90 = scmp.eq.s32.totalorder %s17, 1
    %p91 = por %p89, %p90
    %p92 = scmp.ne.s32.totalorder %s83, %s84
    %p93 = scmp.eq.s32.totalorder %s17, 0
    %p94 = por %p92, %p93
    %p95 = scmp.ne.s32.totalorder %s83, %s84
    %p96 = scmp.eq.s32.totalorder %s18, 1
    %p97 = por %p95, %p96
    %p99 = scmp.ne.s32.totalorder %s84, %s98
    %p100 = scmp.eq.s32.totalorder %s18, 0
    %p101 = por %p99, %p100
    %s102 = ssub.s32 %s19, %s31
    %s103 = ssub.s32 %s20, %s27
    %s104 = sor.u32 %s102, %s103
    %p105 = scmp.eq.s32.totalorder %s104, 0
    %s107 = sadd.s32 %s106, 1
    %s108 = scalar_select %p105, %s106, %s107
    %p111 = pneg %p105
    %p112 = scmp.eq.s32.totalorder %s12, 1
    %p113 = por %p111, %p112
    %p114 = scmp.ne.s32.totalorder %s106, %s109
    %p115 = scmp.eq.s32.totalorder %s12, 0
    %p116 = por %p114, %p115
    %p117 = scmp.ne.s32.totalorder %s106, %s109
    %p118 = scmp.eq.s32.totalorder %s17, 1
    %p119 = por %p117, %p118
    %p120 = scmp.ne.s32.totalorder %s109, %s110
    %p121 = scmp.eq.s32.totalorder %s17, 0
    %p122 = por %p120, %p121
    %p123 = scmp.ne.s32.totalorder %s109, %s110
    %p124 = scmp.eq.s32.totalorder %s18, 1
    %p125 = por %p123, %p124
    %p127 = scmp.ne.s32.totalorder %s110, %s126
    %p128 = scmp.eq.s32.totalorder %s18, 0
    %p129 = por %p127, %p128
    %s131 = sadd.s32 %s130, 1
    %p134 = scmp.eq.s32.totalorder %s12, 1
    %p135 = scmp.ne.s32.totalorder %s130, %s132
    %p136 = scmp.eq.s32.totalorder %s12, 0
    %p137 = por %p135, %p136
    %p138 = scmp.ne.s32.totalorder %s130, %s132
    %p139 = scmp.eq.s32.totalorder %s17, 1
    %p140 = por %p138, %p139
    %p141 = scmp.ne.s32.totalorder %s132, %s133
    %p142 = scmp.eq.s32.totalorder %s17, 0
    %p143 = por %p141, %p142
    %p144 = scmp.ne.s32.totalorder %s132, %s133
    %p145 = scmp.eq.s32.totalorder %s18, 1
    %p146 = por %p144, %p145
    %p148 = scmp.ne.s32.totalorder %s133, %s147
    %p149 = scmp.eq.s32.totalorder %s18, 0
    %p150 = por %p148, %p149
    %s152 = sadd.s32 %s151, 1
    %p155 = scmp.eq.s32.totalorder %s12, 1
    %p156 = scmp.ne.s32.totalorder %s151, %s153
    %p157 = scmp.eq.s32.totalorder %s12, 0
    %p158 = por %p156, %p157
    %p159 = scmp.ne.s32.totalorder %s151, %s153
    %p160 = scmp.eq.s32.totalorder %s17, 1
    %p161 = por %p159, %p160
    %p162 = scmp.ne.s32.totalorder %s153, %s154
    %p163 = scmp.eq.s32.totalorder %s17, 0
    %p164 = por %p162, %p163
    %p165 = scmp.ne.s32.totalorder %s153, %s154
    %p166 = scmp.eq.s32.totalorder %s18, 1
    %p167 = por %p165, %p166
    %p169 = scmp.ne.s32.totalorder %s154, %s168
    %p170 = scmp.eq.s32.totalorder %s18, 0
    %p171 = por %p169, %p170
    %s172 = ssub.s32 %s19, %s31
    %s173 = ssub.s32 %s20, %s27
    %s174 = sor.u32 %s172, %s173
    %p175 = scmp.eq.s32.totalorder %s174, 0
    %s177 = sadd.s32 %s176, 1
    %s178 = scalar_select %p175, %s176, %s177
    %p181 = pneg %p175
    %p182 = scmp.eq.s32.totalorder %s12, 1
    %p183 = por %p181, %p182
    %p184 = scmp.ne.s32.totalorder %s176, %s179
    %p185 = scmp.eq.s32.totalorder %s12, 0
    %p186 = por %p184, %p185
    %p187 = scmp.ne.s32.totalorder %s176, %s179
    %p188 = scmp.eq.s32.totalorder %s17, 1
    %p189 = por %p187, %p188
    %p190 = scmp.ne.s32.totalorder %s179, %s180
    %p191 = scmp.eq.s32.totalorder %s17, 0
    %p192 = por %p190, %p191
    %p193 = scmp.ne.s32.totalorder %s179, %s180
    %p194 = scmp.eq.s32.totalorder %s18, 1
    %p195 = por %p193, %p194
    %p197 = scmp.ne.s32.totalorder %s180, %s196
    %p198 = scmp.eq.s32.totalorder %s18, 0
    %p199 = por %p197, %p198
    %p200 = scmp.le.s32.totalorder 1, %s12
    %p201 = scmp.lt.s32.totalorder %s12, 3
    %p202 = pnand %p200, %p201
    %p203 = pneg %p202
    // Predicated region
    $region9: #{_lambda_.31} parent=5 // pred_check
      _
    $region10: #{_lambda_.31} parent=5 // pred_check_branch
      %205 = sbr.rel (%p202) target = $region12
    $region11: #{_lambda_.31} parent=5 // pred_region
      %s206 = ssub.s32 %s12, 1
      // Predicated region
      $region13: #{_lambda_.31} parent=11 // pred_check
        %p207 = pneg %p73
      $region14: #{_lambda_.31} parent=11 // pred_check_branch
        %209 = sbr.rel (%p207) target = $region16
      $region15: #{_lambda_.31} parent=11 // pred_region
        _
      $region16: #{_lambda_.31} parent=11 // pred_fallthru
        _
      // Predicated region
      $region17: #{_lambda_.31} parent=11 // pred_check
        %p210 = pneg %p94
      $region18: #{_lambda_.31} parent=11 // pred_check_branch
        %212 = sbr.rel (%p210) target = $region20
      $region19: #{_lambda_.31} parent=11 // pred_region
        _
      $region20: #{_lambda_.31} parent=11 // pred_fallthru
        _
      // Predicated region
      $region21: #{_lambda_.31} parent=11 // pred_check
        %p213 = pneg %p143
      $region22: #{_lambda_.31} parent=11 // pred_check_branch
        %215 = sbr.rel (%p213) target = $region24
      $region23: #{_lambda_.31} parent=11 // pred_region
        _
      $region24: #{_lambda_.31} parent=11 // pred_fallthru
        _
      // Predicated region
      $region25: #{_lambda_.31} parent=11 // pred_check
        %p216 = pneg %p164
      $region26: #{_lambda_.31} parent=11 // pred_check_branch
        %218 = sbr.rel (%p216) target = $region28
      $region27: #{_lambda_.31} parent=11 // pred_region
        _
      $region28: #{_lambda_.31} parent=11 // pred_fallthru
        _
    $region12: #{_lambda_.31} parent=5 // pred_fallthru
      _
    %p219 = scmp.lt.s32.totalorder %s12, 2
    // Predicated region
    $region29: #{_lambda_.31} parent=5 // pred_check
      %p220 = pneg %p219
    $region30: #{_lambda_.31} parent=5 // pred_check_branch
      %222 = sbr.rel (%p220) target = $region32
    $region31: #{_lambda_.31} parent=5 // pred_region
      // Predicated region
      $region33: #{_lambda_.31} parent=31 // pred_check
        %p223 = pneg %p46
      $region34: #{_lambda_.31} parent=31 // pred_check_branch
        %225 = sbr.rel (%p223) target = $region36
      $region35: #{_lambda_.31} parent=31 // pred_region
        %p226 = scmp.lt.s32.totalorder %s19, 1
        %s227 = scalar_select %p226, %s19, 1
        %p228 = scmp.lt.s32.totalorder %s20, 0
        %s229 = scalar_select %p228, %s20, 0
        %s230 = smul.addr %s227, 4
        %s231 = sadd.s32 %s229, %s230
        %s232 = smul.addr %s231, 4
        %s233 = scalar_lea.vmem %s0, %s232
      $region36: #{_lambda_.31} parent=31 // pred_fallthru
        _
      // Predicated region
      $region37: #{_lambda_.31} parent=31 // pred_check
        %p234 = pneg %p116
      $region38: #{_lambda_.31} parent=31 // pred_check_branch
        %236 = sbr.rel (%p234) target = $region40
      $region39: #{_lambda_.31} parent=31 // pred_region
        %p237 = scmp.lt.s32.totalorder %s19, 1
        %s238 = scalar_select %p237, %s19, 1
        %p239 = scmp.lt.s32.totalorder %s20, 0
        %s240 = scalar_select %p239, %s20, 0
        %s241 = sadd.s32 %s240, %s238
        %s242 = smul.addr %s241, 8
        %s243 = scalar_lea.vmem %s3, %s242
      $region40: #{_lambda_.31} parent=31 // pred_fallthru
        _
    $region32: #{_lambda_.31} parent=5 // pred_fallthru
      _
    %p244 = scmp.le.s32.totalorder 1, %s12
    %p245 = scmp.lt.s32.totalorder %s12, 3
    %p246 = pnand %p244, %p245
    %p247 = pneg %p246
    // Predicated region
    $region41: #{_lambda_.31} parent=5 // pred_check
      _
    $region42: #{_lambda_.31} parent=5 // pred_check_branch
      %249 = sbr.rel (%p246) target = $region44
    $region43: #{_lambda_.31} parent=5 // pred_region
      %s250 = ssub.s32 %s12, 1
      %p251 = scmp.lt.s32.totalorder %s21, 1
      %s252 = scalar_select %p251, %s21, 1
      %p253 = scmp.lt.s32.totalorder %s22, 0
      %s254 = scalar_select %p253, %s22, 0
      %s255 = smul.addr %s252, 4
      %s256 = sadd.s32 %s254, %s255
      %s257 = smul.addr %s256, 4
      %s258 = scalar_lea.vmem %s0, %s257
      %p259 = pneg %p52
      %p260 = pneg %p49
      %p261 = pneg %p73
      %p262 = pneg %p70
      %p263 = pneg %p94
      %p264 = pneg %p91
      %p265 = scmp.lt.s32.totalorder %s21, 1
      %s266 = scalar_select %p265, %s21, 1
      %p267 = scmp.lt.s32.totalorder %s22, 0
      %s268 = scalar_select %p267, %s22, 0
      %s269 = sadd.s32 %s268, %s266
      %s270 = smul.addr %s269, 8
      %s271 = scalar_lea.vmem %s3, %s270
      %p272 = pneg %p122
      %p273 = pneg %p119
      %p274 = pneg %p143
      %p275 = pneg %p140
      %p276 = pneg %p164
      %p277 = pneg %p161
      %p278 = pneg %p192
      %p279 = pneg %p189
      %p280 = scmp.lt.s32.totalorder %s21, 1
      %s281 = scalar_select %p280, %s21, 1
      %p282 = scmp.lt.s32.totalorder %s22, 0
      %s283 = scalar_select %p282, %s22, 0
      %s284 = sadd.s32 %s283, %s281
      %s285 = smul.addr %s284, 8
      %s286 = scalar_lea.vmem %s6, %s285
      %p287 = scmp.lt.s32.totalorder %s21, 1
      %s288 = scalar_select %p287, %s21, 1
      %p289 = scmp.lt.s32.totalorder %s22, 0
      %s290 = scalar_select %p289, %s22, 0
      %s291 = smul.addr %s288, 4
      %s292 = sadd.s32 %s290, %s291
      %s293 = smul.addr %s292, 4
      %s294 = scalar_lea.vmem %s0, %s293
      %p295 = scmp.lt.s32.totalorder %s21, 1
      %s296 = scalar_select %p295, %s21, 1
      %p297 = scmp.lt.s32.totalorder %s22, 0
      %s298 = scalar_select %p297, %s22, 0
      %s299 = sadd.s32 %s298, %s296
      %s300 = smul.addr %s299, 8
      %s301 = scalar_lea.vmem %s3, %s300
      %p302 = scmp.lt.s32.totalorder %s21, 1
      %s303 = scalar_select %p302, %s21, 1
      %p304 = scmp.lt.s32.totalorder %s22, 0
      %s305 = scalar_select %p304, %s22, 0
      %s306 = sadd.s32 %s305, %s303
      %s307 = smul.addr %s306, 8
      %s308 = scalar_lea.vmem %s6, %s307
      %v310 = vld [vmem:[%s301] sm:$0xff]
      %v311 = vld [vmem:[%s2] sm:$0x1]
      %v313 = vperm.slane %v311, 0
      %v315 = vadd.f32 %v310, %v313
      %v316 = vld [vmem:[%s294] sm:$0xf]
      %v317 = vld [vmem:[%s1] sm:$0xf]
      %vm318 = vcmask 64512
      %v320 = vsel %vm318, %v316, 0
      %vm322 = vcmask 1043456
      %v324 = vsel %vm322, %v317, 0
      %326 = vmatpush.bf16.msra.mxu0 0
      %327 = vmatpush.bf16.msra.mxu0 0
      %328 = vmatpush.bf16.msra.mxu0 0
      %329 = vmatpush.bf16.msra.mxu0 0
      %330 = vmatpush.bf16.msra.mxu0 0
      %331 = vmatpush.bf16.msra.mxu0 0
      %332 = vmatpush.bf16.msra.mxu0 0
      %333 = vmatpush.bf16.msra.mxu0 %v324
      %334 = vmatmul.bf16.gmra.mxu0 %v320
      %v335 = vpop.f32.mrf.mxu0
      %v336 = vadd.f32 0.0, %v335
      %v337 = vpop.f32.mrf.mxu0
      %338 = vdwg.mxu0
      %v339 = vadd.f32 %v315, %v336
      %s340 = scalar_lea.vmem %s294, 4
      %v341 = vld [vmem:[%s340] sm:$0xf]
      %s342 = scalar_lea.vmem %s1, 4
      %v343 = vld [vmem:[%s342] sm:$0xf]
      %v345 = vsel %vm318, %v341, 0
      %v348 = vsel %vm322, %v343, 0
      %350 = vmatpush.bf16.msra.mxu0 0
      %351 = vmatpush.bf16.msra.mxu0 0
      %352 = vmatpush.bf16.msra.mxu0 0
      %353 = vmatpush.bf16.msra.mxu0 0
      %354 = vmatpush.bf16.msra.mxu0 0
      %355 = vmatpush.bf16.msra.mxu0 0
      %356 = vmatpush.bf16.msra.mxu0 0
      %357 = vmatpush.bf16.msra.mxu0 %v348
      %358 = vmatmul.bf16.gmra.mxu0 %v345
      %v359 = vpop.f32.mrf.mxu0
      %v360 = vadd.f32 0.0, %v359
      %v361 = vpop.f32.mrf.mxu0
      %362 = vdwg.mxu0
      %v363 = vadd.f32 %v339, %v360
      %s364 = scalar_lea.vmem %s294, 8
      %v365 = vld [vmem:[%s364] sm:$0xf]
      %s366 = scalar_lea.vmem %s1, 8
      %v367 = vld [vmem:[%s366] sm:$0xf]
      %v369 = vsel %vm318, %v365, 0
      %v372 = vsel %vm322, %v367, 0
      %374 = vmatpush.bf16.msra.mxu0 0
      %375 = vmatpush.bf16.msra.mxu0 0
      %376 = vmatpush.bf16.msra.mxu0 0
      %377 = vmatpush.bf16.msra.mxu0 0
      %378 = vmatpush.bf16.msra.mxu0 0
      %379 = vmatpush.bf16.msra.mxu0 0
      %380 = vmatpush.bf16.msra.mxu0 0
      %381 = vmatpush.bf16.msra.mxu0 %v372
      %382 = vmatmul.bf16.gmra.mxu0 %v369
      %v383 = vpop.f32.mrf.mxu0
      %v384 = vadd.f32 0.0, %v383
      %v385 = vpop.f32.mrf.mxu0
      %386 = vdwg.mxu0
      %v387 = vadd.f32 %v363, %v384
      %s388 = scalar_lea.vmem %s294, 12
      %v389 = vld [vmem:[%s388] sm:$0xf]
      %s390 = scalar_lea.vmem %s1, 12
      %v391 = vld [vmem:[%s390] sm:$0xf]
      %v393 = vsel %vm318, %v389, 0
      %v396 = vsel %vm322, %v391, 0
      %398 = vmatpush.bf16.msra.mxu0 0
      %399 = vmatpush.bf16.msra.mxu0 0
      %400 = vmatpush.bf16.msra.mxu0 0
      %401 = vmatpush.bf16.msra.mxu0 0
      %402 = vmatpush.bf16.msra.mxu0 0
      %403 = vmatpush.bf16.msra.mxu0 0
      %404 = vmatpush.bf16.msra.mxu0 0
      %405 = vmatpush.bf16.msra.mxu0 %v396
      %406 = vmatmul.bf16.gmra.mxu0 %v393
      %v407 = vpop.f32.mrf.mxu0
      %v408 = vadd.f32 0.0, %v407
      %v409 = vpop.f32.mrf.mxu0
      %410 = vdwg.mxu0
      %v411 = vadd.f32 %v387, %v408
      %vm412 = vcmask 261120
      %v413 = vsel %vm412, %v411, 0.0
      %414 = vadd.xlane.f32.xlu0 %v413
      %v415 = vpop.xlane.xlu0 %414
      %v416 = vrcp.pop 32.0
      %v417 = vmul.f32 32.0, %v416
      %v418 = vsub.f32 1.0, %v417
      %v419 = vmul.f32 %v416, %v418
      %v420 = vadd.f32 %v416, %v419
      %vm421 = vweird.f32 %v416
      %v422 = vsel %vm421, %v416, %v420
      %v423 = vmul.f32 %v415, %v422
      %v424 = vsub.f32 %v411, %v423
      %v425 = vmul.f32 %v424, %v424
      %v426 = vsel %vm412, %v425, 0.0
      %427 = vadd.xlane.f32.xlu0 %v426
      %v428 = vpop.xlane.xlu0 %427
      %v429 = vmul.f32 %v428, %v422
      %v430 = vadd.f32 %v429, 1e-05
      %v431 = vrsqrt.pop %v430
      %v432 = vmul.f32 %v431, %v430
      %v433 = vmul.f32 %v432, %v431
      %v434 = vmul.f32 0.5, %v433
      %v435 = vsub.f32 1.5, %v434
      %v436 = vmul.f32 %v431, %v435
      %vm437 = vweird.f32 %v430
      %vm438 = vweird.f32 %v431
      %vm439 = vmor %vm437, %vm438
      %v440 = vsel %vm439, %v431, %v436
      %v441 = vmul.f32 %v424, %v440
      %v442 = vld [vmem:[%s4] sm:$0x1]
      %v444 = vperm.slane %v442, 0
      %v446 = vmul.f32 %v441, %v444
      %v447 = vld [vmem:[%s5] sm:$0x1]
      %v449 = vperm.slane %v447, 0
      %v451 = vadd.f32 %v446, %v449
      %452 = vst.msk [vmem:[%s308] sm:$0xff] %vm412, %v451
      %p453 = scmp.lt.s32.totalorder %s21, 1
      %s454 = scalar_select %p453, %s21, 1
      %p455 = scmp.lt.s32.totalorder %s22, 0
      %s456 = scalar_select %p455, %s22, 0
      %s457 = sadd.s32 %s456, %s454
      %s458 = smul.addr %s457, 8
      %s459 = scalar_lea.vmem %s6, %s458
      // Predicated region
      $region45: #{_lambda_.31} parent=43 // pred_check
        %p460 = pneg %p189
      $region46: #{_lambda_.31} parent=43 // pred_check_branch
        %462 = sbr.rel (%p460) target = $region48
      $region47: #{_lambda_.31} parent=43 // pred_region
        _
      $region48: #{_lambda_.31} parent=43 // pred_fallthru
        _
    $region44: #{_lambda_.31} parent=5 // pred_fallthru
      _
    %p463 = scmp.le.s32.totalorder 2, %s12
    // Predicated region
    $region49: #{_lambda_.31} parent=5 // pred_check
      %p464 = pneg %p463
    $region50: #{_lambda_.31} parent=5 // pred_check_branch
      %466 = sbr.rel (%p464) target = $region52
    $region51: #{_lambda_.31} parent=5 // pred_region
      %s467 = ssub.s32 %s12, 2
      // Predicated region
      $region53: #{_lambda_.31} parent=51 // pred_check
        %p468 = pneg %p195
      $region54: #{_lambda_.31} parent=51 // pred_check_branch
        %470 = sbr.rel (%p468) target = $region56
      $region55: #{_lambda_.31} parent=51 // pred_region
        %p471 = scmp.lt.s32.totalorder %s23, 1
        %s472 = scalar_select %p471, %s23, 1
        %p473 = scmp.lt.s32.totalorder %s24, 0
        %s474 = scalar_select %p473, %s24, 0
        %s475 = sadd.s32 %s474, %s472
        %s476 = smul.addr %s475, 8
        %s477 = scalar_lea.vmem %s6, %s476
      $region56: #{_lambda_.31} parent=51 // pred_fallthru
        _
    $region52: #{_lambda_.31} parent=5 // pred_fallthru
      _
  $region6: #{_lambda_.31} parent=0 // loop_footer
    %s16 = sadd.s32 1, %s12
  $region7: #{_lambda_.31} parent=0 // loop_footer_branch
    %11 = sbr.rel target = $region3
  $region8: #{_lambda_.31} parent=0 // loop_exit
    _

// kernel: _lambda_.32
$region0: #{_lambda_.32}
  #allocation0 [shape = 'u32[]', space=smem, size = 0x4, offset = 0x4, fixed_abs, tag = 'smem constant byte address 0x4 - core index']
  #allocation1 [shape = 'u32[72,128]{1,0:T(1,128)}', space=vmem, size = 0x9000, scoped, tag = 'internal scratch']
  %s0 = inlined_call_operand.vmem [shape: f32[2,8,32], index: 0, kind: input, shape index: {}]
  %s1 = inlined_call_operand.vmem [shape: bf16[32,64], index: 1, kind: input, shape index: {}]
  %s2 = inlined_call_operand.vmem [shape: f32[1,64], index: 2, kind: input, shape index: {}]
  %s3 = inlined_call_operand.vmem [shape: bf16[64,32], index: 3, kind: input, shape index: {}]
  %s4 = inlined_call_operand.vmem [shape: f32[1,32], index: 4, kind: input, shape index: {}]
  %s5 = inlined_call_operand.vmem [shape: f32[1,32], index: 5, kind: input, shape index: {}]
  %s6 = inlined_call_operand.vmem [shape: f32[1,32], index: 6, kind: input, shape index: {}]
  %s7 = inlined_call_operand.vmem [shape: f32[2,8,32], index: 7, kind: output, shape index: {}]
  %s8 = sld [smem:[#allocation0]]
  $region61: #{_lambda_.32} parent=0
    _
  %s10 = ssub.s32 1, %s8
  %s11 = scalar_select 0, %s10, %s8
  loop: start=0, step=1, limit=4
  $region2: #{_lambda_.32} parent=0 // loop_pre_header
    _
  $region3: #{_lambda_.32} parent=0 // loop_header
    %s13 = sphi 0, %s17
    %p14 = scmp.ge.s32.totalorder %s13, 4
    %s20 = sphi 0, %s32
    %s21 = sphi 0, %s28
    %s22 = sphi 0, %s20
    %s23 = sphi 0, %s21
    %s24 = sphi 0, %s22
    %s25 = sphi 0, %s23
    %s37 = sphi 0, %s39
    %s40 = sphi 0, %s37
    %s41 = sphi 0, %s40
    %s57 = sphi 0, %s41
    %s61 = sphi 0, %s61
    %s63 = sphi 0, %s61
    %s64 = sphi 0, %s63
    %s78 = sphi 0, %s64
    %s82 = sphi 0, %s82
    %s84 = sphi 0, %s82
    %s85 = sphi 0, %s84
    %s99 = sphi 0, %s85
    %s103 = sphi 0, %s103
    %s105 = sphi 0, %s103
    %s106 = sphi 0, %s105
    %s120 = sphi 0, %s106
    %s124 = sphi 0, %s124
    %s126 = sphi 0, %s124
    %s127 = sphi 0, %s126
    %s141 = sphi 0, %s127
    %s145 = sphi 0, %s145
    %s147 = sphi 0, %s145
    %s148 = sphi 0, %s147
    %s162 = sphi 0, %s148
    %s166 = sphi 0, %s166
    %s168 = sphi 0, %s166
    %s169 = sphi 0, %s168
    %s183 = sphi 0, %s169
    %s191 = sphi 0, %s193
    %s194 = sphi 0, %s191
    %s195 = sphi 0, %s194
    %s211 = sphi 0, %s195
  $region4: #{_lambda_.32} parent=0 // loop_header_branch
    %16 = sbr.rel (%p14) target = $region8
  $region5: #{_lambda_.32} parent=0 // loop_body
    %s18 = ssub.s32 %s13, 1
    %s19 = ssub.s32 %s13, 2
    %s26 = sadd.s32 1, %s21
    %p27 = scmp.ge.s32.totalorder %s26, 1
    %s28 = scalar_select %p27, 0, %s26
    %s29 = sadd.s32 1, %s20
    %s30 = scalar_select %p27, %s29, %s20
    %p31 = scmp.ge.s32.totalorder %s30, 2
    %s32 = scalar_select %p31, 0, %s30
    %s33 = ssub.s32 %s20, %s32
    %s34 = ssub.s32 %s21, %s28
    %s35 = sor.u32 %s33, %s34
    %p36 = scmp.eq.s32.totalorder %s35, 0
    %s38 = sadd.s32 %s37, 1
    %s39 = scalar_select %p36, %s37, %s38
    %p42 = pneg %p36
    %p43 = scmp.eq.s32.totalorder %s13, 1
    %p44 = por %p42, %p43
    %p45 = scmp.ne.s32.totalorder %s37, %s40
    %p46 = scmp.eq.s32.totalorder %s13, 0
    %p47 = por %p45, %p46
    %p48 = scmp.ne.s32.totalorder %s37, %s40
    %p49 = scmp.eq.s32.totalorder %s18, 1
    %p50 = por %p48, %p49
    %p51 = scmp.ne.s32.totalorder %s40, %s41
    %p52 = scmp.eq.s32.totalorder %s18, 0
    %p53 = por %p51, %p52
    %p54 = scmp.ne.s32.totalorder %s40, %s41
    %p55 = scmp.eq.s32.totalorder %s19, 1
    %p56 = por %p54, %p55
    %p58 = scmp.ne.s32.totalorder %s41, %s57
    %p59 = scmp.eq.s32.totalorder %s19, 0
    %p60 = por %p58, %p59
    %s62 = sadd.s32 %s61, 1
    %p65 = scmp.eq.s32.totalorder %s13, 1
    %p66 = scmp.ne.s32.totalorder %s61, %s63
    %p67 = scmp.eq.s32.totalorder %s13, 0
    %p68 = por %p66, %p67
    %p69 = scmp.ne.s32.totalorder %s61, %s63
    %p70 = scmp.eq.s32.totalorder %s18, 1
    %p71 = por %p69, %p70
    %p72 = scmp.ne.s32.totalorder %s63, %s64
    %p73 = scmp.eq.s32.totalorder %s18, 0
    %p74 = por %p72, %p73
    %p75 = scmp.ne.s32.totalorder %s63, %s64
    %p76 = scmp.eq.s32.totalorder %s19, 1
    %p77 = por %p75, %p76
    %p79 = scmp.ne.s32.totalorder %s64, %s78
    %p80 = scmp.eq.s32.totalorder %s19, 0
    %p81 = por %p79, %p80
    %s83 = sadd.s32 %s82, 1
    %p86 = scmp.eq.s32.totalorder %s13, 1
    %p87 = scmp.ne.s32.totalorder %s82, %s84
    %p88 = scmp.eq.s32.totalorder %s13, 0
    %p89 = por %p87, %p88
    %p90 = scmp.ne.s32.totalorder %s82, %s84
    %p91 = scmp.eq.s32.totalorder %s18, 1
    %p92 = por %p90, %p91
    %p93 = scmp.ne.s32.totalorder %s84, %s85
    %p94 = scmp.eq.s32.totalorder %s18, 0
    %p95 = por %p93, %p94
    %p96 = scmp.ne.s32.totalorder %s84, %s85
    %p97 = scmp.eq.s32.totalorder %s19, 1
    %p98 = por %p96, %p97
    %p100 = scmp.ne.s32.totalorder %s85, %s99
    %p101 = scmp.eq.s32.totalorder %s19, 0
    %p102 = por %p100, %p101
    %s104 = sadd.s32 %s103, 1
    %p107 = scmp.eq.s32.totalorder %s13, 1
    %p108 = scmp.ne.s32.totalorder %s103, %s105
    %p109 = scmp.eq.s32.totalorder %s13, 0
    %p110 = por %p108, %p109
    %p111 = scmp.ne.s32.totalorder %s103, %s105
    %p112 = scmp.eq.s32.totalorder %s18, 1
    %p113 = por %p111, %p112
    %p114 = scmp.ne.s32.totalorder %s105, %s106
    %p115 = scmp.eq.s32.totalorder %s18, 0
    %p116 = por %p114, %p115
    %p117 = scmp.ne.s32.totalorder %s105, %s106
    %p118 = scmp.eq.s32.totalorder %s19, 1
    %p119 = por %p117, %p118
    %p121 = scmp.ne.s32.totalorder %s106, %s120
    %p122 = scmp.eq.s32.totalorder %s19, 0
    %p123 = por %p121, %p122
    %s125 = sadd.s32 %s124, 1
    %p128 = scmp.eq.s32.totalorder %s13, 1
    %p129 = scmp.ne.s32.totalorder %s124, %s126
    %p130 = scmp.eq.s32.totalorder %s13, 0
    %p131 = por %p129, %p130
    %p132 = scmp.ne.s32.totalorder %s124, %s126
    %p133 = scmp.eq.s32.totalorder %s18, 1
    %p134 = por %p132, %p133
    %p135 = scmp.ne.s32.totalorder %s126, %s127
    %p136 = scmp.eq.s32.totalorder %s18, 0
    %p137 = por %p135, %p136
    %p138 = scmp.ne.s32.totalorder %s126, %s127
    %p139 = scmp.eq.s32.totalorder %s19, 1
    %p140 = por %p138, %p139
    %p142 = scmp.ne.s32.totalorder %s127, %s141
    %p143 = scmp.eq.s32.totalorder %s19, 0
    %p144 = por %p142, %p143
    %s146 = sadd.s32 %s145, 1
    %p149 = scmp.eq.s32.totalorder %s13, 1
    %p150 = scmp.ne.s32.totalorder %s145, %s147
    %p151 = scmp.eq.s32.totalorder %s13, 0
    %p152 = por %p150, %p151
    %p153 = scmp.ne.s32.totalorder %s145, %s147
    %p154 = scmp.eq.s32.totalorder %s18, 1
    %p155 = por %p153, %p154
    %p156 = scmp.ne.s32.totalorder %s147, %s148
    %p157 = scmp.eq.s32.totalorder %s18, 0
    %p158 = por %p156, %p157
    %p159 = scmp.ne.s32.totalorder %s147, %s148
    %p160 = scmp.eq.s32.totalorder %s19, 1
    %p161 = por %p159, %p160
    %p163 = scmp.ne.s32.totalorder %s148, %s162
    %p164 = scmp.eq.s32.totalorder %s19, 0
    %p165 = por %p163, %p164
    %s167 = sadd.s32 %s166, 1
    %p170 = scmp.eq.s32.totalorder %s13, 1
    %p171 = scmp.ne.s32.totalorder %s166, %s168
    %p172 = scmp.eq.s32.totalorder %s13, 0
    %p173 = por %p171, %p172
    %p174 = scmp.ne.s32.totalorder %s166, %s168
    %p175 = scmp.eq.s32.totalorder %s18, 1
    %p176 = por %p174, %p175
    %p177 = scmp.ne.s32.totalorder %s168, %s169
    %p178 = scmp.eq.s32.totalorder %s18, 0
    %p179 = por %p177, %p178
    %p180 = scmp.ne.s32.totalorder %s168, %s169
    %p181 = scmp.eq.s32.totalorder %s19, 1
    %p182 = por %p180, %p181
    %p184 = scmp.ne.s32.totalorder %s169, %s183
    %p185 = scmp.eq.s32.totalorder %s19, 0
    %p186 = por %p184, %p185
    %s187 = ssub.s32 %s20, %s32
    %s188 = ssub.s32 %s21, %s28
    %s189 = sor.u32 %s187, %s188
    %p190 = scmp.eq.s32.totalorder %s189, 0
    %s192 = sadd.s32 %s191, 1
    %s193 = scalar_select %p190, %s191, %s192
    %p196 = pneg %p190
    %p197 = scmp.eq.s32.totalorder %s13, 1
    %p198 = por %p196, %p197
    %p199 = scmp.ne.s32.totalorder %s191, %s194
    %p200 = scmp.eq.s32.totalorder %s13, 0
    %p201 = por %p199, %p200
    %p202 = scmp.ne.s32.totalorder %s191, %s194
    %p203 = scmp.eq.s32.totalorder %s18, 1
    %p204 = por %p202, %p203
    %p205 = scmp.ne.s32.totalorder %s194, %s195
    %p206 = scmp.eq.s32.totalorder %s18, 0
    %p207 = por %p205, %p206
    %p208 = scmp.ne.s32.totalorder %s194, %s195
    %p209 = scmp.eq.s32.totalorder %s19, 1
    %p210 = por %p208, %p209
    %p212 = scmp.ne.s32.totalorder %s195, %s211
    %p213 = scmp.eq.s32.totalorder %s19, 0
    %p214 = por %p212, %p213
    %p215 = scmp.le.s32.totalorder 1, %s13
    %p216 = scmp.lt.s32.totalorder %s13, 3
    %p217 = pnand %p215, %p216
    %p218 = pneg %p217
    // Predicated region
    $region9: #{_lambda_.32} parent=5 // pred_check
      _
    $region10: #{_lambda_.32} parent=5 // pred_check_branch
      %220 = sbr.rel (%p217) target = $region12
    $region11: #{_lambda_.32} parent=5 // pred_region
      %s221 = ssub.s32 %s13, 1
      // Predicated region
      $region13: #{_lambda_.32} parent=11 // pred_check
        %p222 = pneg %p74
      $region14: #{_lambda_.32} parent=11 // pred_check_branch
        %224 = sbr.rel (%p222) target = $region16
      $region15: #{_lambda_.32} parent=11 // pred_region
        _
      $region16: #{_lambda_.32} parent=11 // pred_fallthru
        _
      // Predicated region
      $region17: #{_lambda_.32} parent=11 // pred_check
        %p225 = pneg %p95
      $region18: #{_lambda_.32} parent=11 // pred_check_branch
        %227 = sbr.rel (%p225) target = $region20
      $region19: #{_lambda_.32} parent=11 // pred_region
        _
      $region20: #{_lambda_.32} parent=11 // pred_fallthru
        _
      // Predicated region
      $region21: #{_lambda_.32} parent=11 // pred_check
        %p228 = pneg %p116
      $region22: #{_lambda_.32} parent=11 // pred_check_branch
        %230 = sbr.rel (%p228) target = $region24
      $region23: #{_lambda_.32} parent=11 // pred_region
        _
      $region24: #{_lambda_.32} parent=11 // pred_fallthru
        _
      // Predicated region
      $region25: #{_lambda_.32} parent=11 // pred_check
        %p231 = pneg %p137
      $region26: #{_lambda_.32} parent=11 // pred_check_branch
        %233 = sbr.rel (%p231) target = $region28
      $region27: #{_lambda_.32} parent=11 // pred_region
        _
      $region28: #{_lambda_.32} parent=11 // pred_fallthru
        _
      // Predicated region
      $region29: #{_lambda_.32} parent=11 // pred_check
        %p234 = pneg %p158
      $region30: #{_lambda_.32} parent=11 // pred_check_branch
        %236 = sbr.rel (%p234) target = $region32
      $region31: #{_lambda_.32} parent=11 // pred_region
        _
      $region32: #{_lambda_.32} parent=11 // pred_fallthru
        _
      // Predicated region
      $region33: #{_lambda_.32} parent=11 // pred_check
        %p237 = pneg %p179
      $region34: #{_lambda_.32} parent=11 // pred_check_branch
        %239 = sbr.rel (%p237) target = $region36
      $region35: #{_lambda_.32} parent=11 // pred_region
        _
      $region36: #{_lambda_.32} parent=11 // pred_fallthru
        _
    $region12: #{_lambda_.32} parent=5 // pred_fallthru
      _
    %p240 = scmp.lt.s32.totalorder %s13, 2
    // Predicated region
    $region37: #{_lambda_.32} parent=5 // pred_check
      %p241 = pneg %p240
    $region38: #{_lambda_.32} parent=5 // pred_check_branch
      %243 = sbr.rel (%p241) target = $region40
    $region39: #{_lambda_.32} parent=5 // pred_region
      // Predicated region
      $region41: #{_lambda_.32} parent=39 // pred_check
        %p244 = pneg %p47
      $region42: #{_lambda_.32} parent=39 // pred_check_branch
        %246 = sbr.rel (%p244) target = $region44
      $region43: #{_lambda_.32} parent=39 // pred_region
        %p247 = scmp.lt.s32.totalorder %s20, 1
        %s248 = scalar_select %p247, %s20, 1
        %p249 = scmp.lt.s32.totalorder %s21, 0
        %s250 = scalar_select %p249, %s21, 0
        %s251 = sadd.s32 %s250, %s248
        %s252 = smul.addr %s251, 8
        %s253 = scalar_lea.vmem %s0, %s252
      $region44: #{_lambda_.32} parent=39 // pred_fallthru
        _
    $region40: #{_lambda_.32} parent=5 // pred_fallthru
      _
    %p254 = scmp.le.s32.totalorder 1, %s13
    %p255 = scmp.lt.s32.totalorder %s13, 3
    %p256 = pnand %p254, %p255
    %p257 = pneg %p256
    // Predicated region
    $region45: #{_lambda_.32} parent=5 // pred_check
      _
    $region46: #{_lambda_.32} parent=5 // pred_check_branch
      %259 = sbr.rel (%p256) target = $region48
    $region47: #{_lambda_.32} parent=5 // pred_region
      %s260 = ssub.s32 %s13, 1
      %p261 = scmp.lt.s32.totalorder %s22, 1
      %s262 = scalar_select %p261, %s22, 1
      %p263 = scmp.lt.s32.totalorder %s23, 0
      %s264 = scalar_select %p263, %s23, 0
      %s265 = sadd.s32 %s264, %s262
      %s266 = smul.addr %s265, 8
      %s267 = scalar_lea.vmem %s0, %s266
      %p268 = pneg %p53
      %p269 = pneg %p50
      %p270 = pneg %p74
      %p271 = pneg %p71
      %p272 = pneg %p95
      %p273 = pneg %p92
      %p274 = pneg %p116
      %p275 = pneg %p113
      %p276 = pneg %p137
      %p277 = pneg %p134
      %p278 = pneg %p158
      %p279 = pneg %p155
      %p280 = pneg %p179
      %p281 = pneg %p176
      %p282 = pneg %p207
      %p283 = pneg %p204
      %p284 = scmp.lt.s32.totalorder %s22, 1
      %s285 = scalar_select %p284, %s22, 1
      %p286 = scmp.lt.s32.totalorder %s23, 0
      %s287 = scalar_select %p286, %s23, 0
      %s288 = sadd.s32 %s287, %s285
      %s289 = smul.addr %s288, 8
      %s290 = scalar_lea.vmem %s7, %s289
      %p291 = scmp.lt.s32.totalorder %s22, 1
      %s292 = scalar_select %p291, %s22, 1
      %p293 = scmp.lt.s32.totalorder %s23, 0
      %s294 = scalar_select %p293, %s23, 0
      %s295 = sadd.s32 %s294, %s292
      %s296 = smul.addr %s295, 8
      %s297 = scalar_lea.vmem %s0, %s296
      %p298 = scmp.lt.s32.totalorder %s22, 1
      %s299 = scalar_select %p298, %s22, 1
      %p300 = scmp.lt.s32.totalorder %s23, 0
      %s301 = scalar_select %p300, %s23, 0
      %s302 = sadd.s32 %s301, %s299
      %s303 = smul.addr %s302, 8
      %s304 = scalar_lea.vmem %s7, %s303
      %v306 = vld [vmem:[%s297] sm:$0xff]
      %v307 = vpack.c.bf16 %v306, %v306
      %v308 = vld [vmem:[%s1] sm:$0xf]
      %v309 = vld [vmem:[%s1 + $0x4] sm:$0xf]
      %v310 = vld [vmem:[%s1 + $0x8] sm:$0xf]
      %v311 = vld [vmem:[%s1 + $0xc] sm:$0xf]
      %v312 = vld [vmem:[%s2] sm:$0x1]
      %v314 = vperm.slane %v312, 0
      %v320 = vunpack.c.l.b16 %v308
      %v321 = vunpack.c.l.b16 %v309
      %v322 = vunpack.c.l.b16 %v310
      %v323 = vunpack.c.l.b16 %v311
      %v324 = vpack.c.b16 %v321, %v320
      %v325 = vpack.c.b16 %v323, %v322
      %vm328 = vcmask 261120
      %v330 = vsel %vm328, %v307, 0
      %332 = vmatpush.bf16.msra.mxu0 0
      %333 = vmatpush.bf16.msra.mxu0 0
      %334 = vmatpush.bf16.msra.mxu0 0
      %335 = vmatpush.bf16.msra.mxu0 0
      %336 = vmatpush.bf16.msra.mxu0 0
      %337 = vmatpush.bf16.msra.mxu0 0
      %338 = vmatpush.bf16.msra.mxu0 %v325
      %339 = vmatpush.bf16.msra.mxu0 %v324
      %340 = vmatmul.bf16.gmra.mxu0 %v330
      %v341 = vpop.f32.mrf.mxu0
      %v342 = vadd.f32 %v314, %v341
      %v343 = vpop.f32.mrf.mxu0
      %344 = vdwg.mxu0
      %v345 = vmax.f32 %v342, 0.0
      %v346 = vpack.c.bf16 %v345, %v345
      %v347 = vld [vmem:[%s3] sm:$0xf]
      %v348 = vld [vmem:[%s3 + $0x4] sm:$0xf]
      %v349 = vld [vmem:[%s3 + $0x8] sm:$0xf]
      %v350 = vld [vmem:[%s3 + $0xc] sm:$0xf]
      %v351 = vld [vmem:[%s3 + $0x10] sm:$0xf]
      %v352 = vld [vmem:[%s3 + $0x14] sm:$0xf]
      %v353 = vld [vmem:[%s3 + $0x18] sm:$0xf]
      %v354 = vld [vmem:[%s3 + $0x1c] sm:$0xf]
      %v355 = vld [vmem:[%s4] sm:$0x1]
      %v357 = vperm.slane %v355, 0
      %v367 = vunpack.c.l.b16 %v347
      %v368 = vunpack.c.l.b16 %v348
      %v369 = vunpack.c.l.b16 %v349
      %v370 = vunpack.c.l.b16 %v350
      %v371 = vunpack.c.l.b16 %v351
      %v372 = vunpack.c.l.b16 %v352
      %v373 = vunpack.c.l.b16 %v353
      %v374 = vunpack.c.l.b16 %v354
      %v375 = vpack.c.b16 %v368, %v367
      %v376 = vpack.c.b16 %v370, %v369
      %v377 = vpack.c.b16 %v372, %v371
      %v378 = vpack.c.b16 %v374, %v373
      %vm383 = vcmask 523264
      %v385 = vsel %vm383, %v346, 0
      %387 = vmatpush.bf16.msra.mxu0 0
      %388 = vmatpush.bf16.msra.mxu0 0
      %389 = vmatpush.bf16.msra.mxu0 0
      %390 = vmatpush.bf16.msra.mxu0 0
      %391 = vmatpush.bf16.msra.mxu0 %v378
      %392 = vmatpush.bf16.msra.mxu0 %v377
      %393 = vmatpush.bf16.msra.mxu0 %v376
      %394 = vmatpush.bf16.msra.mxu0 %v375
      %395 = vmatmul.bf16.gmra.mxu0 %v385
      %v396 = vpop.f32.mrf.mxu0
      %v397 = vadd.f32 %v357, %v396
      %v398 = vpop.f32.mrf.mxu0
      %399 = vdwg.mxu0
      %v400 = vadd.f32 %v397, %v306
      %v401 = vsel %vm328, %v400, 0.0
      %402 = vadd.xlane.f32.xlu0 %v401
      %v403 = vpop.xlane.xlu0 %402
      %v404 = vrcp.pop 32.0
      %v405 = vmul.f32 32.0, %v404
      %v406 = vsub.f32 1.0, %v405
      %v407 = vmul.f32 %v404, %v406
      %v408 = vadd.f32 %v404, %v407
      %vm409 = vweird.f32 %v404
      %v410 = vsel %vm409, %v404, %v408
      %v411 = vmul.f32 %v403, %v410
      %v412 = vsub.f32 %v400, %v411
      %v413 = vmul.f32 %v412, %v412
      %v414 = vsel %vm328, %v413, 0.0
      %415 = vadd.xlane.f32.xlu0 %v414
      %v416 = vpop.xlane.xlu0 %415
      %v417 = vmul.f32 %v416, %v410
      %v418 = vadd.f32 %v417, 1e-05
      %v419 = vrsqrt.pop %v418
      %v420 = vmul.f32 %v419, %v418
      %v421 = vmul.f32 %v420, %v419
      %v422 = vmul.f32 0.5, %v421
      %v423 = vsub.f32 1.5, %v422
      %v424 = vmul.f32 %v419, %v423
      %vm425 = vweird.f32 %v418
      %vm426 = vweird.f32 %v419
      %vm427 = vmor %vm425, %vm426
      %v428 = vsel %vm427, %v419, %v424
      %v429 = vmul.f32 %v412, %v428
      %v430 = vld [vmem:[%s5] sm:$0x1]
      %v432 = vperm.slane %v430, 0
      %v434 = vmul.f32 %v429, %v432
      %v435 = vld [vmem:[%s6] sm:$0x1]
      %v437 = vperm.slane %v435, 0
      %v439 = vadd.f32 %v434, %v437
      %440 = vst.msk [vmem:[%s304] sm:$0xff] %vm328, %v439
      %p441 = scmp.lt.s32.totalorder %s22, 1
      %s442 = scalar_select %p441, %s22, 1
      %p443 = scmp.lt.s32.totalorder %s23, 0
      %s444 = scalar_select %p443, %s23, 0
      %s445 = sadd.s32 %s444, %s442
      %s446 = smul.addr %s445, 8
      %s447 = scalar_lea.vmem %s7, %s446
      // Predicated region
      $region49: #{_lambda_.32} parent=47 // pred_check
        %p448 = pneg %p204
      $region50: #{_lambda_.32} parent=47 // pred_check_branch
        %450 = sbr.rel (%p448) target = $region52
      $region51: #{_lambda_.32} parent=47 // pred_region
        _
      $region52: #{_lambda_.32} parent=47 // pred_fallthru
        _
    $region48: #{_lambda_.32} parent=5 // pred_fallthru
      _
    %p451 = scmp.le.s32.totalorder 2, %s13
    // Predicated region
    $region53: #{_lambda_.32} parent=5 // pred_check
      %p452 = pneg %p451
    $region54: #{_lambda_.32} parent=5 // pred_check_branch
      %454 = sbr.rel (%p452) target = $region56
    $region55: #{_lambda_.32} parent=5 // pred_region
      %s455 = ssub.s32 %s13, 2
      // Predicated region
      $region57: #{_lambda_.32} parent=55 // pred_check
        %p456 = pneg %p210
      $region58: #{_lambda_.32} parent=55 // pred_check_branch
        %458 = sbr.rel (%p456) target = $region60
      $region59: #{_lambda_.32} parent=55 // pred_region
        %p459 = scmp.lt.s32.totalorder %s24, 1
        %s460 = scalar_select %p459, %s24, 1
        %p461 = scmp.lt.s32.totalorder %s25, 0
        %s462 = scalar_select %p461, %s25, 0
        %s463 = sadd.s32 %s462, %s460
        %s464 = smul.addr %s463, 8
        %s465 = scalar_lea.vmem %s7, %s464
      $region60: #{_lambda_.32} parent=55 // pred_fallthru
        _
    $region56: #{_lambda_.32} parent=5 // pred_fallthru
      _
  $region6: #{_lambda_.32} parent=0 // loop_footer
    %s17 = sadd.s32 1, %s13
  $region7: #{_lambda_.32} parent=0 // loop_footer_branch
    %12 = sbr.rel target = $region3
  $region8: #{_lambda_.32} parent=0 // loop_exit
    _

// kernel: _lambda_.37
$region0: #{_lambda_.37}
  #allocation0 [shape = 'u32[]', space=smem, size = 0x4, offset = 0x4, fixed_abs, tag = 'smem constant byte address 0x4 - core index']
  #allocation1 [shape = 'u32[72,128]{1,0:T(1,128)}', space=vmem, size = 0x9000, scoped, tag = 'internal scratch']
  %s0 = inlined_call_operand.vmem [shape: f32[2,16,32], index: 0, kind: input, shape index: {}]
  %s1 = inlined_call_operand.vmem [shape: f32[2,8,32], index: 1, kind: input, shape index: {}]
  %s2 = inlined_call_operand.vmem [shape: bf16[32,8], index: 2, kind: input, shape index: {}]
  %s3 = inlined_call_operand.vmem [shape: f32[8,1], index: 3, kind: input, shape index: {}]
  %s4 = inlined_call_operand.vmem [shape: bf16[32,16], index: 4, kind: input, shape index: {}]
  %s5 = inlined_call_operand.vmem [shape: f32[1,16], index: 5, kind: input, shape index: {}]
  %s6 = inlined_call_operand.hbm [shape: f32[2,8,16], index: 6, kind: output, shape index: {}]
  %s7 = sld [smem:[#allocation0]]
  $region57: #{_lambda_.37} parent=0
    _
  %s9 = ssub.s32 1, %s7
  %s10 = scalar_select 0, %s9, %s7
  $region1: #{_lambda_.37} parent=0
    #allocation2 [shape = 'u8[8192]{0}', space=vmem, size = 0x2000, scoped, tag = 'output window, operand 0']
    #allocation3 [shape = 's32[2]{0}', space=sflag, size = 0x8, scoped, tag = 'scoped memory for _lambda_.37']
    %11 = vsyncpa [#allocation3], 0
    %s12 = scalar_lea.sflag [#allocation3], 1
    %13 = vsyncpa %s12, 0
    loop: start=0, step=1, limit=4
    $region2: #{_lambda_.37} parent=1 // loop_pre_header
      _
    $region3: #{_lambda_.37} parent=1 // loop_header
      %s15 = sphi 0, %s19
      %p16 = scmp.ge.s32.totalorder %s15, 4
      %s25 = sphi 0, %s27
      %s28 = sphi 0, %s25
      %s29 = sphi 0, %s28
      %s45 = sphi 0, %s29
      %s51 = sphi 0, %s53
      %s54 = sphi 0, %s51
      %s55 = sphi 0, %s54
      %s71 = sphi 0, %s55
      %s75 = sphi 0, %s75
      %s77 = sphi 0, %s75
      %s78 = sphi 0, %s77
      %s92 = sphi 0, %s78
      %s96 = sphi 0, %s96
      %s98 = sphi 0, %s96
      %s99 = sphi 0, %s98
      %s113 = sphi 0, %s99
      %s117 = sphi 0, %s117
      %s119 = sphi 0, %s117
      %s120 = sphi 0, %s119
      %s134 = sphi 0, %s120
      %s138 = sphi 0, %s138
      %s140 = sphi 0, %s138
      %s141 = sphi 0, %s140
      %s155 = sphi 0, %s141
      %s161 = sphi 0, %s163
      %s164 = sphi 0, %s161
      %s165 = sphi 0, %s164
      %s181 = sphi 0, %s165
    $region4: #{_lambda_.37} parent=1 // loop_header_branch
      %18 = sbr.rel (%p16) target = $region8
    $region5: #{_lambda_.37} parent=1 // loop_body
      %s20 = ssub.s32 %s15, 1
      %s21 = ssub.s32 %s15, 2
      %s22 = sadd.s32 %s15, 1
      %s23 = ssub.s32 %s15, %s22
      %p24 = scmp.eq.s32.totalorder %s23, 0
      %s26 = sadd.s32 %s25, 1
      %s27 = scalar_select %p24, %s25, %s26
      %p30 = pneg %p24
      %p31 = scmp.eq.s32.totalorder %s15, 1
      %p32 = por %p30, %p31
      %p33 = scmp.ne.s32.totalorder %s25, %s28
      %p34 = scmp.eq.s32.totalorder %s15, 0
      %p35 = por %p33, %p34
      %p36 = scmp.ne.s32.totalorder %s25, %s28
      %p37 = scmp.eq.s32.totalorder %s20, 1
      %p38 = por %p36, %p37
      %p39 = scmp.ne.s32.totalorder %s28, %s29
      %p40 = scmp.eq.s32.totalorder %s20, 0
      %p41 = por %p39, %p40
      %p42 = scmp.ne.s32.totalorder %s28, %s29
      %p43 = scmp.eq.s32.totalorder %s21, 1
      %p44 = por %p42, %p43
      %p46 = scmp.ne.s32.totalorder %s29, %s45
      %p47 = scmp.eq.s32.totalorder %s21, 0
      %p48 = por %p46, %p47
      %s49 = ssub.s32 %s15, %s22
      %p50 = scmp.eq.s32.totalorder %s49, 0
      %s52 = sadd.s32 %s51, 1
      %s53 = scalar_select %p50, %s51, %s52
      %p56 = pneg %p50
      %p57 = scmp.eq.s32.totalorder %s15, 1
      %p58 = por %p56, %p57
      %p59 = scmp.ne.s32.totalorder %s51, %s54
      %p60 = scmp.eq.s32.totalorder %s15, 0
      %p61 = por %p59, %p60
      %p62 = scmp.ne.s32.totalorder %s51, %s54
      %p63 = scmp.eq.s32.totalorder %s20, 1
      %p64 = por %p62, %p63
      %p65 = scmp.ne.s32.totalorder %s54, %s55
      %p66 = scmp.eq.s32.totalorder %s20, 0
      %p67 = por %p65, %p66
      %p68 = scmp.ne.s32.totalorder %s54, %s55
      %p69 = scmp.eq.s32.totalorder %s21, 1
      %p70 = por %p68, %p69
      %p72 = scmp.ne.s32.totalorder %s55, %s71
      %p73 = scmp.eq.s32.totalorder %s21, 0
      %p74 = por %p72, %p73
      %s76 = sadd.s32 %s75, 1
      %p79 = scmp.eq.s32.totalorder %s15, 1
      %p80 = scmp.ne.s32.totalorder %s75, %s77
      %p81 = scmp.eq.s32.totalorder %s15, 0
      %p82 = por %p80, %p81
      %p83 = scmp.ne.s32.totalorder %s75, %s77
      %p84 = scmp.eq.s32.totalorder %s20, 1
      %p85 = por %p83, %p84
      %p86 = scmp.ne.s32.totalorder %s77, %s78
      %p87 = scmp.eq.s32.totalorder %s20, 0
      %p88 = por %p86, %p87
      %p89 = scmp.ne.s32.totalorder %s77, %s78
      %p90 = scmp.eq.s32.totalorder %s21, 1
      %p91 = por %p89, %p90
      %p93 = scmp.ne.s32.totalorder %s78, %s92
      %p94 = scmp.eq.s32.totalorder %s21, 0
      %p95 = por %p93, %p94
      %s97 = sadd.s32 %s96, 1
      %p100 = scmp.eq.s32.totalorder %s15, 1
      %p101 = scmp.ne.s32.totalorder %s96, %s98
      %p102 = scmp.eq.s32.totalorder %s15, 0
      %p103 = por %p101, %p102
      %p104 = scmp.ne.s32.totalorder %s96, %s98
      %p105 = scmp.eq.s32.totalorder %s20, 1
      %p106 = por %p104, %p105
      %p107 = scmp.ne.s32.totalorder %s98, %s99
      %p108 = scmp.eq.s32.totalorder %s20, 0
      %p109 = por %p107, %p108
      %p110 = scmp.ne.s32.totalorder %s98, %s99
      %p111 = scmp.eq.s32.totalorder %s21, 1
      %p112 = por %p110, %p111
      %p114 = scmp.ne.s32.totalorder %s99, %s113
      %p115 = scmp.eq.s32.totalorder %s21, 0
      %p116 = por %p114, %p115
      %s118 = sadd.s32 %s117, 1
      %p121 = scmp.eq.s32.totalorder %s15, 1
      %p122 = scmp.ne.s32.totalorder %s117, %s119
      %p123 = scmp.eq.s32.totalorder %s15, 0
      %p124 = por %p122, %p123
      %p125 = scmp.ne.s32.totalorder %s117, %s119
      %p126 = scmp.eq.s32.totalorder %s20, 1
      %p127 = por %p125, %p126
      %p128 = scmp.ne.s32.totalorder %s119, %s120
      %p129 = scmp.eq.s32.totalorder %s20, 0
      %p130 = por %p128, %p129
      %p131 = scmp.ne.s32.totalorder %s119, %s120
      %p132 = scmp.eq.s32.totalorder %s21, 1
      %p133 = por %p131, %p132
      %p135 = scmp.ne.s32.totalorder %s120, %s134
      %p136 = scmp.eq.s32.totalorder %s21, 0
      %p137 = por %p135, %p136
      %s139 = sadd.s32 %s138, 1
      %p142 = scmp.eq.s32.totalorder %s15, 1
      %p143 = scmp.ne.s32.totalorder %s138, %s140
      %p144 = scmp.eq.s32.totalorder %s15, 0
      %p145 = por %p143, %p144
      %p146 = scmp.ne.s32.totalorder %s138, %s140
      %p147 = scmp.eq.s32.totalorder %s20, 1
      %p148 = por %p146, %p147
      %p149 = scmp.ne.s32.totalorder %s140, %s141
      %p150 = scmp.eq.s32.totalorder %s20, 0
      %p151 = por %p149, %p150
      %p152 = scmp.ne.s32.totalorder %s140, %s141
      %p153 = scmp.eq.s32.totalorder %s21, 1
      %p154 = por %p152, %p153
      %p156 = scmp.ne.s32.totalorder %s141, %s155
      %p157 = scmp.eq.s32.totalorder %s21, 0
      %p158 = por %p156, %p157
      %s159 = ssub.s32 %s15, %s22
      %p160 = scmp.eq.s32.totalorder %s159, 0
      %s162 = sadd.s32 %s161, 1
      %s163 = scalar_select %p160, %s161, %s162
      %p166 = pneg %p160
      %p167 = scmp.eq.s32.totalorder %s15, 1
      %p168 = por %p166, %p167
      %p169 = scmp.ne.s32.totalorder %s161, %s164
      %p170 = scmp.eq.s32.totalorder %s15, 0
      %p171 = por %p169, %p170
      %p172 = scmp.ne.s32.totalorder %s161, %s164
      %p173 = scmp.eq.s32.totalorder %s20, 1
      %p174 = por %p172, %p173
      %p175 = scmp.ne.s32.totalorder %s164, %s165
      %p176 = scmp.eq.s32.totalorder %s20, 0
      %p177 = por %p175, %p176
      %p178 = scmp.ne.s32.totalorder %s164, %s165
      %p179 = scmp.eq.s32.totalorder %s21, 1
      %p180 = por %p178, %p179
      %p182 = scmp.ne.s32.totalorder %s165, %s181
      %p183 = scmp.eq.s32.totalorder %s21, 0
      %p184 = por %p182, %p183
      %p185 = scmp.le.s32.totalorder 1, %s15
      %p186 = scmp.lt.s32.totalorder %s15, 3
      %p187 = pnand %p185, %p186
      %p188 = pneg %p187
      // Predicated region
      $region9: #{_lambda_.37} parent=5 // pred_check
        _
      $region10: #{_lambda_.37} parent=5 // pred_check_branch
        %190 = sbr.rel (%p187) target = $region12
      $region11: #{_lambda_.37} parent=5 // pred_region
        %s191 = ssub.s32 %s15, 1
        // Predicated region
        $region13: #{_lambda_.37} parent=11 // pred_check
          %p192 = pneg %p88
        $region14: #{_lambda_.37} parent=11 // pred_check_branch
          %194 = sbr.rel (%p192) target = $region16
        $region15: #{_lambda_.37} parent=11 // pred_region
          _
        $region16: #{_lambda_.37} parent=11 // pred_fallthru
          _
        // Predicated region
        $region17: #{_lambda_.37} parent=11 // pred_check
          %p195 = pneg %p109
        $region18: #{_lambda_.37} parent=11 // pred_check_branch
          %197 = sbr.rel (%p195) target = $region20
        $region19: #{_lambda_.37} parent=11 // pred_region
          _
        $region20: #{_lambda_.37} parent=11 // pred_fallthru
          _
        // Predicated region
        $region21: #{_lambda_.37} parent=11 // pred_check
          %p198 = pneg %p130
        $region22: #{_lambda_.37} parent=11 // pred_check_branch
          %200 = sbr.rel (%p198) target = $region24
        $region23: #{_lambda_.37} parent=11 // pred_region
          _
        $region24: #{_lambda_.37} parent=11 // pred_fallthru
          _
        // Predicated region
        $region25: #{_lambda_.37} parent=11 // pred_check
          %p201 = pneg %p151
        $region26: #{_lambda_.37} parent=11 // pred_check_branch
          %203 = sbr.rel (%p201) target = $region28
        $region27: #{_lambda_.37} parent=11 // pred_region
          _
        $region28: #{_lambda_.37} parent=11 // pred_fallthru
          _
      $region12: #{_lambda_.37} parent=5 // pred_fallthru
        _
      %p204 = scmp.lt.s32.totalorder %s15, 2
      // Predicated region
      $region29: #{_lambda_.37} parent=5 // pred_check
        %p205 = pneg %p204
      $region30: #{_lambda_.37} parent=5 // pred_check_branch
        %207 = sbr.rel (%p205) target = $region32
      $region31: #{_lambda_.37} parent=5 // pred_region
        // Predicated region
        $region33: #{_lambda_.37} parent=31 // pred_check
          %p208 = pneg %p35
        $region34: #{_lambda_.37} parent=31 // pred_check_branch
          %210 = sbr.rel (%p208) target = $region36
        $region35: #{_lambda_.37} parent=31 // pred_region
          %p211 = scmp.lt.s32.totalorder %s15, 1
          %s212 = scalar_select %p211, %s15, 1
          %s213 = smul.addr %s212, 2
          %s214 = smul.addr %s213, 8
          %s215 = scalar_lea.vmem %s0, %s214
        $region36: #{_lambda_.37} parent=31 // pred_fallthru
          _
        // Predicated region
        $region37: #{_lambda_.37} parent=31 // pred_check
          %p216 = pneg %p61
        $region38: #{_lambda_.37} parent=31 // pred_check_branch
          %218 = sbr.rel (%p216) target = $region40
        $region39: #{_lambda_.37} parent=31 // pred_region
          %p219 = scmp.lt.s32.totalorder %s15, 1
          %s220 = scalar_select %p219, %s15, 1
          %s221 = smul.addr %s220, 8
          %s222 = scalar_lea.vmem %s1, %s221
        $region40: #{_lambda_.37} parent=31 // pred_fallthru
          _
      $region32: #{_lambda_.37} parent=5 // pred_fallthru
        _
      %p223 = scmp.le.s32.totalorder 1, %s15
      %p224 = scmp.lt.s32.totalorder %s15, 3
      %p225 = pnand %p223, %p224
      %p226 = pneg %p225
      // Predicated region
      $region41: #{_lambda_.37} parent=5 // pred_check
        _
      $region42: #{_lambda_.37} parent=5 // pred_check_branch
        %228 = sbr.rel (%p225) target = $region44
      $region43: #{_lambda_.37} parent=5 // pred_region
        %s229 = ssub.s32 %s15, 1
        %p230 = scmp.lt.s32.totalorder %s20, 1
        %s231 = scalar_select %p230, %s20, 1
        %s232 = smul.addr %s231, 2
        %s233 = smul.addr %s232, 8
        %s234 = scalar_lea.vmem %s0, %s233
        %p235 = pneg %p41
        %p236 = pneg %p38
        %p237 = scmp.lt.s32.totalorder %s20, 1
        %s238 = scalar_select %p237, %s20, 1
        %s239 = smul.addr %s238, 8
        %s240 = scalar_lea.vmem %s1, %s239
        %p241 = pneg %p67
        %p242 = pneg %p64
        %p243 = pneg %p88
        %p244 = pneg %p85
        %p245 = pneg %p109
        %p246 = pneg %p106
        %p247 = pneg %p130
        %p248 = pneg %p127
        %p249 = pneg %p151
        %p250 = pneg %p148
        %p251 = pneg %p177
        %p252 = pneg %p174
        %s253 = sand.u32 %s164, 1
        %s254 = scalar_lea.sflag [#allocation3], %s253
        %s255 = sand.u32 %s164, 1
        %s256 = smul.addr %s255, 8
        %s257 = scalar_lea.vmem [#allocation2], %s256
        %p258 = scmp.lt.s32.totalorder %s20, 1
        %s259 = scalar_select %p258, %s20, 1
        %s260 = smul.addr %s259, 2
        %s261 = smul.addr %s260, 8
        %s262 = scalar_lea.vmem %s0, %s261
        %p263 = scmp.lt.s32.totalorder %s20, 1
        %s264 = scalar_select %p263, %s20, 1
        %s265 = smul.addr %s264, 8
        %s266 = scalar_lea.vmem %s1, %s265
        %v268 = vld [vmem:[%s2] sm:$0xf]
        %v269 = vld [vmem:[%s2 + $0x4] sm:$0xf]
        %v270 = vld [vmem:[%s2 + $0x8] sm:$0xf]
        %v271 = vld [vmem:[%s2 + $0xc] sm:$0xf]
        %v272 = vld [vmem:[%s262] sm:$0xff]
        %v273 = vld [vmem:[%s262 + $0x8] sm:$0xff]
        %v274 = vpack.c.bf16 %v273, %v272
        %v275 = vld [vmem:[%s266] sm:$0xff]
        %v276 = vpack.c.bf16 %v275, %v275
        %v277 = vld [vmem:[%s4] sm:$0xf]
        %v278 = vld [vmem:[%s4 + $0x4] sm:$0xf]
        %v279 = vld [vmem:[%s4 + $0x8] sm:$0xf]
        %v280 = vld [vmem:[%s4 + $0xc] sm:$0xf]
        %v285 = vunpack.c.l.b16 %v277
        %v286 = vunpack.c.l.b16 %v278
        %v287 = vunpack.c.l.b16 %v279
        %v288 = vunpack.c.l.b16 %v280
        %v289 = vpack.c.b16 %v286, %v285
        %v290 = vpack.c.b16 %v288, %v287
        %vm293 = vcmask 261120
        %v295 = vsel %vm293, %v276, 0
        %297 = vmatpush.bf16.msra.mxu0 0
        %298 = vmatpush.bf16.msra.mxu0 0
        %299 = vmatpush.bf16.msra.mxu0 0
        %300 = vmatpush.bf16.msra.mxu0 0
        %301 = vmatpush.bf16.msra.mxu0 0
        %302 = vmatpush.bf16.msra.mxu0 0
        %303 = vmatpush.bf16.msra.mxu0 %v290
        %304 = vmatpush.bf16.msra.mxu0 %v289
        %305 = vmatmul.bf16.gmra.mxu0 %v295
        %v306 = vpop.f32.mrf.mxu0
        %v307 = vadd.f32 0.0, %v306
        %v308 = vpop.f32.mrf.mxu0
        %309 = vdwg.mxu0
        %v314 = vunpack.c.l.b16 %v268
        %v315 = vunpack.c.l.b16 %v269
        %v316 = vunpack.c.l.b16 %v270
        %v317 = vunpack.c.l.b16 %v271
        %v318 = vpack.c.b16 %v315, %v314
        %v319 = vpack.c.b16 %v317, %v316
        %322 = vxpose.xlu0.c.b16.start [1/8] %v318, 128
        %323 = vxpose.xlu0.c.b16.cont [2/8] %v319, 128
        %324 = vxpose.xlu0.c.b16.cont [3/8] 0, 128
        %325 = vxpose.xlu0.c.b16.cont [4/8] 0, 128
        %326 = vxpose.xlu0.c.b16.cont [5/8] 0, 128
        %327 = vxpose.xlu0.c.b16.cont [6/8] 0, 128
        %328 = vxpose.xlu0.c.b16.cont [7/8] 0, 128
        %329 = vxpose.xlu0.c.b16.end [8/8] 0, 128
        %v330 = vpop.trf.xlu0
        %v331 = vpop.trf.xlu0
        %v332 = vpop.trf.xlu0
        %v333 = vpop.trf.xlu0
        %v334 = vpop.trf.xlu0
        %v335 = vpop.trf.xlu0
        %v336 = vpop.trf.xlu0
        %v337 = vpop.trf.xlu0
        %v339 = vsel %vm293, %v330, 0
        %v342 = vsel %vm293, %v274, 0
        %344 = vmatpush.bf16.xpose.msra.mxu0 0
        %345 = vmatpush.bf16.xpose.msra.mxu0 0
        %346 = vmatpush.bf16.xpose.msra.mxu0 0
        %347 = vmatpush.bf16.xpose.msra.mxu0 0
        %348 = vmatpush.bf16.xpose.msra.mxu0 0
        %349 = vmatpush.bf16.xpose.msra.mxu0 0
        %350 = vmatpush.bf16.xpose.msra.mxu0 0
        %351 = vmatpush.bf16.xpose.msra.mxu0 %v342
        %352 = vmatmul.bf16.gmra.mxu0 %v339
        %v353 = vpop.f32.mrf.mxu0
        %v354 = vadd.f32 %v307, %v353
        %v355 = vpop.f32.mrf.mxu0
        %356 = vdwg.mxu0
        %v357 = vld [vmem:[%s3] sm:$0xff]
        %359 = vset.pattern.permute.xlu0 0
        %360 = vperm.xlu0 %359, %v357
        %v361 = vpop.permute.xlu0 %360
        %v363 = vadd.f32 %v354, %v361
        %v364 = vld [vmem:[%s5] sm:$0x1]
        %v366 = vperm.slane %v364, 0
        %v368 = vadd.f32 %v363, %v366
        %vm369 = vcmask 130048
        %370 = vst.msk [vmem:[%s257] sm:$0xff] %vm369, %v368
        %s371 = sand.u32 %s164, 1
        %s372 = scalar_lea.sflag [#allocation3], %s371
        %s373 = sand.u32 %s164, 1
        %s374 = smul.addr %s373, 8
        %s375 = scalar_lea.vmem [#allocation2], %s374
        // Predicated region
        $region45: #{_lambda_.37} parent=43 // pred_check
          %p376 = pneg %p174
        $region46: #{_lambda_.37} parent=43 // pred_check_branch
          %378 = sbr.rel (%p376) target = $region48
        $region47: #{_lambda_.37} parent=43 // pred_region
          %380 = vsyncadd %s372, 0
          %s381 = smul.addr %s20, 8
          %s382 = scalar_lea.hbm %s6, %s381
          %s384 = sshll.u32 %s375, 4
          %s385 = int_to_ptr.vmem [resolvable:$true] %s384
          %s386 = sshll.u32 %s382, 4
          %s387 = int_to_ptr.hbm [resolvable:$true] %s386
          %389 = dma.vmem_to_hbm [thread:$0]  %s385, 128, %s387, %s372
        $region48: #{_lambda_.37} parent=43 // pred_fallthru
          _
      $region44: #{_lambda_.37} parent=5 // pred_fallthru
        _
      %p390 = scmp.le.s32.totalorder 2, %s15
      // Predicated region
      $region49: #{_lambda_.37} parent=5 // pred_check
        %p391 = pneg %p390
      $region50: #{_lambda_.37} parent=5 // pred_check_branch
        %393 = sbr.rel (%p391) target = $region52
      $region51: #{_lambda_.37} parent=5 // pred_region
        %s394 = ssub.s32 %s15, 2
        // Predicated region
        $region53: #{_lambda_.37} parent=51 // pred_check
          %p395 = pneg %p180
        $region54: #{_lambda_.37} parent=51 // pred_check_branch
          %397 = sbr.rel (%p395) target = $region56
        $region55: #{_lambda_.37} parent=51 // pred_region
          %s398 = sand.u32 %s165, 1
          %s399 = scalar_lea.sflag [#allocation3], %s398
          %s400 = sand.u32 %s165, 1
          %s401 = smul.addr %s400, 8
          %s402 = scalar_lea.vmem [#allocation2], %s401
          %404 = dma.done %s399, 128
        $region56: #{_lambda_.37} parent=51 // pred_fallthru
          _
      $region52: #{_lambda_.37} parent=5 // pred_fallthru
        _
    $region6: #{_lambda_.37} parent=1 // loop_footer
      %s19 = sadd.s32 1, %s15
    $region7: #{_lambda_.37} parent=1 // loop_footer_branch
      %14 = sbr.rel target = $region3
    $region8: #{_lambda_.37} parent=1 // loop_exit
      _
    %405 = vsyncpa [#allocation3], 1
    %s406 = scalar_lea.sflag [#allocation3], 1
    %407 = vsyncpa %s406, 1

</llo_original>
